<compile_context>
chip_gen: v6e
topology: v6e:2x2x1
jax: 0.10.0
libtpu: 0.0.40
codegen_flags: <defaults>
</compile_context>

<pallas_src>
import functools

import jax
import jax.numpy as jnp
from jax import lax
from jax.experimental import pallas as pl
from jax.experimental.pallas import tpu as pltpu


def _deconv_kernel(w_ref, xp_ref, o_ref, xs_ref, *,
                   kh, kw, oh, ow, cin, cout, cout_blk, bpack, hp):
    """One (batch-group, cout-block) tile per grid step.

    w_ref : SMEM f32[kh*kw*cin*cout], flat flipped weight,
            index (((i*kw + j)*cin + ci)*cout + co)
    xp_ref: VMEM (bpack, Cin, Hp, Wp)      dilated + padded input (W in lanes)
    o_ref : VMEM (bpack, Cout_blk, OH, OW) output tile (OW in lanes)
    xs_ref: VMEM (Cin, kw, Hp, bpack*OW)   lane-shifted, batch-packed staging planes
    """
    co_base = pl.program_id(1) * cout_blk
    pw_packed = bpack * ow

    # ---- Stage 1: hoist the kw lane shifts ------------------------------------------
    # For each (ci, j), stage one batch-packed plane whose lane start is 0; the tap loop
    # below then needs only sublane-offset (free-address) loads.  Static slices only.
    for ci in range(cin):
        for j in range(kw):
            for b in range(bpack):
                xs_ref[ci, j, :, b * ow:(b + 1) * ow] = xp_ref[b, ci, :, j:j + ow]

    # ---- Stage 2: per-tap scalar(weight-from-SMEM) * plane FMAs on the VPU -----------
    # vreg-resident f32 accumulators: cout_blk * ceil(oh/8) * ceil(pw_packed/128) vregs.
    accs = [jnp.zeros((oh, pw_packed), jnp.float32) for _ in range(cout_blk)]
    for ci in range(cin):
        for j in range(kw):
            for i in range(kh):
                # Lane start 0, sublane offset i: plain VMEM addressing, no lane rotate.
                p = xs_ref[ci, j, i:i + oh, :]
                base = (i * kw + j) * cin * cout + ci * cout + co_base
                for co in range(cout_blk):
                    wv = w_ref[base + co]          # scalar from SMEM
                    accs[co] = accs[co] + wv * p   # VPU broadcast FMA

    # ---- Stage 3: unpack the batch lanes and store NCHW blocks -----------------------
    for co in range(cout_blk):
        acc = accs[co]
        for b in range(bpack):
            o_ref[b, co] = acc[:, b * ow:(b + 1) * ow].astype(o_ref.dtype)


def conv_transpose2d_pallas(x_nchw, weight, *, stride, padding):
    """PyTorch-semantics ConvTranspose2d (bias=False).

    x_nchw : (N, Cin, H, W)
    weight : (Cin, Cout, kH, kW)  -- PyTorch ConvTranspose2d weight layout
    returns: (N, Cout, OH, OW)
    """
    n, cin, h, w = x_nchw.shape
    cin_w, cout, kh, kw = weight.shape
    assert cin == cin_w
    sh, sw = stride
    ph, pw = padding

    oh = (h - 1) * sh - 2 * ph + kh
    ow = (w - 1) * sw - 2 * pw + kw

    pad_h = kh - 1 - ph
    pad_w = kw - 1 - pw
    assert pad_h >= 0 and pad_w >= 0, "padding > kernel_size - 1 not supported"
    hp = oh + kh - 1
    wp = ow + kw - 1

    # Stride-dilate + zero-pad with a single interior-padding lax.pad (no scatter).
    xp = lax.pad(x_nchw, jnp.array(0, x_nchw.dtype),
                 ((0, 0, 0), (0, 0, 0),
                  (pad_h, pad_h, sh - 1), (pad_w, pad_w, sw - 1)))
    assert xp.shape == (n, cin, hp, wp), (xp.shape, (n, cin, hp, wp))

    # w_flat[((i*kw + j)*cin + ci)*cout + co] = weight[ci, co, kh-1-i, kw-1-j]
    w_flat = jnp.transpose(weight[:, :, ::-1, ::-1], (2, 3, 0, 1)).reshape(-1)
    w_flat = w_flat.astype(jnp.float32)

    # Pack as many batches as fit one 128-lane group side-by-side along the lane axis.
    bpack = 1
    for d in range(n, 0, -1):
        if n % d == 0 and d * ow <= max(128, ow):
            bpack = d
            break
    n_bg = n // bpack
    # Keep >= 2 parallel grid steps for v7x's two TensorCores whenever possible.
    n_cb = 2 if (n_bg == 1 and cout % 2 == 0) else 1
    cout_blk = cout // n_cb

    kern = functools.partial(_deconv_kernel, kh=kh, kw=kw, oh=oh, ow=ow,
                             cin=cin, cout=cout, cout_blk=cout_blk,
                             bpack=bpack, hp=hp)

    out = pl.pallas_call(
        kern,
        out_shape=jax.ShapeDtypeStruct((n, cout, oh, ow), x_nchw.dtype),
        grid_spec=pltpu.PrefetchScalarGridSpec(
            num_scalar_prefetch=0,
            grid=(n_bg, n_cb),
            in_specs=[
                pl.BlockSpec(memory_space=pltpu.MemorySpace.SMEM),        # weights
                pl.BlockSpec((bpack, cin, hp, wp), lambda bg, cb: (bg, 0, 0, 0)),
            ],
            out_specs=pl.BlockSpec((bpack, cout_blk, oh, ow),
                                   lambda bg, cb: (bg, cb, 0, 0)),
            scratch_shapes=[pltpu.VMEM((cin, kw, hp, bpack * ow), x_nchw.dtype)],
        ),
        compiler_params=pltpu.CompilerParams(
            dimension_semantics=("parallel", "parallel")),
        cost_estimate=pl.CostEstimate(
            flops=2 * n * cout * oh * ow * cin * kh * kw,
            transcendentals=0,
            bytes_accessed=(x_nchw.size + w_flat.size + n * cout * oh * ow) * 4),
    )(w_flat, xp)
    return out


def conv_transpose2d_reference(x_nchw, weight, stride, padding):
    """Pure-JAX reference using conv_general_dilated (lhs-dilation form)."""
    cin, cout, kh, kw = weight.shape
    sh, sw = stride
    ph, pw = padding
    w_conv = jnp.transpose(weight[:, :, ::-1, ::-1], (1, 0, 2, 3))  # (Cout, Cin, kh, kw)
    return lax.conv_general_dilated(
        x_nchw, w_conv,
        window_strides=(1, 1),
        padding=((kh - 1 - ph, kh - 1 - ph), (kw - 1 - pw, kw - 1 - pw)),
        lhs_dilation=(sh, sw),
        dimension_numbers=("NCHW", "OIHW", "NCHW"),
    )


if __name__ == "__main__":
    # Module config (bias=False): asymmetric kernel / stride / padding.
    in_channels, out_channels = 4, 8
    kernel_size = (3, 5)
    stride = (2, 3)
    padding = (1, 2)
    batch, H, W = 2, 16, 16

    key = jax.random.PRNGKey(0)
    kx, kw_ = jax.random.split(key)
    x = jax.random.normal(kx, (batch, in_channels, H, W), dtype=jnp.float32)
    # PyTorch ConvTranspose2d weight shape: (in_channels, out_channels, kH, kW)
    weight = jax.random.normal(
        kw_, (in_channels, out_channels, *kernel_size), dtype=jnp.float32) * 0.1

    fwd = jax.jit(functools.partial(conv_transpose2d_pallas,
                                    stride=stride, padding=padding))
    out = jax.block_until_ready(fwd(x, weight))

    ref = conv_transpose2d_reference(x, weight, stride, padding)
    assert out.shape == ref.shape, (out.shape, ref.shape)
    assert jnp.allclose(out, ref, atol=1e-4, rtol=1e-4), float(
        jnp.max(jnp.abs(out - ref)))

    print("KERNEL_OK")
</pallas_src>

<mosaic_0001>
module attributes {stable_mosaic.version = 11 : i64} {
  func.func @_deconv_kernel(%arg0: i32, %arg1: i32, %arg2: memref<480xf32, #tpu.memory_space<smem>>, %arg3: memref<2x4x33x50xf32, #tpu.memory_space<vmem>>, %arg4: memref<2x4x31x46xf32, #tpu.memory_space<vmem>>, %arg5: memref<4x5x33x92xf32, #tpu.memory_space<vmem>>) attributes {dimension_semantics = [#tpu.dimension_semantics<parallel>, #tpu.dimension_semantics<parallel>], iteration_bounds = array<i64: 1, 2>, scalar_prefetch = 0 : i64, scratch_operands = 1 : i64, tpu.core_type = #tpu.core_type<tc>, window_params = [{transform_indices = @transform_0, window_bounds = array<i64: 480>}, {transform_indices = @transform_1, window_bounds = array<i64: 2, 4, 33, 50>}, {transform_indices = @transform_2, window_bounds = array<i64: 2, 4, 31, 46>}]} {
    %c4_i32 = arith.constant 4 : i32
    %0 = arith.muli %arg1, %c4_i32 : i32
    %c0 = arith.constant 0 : index
    %c0_0 = arith.constant 0 : index
    %c0_1 = arith.constant 0 : index
    %c0_2 = arith.constant 0 : index
    %1 = vector.load %arg3[%c0, %c0_0, %c0_1, %c0_2] : memref<2x4x33x50xf32, #tpu.memory_space<vmem>>, vector<1x1x33x46xf32>
    %2 = vector.shape_cast %1 : vector<1x1x33x46xf32> to vector<33x46xf32>
    %c0_3 = arith.constant 0 : index
    %c0_4 = arith.constant 0 : index
    %c0_5 = arith.constant 0 : index
    %c0_6 = arith.constant 0 : index
    %3 = vector.load %arg5[%c0_3, %c0_4, %c0_5, %c0_6] : memref<4x5x33x92xf32, #tpu.memory_space<vmem>>, vector<1x1x33x46xf32>
    %4 = vector.shape_cast %3 : vector<1x1x33x46xf32> to vector<33x46xf32>
    %5 = vector.shape_cast %2 : vector<33x46xf32> to vector<1x1x33x46xf32>
    tpu.vector_store %arg5[%c0_3, %c0_4, %c0_5, %c0_6], %5 {strides = array<i32>} : memref<4x5x33x92xf32, #tpu.memory_space<vmem>>, vector<1x1x33x46xf32>,
    %c1 = arith.constant 1 : index
    %c0_7 = arith.constant 0 : index
    %c0_8 = arith.constant 0 : index
    %c0_9 = arith.constant 0 : index
    %6 = vector.load %arg3[%c1, %c0_7, %c0_8, %c0_9] : memref<2x4x33x50xf32, #tpu.memory_space<vmem>>, vector<1x1x33x46xf32>
    %7 = vector.shape_cast %6 : vector<1x1x33x46xf32> to vector<33x46xf32>
    %c0_10 = arith.constant 0 : index
    %c0_11 = arith.constant 0 : index
    %c0_12 = arith.constant 0 : index
    %c46 = arith.constant 46 : index
    %8 = vector.load %arg5[%c0_10, %c0_11, %c0_12, %c46] : memref<4x5x33x92xf32, #tpu.memory_space<vmem>>, vector<1x1x33x46xf32>
    %9 = vector.shape_cast %8 : vector<1x1x33x46xf32> to vector<33x46xf32>
    %10 = vector.shape_cast %7 : vector<33x46xf32> to vector<1x1x33x46xf32>
    tpu.vector_store %arg5[%c0_10, %c0_11, %c0_12, %c46], %10 {strides = array<i32>} : memref<4x5x33x92xf32, #tpu.memory_space<vmem>>, vector<1x1x33x46xf32>,
    %c0_13 = arith.constant 0 : index
    %c0_14 = arith.constant 0 : index
    %c0_15 = arith.constant 0 : index
    %c1_16 = arith.constant 1 : index
    %11 = vector.load %arg3[%c0_13, %c0_14, %c0_15, %c1_16] : memref<2x4x33x50xf32, #tpu.memory_space<vmem>>, vector<1x1x33x46xf32>
    %12 = vector.shape_cast %11 : vector<1x1x33x46xf32> to vector<33x46xf32>
    %c0_17 = arith.constant 0 : index
    %c1_18 = arith.constant 1 : index
    %c0_19 = arith.constant 0 : index
    %c0_20 = arith.constant 0 : index
    %13 = vector.load %arg5[%c0_17, %c1_18, %c0_19, %c0_20] : memref<4x5x33x92xf32, #tpu.memory_space<vmem>>, vector<1x1x33x46xf32>
    %14 = vector.shape_cast %13 : vector<1x1x33x46xf32> to vector<33x46xf32>
    %15 = vector.shape_cast %12 : vector<33x46xf32> to vector<1x1x33x46xf32>
    tpu.vector_store %arg5[%c0_17, %c1_18, %c0_19, %c0_20], %15 {strides = array<i32>} : memref<4x5x33x92xf32, #tpu.memory_space<vmem>>, vector<1x1x33x46xf32>,
    %c1_21 = arith.constant 1 : index
    %c0_22 = arith.constant 0 : index
    %c0_23 = arith.constant 0 : index
    %c1_24 = arith.constant 1 : index
    %16 = vector.load %arg3[%c1_21, %c0_22, %c0_23, %c1_24] : memref<2x4x33x50xf32, #tpu.memory_space<vmem>>, vector<1x1x33x46xf32>
    %17 = vector.shape_cast %16 : vector<1x1x33x46xf32> to vector<33x46xf32>
    %c0_25 = arith.constant 0 : index
    %c1_26 = arith.constant 1 : index
    %c0_27 = arith.constant 0 : index
    %c46_28 = arith.constant 46 : index
    %18 = vector.load %arg5[%c0_25, %c1_26, %c0_27, %c46_28] : memref<4x5x33x92xf32, #tpu.memory_space<vmem>>, vector<1x1x33x46xf32>
    %19 = vector.shape_cast %18 : vector<1x1x33x46xf32> to vector<33x46xf32>
    %20 = vector.shape_cast %17 : vector<33x46xf32> to vector<1x1x33x46xf32>
    tpu.vector_store %arg5[%c0_25, %c1_26, %c0_27, %c46_28], %20 {strides = array<i32>} : memref<4x5x33x92xf32, #tpu.memory_space<vmem>>, vector<1x1x33x46xf32>,
    %c0_29 = arith.constant 0 : index
    %c0_30 = arith.constant 0 : index
    %c0_31 = arith.constant 0 : index
    %c2 = arith.constant 2 : index
    %21 = vector.load %arg3[%c0_29, %c0_30, %c0_31, %c2] : memref<2x4x33x50xf32, #tpu.memory_space<vmem>>, vector<1x1x33x46xf32>
    %22 = vector.shape_cast %21 : vector<1x1x33x46xf32> to vector<33x46xf32>
    %c0_32 = arith.constant 0 : index
    %c2_33 = arith.constant 2 : index
    %c0_34 = arith.constant 0 : index
    %c0_35 = arith.constant 0 : index
    %23 = vector.load %arg5[%c0_32, %c2_33, %c0_34, %c0_35] : memref<4x5x33x92xf32, #tpu.memory_space<vmem>>, vector<1x1x33x46xf32>
    %24 = vector.shape_cast %23 : vector<1x1x33x46xf32> to vector<33x46xf32>
    %25 = vector.shape_cast %22 : vector<33x46xf32> to vector<1x1x33x46xf32>
    tpu.vector_store %arg5[%c0_32, %c2_33, %c0_34, %c0_35], %25 {strides = array<i32>} : memref<4x5x33x92xf32, #tpu.memory_space<vmem>>, vector<1x1x33x46xf32>,
    %c1_36 = arith.constant 1 : index
    %c0_37 = arith.constant 0 : index
    %c0_38 = arith.constant 0 : index
    %c2_39 = arith.constant 2 : index
    %26 = vector.load %arg3[%c1_36, %c0_37, %c0_38, %c2_39] : memref<2x4x33x50xf32, #tpu.memory_space<vmem>>, vector<1x1x33x46xf32>
    %27 = vector.shape_cast %26 : vector<1x1x33x46xf32> to vector<33x46xf32>
    %c0_40 = arith.constant 0 : index
    %c2_41 = arith.constant 2 : index
    %c0_42 = arith.constant 0 : index
    %c46_43 = arith.constant 46 : index
    %28 = vector.load %arg5[%c0_40, %c2_41, %c0_42, %c46_43] : memref<4x5x33x92xf32, #tpu.memory_space<vmem>>, vector<1x1x33x46xf32>
    %29 = vector.shape_cast %28 : vector<1x1x33x46xf32> to vector<33x46xf32>
    %30 = vector.shape_cast %27 : vector<33x46xf32> to vector<1x1x33x46xf32>
    tpu.vector_store %arg5[%c0_40, %c2_41, %c0_42, %c46_43], %30 {strides = array<i32>} : memref<4x5x33x92xf32, #tpu.memory_space<vmem>>, vector<1x1x33x46xf32>,
    %c0_44 = arith.constant 0 : index
    %c0_45 = arith.constant 0 : index
    %c0_46 = arith.constant 0 : index
    %c3 = arith.constant 3 : index
    %31 = vector.load %arg3[%c0_44, %c0_45, %c0_46, %c3] : memref<2x4x33x50xf32, #tpu.memory_space<vmem>>, vector<1x1x33x46xf32>
    %32 = vector.shape_cast %31 : vector<1x1x33x46xf32> to vector<33x46xf32>
    %c0_47 = arith.constant 0 : index
    %c3_48 = arith.constant 3 : index
    %c0_49 = arith.constant 0 : index
    %c0_50 = arith.constant 0 : index
    %33 = vector.load %arg5[%c0_47, %c3_48, %c0_49, %c0_50] : memref<4x5x33x92xf32, #tpu.memory_space<vmem>>, vector<1x1x33x46xf32>
    %34 = vector.shape_cast %33 : vector<1x1x33x46xf32> to vector<33x46xf32>
    %35 = vector.shape_cast %32 : vector<33x46xf32> to vector<1x1x33x46xf32>
    tpu.vector_store %arg5[%c0_47, %c3_48, %c0_49, %c0_50], %35 {strides = array<i32>} : memref<4x5x33x92xf32, #tpu.memory_space<vmem>>, vector<1x1x33x46xf32>,
    %c1_51 = arith.constant 1 : index
    %c0_52 = arith.constant 0 : index
    %c0_53 = arith.constant 0 : index
    %c3_54 = arith.constant 3 : index
    %36 = vector.load %arg3[%c1_51, %c0_52, %c0_53, %c3_54] : memref<2x4x33x50xf32, #tpu.memory_space<vmem>>, vector<1x1x33x46xf32>
    %37 = vector.shape_cast %36 : vector<1x1x33x46xf32> to vector<33x46xf32>
    %c0_55 = arith.constant 0 : index
    %c3_56 = arith.constant 3 : index
    %c0_57 = arith.constant 0 : index
    %c46_58 = arith.constant 46 : index
    %38 = vector.load %arg5[%c0_55, %c3_56, %c0_57, %c46_58] : memref<4x5x33x92xf32, #tpu.memory_space<vmem>>, vector<1x1x33x46xf32>
    %39 = vector.shape_cast %38 : vector<1x1x33x46xf32> to vector<33x46xf32>
    %40 = vector.shape_cast %37 : vector<33x46xf32> to vector<1x1x33x46xf32>
    tpu.vector_store %arg5[%c0_55, %c3_56, %c0_57, %c46_58], %40 {strides = array<i32>} : memref<4x5x33x92xf32, #tpu.memory_space<vmem>>, vector<1x1x33x46xf32>,
    %c0_59 = arith.constant 0 : index
    %c0_60 = arith.constant 0 : index
    %c0_61 = arith.constant 0 : index
    %c4 = arith.constant 4 : index
    %41 = vector.load %arg3[%c0_59, %c0_60, %c0_61, %c4] : memref<2x4x33x50xf32, #tpu.memory_space<vmem>>, vector<1x1x33x46xf32>
    %42 = vector.shape_cast %41 : vector<1x1x33x46xf32> to vector<33x46xf32>
    %c0_62 = arith.constant 0 : index
    %c4_63 = arith.constant 4 : index
    %c0_64 = arith.constant 0 : index
    %c0_65 = arith.constant 0 : index
    %43 = vector.load %arg5[%c0_62, %c4_63, %c0_64, %c0_65] : memref<4x5x33x92xf32, #tpu.memory_space<vmem>>, vector<1x1x33x46xf32>
    %44 = vector.shape_cast %43 : vector<1x1x33x46xf32> to vector<33x46xf32>
    %45 = vector.shape_cast %42 : vector<33x46xf32> to vector<1x1x33x46xf32>
    tpu.vector_store %arg5[%c0_62, %c4_63, %c0_64, %c0_65], %45 {strides = array<i32>} : memref<4x5x33x92xf32, #tpu.memory_space<vmem>>, vector<1x1x33x46xf32>,
    %c1_66 = arith.constant 1 : index
    %c0_67 = arith.constant 0 : index
    %c0_68 = arith.constant 0 : index
    %c4_69 = arith.constant 4 : index
    %46 = vector.load %arg3[%c1_66, %c0_67, %c0_68, %c4_69] : memref<2x4x33x50xf32, #tpu.memory_space<vmem>>, vector<1x1x33x46xf32>
    %47 = vector.shape_cast %46 : vector<1x1x33x46xf32> to vector<33x46xf32>
    %c0_70 = arith.constant 0 : index
    %c4_71 = arith.constant 4 : index
    %c0_72 = arith.constant 0 : index
    %c46_73 = arith.constant 46 : index
    %48 = vector.load %arg5[%c0_70, %c4_71, %c0_72, %c46_73] : memref<4x5x33x92xf32, #tpu.memory_space<vmem>>, vector<1x1x33x46xf32>
    %49 = vector.shape_cast %48 : vector<1x1x33x46xf32> to vector<33x46xf32>
    %50 = vector.shape_cast %47 : vector<33x46xf32> to vector<1x1x33x46xf32>
    tpu.vector_store %arg5[%c0_70, %c4_71, %c0_72, %c46_73], %50 {strides = array<i32>} : memref<4x5x33x92xf32, #tpu.memory_space<vmem>>, vector<1x1x33x46xf32>,
    %c0_74 = arith.constant 0 : index
    %c1_75 = arith.constant 1 : index
    %c0_76 = arith.constant 0 : index
    %c0_77 = arith.constant 0 : index
    %51 = vector.load %arg3[%c0_74, %c1_75, %c0_76, %c0_77] : memref<2x4x33x50xf32, #tpu.memory_space<vmem>>, vector<1x1x33x46xf32>
    %52 = vector.shape_cast %51 : vector<1x1x33x46xf32> to vector<33x46xf32>
    %c1_78 = arith.constant 1 : index
    %c0_79 = arith.constant 0 : index
    %c0_80 = arith.constant 0 : index
    %c0_81 = arith.constant 0 : index
    %53 = vector.load %arg5[%c1_78, %c0_79, %c0_80, %c0_81] : memref<4x5x33x92xf32, #tpu.memory_space<vmem>>, vector<1x1x33x46xf32>
    %54 = vector.shape_cast %53 : vector<1x1x33x46xf32> to vector<33x46xf32>
    %55 = vector.shape_cast %52 : vector<33x46xf32> to vector<1x1x33x46xf32>
    tpu.vector_store %arg5[%c1_78, %c0_79, %c0_80, %c0_81], %55 {strides = array<i32>} : memref<4x5x33x92xf32, #tpu.memory_space<vmem>>, vector<1x1x33x46xf32>,
    %c1_82 = arith.constant 1 : index
    %c1_83 = arith.constant 1 : index
    %c0_84 = arith.constant 0 : index
    %c0_85 = arith.constant 0 : index
    %56 = vector.load %arg3[%c1_82, %c1_83, %c0_84, %c0_85] : memref<2x4x33x50xf32, #tpu.memory_space<vmem>>, vector<1x1x33x46xf32>
    %57 = vector.shape_cast %56 : vector<1x1x33x46xf32> to vector<33x46xf32>
    %c1_86 = arith.constant 1 : index
    %c0_87 = arith.constant 0 : index
    %c0_88 = arith.constant 0 : index
    %c46_89 = arith.constant 46 : index
    %58 = vector.load %arg5[%c1_86, %c0_87, %c0_88, %c46_89] : memref<4x5x33x92xf32, #tpu.memory_space<vmem>>, vector<1x1x33x46xf32>
    %59 = vector.shape_cast %58 : vector<1x1x33x46xf32> to vector<33x46xf32>
    %60 = vector.shape_cast %57 : vector<33x46xf32> to vector<1x1x33x46xf32>
    tpu.vector_store %arg5[%c1_86, %c0_87, %c0_88, %c46_89], %60 {strides = array<i32>} : memref<4x5x33x92xf32, #tpu.memory_space<vmem>>, vector<1x1x33x46xf32>,
    %c0_90 = arith.constant 0 : index
    %c1_91 = arith.constant 1 : index
    %c0_92 = arith.constant 0 : index
    %c1_93 = arith.constant 1 : index
    %61 = vector.load %arg3[%c0_90, %c1_91, %c0_92, %c1_93] : memref<2x4x33x50xf32, #tpu.memory_space<vmem>>, vector<1x1x33x46xf32>
    %62 = vector.shape_cast %61 : vector<1x1x33x46xf32> to vector<33x46xf32>
    %c1_94 = arith.constant 1 : index
    %c1_95 = arith.constant 1 : index
    %c0_96 = arith.constant 0 : index
    %c0_97 = arith.constant 0 : index
    %63 = vector.load %arg5[%c1_94, %c1_95, %c0_96, %c0_97] : memref<4x5x33x92xf32, #tpu.memory_space<vmem>>, vector<1x1x33x46xf32>
    %64 = vector.shape_cast %63 : vector<1x1x33x46xf32> to vector<33x46xf32>
    %65 = vector.shape_cast %62 : vector<33x46xf32> to vector<1x1x33x46xf32>
    tpu.vector_store %arg5[%c1_94, %c1_95, %c0_96, %c0_97], %65 {strides = array<i32>} : memref<4x5x33x92xf32, #tpu.memory_space<vmem>>, vector<1x1x33x46xf32>,
    %c1_98 = arith.constant 1 : index
    %c1_99 = arith.constant 1 : index
    %c0_100 = arith.constant 0 : index
    %c1_101 = arith.constant 1 : index
    %66 = vector.load %arg3[%c1_98, %c1_99, %c0_100, %c1_101] : memref<2x4x33x50xf32, #tpu.memory_space<vmem>>, vector<1x1x33x46xf32>
    %67 = vector.shape_cast %66 : vector<1x1x33x46xf32> to vector<33x46xf32>
    %c1_102 = arith.constant 1 : index
    %c1_103 = arith.constant 1 : index
    %c0_104 = arith.constant 0 : index
    %c46_105 = arith.constant 46 : index
    %68 = vector.load %arg5[%c1_102, %c1_103, %c0_104, %c46_105] : memref<4x5x33x92xf32, #tpu.memory_space<vmem>>, vector<1x1x33x46xf32>
    %69 = vector.shape_cast %68 : vector<1x1x33x46xf32> to vector<33x46xf32>
    %70 = vector.shape_cast %67 : vector<33x46xf32> to vector<1x1x33x46xf32>
    tpu.vector_store %arg5[%c1_102, %c1_103, %c0_104, %c46_105], %70 {strides = array<i32>} : memref<4x5x33x92xf32, #tpu.memory_space<vmem>>, vector<1x1x33x46xf32>,
    %c0_106 = arith.constant 0 : index
    %c1_107 = arith.constant 1 : index
    %c0_108 = arith.constant 0 : index
    %c2_109 = arith.constant 2 : index
    %71 = vector.load %arg3[%c0_106, %c1_107, %c0_108, %c2_109] : memref<2x4x33x50xf32, #tpu.memory_space<vmem>>, vector<1x1x33x46xf32>
    %72 = vector.shape_cast %71 : vector<1x1x33x46xf32> to vector<33x46xf32>
    %c1_110 = arith.constant 1 : index
    %c2_111 = arith.constant 2 : index
    %c0_112 = arith.constant 0 : index
    %c0_113 = arith.constant 0 : index
    %73 = vector.load %arg5[%c1_110, %c2_111, %c0_112, %c0_113] : memref<4x5x33x92xf32, #tpu.memory_space<vmem>>, vector<1x1x33x46xf32>
    %74 = vector.shape_cast %73 : vector<1x1x33x46xf32> to vector<33x46xf32>
    %75 = vector.shape_cast %72 : vector<33x46xf32> to vector<1x1x33x46xf32>
    tpu.vector_store %arg5[%c1_110, %c2_111, %c0_112, %c0_113], %75 {strides = array<i32>} : memref<4x5x33x92xf32, #tpu.memory_space<vmem>>, vector<1x1x33x46xf32>,
    %c1_114 = arith.constant 1 : index
    %c1_115 = arith.constant 1 : index
    %c0_116 = arith.constant 0 : index
    %c2_117 = arith.constant 2 : index
    %76 = vector.load %arg3[%c1_114, %c1_115, %c0_116, %c2_117] : memref<2x4x33x50xf32, #tpu.memory_space<vmem>>, vector<1x1x33x46xf32>
    %77 = vector.shape_cast %76 : vector<1x1x33x46xf32> to vector<33x46xf32>
    %c1_118 = arith.constant 1 : index
    %c2_119 = arith.constant 2 : index
    %c0_120 = arith.constant 0 : index
    %c46_121 = arith.constant 46 : index
    %78 = vector.load %arg5[%c1_118, %c2_119, %c0_120, %c46_121] : memref<4x5x33x92xf32, #tpu.memory_space<vmem>>, vector<1x1x33x46xf32>
    %79 = vector.shape_cast %78 : vector<1x1x33x46xf32> to vector<33x46xf32>
    %80 = vector.shape_cast %77 : vector<33x46xf32> to vector<1x1x33x46xf32>
    tpu.vector_store %arg5[%c1_118, %c2_119, %c0_120, %c46_121], %80 {strides = array<i32>} : memref<4x5x33x92xf32, #tpu.memory_space<vmem>>, vector<1x1x33x46xf32>,
    %c0_122 = arith.constant 0 : index
    %c1_123 = arith.constant 1 : index
    %c0_124 = arith.constant 0 : index
    %c3_125 = arith.constant 3 : index
    %81 = vector.load %arg3[%c0_122, %c1_123, %c0_124, %c3_125] : memref<2x4x33x50xf32, #tpu.memory_space<vmem>>, vector<1x1x33x46xf32>
    %82 = vector.shape_cast %81 : vector<1x1x33x46xf32> to vector<33x46xf32>
    %c1_126 = arith.constant 1 : index
    %c3_127 = arith.constant 3 : index
    %c0_128 = arith.constant 0 : index
    %c0_129 = arith.constant 0 : index
    %83 = vector.load %arg5[%c1_126, %c3_127, %c0_128, %c0_129] : memref<4x5x33x92xf32, #tpu.memory_space<vmem>>, vector<1x1x33x46xf32>
    %84 = vector.shape_cast %83 : vector<1x1x33x46xf32> to vector<33x46xf32>
    %85 = vector.shape_cast %82 : vector<33x46xf32> to vector<1x1x33x46xf32>
    tpu.vector_store %arg5[%c1_126, %c3_127, %c0_128, %c0_129], %85 {strides = array<i32>} : memref<4x5x33x92xf32, #tpu.memory_space<vmem>>, vector<1x1x33x46xf32>,
    %c1_130 = arith.constant 1 : index
    %c1_131 = arith.constant 1 : index
    %c0_132 = arith.constant 0 : index
    %c3_133 = arith.constant 3 : index
    %86 = vector.load %arg3[%c1_130, %c1_131, %c0_132, %c3_133] : memref<2x4x33x50xf32, #tpu.memory_space<vmem>>, vector<1x1x33x46xf32>
    %87 = vector.shape_cast %86 : vector<1x1x33x46xf32> to vector<33x46xf32>
    %c1_134 = arith.constant 1 : index
    %c3_135 = arith.constant 3 : index
    %c0_136 = arith.constant 0 : index
    %c46_137 = arith.constant 46 : index
    %88 = vector.load %arg5[%c1_134, %c3_135, %c0_136, %c46_137] : memref<4x5x33x92xf32, #tpu.memory_space<vmem>>, vector<1x1x33x46xf32>
    %89 = vector.shape_cast %88 : vector<1x1x33x46xf32> to vector<33x46xf32>
    %90 = vector.shape_cast %87 : vector<33x46xf32> to vector<1x1x33x46xf32>
    tpu.vector_store %arg5[%c1_134, %c3_135, %c0_136, %c46_137], %90 {strides = array<i32>} : memref<4x5x33x92xf32, #tpu.memory_space<vmem>>, vector<1x1x33x46xf32>,
    %c0_138 = arith.constant 0 : index
    %c1_139 = arith.constant 1 : index
    %c0_140 = arith.constant 0 : index
    %c4_141 = arith.constant 4 : index
    %91 = vector.load %arg3[%c0_138, %c1_139, %c0_140, %c4_141] : memref<2x4x33x50xf32, #tpu.memory_space<vmem>>, vector<1x1x33x46xf32>
    %92 = vector.shape_cast %91 : vector<1x1x33x46xf32> to vector<33x46xf32>
    %c1_142 = arith.constant 1 : index
    %c4_143 = arith.constant 4 : index
    %c0_144 = arith.constant 0 : index
    %c0_145 = arith.constant 0 : index
    %93 = vector.load %arg5[%c1_142, %c4_143, %c0_144, %c0_145] : memref<4x5x33x92xf32, #tpu.memory_space<vmem>>, vector<1x1x33x46xf32>
    %94 = vector.shape_cast %93 : vector<1x1x33x46xf32> to vector<33x46xf32>
    %95 = vector.shape_cast %92 : vector<33x46xf32> to vector<1x1x33x46xf32>
    tpu.vector_store %arg5[%c1_142, %c4_143, %c0_144, %c0_145], %95 {strides = array<i32>} : memref<4x5x33x92xf32, #tpu.memory_space<vmem>>, vector<1x1x33x46xf32>,
    %c1_146 = arith.constant 1 : index
    %c1_147 = arith.constant 1 : index
    %c0_148 = arith.constant 0 : index
    %c4_149 = arith.constant 4 : index
    %96 = vector.load %arg3[%c1_146, %c1_147, %c0_148, %c4_149] : memref<2x4x33x50xf32, #tpu.memory_space<vmem>>, vector<1x1x33x46xf32>
    %97 = vector.shape_cast %96 : vector<1x1x33x46xf32> to vector<33x46xf32>
    %c1_150 = arith.constant 1 : index
    %c4_151 = arith.constant 4 : index
    %c0_152 = arith.constant 0 : index
    %c46_153 = arith.constant 46 : index
    %98 = vector.load %arg5[%c1_150, %c4_151, %c0_152, %c46_153] : memref<4x5x33x92xf32, #tpu.memory_space<vmem>>, vector<1x1x33x46xf32>
    %99 = vector.shape_cast %98 : vector<1x1x33x46xf32> to vector<33x46xf32>
    %100 = vector.shape_cast %97 : vector<33x46xf32> to vector<1x1x33x46xf32>
    tpu.vector_store %arg5[%c1_150, %c4_151, %c0_152, %c46_153], %100 {strides = array<i32>} : memref<4x5x33x92xf32, #tpu.memory_space<vmem>>, vector<1x1x33x46xf32>,
    %c0_154 = arith.constant 0 : index
    %c2_155 = arith.constant 2 : index
    %c0_156 = arith.constant 0 : index
    %c0_157 = arith.constant 0 : index
    %101 = vector.load %arg3[%c0_154, %c2_155, %c0_156, %c0_157] : memref<2x4x33x50xf32, #tpu.memory_space<vmem>>, vector<1x1x33x46xf32>
    %102 = vector.shape_cast %101 : vector<1x1x33x46xf32> to vector<33x46xf32>
    %c2_158 = arith.constant 2 : index
    %c0_159 = arith.constant 0 : index
    %c0_160 = arith.constant 0 : index
    %c0_161 = arith.constant 0 : index
    %103 = vector.load %arg5[%c2_158, %c0_159, %c0_160, %c0_161] : memref<4x5x33x92xf32, #tpu.memory_space<vmem>>, vector<1x1x33x46xf32>
    %104 = vector.shape_cast %103 : vector<1x1x33x46xf32> to vector<33x46xf32>
    %105 = vector.shape_cast %102 : vector<33x46xf32> to vector<1x1x33x46xf32>
    tpu.vector_store %arg5[%c2_158, %c0_159, %c0_160, %c0_161], %105 {strides = array<i32>} : memref<4x5x33x92xf32, #tpu.memory_space<vmem>>, vector<1x1x33x46xf32>,
    %c1_162 = arith.constant 1 : index
    %c2_163 = arith.constant 2 : index
    %c0_164 = arith.constant 0 : index
    %c0_165 = arith.constant 0 : index
    %106 = vector.load %arg3[%c1_162, %c2_163, %c0_164, %c0_165] : memref<2x4x33x50xf32, #tpu.memory_space<vmem>>, vector<1x1x33x46xf32>
    %107 = vector.shape_cast %106 : vector<1x1x33x46xf32> to vector<33x46xf32>
    %c2_166 = arith.constant 2 : index
    %c0_167 = arith.constant 0 : index
    %c0_168 = arith.constant 0 : index
    %c46_169 = arith.constant 46 : index
    %108 = vector.load %arg5[%c2_166, %c0_167, %c0_168, %c46_169] : memref<4x5x33x92xf32, #tpu.memory_space<vmem>>, vector<1x1x33x46xf32>
    %109 = vector.shape_cast %108 : vector<1x1x33x46xf32> to vector<33x46xf32>
    %110 = vector.shape_cast %107 : vector<33x46xf32> to vector<1x1x33x46xf32>
    tpu.vector_store %arg5[%c2_166, %c0_167, %c0_168, %c46_169], %110 {strides = array<i32>} : memref<4x5x33x92xf32, #tpu.memory_space<vmem>>, vector<1x1x33x46xf32>,
    %c0_170 = arith.constant 0 : index
    %c2_171 = arith.constant 2 : index
    %c0_172 = arith.constant 0 : index
    %c1_173 = arith.constant 1 : index
    %111 = vector.load %arg3[%c0_170, %c2_171, %c0_172, %c1_173] : memref<2x4x33x50xf32, #tpu.memory_space<vmem>>, vector<1x1x33x46xf32>
    %112 = vector.shape_cast %111 : vector<1x1x33x46xf32> to vector<33x46xf32>
    %c2_174 = arith.constant 2 : index
    %c1_175 = arith.constant 1 : index
    %c0_176 = arith.constant 0 : index
    %c0_177 = arith.constant 0 : index
    %113 = vector.load %arg5[%c2_174, %c1_175, %c0_176, %c0_177] : memref<4x5x33x92xf32, #tpu.memory_space<vmem>>, vector<1x1x33x46xf32>
    %114 = vector.shape_cast %113 : vector<1x1x33x46xf32> to vector<33x46xf32>
    %115 = vector.shape_cast %112 : vector<33x46xf32> to vector<1x1x33x46xf32>
    tpu.vector_store %arg5[%c2_174, %c1_175, %c0_176, %c0_177], %115 {strides = array<i32>} : memref<4x5x33x92xf32, #tpu.memory_space<vmem>>, vector<1x1x33x46xf32>,
    %c1_178 = arith.constant 1 : index
    %c2_179 = arith.constant 2 : index
    %c0_180 = arith.constant 0 : index
    %c1_181 = arith.constant 1 : index
    %116 = vector.load %arg3[%c1_178, %c2_179, %c0_180, %c1_181] : memref<2x4x33x50xf32, #tpu.memory_space<vmem>>, vector<1x1x33x46xf32>
    %117 = vector.shape_cast %116 : vector<1x1x33x46xf32> to vector<33x46xf32>
    %c2_182 = arith.constant 2 : index
    %c1_183 = arith.constant 1 : index
    %c0_184 = arith.constant 0 : index
    %c46_185 = arith.constant 46 : index
    %118 = vector.load %arg5[%c2_182, %c1_183, %c0_184, %c46_185] : memref<4x5x33x92xf32, #tpu.memory_space<vmem>>, vector<1x1x33x46xf32>
    %119 = vector.shape_cast %118 : vector<1x1x33x46xf32> to vector<33x46xf32>
    %120 = vector.shape_cast %117 : vector<33x46xf32> to vector<1x1x33x46xf32>
    tpu.vector_store %arg5[%c2_182, %c1_183, %c0_184, %c46_185], %120 {strides = array<i32>} : memref<4x5x33x92xf32, #tpu.memory_space<vmem>>, vector<1x1x33x46xf32>,
    %c0_186 = arith.constant 0 : index
    %c2_187 = arith.constant 2 : index
    %c0_188 = arith.constant 0 : index
    %c2_189 = arith.constant 2 : index
    %121 = vector.load %arg3[%c0_186, %c2_187, %c0_188, %c2_189] : memref<2x4x33x50xf32, #tpu.memory_space<vmem>>, vector<1x1x33x46xf32>
    %122 = vector.shape_cast %121 : vector<1x1x33x46xf32> to vector<33x46xf32>
    %c2_190 = arith.constant 2 : index
    %c2_191 = arith.constant 2 : index
    %c0_192 = arith.constant 0 : index
    %c0_193 = arith.constant 0 : index
    %123 = vector.load %arg5[%c2_190, %c2_191, %c0_192, %c0_193] : memref<4x5x33x92xf32, #tpu.memory_space<vmem>>, vector<1x1x33x46xf32>
    %124 = vector.shape_cast %123 : vector<1x1x33x46xf32> to vector<33x46xf32>
    %125 = vector.shape_cast %122 : vector<33x46xf32> to vector<1x1x33x46xf32>
    tpu.vector_store %arg5[%c2_190, %c2_191, %c0_192, %c0_193], %125 {strides = array<i32>} : memref<4x5x33x92xf32, #tpu.memory_space<vmem>>, vector<1x1x33x46xf32>,
    %c1_194 = arith.constant 1 : index
    %c2_195 = arith.constant 2 : index
    %c0_196 = arith.constant 0 : index
    %c2_197 = arith.constant 2 : index
    %126 = vector.load %arg3[%c1_194, %c2_195, %c0_196, %c2_197] : memref<2x4x33x50xf32, #tpu.memory_space<vmem>>, vector<1x1x33x46xf32>
    %127 = vector.shape_cast %126 : vector<1x1x33x46xf32> to vector<33x46xf32>
    %c2_198 = arith.constant 2 : index
    %c2_199 = arith.constant 2 : index
    %c0_200 = arith.constant 0 : index
    %c46_201 = arith.constant 46 : index
    %128 = vector.load %arg5[%c2_198, %c2_199, %c0_200, %c46_201] : memref<4x5x33x92xf32, #tpu.memory_space<vmem>>, vector<1x1x33x46xf32>
    %129 = vector.shape_cast %128 : vector<1x1x33x46xf32> to vector<33x46xf32>
    %130 = vector.shape_cast %127 : vector<33x46xf32> to vector<1x1x33x46xf32>
    tpu.vector_store %arg5[%c2_198, %c2_199, %c0_200, %c46_201], %130 {strides = array<i32>} : memref<4x5x33x92xf32, #tpu.memory_space<vmem>>, vector<1x1x33x46xf32>,
    %c0_202 = arith.constant 0 : index
    %c2_203 = arith.constant 2 : index
    %c0_204 = arith.constant 0 : index
    %c3_205 = arith.constant 3 : index
    %131 = vector.load %arg3[%c0_202, %c2_203, %c0_204, %c3_205] : memref<2x4x33x50xf32, #tpu.memory_space<vmem>>, vector<1x1x33x46xf32>
    %132 = vector.shape_cast %131 : vector<1x1x33x46xf32> to vector<33x46xf32>
    %c2_206 = arith.constant 2 : index
    %c3_207 = arith.constant 3 : index
    %c0_208 = arith.constant 0 : index
    %c0_209 = arith.constant 0 : index
    %133 = vector.load %arg5[%c2_206, %c3_207, %c0_208, %c0_209] : memref<4x5x33x92xf32, #tpu.memory_space<vmem>>, vector<1x1x33x46xf32>
    %134 = vector.shape_cast %133 : vector<1x1x33x46xf32> to vector<33x46xf32>
    %135 = vector.shape_cast %132 : vector<33x46xf32> to vector<1x1x33x46xf32>
    tpu.vector_store %arg5[%c2_206, %c3_207, %c0_208, %c0_209], %135 {strides = array<i32>} : memref<4x5x33x92xf32, #tpu.memory_space<vmem>>, vector<1x1x33x46xf32>,
    %c1_210 = arith.constant 1 : index
    %c2_211 = arith.constant 2 : index
    %c0_212 = arith.constant 0 : index
    %c3_213 = arith.constant 3 : index
    %136 = vector.load %arg3[%c1_210, %c2_211, %c0_212, %c3_213] : memref<2x4x33x50xf32, #tpu.memory_space<vmem>>, vector<1x1x33x46xf32>
    %137 = vector.shape_cast %136 : vector<1x1x33x46xf32> to vector<33x46xf32>
    %c2_214 = arith.constant 2 : index
    %c3_215 = arith.constant 3 : index
    %c0_216 = arith.constant 0 : index
    %c46_217 = arith.constant 46 : index
    %138 = vector.load %arg5[%c2_214, %c3_215, %c0_216, %c46_217] : memref<4x5x33x92xf32, #tpu.memory_space<vmem>>, vector<1x1x33x46xf32>
    %139 = vector.shape_cast %138 : vector<1x1x33x46xf32> to vector<33x46xf32>
    %140 = vector.shape_cast %137 : vector<33x46xf32> to vector<1x1x33x46xf32>
    tpu.vector_store %arg5[%c2_214, %c3_215, %c0_216, %c46_217], %140 {strides = array<i32>} : memref<4x5x33x92xf32, #tpu.memory_space<vmem>>, vector<1x1x33x46xf32>,
    %c0_218 = arith.constant 0 : index
    %c2_219 = arith.constant 2 : index
    %c0_220 = arith.constant 0 : index
    %c4_221 = arith.constant 4 : index
    %141 = vector.load %arg3[%c0_218, %c2_219, %c0_220, %c4_221] : memref<2x4x33x50xf32, #tpu.memory_space<vmem>>, vector<1x1x33x46xf32>
    %142 = vector.shape_cast %141 : vector<1x1x33x46xf32> to vector<33x46xf32>
    %c2_222 = arith.constant 2 : index
    %c4_223 = arith.constant 4 : index
    %c0_224 = arith.constant 0 : index
    %c0_225 = arith.constant 0 : index
    %143 = vector.load %arg5[%c2_222, %c4_223, %c0_224, %c0_225] : memref<4x5x33x92xf32, #tpu.memory_space<vmem>>, vector<1x1x33x46xf32>
    %144 = vector.shape_cast %143 : vector<1x1x33x46xf32> to vector<33x46xf32>
    %145 = vector.shape_cast %142 : vector<33x46xf32> to vector<1x1x33x46xf32>
    tpu.vector_store %arg5[%c2_222, %c4_223, %c0_224, %c0_225], %145 {strides = array<i32>} : memref<4x5x33x92xf32, #tpu.memory_space<vmem>>, vector<1x1x33x46xf32>,
    %c1_226 = arith.constant 1 : index
    %c2_227 = arith.constant 2 : index
    %c0_228 = arith.constant 0 : index
    %c4_229 = arith.constant 4 : index
    %146 = vector.load %arg3[%c1_226, %c2_227, %c0_228, %c4_229] : memref<2x4x33x50xf32, #tpu.memory_space<vmem>>, vector<1x1x33x46xf32>
    %147 = vector.shape_cast %146 : vector<1x1x33x46xf32> to vector<33x46xf32>
    %c2_230 = arith.constant 2 : index
    %c4_231 = arith.constant 4 : index
    %c0_232 = arith.constant 0 : index
    %c46_233 = arith.constant 46 : index
    %148 = vector.load %arg5[%c2_230, %c4_231, %c0_232, %c46_233] : memref<4x5x33x92xf32, #tpu.memory_space<vmem>>, vector<1x1x33x46xf32>
    %149 = vector.shape_cast %148 : vector<1x1x33x46xf32> to vector<33x46xf32>
    %150 = vector.shape_cast %147 : vector<33x46xf32> to vector<1x1x33x46xf32>
    tpu.vector_store %arg5[%c2_230, %c4_231, %c0_232, %c46_233], %150 {strides = array<i32>} : memref<4x5x33x92xf32, #tpu.memory_space<vmem>>, vector<1x1x33x46xf32>,
    %c0_234 = arith.constant 0 : index
    %c3_235 = arith.constant 3 : index
    %c0_236 = arith.constant 0 : index
    %c0_237 = arith.constant 0 : index
    %151 = vector.load %arg3[%c0_234, %c3_235, %c0_236, %c0_237] : memref<2x4x33x50xf32, #tpu.memory_space<vmem>>, vector<1x1x33x46xf32>
    %152 = vector.shape_cast %151 : vector<1x1x33x46xf32> to vector<33x46xf32>
    %c3_238 = arith.constant 3 : index
    %c0_239 = arith.constant 0 : index
    %c0_240 = arith.constant 0 : index
    %c0_241 = arith.constant 0 : index
    %153 = vector.load %arg5[%c3_238, %c0_239, %c0_240, %c0_241] : memref<4x5x33x92xf32, #tpu.memory_space<vmem>>, vector<1x1x33x46xf32>
    %154 = vector.shape_cast %153 : vector<1x1x33x46xf32> to vector<33x46xf32>
    %155 = vector.shape_cast %152 : vector<33x46xf32> to vector<1x1x33x46xf32>
    tpu.vector_store %arg5[%c3_238, %c0_239, %c0_240, %c0_241], %155 {strides = array<i32>} : memref<4x5x33x92xf32, #tpu.memory_space<vmem>>, vector<1x1x33x46xf32>,
    %c1_242 = arith.constant 1 : index
    %c3_243 = arith.constant 3 : index
    %c0_244 = arith.constant 0 : index
    %c0_245 = arith.constant 0 : index
    %156 = vector.load %arg3[%c1_242, %c3_243, %c0_244, %c0_245] : memref<2x4x33x50xf32, #tpu.memory_space<vmem>>, vector<1x1x33x46xf32>
    %157 = vector.shape_cast %156 : vector<1x1x33x46xf32> to vector<33x46xf32>
    %c3_246 = arith.constant 3 : index
    %c0_247 = arith.constant 0 : index
    %c0_248 = arith.constant 0 : index
    %c46_249 = arith.constant 46 : index
    %158 = vector.load %arg5[%c3_246, %c0_247, %c0_248, %c46_249] : memref<4x5x33x92xf32, #tpu.memory_space<vmem>>, vector<1x1x33x46xf32>
    %159 = vector.shape_cast %158 : vector<1x1x33x46xf32> to vector<33x46xf32>
    %160 = vector.shape_cast %157 : vector<33x46xf32> to vector<1x1x33x46xf32>
    tpu.vector_store %arg5[%c3_246, %c0_247, %c0_248, %c46_249], %160 {strides = array<i32>} : memref<4x5x33x92xf32, #tpu.memory_space<vmem>>, vector<1x1x33x46xf32>,
    %c0_250 = arith.constant 0 : index
    %c3_251 = arith.constant 3 : index
    %c0_252 = arith.constant 0 : index
    %c1_253 = arith.constant 1 : index
    %161 = vector.load %arg3[%c0_250, %c3_251, %c0_252, %c1_253] : memref<2x4x33x50xf32, #tpu.memory_space<vmem>>, vector<1x1x33x46xf32>
    %162 = vector.shape_cast %161 : vector<1x1x33x46xf32> to vector<33x46xf32>
    %c3_254 = arith.constant 3 : index
    %c1_255 = arith.constant 1 : index
    %c0_256 = arith.constant 0 : index
    %c0_257 = arith.constant 0 : index
    %163 = vector.load %arg5[%c3_254, %c1_255, %c0_256, %c0_257] : memref<4x5x33x92xf32, #tpu.memory_space<vmem>>, vector<1x1x33x46xf32>
    %164 = vector.shape_cast %163 : vector<1x1x33x46xf32> to vector<33x46xf32>
    %165 = vector.shape_cast %162 : vector<33x46xf32> to vector<1x1x33x46xf32>
    tpu.vector_store %arg5[%c3_254, %c1_255, %c0_256, %c0_257], %165 {strides = array<i32>} : memref<4x5x33x92xf32, #tpu.memory_space<vmem>>, vector<1x1x33x46xf32>,
    %c1_258 = arith.constant 1 : index
    %c3_259 = arith.constant 3 : index
    %c0_260 = arith.constant 0 : index
    %c1_261 = arith.constant 1 : index
    %166 = vector.load %arg3[%c1_258, %c3_259, %c0_260, %c1_261] : memref<2x4x33x50xf32, #tpu.memory_space<vmem>>, vector<1x1x33x46xf32>
    %167 = vector.shape_cast %166 : vector<1x1x33x46xf32> to vector<33x46xf32>
    %c3_262 = arith.constant 3 : index
    %c1_263 = arith.constant 1 : index
    %c0_264 = arith.constant 0 : index
    %c46_265 = arith.constant 46 : index
    %168 = vector.load %arg5[%c3_262, %c1_263, %c0_264, %c46_265] : memref<4x5x33x92xf32, #tpu.memory_space<vmem>>, vector<1x1x33x46xf32>
    %169 = vector.shape_cast %168 : vector<1x1x33x46xf32> to vector<33x46xf32>
    %170 = vector.shape_cast %167 : vector<33x46xf32> to vector<1x1x33x46xf32>
    tpu.vector_store %arg5[%c3_262, %c1_263, %c0_264, %c46_265], %170 {strides = array<i32>} : memref<4x5x33x92xf32, #tpu.memory_space<vmem>>, vector<1x1x33x46xf32>,
    %c0_266 = arith.constant 0 : index
    %c3_267 = arith.constant 3 : index
    %c0_268 = arith.constant 0 : index
    %c2_269 = arith.constant 2 : index
    %171 = vector.load %arg3[%c0_266, %c3_267, %c0_268, %c2_269] : memref<2x4x33x50xf32, #tpu.memory_space<vmem>>, vector<1x1x33x46xf32>
    %172 = vector.shape_cast %171 : vector<1x1x33x46xf32> to vector<33x46xf32>
    %c3_270 = arith.constant 3 : index
    %c2_271 = arith.constant 2 : index
    %c0_272 = arith.constant 0 : index
    %c0_273 = arith.constant 0 : index
    %173 = vector.load %arg5[%c3_270, %c2_271, %c0_272, %c0_273] : memref<4x5x33x92xf32, #tpu.memory_space<vmem>>, vector<1x1x33x46xf32>
    %174 = vector.shape_cast %173 : vector<1x1x33x46xf32> to vector<33x46xf32>
    %175 = vector.shape_cast %172 : vector<33x46xf32> to vector<1x1x33x46xf32>
    tpu.vector_store %arg5[%c3_270, %c2_271, %c0_272, %c0_273], %175 {strides = array<i32>} : memref<4x5x33x92xf32, #tpu.memory_space<vmem>>, vector<1x1x33x46xf32>,
    %c1_274 = arith.constant 1 : index
    %c3_275 = arith.constant 3 : index
    %c0_276 = arith.constant 0 : index
    %c2_277 = arith.constant 2 : index
    %176 = vector.load %arg3[%c1_274, %c3_275, %c0_276, %c2_277] : memref<2x4x33x50xf32, #tpu.memory_space<vmem>>, vector<1x1x33x46xf32>
    %177 = vector.shape_cast %176 : vector<1x1x33x46xf32> to vector<33x46xf32>
    %c3_278 = arith.constant 3 : index
    %c2_279 = arith.constant 2 : index
    %c0_280 = arith.constant 0 : index
    %c46_281 = arith.constant 46 : index
    %178 = vector.load %arg5[%c3_278, %c2_279, %c0_280, %c46_281] : memref<4x5x33x92xf32, #tpu.memory_space<vmem>>, vector<1x1x33x46xf32>
    %179 = vector.shape_cast %178 : vector<1x1x33x46xf32> to vector<33x46xf32>
    %180 = vector.shape_cast %177 : vector<33x46xf32> to vector<1x1x33x46xf32>
    tpu.vector_store %arg5[%c3_278, %c2_279, %c0_280, %c46_281], %180 {strides = array<i32>} : memref<4x5x33x92xf32, #tpu.memory_space<vmem>>, vector<1x1x33x46xf32>,
    %c0_282 = arith.constant 0 : index
    %c3_283 = arith.constant 3 : index
    %c0_284 = arith.constant 0 : index
    %c3_285 = arith.constant 3 : index
    %181 = vector.load %arg3[%c0_282, %c3_283, %c0_284, %c3_285] : memref<2x4x33x50xf32, #tpu.memory_space<vmem>>, vector<1x1x33x46xf32>
    %182 = vector.shape_cast %181 : vector<1x1x33x46xf32> to vector<33x46xf32>
    %c3_286 = arith.constant 3 : index
    %c3_287 = arith.constant 3 : index
    %c0_288 = arith.constant 0 : index
    %c0_289 = arith.constant 0 : index
    %183 = vector.load %arg5[%c3_286, %c3_287, %c0_288, %c0_289] : memref<4x5x33x92xf32, #tpu.memory_space<vmem>>, vector<1x1x33x46xf32>
    %184 = vector.shape_cast %183 : vector<1x1x33x46xf32> to vector<33x46xf32>
    %185 = vector.shape_cast %182 : vector<33x46xf32> to vector<1x1x33x46xf32>
    tpu.vector_store %arg5[%c3_286, %c3_287, %c0_288, %c0_289], %185 {strides = array<i32>} : memref<4x5x33x92xf32, #tpu.memory_space<vmem>>, vector<1x1x33x46xf32>,
    %c1_290 = arith.constant 1 : index
    %c3_291 = arith.constant 3 : index
    %c0_292 = arith.constant 0 : index
    %c3_293 = arith.constant 3 : index
    %186 = vector.load %arg3[%c1_290, %c3_291, %c0_292, %c3_293] : memref<2x4x33x50xf32, #tpu.memory_space<vmem>>, vector<1x1x33x46xf32>
    %187 = vector.shape_cast %186 : vector<1x1x33x46xf32> to vector<33x46xf32>
    %c3_294 = arith.constant 3 : index
    %c3_295 = arith.constant 3 : index
    %c0_296 = arith.constant 0 : index
    %c46_297 = arith.constant 46 : index
    %188 = vector.load %arg5[%c3_294, %c3_295, %c0_296, %c46_297] : memref<4x5x33x92xf32, #tpu.memory_space<vmem>>, vector<1x1x33x46xf32>
    %189 = vector.shape_cast %188 : vector<1x1x33x46xf32> to vector<33x46xf32>
    %190 = vector.shape_cast %187 : vector<33x46xf32> to vector<1x1x33x46xf32>
    tpu.vector_store %arg5[%c3_294, %c3_295, %c0_296, %c46_297], %190 {strides = array<i32>} : memref<4x5x33x92xf32, #tpu.memory_space<vmem>>, vector<1x1x33x46xf32>,
    %c0_298 = arith.constant 0 : index
    %c3_299 = arith.constant 3 : index
    %c0_300 = arith.constant 0 : index
    %c4_301 = arith.constant 4 : index
    %191 = vector.load %arg3[%c0_298, %c3_299, %c0_300, %c4_301] : memref<2x4x33x50xf32, #tpu.memory_space<vmem>>, vector<1x1x33x46xf32>
    %192 = vector.shape_cast %191 : vector<1x1x33x46xf32> to vector<33x46xf32>
    %c3_302 = arith.constant 3 : index
    %c4_303 = arith.constant 4 : index
    %c0_304 = arith.constant 0 : index
    %c0_305 = arith.constant 0 : index
    %193 = vector.load %arg5[%c3_302, %c4_303, %c0_304, %c0_305] : memref<4x5x33x92xf32, #tpu.memory_space<vmem>>, vector<1x1x33x46xf32>
    %194 = vector.shape_cast %193 : vector<1x1x33x46xf32> to vector<33x46xf32>
    %195 = vector.shape_cast %192 : vector<33x46xf32> to vector<1x1x33x46xf32>
    tpu.vector_store %arg5[%c3_302, %c4_303, %c0_304, %c0_305], %195 {strides = array<i32>} : memref<4x5x33x92xf32, #tpu.memory_space<vmem>>, vector<1x1x33x46xf32>,
    %c1_306 = arith.constant 1 : index
    %c3_307 = arith.constant 3 : index
    %c0_308 = arith.constant 0 : index
    %c4_309 = arith.constant 4 : index
    %196 = vector.load %arg3[%c1_306, %c3_307, %c0_308, %c4_309] : memref<2x4x33x50xf32, #tpu.memory_space<vmem>>, vector<1x1x33x46xf32>
    %197 = vector.shape_cast %196 : vector<1x1x33x46xf32> to vector<33x46xf32>
    %c3_310 = arith.constant 3 : index
    %c4_311 = arith.constant 4 : index
    %c0_312 = arith.constant 0 : index
    %c46_313 = arith.constant 46 : index
    %198 = vector.load %arg5[%c3_310, %c4_311, %c0_312, %c46_313] : memref<4x5x33x92xf32, #tpu.memory_space<vmem>>, vector<1x1x33x46xf32>
    %199 = vector.shape_cast %198 : vector<1x1x33x46xf32> to vector<33x46xf32>
    %200 = vector.shape_cast %197 : vector<33x46xf32> to vector<1x1x33x46xf32>
    tpu.vector_store %arg5[%c3_310, %c4_311, %c0_312, %c46_313], %200 {strides = array<i32>} : memref<4x5x33x92xf32, #tpu.memory_space<vmem>>, vector<1x1x33x46xf32>,
    %cst = arith.constant 0.000000e+00 : f32
    %201 = vector.broadcast %cst : f32 to vector<31x92xf32>
    %cst_314 = arith.constant 0.000000e+00 : f32
    %202 = vector.broadcast %cst_314 : f32 to vector<31x92xf32>
    %cst_315 = arith.constant 0.000000e+00 : f32
    %203 = vector.broadcast %cst_315 : f32 to vector<31x92xf32>
    %cst_316 = arith.constant 0.000000e+00 : f32
    %204 = vector.broadcast %cst_316 : f32 to vector<31x92xf32>
    %c0_317 = arith.constant 0 : index
    %c0_318 = arith.constant 0 : index
    %c0_319 = arith.constant 0 : index
    %c0_320 = arith.constant 0 : index
    %205 = vector.load %arg5[%c0_317, %c0_318, %c0_319, %c0_320] : memref<4x5x33x92xf32, #tpu.memory_space<vmem>>, vector<1x1x31x92xf32>
    %206 = vector.shape_cast %205 : vector<1x1x31x92xf32> to vector<31x92xf32>
    %c0_i32 = arith.constant 0 : i32
    %207 = arith.addi %c0_i32, %0 : i32
    %c0_i32_321 = arith.constant 0 : i32
    %208 = arith.addi %207, %c0_i32_321 : i32
    %209 = arith.index_cast %208 : i32 to index
    %210 = memref.load %arg2[%209] : memref<480xf32, #tpu.memory_space<smem>>
    %211 = vector.broadcast %210 : f32 to vector<31x92xf32>
    %212 = arith.mulf %211, %206 : vector<31x92xf32>
    %213 = arith.addf %201, %212 : vector<31x92xf32>
    %c1_i32 = arith.constant 1 : i32
    %214 = arith.addi %207, %c1_i32 : i32
    %215 = arith.index_cast %214 : i32 to index
    %216 = memref.load %arg2[%215] : memref<480xf32, #tpu.memory_space<smem>>
    %217 = vector.broadcast %216 : f32 to vector<31x92xf32>
    %218 = arith.mulf %217, %206 : vector<31x92xf32>
    %219 = arith.addf %202, %218 : vector<31x92xf32>
    %c2_i32 = arith.constant 2 : i32
    %220 = arith.addi %207, %c2_i32 : i32
    %221 = arith.index_cast %220 : i32 to index
    %222 = memref.load %arg2[%221] : memref<480xf32, #tpu.memory_space<smem>>
    %223 = vector.broadcast %222 : f32 to vector<31x92xf32>
    %224 = arith.mulf %223, %206 : vector<31x92xf32>
    %225 = arith.addf %203, %224 : vector<31x92xf32>
    %c3_i32 = arith.constant 3 : i32
    %226 = arith.addi %207, %c3_i32 : i32
    %227 = arith.index_cast %226 : i32 to index
    %228 = memref.load %arg2[%227] : memref<480xf32, #tpu.memory_space<smem>>
    %229 = vector.broadcast %228 : f32 to vector<31x92xf32>
    %230 = arith.mulf %229, %206 : vector<31x92xf32>
    %231 = arith.addf %204, %230 : vector<31x92xf32>
    %c0_322 = arith.constant 0 : index
    %c0_323 = arith.constant 0 : index
    %c1_324 = arith.constant 1 : index
    %c0_325 = arith.constant 0 : index
    %232 = vector.load %arg5[%c0_322, %c0_323, %c1_324, %c0_325] : memref<4x5x33x92xf32, #tpu.memory_space<vmem>>, vector<1x1x31x92xf32>
    %233 = vector.shape_cast %232 : vector<1x1x31x92xf32> to vector<31x92xf32>
    %c160_i32 = arith.constant 160 : i32
    %234 = arith.addi %c160_i32, %0 : i32
    %c0_i32_326 = arith.constant 0 : i32
    %235 = arith.addi %234, %c0_i32_326 : i32
    %236 = arith.index_cast %235 : i32 to index
    %237 = memref.load %arg2[%236] : memref<480xf32, #tpu.memory_space<smem>>
    %238 = vector.broadcast %237 : f32 to vector<31x92xf32>
    %239 = arith.mulf %238, %233 : vector<31x92xf32>
    %240 = arith.addf %213, %239 : vector<31x92xf32>
    %c1_i32_327 = arith.constant 1 : i32
    %241 = arith.addi %234, %c1_i32_327 : i32
    %242 = arith.index_cast %241 : i32 to index
    %243 = memref.load %arg2[%242] : memref<480xf32, #tpu.memory_space<smem>>
    %244 = vector.broadcast %243 : f32 to vector<31x92xf32>
    %245 = arith.mulf %244, %233 : vector<31x92xf32>
    %246 = arith.addf %219, %245 : vector<31x92xf32>
    %c2_i32_328 = arith.constant 2 : i32
    %247 = arith.addi %234, %c2_i32_328 : i32
    %248 = arith.index_cast %247 : i32 to index
    %249 = memref.load %arg2[%248] : memref<480xf32, #tpu.memory_space<smem>>
    %250 = vector.broadcast %249 : f32 to vector<31x92xf32>
    %251 = arith.mulf %250, %233 : vector<31x92xf32>
    %252 = arith.addf %225, %251 : vector<31x92xf32>
    %c3_i32_329 = arith.constant 3 : i32
    %253 = arith.addi %234, %c3_i32_329 : i32
    %254 = arith.index_cast %253 : i32 to index
    %255 = memref.load %arg2[%254] : memref<480xf32, #tpu.memory_space<smem>>
    %256 = vector.broadcast %255 : f32 to vector<31x92xf32>
    %257 = arith.mulf %256, %233 : vector<31x92xf32>
    %258 = arith.addf %231, %257 : vector<31x92xf32>
    %c0_330 = arith.constant 0 : index
    %c0_331 = arith.constant 0 : index
    %c2_332 = arith.constant 2 : index
    %c0_333 = arith.constant 0 : index
    %259 = vector.load %arg5[%c0_330, %c0_331, %c2_332, %c0_333] : memref<4x5x33x92xf32, #tpu.memory_space<vmem>>, vector<1x1x31x92xf32>
    %260 = vector.shape_cast %259 : vector<1x1x31x92xf32> to vector<31x92xf32>
    %c320_i32 = arith.constant 320 : i32
    %261 = arith.addi %c320_i32, %0 : i32
    %c0_i32_334 = arith.constant 0 : i32
    %262 = arith.addi %261, %c0_i32_334 : i32
    %263 = arith.index_cast %262 : i32 to index
    %264 = memref.load %arg2[%263] : memref<480xf32, #tpu.memory_space<smem>>
    %265 = vector.broadcast %264 : f32 to vector<31x92xf32>
    %266 = arith.mulf %265, %260 : vector<31x92xf32>
    %267 = arith.addf %240, %266 : vector<31x92xf32>
    %c1_i32_335 = arith.constant 1 : i32
    %268 = arith.addi %261, %c1_i32_335 : i32
    %269 = arith.index_cast %268 : i32 to index
    %270 = memref.load %arg2[%269] : memref<480xf32, #tpu.memory_space<smem>>
    %271 = vector.broadcast %270 : f32 to vector<31x92xf32>
    %272 = arith.mulf %271, %260 : vector<31x92xf32>
    %273 = arith.addf %246, %272 : vector<31x92xf32>
    %c2_i32_336 = arith.constant 2 : i32
    %274 = arith.addi %261, %c2_i32_336 : i32
    %275 = arith.index_cast %274 : i32 to index
    %276 = memref.load %arg2[%275] : memref<480xf32, #tpu.memory_space<smem>>
    %277 = vector.broadcast %276 : f32 to vector<31x92xf32>
    %278 = arith.mulf %277, %260 : vector<31x92xf32>
    %279 = arith.addf %252, %278 : vector<31x92xf32>
    %c3_i32_337 = arith.constant 3 : i32
    %280 = arith.addi %261, %c3_i32_337 : i32
    %281 = arith.index_cast %280 : i32 to index
    %282 = memref.load %arg2[%281] : memref<480xf32, #tpu.memory_space<smem>>
    %283 = vector.broadcast %282 : f32 to vector<31x92xf32>
    %284 = arith.mulf %283, %260 : vector<31x92xf32>
    %285 = arith.addf %258, %284 : vector<31x92xf32>
    %c0_338 = arith.constant 0 : index
    %c1_339 = arith.constant 1 : index
    %c0_340 = arith.constant 0 : index
    %c0_341 = arith.constant 0 : index
    %286 = vector.load %arg5[%c0_338, %c1_339, %c0_340, %c0_341] : memref<4x5x33x92xf32, #tpu.memory_space<vmem>>, vector<1x1x31x92xf32>
    %287 = vector.shape_cast %286 : vector<1x1x31x92xf32> to vector<31x92xf32>
    %c32_i32 = arith.constant 32 : i32
    %288 = arith.addi %c32_i32, %0 : i32
    %c0_i32_342 = arith.constant 0 : i32
    %289 = arith.addi %288, %c0_i32_342 : i32
    %290 = arith.index_cast %289 : i32 to index
    %291 = memref.load %arg2[%290] : memref<480xf32, #tpu.memory_space<smem>>
    %292 = vector.broadcast %291 : f32 to vector<31x92xf32>
    %293 = arith.mulf %292, %287 : vector<31x92xf32>
    %294 = arith.addf %267, %293 : vector<31x92xf32>
    %c1_i32_343 = arith.constant 1 : i32
    %295 = arith.addi %288, %c1_i32_343 : i32
    %296 = arith.index_cast %295 : i32 to index
    %297 = memref.load %arg2[%296] : memref<480xf32, #tpu.memory_space<smem>>
    %298 = vector.broadcast %297 : f32 to vector<31x92xf32>
    %299 = arith.mulf %298, %287 : vector<31x92xf32>
    %300 = arith.addf %273, %299 : vector<31x92xf32>
    %c2_i32_344 = arith.constant 2 : i32
    %301 = arith.addi %288, %c2_i32_344 : i32
    %302 = arith.index_cast %301 : i32 to index
    %303 = memref.load %arg2[%302] : memref<480xf32, #tpu.memory_space<smem>>
    %304 = vector.broadcast %303 : f32 to vector<31x92xf32>
    %305 = arith.mulf %304, %287 : vector<31x92xf32>
    %306 = arith.addf %279, %305 : vector<31x92xf32>
    %c3_i32_345 = arith.constant 3 : i32
    %307 = arith.addi %288, %c3_i32_345 : i32
    %308 = arith.index_cast %307 : i32 to index
    %309 = memref.load %arg2[%308] : memref<480xf32, #tpu.memory_space<smem>>
    %310 = vector.broadcast %309 : f32 to vector<31x92xf32>
    %311 = arith.mulf %310, %287 : vector<31x92xf32>
    %312 = arith.addf %285, %311 : vector<31x92xf32>
    %c0_346 = arith.constant 0 : index
    %c1_347 = arith.constant 1 : index
    %c1_348 = arith.constant 1 : index
    %c0_349 = arith.constant 0 : index
    %313 = vector.load %arg5[%c0_346, %c1_347, %c1_348, %c0_349] : memref<4x5x33x92xf32, #tpu.memory_space<vmem>>, vector<1x1x31x92xf32>
    %314 = vector.shape_cast %313 : vector<1x1x31x92xf32> to vector<31x92xf32>
    %c192_i32 = arith.constant 192 : i32
    %315 = arith.addi %c192_i32, %0 : i32
    %c0_i32_350 = arith.constant 0 : i32
    %316 = arith.addi %315, %c0_i32_350 : i32
    %317 = arith.index_cast %316 : i32 to index
    %318 = memref.load %arg2[%317] : memref<480xf32, #tpu.memory_space<smem>>
    %319 = vector.broadcast %318 : f32 to vector<31x92xf32>
    %320 = arith.mulf %319, %314 : vector<31x92xf32>
    %321 = arith.addf %294, %320 : vector<31x92xf32>
    %c1_i32_351 = arith.constant 1 : i32
    %322 = arith.addi %315, %c1_i32_351 : i32
    %323 = arith.index_cast %322 : i32 to index
    %324 = memref.load %arg2[%323] : memref<480xf32, #tpu.memory_space<smem>>
    %325 = vector.broadcast %324 : f32 to vector<31x92xf32>
    %326 = arith.mulf %325, %314 : vector<31x92xf32>
    %327 = arith.addf %300, %326 : vector<31x92xf32>
    %c2_i32_352 = arith.constant 2 : i32
    %328 = arith.addi %315, %c2_i32_352 : i32
    %329 = arith.index_cast %328 : i32 to index
    %330 = memref.load %arg2[%329] : memref<480xf32, #tpu.memory_space<smem>>
    %331 = vector.broadcast %330 : f32 to vector<31x92xf32>
    %332 = arith.mulf %331, %314 : vector<31x92xf32>
    %333 = arith.addf %306, %332 : vector<31x92xf32>
    %c3_i32_353 = arith.constant 3 : i32
    %334 = arith.addi %315, %c3_i32_353 : i32
    %335 = arith.index_cast %334 : i32 to index
    %336 = memref.load %arg2[%335] : memref<480xf32, #tpu.memory_space<smem>>
    %337 = vector.broadcast %336 : f32 to vector<31x92xf32>
    %338 = arith.mulf %337, %314 : vector<31x92xf32>
    %339 = arith.addf %312, %338 : vector<31x92xf32>
    %c0_354 = arith.constant 0 : index
    %c1_355 = arith.constant 1 : index
    %c2_356 = arith.constant 2 : index
    %c0_357 = arith.constant 0 : index
    %340 = vector.load %arg5[%c0_354, %c1_355, %c2_356, %c0_357] : memref<4x5x33x92xf32, #tpu.memory_space<vmem>>, vector<1x1x31x92xf32>
    %341 = vector.shape_cast %340 : vector<1x1x31x92xf32> to vector<31x92xf32>
    %c352_i32 = arith.constant 352 : i32
    %342 = arith.addi %c352_i32, %0 : i32
    %c0_i32_358 = arith.constant 0 : i32
    %343 = arith.addi %342, %c0_i32_358 : i32
    %344 = arith.index_cast %343 : i32 to index
    %345 = memref.load %arg2[%344] : memref<480xf32, #tpu.memory_space<smem>>
    %346 = vector.broadcast %345 : f32 to vector<31x92xf32>
    %347 = arith.mulf %346, %341 : vector<31x92xf32>
    %348 = arith.addf %321, %347 : vector<31x92xf32>
    %c1_i32_359 = arith.constant 1 : i32
    %349 = arith.addi %342, %c1_i32_359 : i32
    %350 = arith.index_cast %349 : i32 to index
    %351 = memref.load %arg2[%350] : memref<480xf32, #tpu.memory_space<smem>>
    %352 = vector.broadcast %351 : f32 to vector<31x92xf32>
    %353 = arith.mulf %352, %341 : vector<31x92xf32>
    %354 = arith.addf %327, %353 : vector<31x92xf32>
    %c2_i32_360 = arith.constant 2 : i32
    %355 = arith.addi %342, %c2_i32_360 : i32
    %356 = arith.index_cast %355 : i32 to index
    %357 = memref.load %arg2[%356] : memref<480xf32, #tpu.memory_space<smem>>
    %358 = vector.broadcast %357 : f32 to vector<31x92xf32>
    %359 = arith.mulf %358, %341 : vector<31x92xf32>
    %360 = arith.addf %333, %359 : vector<31x92xf32>
    %c3_i32_361 = arith.constant 3 : i32
    %361 = arith.addi %342, %c3_i32_361 : i32
    %362 = arith.index_cast %361 : i32 to index
    %363 = memref.load %arg2[%362] : memref<480xf32, #tpu.memory_space<smem>>
    %364 = vector.broadcast %363 : f32 to vector<31x92xf32>
    %365 = arith.mulf %364, %341 : vector<31x92xf32>
    %366 = arith.addf %339, %365 : vector<31x92xf32>
    %c0_362 = arith.constant 0 : index
    %c2_363 = arith.constant 2 : index
    %c0_364 = arith.constant 0 : index
    %c0_365 = arith.constant 0 : index
    %367 = vector.load %arg5[%c0_362, %c2_363, %c0_364, %c0_365] : memref<4x5x33x92xf32, #tpu.memory_space<vmem>>, vector<1x1x31x92xf32>
    %368 = vector.shape_cast %367 : vector<1x1x31x92xf32> to vector<31x92xf32>
    %c64_i32 = arith.constant 64 : i32
    %369 = arith.addi %c64_i32, %0 : i32
    %c0_i32_366 = arith.constant 0 : i32
    %370 = arith.addi %369, %c0_i32_366 : i32
    %371 = arith.index_cast %370 : i32 to index
    %372 = memref.load %arg2[%371] : memref<480xf32, #tpu.memory_space<smem>>
    %373 = vector.broadcast %372 : f32 to vector<31x92xf32>
    %374 = arith.mulf %373, %368 : vector<31x92xf32>
    %375 = arith.addf %348, %374 : vector<31x92xf32>
    %c1_i32_367 = arith.constant 1 : i32
    %376 = arith.addi %369, %c1_i32_367 : i32
    %377 = arith.index_cast %376 : i32 to index
    %378 = memref.load %arg2[%377] : memref<480xf32, #tpu.memory_space<smem>>
    %379 = vector.broadcast %378 : f32 to vector<31x92xf32>
    %380 = arith.mulf %379, %368 : vector<31x92xf32>
    %381 = arith.addf %354, %380 : vector<31x92xf32>
    %c2_i32_368 = arith.constant 2 : i32
    %382 = arith.addi %369, %c2_i32_368 : i32
    %383 = arith.index_cast %382 : i32 to index
    %384 = memref.load %arg2[%383] : memref<480xf32, #tpu.memory_space<smem>>
    %385 = vector.broadcast %384 : f32 to vector<31x92xf32>
    %386 = arith.mulf %385, %368 : vector<31x92xf32>
    %387 = arith.addf %360, %386 : vector<31x92xf32>
    %c3_i32_369 = arith.constant 3 : i32
    %388 = arith.addi %369, %c3_i32_369 : i32
    %389 = arith.index_cast %388 : i32 to index
    %390 = memref.load %arg2[%389] : memref<480xf32, #tpu.memory_space<smem>>
    %391 = vector.broadcast %390 : f32 to vector<31x92xf32>
    %392 = arith.mulf %391, %368 : vector<31x92xf32>
    %393 = arith.addf %366, %392 : vector<31x92xf32>
    %c0_370 = arith.constant 0 : index
    %c2_371 = arith.constant 2 : index
    %c1_372 = arith.constant 1 : index
    %c0_373 = arith.constant 0 : index
    %394 = vector.load %arg5[%c0_370, %c2_371, %c1_372, %c0_373] : memref<4x5x33x92xf32, #tpu.memory_space<vmem>>, vector<1x1x31x92xf32>
    %395 = vector.shape_cast %394 : vector<1x1x31x92xf32> to vector<31x92xf32>
    %c224_i32 = arith.constant 224 : i32
    %396 = arith.addi %c224_i32, %0 : i32
    %c0_i32_374 = arith.constant 0 : i32
    %397 = arith.addi %396, %c0_i32_374 : i32
    %398 = arith.index_cast %397 : i32 to index
    %399 = memref.load %arg2[%398] : memref<480xf32, #tpu.memory_space<smem>>
    %400 = vector.broadcast %399 : f32 to vector<31x92xf32>
    %401 = arith.mulf %400, %395 : vector<31x92xf32>
    %402 = arith.addf %375, %401 : vector<31x92xf32>
    %c1_i32_375 = arith.constant 1 : i32
    %403 = arith.addi %396, %c1_i32_375 : i32
    %404 = arith.index_cast %403 : i32 to index
    %405 = memref.load %arg2[%404] : memref<480xf32, #tpu.memory_space<smem>>
    %406 = vector.broadcast %405 : f32 to vector<31x92xf32>
    %407 = arith.mulf %406, %395 : vector<31x92xf32>
    %408 = arith.addf %381, %407 : vector<31x92xf32>
    %c2_i32_376 = arith.constant 2 : i32
    %409 = arith.addi %396, %c2_i32_376 : i32
    %410 = arith.index_cast %409 : i32 to index
    %411 = memref.load %arg2[%410] : memref<480xf32, #tpu.memory_space<smem>>
    %412 = vector.broadcast %411 : f32 to vector<31x92xf32>
    %413 = arith.mulf %412, %395 : vector<31x92xf32>
    %414 = arith.addf %387, %413 : vector<31x92xf32>
    %c3_i32_377 = arith.constant 3 : i32
    %415 = arith.addi %396, %c3_i32_377 : i32
    %416 = arith.index_cast %415 : i32 to index
    %417 = memref.load %arg2[%416] : memref<480xf32, #tpu.memory_space<smem>>
    %418 = vector.broadcast %417 : f32 to vector<31x92xf32>
    %419 = arith.mulf %418, %395 : vector<31x92xf32>
    %420 = arith.addf %393, %419 : vector<31x92xf32>
    %c0_378 = arith.constant 0 : index
    %c2_379 = arith.constant 2 : index
    %c2_380 = arith.constant 2 : index
    %c0_381 = arith.constant 0 : index
    %421 = vector.load %arg5[%c0_378, %c2_379, %c2_380, %c0_381] : memref<4x5x33x92xf32, #tpu.memory_space<vmem>>, vector<1x1x31x92xf32>
    %422 = vector.shape_cast %421 : vector<1x1x31x92xf32> to vector<31x92xf32>
    %c384_i32 = arith.constant 384 : i32
    %423 = arith.addi %c384_i32, %0 : i32
    %c0_i32_382 = arith.constant 0 : i32
    %424 = arith.addi %423, %c0_i32_382 : i32
    %425 = arith.index_cast %424 : i32 to index
    %426 = memref.load %arg2[%425] : memref<480xf32, #tpu.memory_space<smem>>
    %427 = vector.broadcast %426 : f32 to vector<31x92xf32>
    %428 = arith.mulf %427, %422 : vector<31x92xf32>
    %429 = arith.addf %402, %428 : vector<31x92xf32>
    %c1_i32_383 = arith.constant 1 : i32
    %430 = arith.addi %423, %c1_i32_383 : i32
    %431 = arith.index_cast %430 : i32 to index
    %432 = memref.load %arg2[%431] : memref<480xf32, #tpu.memory_space<smem>>
    %433 = vector.broadcast %432 : f32 to vector<31x92xf32>
    %434 = arith.mulf %433, %422 : vector<31x92xf32>
    %435 = arith.addf %408, %434 : vector<31x92xf32>
    %c2_i32_384 = arith.constant 2 : i32
    %436 = arith.addi %423, %c2_i32_384 : i32
    %437 = arith.index_cast %436 : i32 to index
    %438 = memref.load %arg2[%437] : memref<480xf32, #tpu.memory_space<smem>>
    %439 = vector.broadcast %438 : f32 to vector<31x92xf32>
    %440 = arith.mulf %439, %422 : vector<31x92xf32>
    %441 = arith.addf %414, %440 : vector<31x92xf32>
    %c3_i32_385 = arith.constant 3 : i32
    %442 = arith.addi %423, %c3_i32_385 : i32
    %443 = arith.index_cast %442 : i32 to index
    %444 = memref.load %arg2[%443] : memref<480xf32, #tpu.memory_space<smem>>
    %445 = vector.broadcast %444 : f32 to vector<31x92xf32>
    %446 = arith.mulf %445, %422 : vector<31x92xf32>
    %447 = arith.addf %420, %446 : vector<31x92xf32>
    %c0_386 = arith.constant 0 : index
    %c3_387 = arith.constant 3 : index
    %c0_388 = arith.constant 0 : index
    %c0_389 = arith.constant 0 : index
    %448 = vector.load %arg5[%c0_386, %c3_387, %c0_388, %c0_389] : memref<4x5x33x92xf32, #tpu.memory_space<vmem>>, vector<1x1x31x92xf32>
    %449 = vector.shape_cast %448 : vector<1x1x31x92xf32> to vector<31x92xf32>
    %c96_i32 = arith.constant 96 : i32
    %450 = arith.addi %c96_i32, %0 : i32
    %c0_i32_390 = arith.constant 0 : i32
    %451 = arith.addi %450, %c0_i32_390 : i32
    %452 = arith.index_cast %451 : i32 to index
    %453 = memref.load %arg2[%452] : memref<480xf32, #tpu.memory_space<smem>>
    %454 = vector.broadcast %453 : f32 to vector<31x92xf32>
    %455 = arith.mulf %454, %449 : vector<31x92xf32>
    %456 = arith.addf %429, %455 : vector<31x92xf32>
    %c1_i32_391 = arith.constant 1 : i32
    %457 = arith.addi %450, %c1_i32_391 : i32
    %458 = arith.index_cast %457 : i32 to index
    %459 = memref.load %arg2[%458] : memref<480xf32, #tpu.memory_space<smem>>
    %460 = vector.broadcast %459 : f32 to vector<31x92xf32>
    %461 = arith.mulf %460, %449 : vector<31x92xf32>
    %462 = arith.addf %435, %461 : vector<31x92xf32>
    %c2_i32_392 = arith.constant 2 : i32
    %463 = arith.addi %450, %c2_i32_392 : i32
    %464 = arith.index_cast %463 : i32 to index
    %465 = memref.load %arg2[%464] : memref<480xf32, #tpu.memory_space<smem>>
    %466 = vector.broadcast %465 : f32 to vector<31x92xf32>
    %467 = arith.mulf %466, %449 : vector<31x92xf32>
    %468 = arith.addf %441, %467 : vector<31x92xf32>
    %c3_i32_393 = arith.constant 3 : i32
    %469 = arith.addi %450, %c3_i32_393 : i32
    %470 = arith.index_cast %469 : i32 to index
    %471 = memref.load %arg2[%470] : memref<480xf32, #tpu.memory_space<smem>>
    %472 = vector.broadcast %471 : f32 to vector<31x92xf32>
    %473 = arith.mulf %472, %449 : vector<31x92xf32>
    %474 = arith.addf %447, %473 : vector<31x92xf32>
    %c0_394 = arith.constant 0 : index
    %c3_395 = arith.constant 3 : index
    %c1_396 = arith.constant 1 : index
    %c0_397 = arith.constant 0 : index
    %475 = vector.load %arg5[%c0_394, %c3_395, %c1_396, %c0_397] : memref<4x5x33x92xf32, #tpu.memory_space<vmem>>, vector<1x1x31x92xf32>
    %476 = vector.shape_cast %475 : vector<1x1x31x92xf32> to vector<31x92xf32>
    %c256_i32 = arith.constant 256 : i32
    %477 = arith.addi %c256_i32, %0 : i32
    %c0_i32_398 = arith.constant 0 : i32
    %478 = arith.addi %477, %c0_i32_398 : i32
    %479 = arith.index_cast %478 : i32 to index
    %480 = memref.load %arg2[%479] : memref<480xf32, #tpu.memory_space<smem>>
    %481 = vector.broadcast %480 : f32 to vector<31x92xf32>
    %482 = arith.mulf %481, %476 : vector<31x92xf32>
    %483 = arith.addf %456, %482 : vector<31x92xf32>
    %c1_i32_399 = arith.constant 1 : i32
    %484 = arith.addi %477, %c1_i32_399 : i32
    %485 = arith.index_cast %484 : i32 to index
    %486 = memref.load %arg2[%485] : memref<480xf32, #tpu.memory_space<smem>>
    %487 = vector.broadcast %486 : f32 to vector<31x92xf32>
    %488 = arith.mulf %487, %476 : vector<31x92xf32>
    %489 = arith.addf %462, %488 : vector<31x92xf32>
    %c2_i32_400 = arith.constant 2 : i32
    %490 = arith.addi %477, %c2_i32_400 : i32
    %491 = arith.index_cast %490 : i32 to index
    %492 = memref.load %arg2[%491] : memref<480xf32, #tpu.memory_space<smem>>
    %493 = vector.broadcast %492 : f32 to vector<31x92xf32>
    %494 = arith.mulf %493, %476 : vector<31x92xf32>
    %495 = arith.addf %468, %494 : vector<31x92xf32>
    %c3_i32_401 = arith.constant 3 : i32
    %496 = arith.addi %477, %c3_i32_401 : i32
    %497 = arith.index_cast %496 : i32 to index
    %498 = memref.load %arg2[%497] : memref<480xf32, #tpu.memory_space<smem>>
    %499 = vector.broadcast %498 : f32 to vector<31x92xf32>
    %500 = arith.mulf %499, %476 : vector<31x92xf32>
    %501 = arith.addf %474, %500 : vector<31x92xf32>
    %c0_402 = arith.constant 0 : index
    %c3_403 = arith.constant 3 : index
    %c2_404 = arith.constant 2 : index
    %c0_405 = arith.constant 0 : index
    %502 = vector.load %arg5[%c0_402, %c3_403, %c2_404, %c0_405] : memref<4x5x33x92xf32, #tpu.memory_space<vmem>>, vector<1x1x31x92xf32>
    %503 = vector.shape_cast %502 : vector<1x1x31x92xf32> to vector<31x92xf32>
    %c416_i32 = arith.constant 416 : i32
    %504 = arith.addi %c416_i32, %0 : i32
    %c0_i32_406 = arith.constant 0 : i32
    %505 = arith.addi %504, %c0_i32_406 : i32
    %506 = arith.index_cast %505 : i32 to index
    %507 = memref.load %arg2[%506] : memref<480xf32, #tpu.memory_space<smem>>
    %508 = vector.broadcast %507 : f32 to vector<31x92xf32>
    %509 = arith.mulf %508, %503 : vector<31x92xf32>
    %510 = arith.addf %483, %509 : vector<31x92xf32>
    %c1_i32_407 = arith.constant 1 : i32
    %511 = arith.addi %504, %c1_i32_407 : i32
    %512 = arith.index_cast %511 : i32 to index
    %513 = memref.load %arg2[%512] : memref<480xf32, #tpu.memory_space<smem>>
    %514 = vector.broadcast %513 : f32 to vector<31x92xf32>
    %515 = arith.mulf %514, %503 : vector<31x92xf32>
    %516 = arith.addf %489, %515 : vector<31x92xf32>
    %c2_i32_408 = arith.constant 2 : i32
    %517 = arith.addi %504, %c2_i32_408 : i32
    %518 = arith.index_cast %517 : i32 to index
    %519 = memref.load %arg2[%518] : memref<480xf32, #tpu.memory_space<smem>>
    %520 = vector.broadcast %519 : f32 to vector<31x92xf32>
    %521 = arith.mulf %520, %503 : vector<31x92xf32>
    %522 = arith.addf %495, %521 : vector<31x92xf32>
    %c3_i32_409 = arith.constant 3 : i32
    %523 = arith.addi %504, %c3_i32_409 : i32
    %524 = arith.index_cast %523 : i32 to index
    %525 = memref.load %arg2[%524] : memref<480xf32, #tpu.memory_space<smem>>
    %526 = vector.broadcast %525 : f32 to vector<31x92xf32>
    %527 = arith.mulf %526, %503 : vector<31x92xf32>
    %528 = arith.addf %501, %527 : vector<31x92xf32>
    %c0_410 = arith.constant 0 : index
    %c4_411 = arith.constant 4 : index
    %c0_412 = arith.constant 0 : index
    %c0_413 = arith.constant 0 : index
    %529 = vector.load %arg5[%c0_410, %c4_411, %c0_412, %c0_413] : memref<4x5x33x92xf32, #tpu.memory_space<vmem>>, vector<1x1x31x92xf32>
    %530 = vector.shape_cast %529 : vector<1x1x31x92xf32> to vector<31x92xf32>
    %c128_i32 = arith.constant 128 : i32
    %531 = arith.addi %c128_i32, %0 : i32
    %c0_i32_414 = arith.constant 0 : i32
    %532 = arith.addi %531, %c0_i32_414 : i32
    %533 = arith.index_cast %532 : i32 to index
    %534 = memref.load %arg2[%533] : memref<480xf32, #tpu.memory_space<smem>>
    %535 = vector.broadcast %534 : f32 to vector<31x92xf32>
    %536 = arith.mulf %535, %530 : vector<31x92xf32>
    %537 = arith.addf %510, %536 : vector<31x92xf32>
    %c1_i32_415 = arith.constant 1 : i32
    %538 = arith.addi %531, %c1_i32_415 : i32
    %539 = arith.index_cast %538 : i32 to index
    %540 = memref.load %arg2[%539] : memref<480xf32, #tpu.memory_space<smem>>
    %541 = vector.broadcast %540 : f32 to vector<31x92xf32>
    %542 = arith.mulf %541, %530 : vector<31x92xf32>
    %543 = arith.addf %516, %542 : vector<31x92xf32>
    %c2_i32_416 = arith.constant 2 : i32
    %544 = arith.addi %531, %c2_i32_416 : i32
    %545 = arith.index_cast %544 : i32 to index
    %546 = memref.load %arg2[%545] : memref<480xf32, #tpu.memory_space<smem>>
    %547 = vector.broadcast %546 : f32 to vector<31x92xf32>
    %548 = arith.mulf %547, %530 : vector<31x92xf32>
    %549 = arith.addf %522, %548 : vector<31x92xf32>
    %c3_i32_417 = arith.constant 3 : i32
    %550 = arith.addi %531, %c3_i32_417 : i32
    %551 = arith.index_cast %550 : i32 to index
    %552 = memref.load %arg2[%551] : memref<480xf32, #tpu.memory_space<smem>>
    %553 = vector.broadcast %552 : f32 to vector<31x92xf32>
    %554 = arith.mulf %553, %530 : vector<31x92xf32>
    %555 = arith.addf %528, %554 : vector<31x92xf32>
    %c0_418 = arith.constant 0 : index
    %c4_419 = arith.constant 4 : index
    %c1_420 = arith.constant 1 : index
    %c0_421 = arith.constant 0 : index
    %556 = vector.load %arg5[%c0_418, %c4_419, %c1_420, %c0_421] : memref<4x5x33x92xf32, #tpu.memory_space<vmem>>, vector<1x1x31x92xf32>
    %557 = vector.shape_cast %556 : vector<1x1x31x92xf32> to vector<31x92xf32>
    %c288_i32 = arith.constant 288 : i32
    %558 = arith.addi %c288_i32, %0 : i32
    %c0_i32_422 = arith.constant 0 : i32
    %559 = arith.addi %558, %c0_i32_422 : i32
    %560 = arith.index_cast %559 : i32 to index
    %561 = memref.load %arg2[%560] : memref<480xf32, #tpu.memory_space<smem>>
    %562 = vector.broadcast %561 : f32 to vector<31x92xf32>
    %563 = arith.mulf %562, %557 : vector<31x92xf32>
    %564 = arith.addf %537, %563 : vector<31x92xf32>
    %c1_i32_423 = arith.constant 1 : i32
    %565 = arith.addi %558, %c1_i32_423 : i32
    %566 = arith.index_cast %565 : i32 to index
    %567 = memref.load %arg2[%566] : memref<480xf32, #tpu.memory_space<smem>>
    %568 = vector.broadcast %567 : f32 to vector<31x92xf32>
    %569 = arith.mulf %568, %557 : vector<31x92xf32>
    %570 = arith.addf %543, %569 : vector<31x92xf32>
    %c2_i32_424 = arith.constant 2 : i32
    %571 = arith.addi %558, %c2_i32_424 : i32
    %572 = arith.index_cast %571 : i32 to index
    %573 = memref.load %arg2[%572] : memref<480xf32, #tpu.memory_space<smem>>
    %574 = vector.broadcast %573 : f32 to vector<31x92xf32>
    %575 = arith.mulf %574, %557 : vector<31x92xf32>
    %576 = arith.addf %549, %575 : vector<31x92xf32>
    %c3_i32_425 = arith.constant 3 : i32
    %577 = arith.addi %558, %c3_i32_425 : i32
    %578 = arith.index_cast %577 : i32 to index
    %579 = memref.load %arg2[%578] : memref<480xf32, #tpu.memory_space<smem>>
    %580 = vector.broadcast %579 : f32 to vector<31x92xf32>
    %581 = arith.mulf %580, %557 : vector<31x92xf32>
    %582 = arith.addf %555, %581 : vector<31x92xf32>
    %c0_426 = arith.constant 0 : index
    %c4_427 = arith.constant 4 : index
    %c2_428 = arith.constant 2 : index
    %c0_429 = arith.constant 0 : index
    %583 = vector.load %arg5[%c0_426, %c4_427, %c2_428, %c0_429] : memref<4x5x33x92xf32, #tpu.memory_space<vmem>>, vector<1x1x31x92xf32>
    %584 = vector.shape_cast %583 : vector<1x1x31x92xf32> to vector<31x92xf32>
    %c448_i32 = arith.constant 448 : i32
    %585 = arith.addi %c448_i32, %0 : i32
    %c0_i32_430 = arith.constant 0 : i32
    %586 = arith.addi %585, %c0_i32_430 : i32
    %587 = arith.index_cast %586 : i32 to index
    %588 = memref.load %arg2[%587] : memref<480xf32, #tpu.memory_space<smem>>
    %589 = vector.broadcast %588 : f32 to vector<31x92xf32>
    %590 = arith.mulf %589, %584 : vector<31x92xf32>
    %591 = arith.addf %564, %590 : vector<31x92xf32>
    %c1_i32_431 = arith.constant 1 : i32
    %592 = arith.addi %585, %c1_i32_431 : i32
    %593 = arith.index_cast %592 : i32 to index
    %594 = memref.load %arg2[%593] : memref<480xf32, #tpu.memory_space<smem>>
    %595 = vector.broadcast %594 : f32 to vector<31x92xf32>
    %596 = arith.mulf %595, %584 : vector<31x92xf32>
    %597 = arith.addf %570, %596 : vector<31x92xf32>
    %c2_i32_432 = arith.constant 2 : i32
    %598 = arith.addi %585, %c2_i32_432 : i32
    %599 = arith.index_cast %598 : i32 to index
    %600 = memref.load %arg2[%599] : memref<480xf32, #tpu.memory_space<smem>>
    %601 = vector.broadcast %600 : f32 to vector<31x92xf32>
    %602 = arith.mulf %601, %584 : vector<31x92xf32>
    %603 = arith.addf %576, %602 : vector<31x92xf32>
    %c3_i32_433 = arith.constant 3 : i32
    %604 = arith.addi %585, %c3_i32_433 : i32
    %605 = arith.index_cast %604 : i32 to index
    %606 = memref.load %arg2[%605] : memref<480xf32, #tpu.memory_space<smem>>
    %607 = vector.broadcast %606 : f32 to vector<31x92xf32>
    %608 = arith.mulf %607, %584 : vector<31x92xf32>
    %609 = arith.addf %582, %608 : vector<31x92xf32>
    %c1_434 = arith.constant 1 : index
    %c0_435 = arith.constant 0 : index
    %c0_436 = arith.constant 0 : index
    %c0_437 = arith.constant 0 : index
    %610 = vector.load %arg5[%c1_434, %c0_435, %c0_436, %c0_437] : memref<4x5x33x92xf32, #tpu.memory_space<vmem>>, vector<1x1x31x92xf32>
    %611 = vector.shape_cast %610 : vector<1x1x31x92xf32> to vector<31x92xf32>
    %c8_i32 = arith.constant 8 : i32
    %612 = arith.addi %c8_i32, %0 : i32
    %c0_i32_438 = arith.constant 0 : i32
    %613 = arith.addi %612, %c0_i32_438 : i32
    %614 = arith.index_cast %613 : i32 to index
    %615 = memref.load %arg2[%614] : memref<480xf32, #tpu.memory_space<smem>>
    %616 = vector.broadcast %615 : f32 to vector<31x92xf32>
    %617 = arith.mulf %616, %611 : vector<31x92xf32>
    %618 = arith.addf %591, %617 : vector<31x92xf32>
    %c1_i32_439 = arith.constant 1 : i32
    %619 = arith.addi %612, %c1_i32_439 : i32
    %620 = arith.index_cast %619 : i32 to index
    %621 = memref.load %arg2[%620] : memref<480xf32, #tpu.memory_space<smem>>
    %622 = vector.broadcast %621 : f32 to vector<31x92xf32>
    %623 = arith.mulf %622, %611 : vector<31x92xf32>
    %624 = arith.addf %597, %623 : vector<31x92xf32>
    %c2_i32_440 = arith.constant 2 : i32
    %625 = arith.addi %612, %c2_i32_440 : i32
    %626 = arith.index_cast %625 : i32 to index
    %627 = memref.load %arg2[%626] : memref<480xf32, #tpu.memory_space<smem>>
    %628 = vector.broadcast %627 : f32 to vector<31x92xf32>
    %629 = arith.mulf %628, %611 : vector<31x92xf32>
    %630 = arith.addf %603, %629 : vector<31x92xf32>
    %c3_i32_441 = arith.constant 3 : i32
    %631 = arith.addi %612, %c3_i32_441 : i32
    %632 = arith.index_cast %631 : i32 to index
    %633 = memref.load %arg2[%632] : memref<480xf32, #tpu.memory_space<smem>>
    %634 = vector.broadcast %633 : f32 to vector<31x92xf32>
    %635 = arith.mulf %634, %611 : vector<31x92xf32>
    %636 = arith.addf %609, %635 : vector<31x92xf32>
    %c1_442 = arith.constant 1 : index
    %c0_443 = arith.constant 0 : index
    %c1_444 = arith.constant 1 : index
    %c0_445 = arith.constant 0 : index
    %637 = vector.load %arg5[%c1_442, %c0_443, %c1_444, %c0_445] : memref<4x5x33x92xf32, #tpu.memory_space<vmem>>, vector<1x1x31x92xf32>
    %638 = vector.shape_cast %637 : vector<1x1x31x92xf32> to vector<31x92xf32>
    %c168_i32 = arith.constant 168 : i32
    %639 = arith.addi %c168_i32, %0 : i32
    %c0_i32_446 = arith.constant 0 : i32
    %640 = arith.addi %639, %c0_i32_446 : i32
    %641 = arith.index_cast %640 : i32 to index
    %642 = memref.load %arg2[%641] : memref<480xf32, #tpu.memory_space<smem>>
    %643 = vector.broadcast %642 : f32 to vector<31x92xf32>
    %644 = arith.mulf %643, %638 : vector<31x92xf32>
    %645 = arith.addf %618, %644 : vector<31x92xf32>
    %c1_i32_447 = arith.constant 1 : i32
    %646 = arith.addi %639, %c1_i32_447 : i32
    %647 = arith.index_cast %646 : i32 to index
    %648 = memref.load %arg2[%647] : memref<480xf32, #tpu.memory_space<smem>>
    %649 = vector.broadcast %648 : f32 to vector<31x92xf32>
    %650 = arith.mulf %649, %638 : vector<31x92xf32>
    %651 = arith.addf %624, %650 : vector<31x92xf32>
    %c2_i32_448 = arith.constant 2 : i32
    %652 = arith.addi %639, %c2_i32_448 : i32
    %653 = arith.index_cast %652 : i32 to index
    %654 = memref.load %arg2[%653] : memref<480xf32, #tpu.memory_space<smem>>
    %655 = vector.broadcast %654 : f32 to vector<31x92xf32>
    %656 = arith.mulf %655, %638 : vector<31x92xf32>
    %657 = arith.addf %630, %656 : vector<31x92xf32>
    %c3_i32_449 = arith.constant 3 : i32
    %658 = arith.addi %639, %c3_i32_449 : i32
    %659 = arith.index_cast %658 : i32 to index
    %660 = memref.load %arg2[%659] : memref<480xf32, #tpu.memory_space<smem>>
    %661 = vector.broadcast %660 : f32 to vector<31x92xf32>
    %662 = arith.mulf %661, %638 : vector<31x92xf32>
    %663 = arith.addf %636, %662 : vector<31x92xf32>
    %c1_450 = arith.constant 1 : index
    %c0_451 = arith.constant 0 : index
    %c2_452 = arith.constant 2 : index
    %c0_453 = arith.constant 0 : index
    %664 = vector.load %arg5[%c1_450, %c0_451, %c2_452, %c0_453] : memref<4x5x33x92xf32, #tpu.memory_space<vmem>>, vector<1x1x31x92xf32>
    %665 = vector.shape_cast %664 : vector<1x1x31x92xf32> to vector<31x92xf32>
    %c328_i32 = arith.constant 328 : i32
    %666 = arith.addi %c328_i32, %0 : i32
    %c0_i32_454 = arith.constant 0 : i32
    %667 = arith.addi %666, %c0_i32_454 : i32
    %668 = arith.index_cast %667 : i32 to index
    %669 = memref.load %arg2[%668] : memref<480xf32, #tpu.memory_space<smem>>
    %670 = vector.broadcast %669 : f32 to vector<31x92xf32>
    %671 = arith.mulf %670, %665 : vector<31x92xf32>
    %672 = arith.addf %645, %671 : vector<31x92xf32>
    %c1_i32_455 = arith.constant 1 : i32
    %673 = arith.addi %666, %c1_i32_455 : i32
    %674 = arith.index_cast %673 : i32 to index
    %675 = memref.load %arg2[%674] : memref<480xf32, #tpu.memory_space<smem>>
    %676 = vector.broadcast %675 : f32 to vector<31x92xf32>
    %677 = arith.mulf %676, %665 : vector<31x92xf32>
    %678 = arith.addf %651, %677 : vector<31x92xf32>
    %c2_i32_456 = arith.constant 2 : i32
    %679 = arith.addi %666, %c2_i32_456 : i32
    %680 = arith.index_cast %679 : i32 to index
    %681 = memref.load %arg2[%680] : memref<480xf32, #tpu.memory_space<smem>>
    %682 = vector.broadcast %681 : f32 to vector<31x92xf32>
    %683 = arith.mulf %682, %665 : vector<31x92xf32>
    %684 = arith.addf %657, %683 : vector<31x92xf32>
    %c3_i32_457 = arith.constant 3 : i32
    %685 = arith.addi %666, %c3_i32_457 : i32
    %686 = arith.index_cast %685 : i32 to index
    %687 = memref.load %arg2[%686] : memref<480xf32, #tpu.memory_space<smem>>
    %688 = vector.broadcast %687 : f32 to vector<31x92xf32>
    %689 = arith.mulf %688, %665 : vector<31x92xf32>
    %690 = arith.addf %663, %689 : vector<31x92xf32>
    %c1_458 = arith.constant 1 : index
    %c1_459 = arith.constant 1 : index
    %c0_460 = arith.constant 0 : index
    %c0_461 = arith.constant 0 : index
    %691 = vector.load %arg5[%c1_458, %c1_459, %c0_460, %c0_461] : memref<4x5x33x92xf32, #tpu.memory_space<vmem>>, vector<1x1x31x92xf32>
    %692 = vector.shape_cast %691 : vector<1x1x31x92xf32> to vector<31x92xf32>
    %c40_i32 = arith.constant 40 : i32
    %693 = arith.addi %c40_i32, %0 : i32
    %c0_i32_462 = arith.constant 0 : i32
    %694 = arith.addi %693, %c0_i32_462 : i32
    %695 = arith.index_cast %694 : i32 to index
    %696 = memref.load %arg2[%695] : memref<480xf32, #tpu.memory_space<smem>>
    %697 = vector.broadcast %696 : f32 to vector<31x92xf32>
    %698 = arith.mulf %697, %692 : vector<31x92xf32>
    %699 = arith.addf %672, %698 : vector<31x92xf32>
    %c1_i32_463 = arith.constant 1 : i32
    %700 = arith.addi %693, %c1_i32_463 : i32
    %701 = arith.index_cast %700 : i32 to index
    %702 = memref.load %arg2[%701] : memref<480xf32, #tpu.memory_space<smem>>
    %703 = vector.broadcast %702 : f32 to vector<31x92xf32>
    %704 = arith.mulf %703, %692 : vector<31x92xf32>
    %705 = arith.addf %678, %704 : vector<31x92xf32>
    %c2_i32_464 = arith.constant 2 : i32
    %706 = arith.addi %693, %c2_i32_464 : i32
    %707 = arith.index_cast %706 : i32 to index
    %708 = memref.load %arg2[%707] : memref<480xf32, #tpu.memory_space<smem>>
    %709 = vector.broadcast %708 : f32 to vector<31x92xf32>
    %710 = arith.mulf %709, %692 : vector<31x92xf32>
    %711 = arith.addf %684, %710 : vector<31x92xf32>
    %c3_i32_465 = arith.constant 3 : i32
    %712 = arith.addi %693, %c3_i32_465 : i32
    %713 = arith.index_cast %712 : i32 to index
    %714 = memref.load %arg2[%713] : memref<480xf32, #tpu.memory_space<smem>>
    %715 = vector.broadcast %714 : f32 to vector<31x92xf32>
    %716 = arith.mulf %715, %692 : vector<31x92xf32>
    %717 = arith.addf %690, %716 : vector<31x92xf32>
    %c1_466 = arith.constant 1 : index
    %c1_467 = arith.constant 1 : index
    %c1_468 = arith.constant 1 : index
    %c0_469 = arith.constant 0 : index
    %718 = vector.load %arg5[%c1_466, %c1_467, %c1_468, %c0_469] : memref<4x5x33x92xf32, #tpu.memory_space<vmem>>, vector<1x1x31x92xf32>
    %719 = vector.shape_cast %718 : vector<1x1x31x92xf32> to vector<31x92xf32>
    %c200_i32 = arith.constant 200 : i32
    %720 = arith.addi %c200_i32, %0 : i32
    %c0_i32_470 = arith.constant 0 : i32
    %721 = arith.addi %720, %c0_i32_470 : i32
    %722 = arith.index_cast %721 : i32 to index
    %723 = memref.load %arg2[%722] : memref<480xf32, #tpu.memory_space<smem>>
    %724 = vector.broadcast %723 : f32 to vector<31x92xf32>
    %725 = arith.mulf %724, %719 : vector<31x92xf32>
    %726 = arith.addf %699, %725 : vector<31x92xf32>
    %c1_i32_471 = arith.constant 1 : i32
    %727 = arith.addi %720, %c1_i32_471 : i32
    %728 = arith.index_cast %727 : i32 to index
    %729 = memref.load %arg2[%728] : memref<480xf32, #tpu.memory_space<smem>>
    %730 = vector.broadcast %729 : f32 to vector<31x92xf32>
    %731 = arith.mulf %730, %719 : vector<31x92xf32>
    %732 = arith.addf %705, %731 : vector<31x92xf32>
    %c2_i32_472 = arith.constant 2 : i32
    %733 = arith.addi %720, %c2_i32_472 : i32
    %734 = arith.index_cast %733 : i32 to index
    %735 = memref.load %arg2[%734] : memref<480xf32, #tpu.memory_space<smem>>
    %736 = vector.broadcast %735 : f32 to vector<31x92xf32>
    %737 = arith.mulf %736, %719 : vector<31x92xf32>
    %738 = arith.addf %711, %737 : vector<31x92xf32>
    %c3_i32_473 = arith.constant 3 : i32
    %739 = arith.addi %720, %c3_i32_473 : i32
    %740 = arith.index_cast %739 : i32 to index
    %741 = memref.load %arg2[%740] : memref<480xf32, #tpu.memory_space<smem>>
    %742 = vector.broadcast %741 : f32 to vector<31x92xf32>
    %743 = arith.mulf %742, %719 : vector<31x92xf32>
    %744 = arith.addf %717, %743 : vector<31x92xf32>
    %c1_474 = arith.constant 1 : index
    %c1_475 = arith.constant 1 : index
    %c2_476 = arith.constant 2 : index
    %c0_477 = arith.constant 0 : index
    %745 = vector.load %arg5[%c1_474, %c1_475, %c2_476, %c0_477] : memref<4x5x33x92xf32, #tpu.memory_space<vmem>>, vector<1x1x31x92xf32>
    %746 = vector.shape_cast %745 : vector<1x1x31x92xf32> to vector<31x92xf32>
    %c360_i32 = arith.constant 360 : i32
    %747 = arith.addi %c360_i32, %0 : i32
    %c0_i32_478 = arith.constant 0 : i32
    %748 = arith.addi %747, %c0_i32_478 : i32
    %749 = arith.index_cast %748 : i32 to index
    %750 = memref.load %arg2[%749] : memref<480xf32, #tpu.memory_space<smem>>
    %751 = vector.broadcast %750 : f32 to vector<31x92xf32>
    %752 = arith.mulf %751, %746 : vector<31x92xf32>
    %753 = arith.addf %726, %752 : vector<31x92xf32>
    %c1_i32_479 = arith.constant 1 : i32
    %754 = arith.addi %747, %c1_i32_479 : i32
    %755 = arith.index_cast %754 : i32 to index
    %756 = memref.load %arg2[%755] : memref<480xf32, #tpu.memory_space<smem>>
    %757 = vector.broadcast %756 : f32 to vector<31x92xf32>
    %758 = arith.mulf %757, %746 : vector<31x92xf32>
    %759 = arith.addf %732, %758 : vector<31x92xf32>
    %c2_i32_480 = arith.constant 2 : i32
    %760 = arith.addi %747, %c2_i32_480 : i32
    %761 = arith.index_cast %760 : i32 to index
    %762 = memref.load %arg2[%761] : memref<480xf32, #tpu.memory_space<smem>>
    %763 = vector.broadcast %762 : f32 to vector<31x92xf32>
    %764 = arith.mulf %763, %746 : vector<31x92xf32>
    %765 = arith.addf %738, %764 : vector<31x92xf32>
    %c3_i32_481 = arith.constant 3 : i32
    %766 = arith.addi %747, %c3_i32_481 : i32
    %767 = arith.index_cast %766 : i32 to index
    %768 = memref.load %arg2[%767] : memref<480xf32, #tpu.memory_space<smem>>
    %769 = vector.broadcast %768 : f32 to vector<31x92xf32>
    %770 = arith.mulf %769, %746 : vector<31x92xf32>
    %771 = arith.addf %744, %770 : vector<31x92xf32>
    %c1_482 = arith.constant 1 : index
    %c2_483 = arith.constant 2 : index
    %c0_484 = arith.constant 0 : index
    %c0_485 = arith.constant 0 : index
    %772 = vector.load %arg5[%c1_482, %c2_483, %c0_484, %c0_485] : memref<4x5x33x92xf32, #tpu.memory_space<vmem>>, vector<1x1x31x92xf32>
    %773 = vector.shape_cast %772 : vector<1x1x31x92xf32> to vector<31x92xf32>
    %c72_i32 = arith.constant 72 : i32
    %774 = arith.addi %c72_i32, %0 : i32
    %c0_i32_486 = arith.constant 0 : i32
    %775 = arith.addi %774, %c0_i32_486 : i32
    %776 = arith.index_cast %775 : i32 to index
    %777 = memref.load %arg2[%776] : memref<480xf32, #tpu.memory_space<smem>>
    %778 = vector.broadcast %777 : f32 to vector<31x92xf32>
    %779 = arith.mulf %778, %773 : vector<31x92xf32>
    %780 = arith.addf %753, %779 : vector<31x92xf32>
    %c1_i32_487 = arith.constant 1 : i32
    %781 = arith.addi %774, %c1_i32_487 : i32
    %782 = arith.index_cast %781 : i32 to index
    %783 = memref.load %arg2[%782] : memref<480xf32, #tpu.memory_space<smem>>
    %784 = vector.broadcast %783 : f32 to vector<31x92xf32>
    %785 = arith.mulf %784, %773 : vector<31x92xf32>
    %786 = arith.addf %759, %785 : vector<31x92xf32>
    %c2_i32_488 = arith.constant 2 : i32
    %787 = arith.addi %774, %c2_i32_488 : i32
    %788 = arith.index_cast %787 : i32 to index
    %789 = memref.load %arg2[%788] : memref<480xf32, #tpu.memory_space<smem>>
    %790 = vector.broadcast %789 : f32 to vector<31x92xf32>
    %791 = arith.mulf %790, %773 : vector<31x92xf32>
    %792 = arith.addf %765, %791 : vector<31x92xf32>
    %c3_i32_489 = arith.constant 3 : i32
    %793 = arith.addi %774, %c3_i32_489 : i32
    %794 = arith.index_cast %793 : i32 to index
    %795 = memref.load %arg2[%794] : memref<480xf32, #tpu.memory_space<smem>>
    %796 = vector.broadcast %795 : f32 to vector<31x92xf32>
    %797 = arith.mulf %796, %773 : vector<31x92xf32>
    %798 = arith.addf %771, %797 : vector<31x92xf32>
    %c1_490 = arith.constant 1 : index
    %c2_491 = arith.constant 2 : index
    %c1_492 = arith.constant 1 : index
    %c0_493 = arith.constant 0 : index
    %799 = vector.load %arg5[%c1_490, %c2_491, %c1_492, %c0_493] : memref<4x5x33x92xf32, #tpu.memory_space<vmem>>, vector<1x1x31x92xf32>
    %800 = vector.shape_cast %799 : vector<1x1x31x92xf32> to vector<31x92xf32>
    %c232_i32 = arith.constant 232 : i32
    %801 = arith.addi %c232_i32, %0 : i32
    %c0_i32_494 = arith.constant 0 : i32
    %802 = arith.addi %801, %c0_i32_494 : i32
    %803 = arith.index_cast %802 : i32 to index
    %804 = memref.load %arg2[%803] : memref<480xf32, #tpu.memory_space<smem>>
    %805 = vector.broadcast %804 : f32 to vector<31x92xf32>
    %806 = arith.mulf %805, %800 : vector<31x92xf32>
    %807 = arith.addf %780, %806 : vector<31x92xf32>
    %c1_i32_495 = arith.constant 1 : i32
    %808 = arith.addi %801, %c1_i32_495 : i32
    %809 = arith.index_cast %808 : i32 to index
    %810 = memref.load %arg2[%809] : memref<480xf32, #tpu.memory_space<smem>>
    %811 = vector.broadcast %810 : f32 to vector<31x92xf32>
    %812 = arith.mulf %811, %800 : vector<31x92xf32>
    %813 = arith.addf %786, %812 : vector<31x92xf32>
    %c2_i32_496 = arith.constant 2 : i32
    %814 = arith.addi %801, %c2_i32_496 : i32
    %815 = arith.index_cast %814 : i32 to index
    %816 = memref.load %arg2[%815] : memref<480xf32, #tpu.memory_space<smem>>
    %817 = vector.broadcast %816 : f32 to vector<31x92xf32>
    %818 = arith.mulf %817, %800 : vector<31x92xf32>
    %819 = arith.addf %792, %818 : vector<31x92xf32>
    %c3_i32_497 = arith.constant 3 : i32
    %820 = arith.addi %801, %c3_i32_497 : i32
    %821 = arith.index_cast %820 : i32 to index
    %822 = memref.load %arg2[%821] : memref<480xf32, #tpu.memory_space<smem>>
    %823 = vector.broadcast %822 : f32 to vector<31x92xf32>
    %824 = arith.mulf %823, %800 : vector<31x92xf32>
    %825 = arith.addf %798, %824 : vector<31x92xf32>
    %c1_498 = arith.constant 1 : index
    %c2_499 = arith.constant 2 : index
    %c2_500 = arith.constant 2 : index
    %c0_501 = arith.constant 0 : index
    %826 = vector.load %arg5[%c1_498, %c2_499, %c2_500, %c0_501] : memref<4x5x33x92xf32, #tpu.memory_space<vmem>>, vector<1x1x31x92xf32>
    %827 = vector.shape_cast %826 : vector<1x1x31x92xf32> to vector<31x92xf32>
    %c392_i32 = arith.constant 392 : i32
    %828 = arith.addi %c392_i32, %0 : i32
    %c0_i32_502 = arith.constant 0 : i32
    %829 = arith.addi %828, %c0_i32_502 : i32
    %830 = arith.index_cast %829 : i32 to index
    %831 = memref.load %arg2[%830] : memref<480xf32, #tpu.memory_space<smem>>
    %832 = vector.broadcast %831 : f32 to vector<31x92xf32>
    %833 = arith.mulf %832, %827 : vector<31x92xf32>
    %834 = arith.addf %807, %833 : vector<31x92xf32>
    %c1_i32_503 = arith.constant 1 : i32
    %835 = arith.addi %828, %c1_i32_503 : i32
    %836 = arith.index_cast %835 : i32 to index
    %837 = memref.load %arg2[%836] : memref<480xf32, #tpu.memory_space<smem>>
    %838 = vector.broadcast %837 : f32 to vector<31x92xf32>
    %839 = arith.mulf %838, %827 : vector<31x92xf32>
    %840 = arith.addf %813, %839 : vector<31x92xf32>
    %c2_i32_504 = arith.constant 2 : i32
    %841 = arith.addi %828, %c2_i32_504 : i32
    %842 = arith.index_cast %841 : i32 to index
    %843 = memref.load %arg2[%842] : memref<480xf32, #tpu.memory_space<smem>>
    %844 = vector.broadcast %843 : f32 to vector<31x92xf32>
    %845 = arith.mulf %844, %827 : vector<31x92xf32>
    %846 = arith.addf %819, %845 : vector<31x92xf32>
    %c3_i32_505 = arith.constant 3 : i32
    %847 = arith.addi %828, %c3_i32_505 : i32
    %848 = arith.index_cast %847 : i32 to index
    %849 = memref.load %arg2[%848] : memref<480xf32, #tpu.memory_space<smem>>
    %850 = vector.broadcast %849 : f32 to vector<31x92xf32>
    %851 = arith.mulf %850, %827 : vector<31x92xf32>
    %852 = arith.addf %825, %851 : vector<31x92xf32>
    %c1_506 = arith.constant 1 : index
    %c3_507 = arith.constant 3 : index
    %c0_508 = arith.constant 0 : index
    %c0_509 = arith.constant 0 : index
    %853 = vector.load %arg5[%c1_506, %c3_507, %c0_508, %c0_509] : memref<4x5x33x92xf32, #tpu.memory_space<vmem>>, vector<1x1x31x92xf32>
    %854 = vector.shape_cast %853 : vector<1x1x31x92xf32> to vector<31x92xf32>
    %c104_i32 = arith.constant 104 : i32
    %855 = arith.addi %c104_i32, %0 : i32
    %c0_i32_510 = arith.constant 0 : i32
    %856 = arith.addi %855, %c0_i32_510 : i32
    %857 = arith.index_cast %856 : i32 to index
    %858 = memref.load %arg2[%857] : memref<480xf32, #tpu.memory_space<smem>>
    %859 = vector.broadcast %858 : f32 to vector<31x92xf32>
    %860 = arith.mulf %859, %854 : vector<31x92xf32>
    %861 = arith.addf %834, %860 : vector<31x92xf32>
    %c1_i32_511 = arith.constant 1 : i32
    %862 = arith.addi %855, %c1_i32_511 : i32
    %863 = arith.index_cast %862 : i32 to index
    %864 = memref.load %arg2[%863] : memref<480xf32, #tpu.memory_space<smem>>
    %865 = vector.broadcast %864 : f32 to vector<31x92xf32>
    %866 = arith.mulf %865, %854 : vector<31x92xf32>
    %867 = arith.addf %840, %866 : vector<31x92xf32>
    %c2_i32_512 = arith.constant 2 : i32
    %868 = arith.addi %855, %c2_i32_512 : i32
    %869 = arith.index_cast %868 : i32 to index
    %870 = memref.load %arg2[%869] : memref<480xf32, #tpu.memory_space<smem>>
    %871 = vector.broadcast %870 : f32 to vector<31x92xf32>
    %872 = arith.mulf %871, %854 : vector<31x92xf32>
    %873 = arith.addf %846, %872 : vector<31x92xf32>
    %c3_i32_513 = arith.constant 3 : i32
    %874 = arith.addi %855, %c3_i32_513 : i32
    %875 = arith.index_cast %874 : i32 to index
    %876 = memref.load %arg2[%875] : memref<480xf32, #tpu.memory_space<smem>>
    %877 = vector.broadcast %876 : f32 to vector<31x92xf32>
    %878 = arith.mulf %877, %854 : vector<31x92xf32>
    %879 = arith.addf %852, %878 : vector<31x92xf32>
    %c1_514 = arith.constant 1 : index
    %c3_515 = arith.constant 3 : index
    %c1_516 = arith.constant 1 : index
    %c0_517 = arith.constant 0 : index
    %880 = vector.load %arg5[%c1_514, %c3_515, %c1_516, %c0_517] : memref<4x5x33x92xf32, #tpu.memory_space<vmem>>, vector<1x1x31x92xf32>
    %881 = vector.shape_cast %880 : vector<1x1x31x92xf32> to vector<31x92xf32>
    %c264_i32 = arith.constant 264 : i32
    %882 = arith.addi %c264_i32, %0 : i32
    %c0_i32_518 = arith.constant 0 : i32
    %883 = arith.addi %882, %c0_i32_518 : i32
    %884 = arith.index_cast %883 : i32 to index
    %885 = memref.load %arg2[%884] : memref<480xf32, #tpu.memory_space<smem>>
    %886 = vector.broadcast %885 : f32 to vector<31x92xf32>
    %887 = arith.mulf %886, %881 : vector<31x92xf32>
    %888 = arith.addf %861, %887 : vector<31x92xf32>
    %c1_i32_519 = arith.constant 1 : i32
    %889 = arith.addi %882, %c1_i32_519 : i32
    %890 = arith.index_cast %889 : i32 to index
    %891 = memref.load %arg2[%890] : memref<480xf32, #tpu.memory_space<smem>>
    %892 = vector.broadcast %891 : f32 to vector<31x92xf32>
    %893 = arith.mulf %892, %881 : vector<31x92xf32>
    %894 = arith.addf %867, %893 : vector<31x92xf32>
    %c2_i32_520 = arith.constant 2 : i32
    %895 = arith.addi %882, %c2_i32_520 : i32
    %896 = arith.index_cast %895 : i32 to index
    %897 = memref.load %arg2[%896] : memref<480xf32, #tpu.memory_space<smem>>
    %898 = vector.broadcast %897 : f32 to vector<31x92xf32>
    %899 = arith.mulf %898, %881 : vector<31x92xf32>
    %900 = arith.addf %873, %899 : vector<31x92xf32>
    %c3_i32_521 = arith.constant 3 : i32
    %901 = arith.addi %882, %c3_i32_521 : i32
    %902 = arith.index_cast %901 : i32 to index
    %903 = memref.load %arg2[%902] : memref<480xf32, #tpu.memory_space<smem>>
    %904 = vector.broadcast %903 : f32 to vector<31x92xf32>
    %905 = arith.mulf %904, %881 : vector<31x92xf32>
    %906 = arith.addf %879, %905 : vector<31x92xf32>
    %c1_522 = arith.constant 1 : index
    %c3_523 = arith.constant 3 : index
    %c2_524 = arith.constant 2 : index
    %c0_525 = arith.constant 0 : index
    %907 = vector.load %arg5[%c1_522, %c3_523, %c2_524, %c0_525] : memref<4x5x33x92xf32, #tpu.memory_space<vmem>>, vector<1x1x31x92xf32>
    %908 = vector.shape_cast %907 : vector<1x1x31x92xf32> to vector<31x92xf32>
    %c424_i32 = arith.constant 424 : i32
    %909 = arith.addi %c424_i32, %0 : i32
    %c0_i32_526 = arith.constant 0 : i32
    %910 = arith.addi %909, %c0_i32_526 : i32
    %911 = arith.index_cast %910 : i32 to index
    %912 = memref.load %arg2[%911] : memref<480xf32, #tpu.memory_space<smem>>
    %913 = vector.broadcast %912 : f32 to vector<31x92xf32>
    %914 = arith.mulf %913, %908 : vector<31x92xf32>
    %915 = arith.addf %888, %914 : vector<31x92xf32>
    %c1_i32_527 = arith.constant 1 : i32
    %916 = arith.addi %909, %c1_i32_527 : i32
    %917 = arith.index_cast %916 : i32 to index
    %918 = memref.load %arg2[%917] : memref<480xf32, #tpu.memory_space<smem>>
    %919 = vector.broadcast %918 : f32 to vector<31x92xf32>
    %920 = arith.mulf %919, %908 : vector<31x92xf32>
    %921 = arith.addf %894, %920 : vector<31x92xf32>
    %c2_i32_528 = arith.constant 2 : i32
    %922 = arith.addi %909, %c2_i32_528 : i32
    %923 = arith.index_cast %922 : i32 to index
    %924 = memref.load %arg2[%923] : memref<480xf32, #tpu.memory_space<smem>>
    %925 = vector.broadcast %924 : f32 to vector<31x92xf32>
    %926 = arith.mulf %925, %908 : vector<31x92xf32>
    %927 = arith.addf %900, %926 : vector<31x92xf32>
    %c3_i32_529 = arith.constant 3 : i32
    %928 = arith.addi %909, %c3_i32_529 : i32
    %929 = arith.index_cast %928 : i32 to index
    %930 = memref.load %arg2[%929] : memref<480xf32, #tpu.memory_space<smem>>
    %931 = vector.broadcast %930 : f32 to vector<31x92xf32>
    %932 = arith.mulf %931, %908 : vector<31x92xf32>
    %933 = arith.addf %906, %932 : vector<31x92xf32>
    %c1_530 = arith.constant 1 : index
    %c4_531 = arith.constant 4 : index
    %c0_532 = arith.constant 0 : index
    %c0_533 = arith.constant 0 : index
    %934 = vector.load %arg5[%c1_530, %c4_531, %c0_532, %c0_533] : memref<4x5x33x92xf32, #tpu.memory_space<vmem>>, vector<1x1x31x92xf32>
    %935 = vector.shape_cast %934 : vector<1x1x31x92xf32> to vector<31x92xf32>
    %c136_i32 = arith.constant 136 : i32
    %936 = arith.addi %c136_i32, %0 : i32
    %c0_i32_534 = arith.constant 0 : i32
    %937 = arith.addi %936, %c0_i32_534 : i32
    %938 = arith.index_cast %937 : i32 to index
    %939 = memref.load %arg2[%938] : memref<480xf32, #tpu.memory_space<smem>>
    %940 = vector.broadcast %939 : f32 to vector<31x92xf32>
    %941 = arith.mulf %940, %935 : vector<31x92xf32>
    %942 = arith.addf %915, %941 : vector<31x92xf32>
    %c1_i32_535 = arith.constant 1 : i32
    %943 = arith.addi %936, %c1_i32_535 : i32
    %944 = arith.index_cast %943 : i32 to index
    %945 = memref.load %arg2[%944] : memref<480xf32, #tpu.memory_space<smem>>
    %946 = vector.broadcast %945 : f32 to vector<31x92xf32>
    %947 = arith.mulf %946, %935 : vector<31x92xf32>
    %948 = arith.addf %921, %947 : vector<31x92xf32>
    %c2_i32_536 = arith.constant 2 : i32
    %949 = arith.addi %936, %c2_i32_536 : i32
    %950 = arith.index_cast %949 : i32 to index
    %951 = memref.load %arg2[%950] : memref<480xf32, #tpu.memory_space<smem>>
    %952 = vector.broadcast %951 : f32 to vector<31x92xf32>
    %953 = arith.mulf %952, %935 : vector<31x92xf32>
    %954 = arith.addf %927, %953 : vector<31x92xf32>
    %c3_i32_537 = arith.constant 3 : i32
    %955 = arith.addi %936, %c3_i32_537 : i32
    %956 = arith.index_cast %955 : i32 to index
    %957 = memref.load %arg2[%956] : memref<480xf32, #tpu.memory_space<smem>>
    %958 = vector.broadcast %957 : f32 to vector<31x92xf32>
    %959 = arith.mulf %958, %935 : vector<31x92xf32>
    %960 = arith.addf %933, %959 : vector<31x92xf32>
    %c1_538 = arith.constant 1 : index
    %c4_539 = arith.constant 4 : index
    %c1_540 = arith.constant 1 : index
    %c0_541 = arith.constant 0 : index
    %961 = vector.load %arg5[%c1_538, %c4_539, %c1_540, %c0_541] : memref<4x5x33x92xf32, #tpu.memory_space<vmem>>, vector<1x1x31x92xf32>
    %962 = vector.shape_cast %961 : vector<1x1x31x92xf32> to vector<31x92xf32>
    %c296_i32 = arith.constant 296 : i32
    %963 = arith.addi %c296_i32, %0 : i32
    %c0_i32_542 = arith.constant 0 : i32
    %964 = arith.addi %963, %c0_i32_542 : i32
    %965 = arith.index_cast %964 : i32 to index
    %966 = memref.load %arg2[%965] : memref<480xf32, #tpu.memory_space<smem>>
    %967 = vector.broadcast %966 : f32 to vector<31x92xf32>
    %968 = arith.mulf %967, %962 : vector<31x92xf32>
    %969 = arith.addf %942, %968 : vector<31x92xf32>
    %c1_i32_543 = arith.constant 1 : i32
    %970 = arith.addi %963, %c1_i32_543 : i32
    %971 = arith.index_cast %970 : i32 to index
    %972 = memref.load %arg2[%971] : memref<480xf32, #tpu.memory_space<smem>>
    %973 = vector.broadcast %972 : f32 to vector<31x92xf32>
    %974 = arith.mulf %973, %962 : vector<31x92xf32>
    %975 = arith.addf %948, %974 : vector<31x92xf32>
    %c2_i32_544 = arith.constant 2 : i32
    %976 = arith.addi %963, %c2_i32_544 : i32
    %977 = arith.index_cast %976 : i32 to index
    %978 = memref.load %arg2[%977] : memref<480xf32, #tpu.memory_space<smem>>
    %979 = vector.broadcast %978 : f32 to vector<31x92xf32>
    %980 = arith.mulf %979, %962 : vector<31x92xf32>
    %981 = arith.addf %954, %980 : vector<31x92xf32>
    %c3_i32_545 = arith.constant 3 : i32
    %982 = arith.addi %963, %c3_i32_545 : i32
    %983 = arith.index_cast %982 : i32 to index
    %984 = memref.load %arg2[%983] : memref<480xf32, #tpu.memory_space<smem>>
    %985 = vector.broadcast %984 : f32 to vector<31x92xf32>
    %986 = arith.mulf %985, %962 : vector<31x92xf32>
    %987 = arith.addf %960, %986 : vector<31x92xf32>
    %c1_546 = arith.constant 1 : index
    %c4_547 = arith.constant 4 : index
    %c2_548 = arith.constant 2 : index
    %c0_549 = arith.constant 0 : index
    %988 = vector.load %arg5[%c1_546, %c4_547, %c2_548, %c0_549] : memref<4x5x33x92xf32, #tpu.memory_space<vmem>>, vector<1x1x31x92xf32>
    %989 = vector.shape_cast %988 : vector<1x1x31x92xf32> to vector<31x92xf32>
    %c456_i32 = arith.constant 456 : i32
    %990 = arith.addi %c456_i32, %0 : i32
    %c0_i32_550 = arith.constant 0 : i32
    %991 = arith.addi %990, %c0_i32_550 : i32
    %992 = arith.index_cast %991 : i32 to index
    %993 = memref.load %arg2[%992] : memref<480xf32, #tpu.memory_space<smem>>
    %994 = vector.broadcast %993 : f32 to vector<31x92xf32>
    %995 = arith.mulf %994, %989 : vector<31x92xf32>
    %996 = arith.addf %969, %995 : vector<31x92xf32>
    %c1_i32_551 = arith.constant 1 : i32
    %997 = arith.addi %990, %c1_i32_551 : i32
    %998 = arith.index_cast %997 : i32 to index
    %999 = memref.load %arg2[%998] : memref<480xf32, #tpu.memory_space<smem>>
    %1000 = vector.broadcast %999 : f32 to vector<31x92xf32>
    %1001 = arith.mulf %1000, %989 : vector<31x92xf32>
    %1002 = arith.addf %975, %1001 : vector<31x92xf32>
    %c2_i32_552 = arith.constant 2 : i32
    %1003 = arith.addi %990, %c2_i32_552 : i32
    %1004 = arith.index_cast %1003 : i32 to index
    %1005 = memref.load %arg2[%1004] : memref<480xf32, #tpu.memory_space<smem>>
    %1006 = vector.broadcast %1005 : f32 to vector<31x92xf32>
    %1007 = arith.mulf %1006, %989 : vector<31x92xf32>
    %1008 = arith.addf %981, %1007 : vector<31x92xf32>
    %c3_i32_553 = arith.constant 3 : i32
    %1009 = arith.addi %990, %c3_i32_553 : i32
    %1010 = arith.index_cast %1009 : i32 to index
    %1011 = memref.load %arg2[%1010] : memref<480xf32, #tpu.memory_space<smem>>
    %1012 = vector.broadcast %1011 : f32 to vector<31x92xf32>
    %1013 = arith.mulf %1012, %989 : vector<31x92xf32>
    %1014 = arith.addf %987, %1013 : vector<31x92xf32>
    %c2_554 = arith.constant 2 : index
    %c0_555 = arith.constant 0 : index
    %c0_556 = arith.constant 0 : index
    %c0_557 = arith.constant 0 : index
    %1015 = vector.load %arg5[%c2_554, %c0_555, %c0_556, %c0_557] : memref<4x5x33x92xf32, #tpu.memory_space<vmem>>, vector<1x1x31x92xf32>
    %1016 = vector.shape_cast %1015 : vector<1x1x31x92xf32> to vector<31x92xf32>
    %c16_i32 = arith.constant 16 : i32
    %1017 = arith.addi %c16_i32, %0 : i32
    %c0_i32_558 = arith.constant 0 : i32
    %1018 = arith.addi %1017, %c0_i32_558 : i32
    %1019 = arith.index_cast %1018 : i32 to index
    %1020 = memref.load %arg2[%1019] : memref<480xf32, #tpu.memory_space<smem>>
    %1021 = vector.broadcast %1020 : f32 to vector<31x92xf32>
    %1022 = arith.mulf %1021, %1016 : vector<31x92xf32>
    %1023 = arith.addf %996, %1022 : vector<31x92xf32>
    %c1_i32_559 = arith.constant 1 : i32
    %1024 = arith.addi %1017, %c1_i32_559 : i32
    %1025 = arith.index_cast %1024 : i32 to index
    %1026 = memref.load %arg2[%1025] : memref<480xf32, #tpu.memory_space<smem>>
    %1027 = vector.broadcast %1026 : f32 to vector<31x92xf32>
    %1028 = arith.mulf %1027, %1016 : vector<31x92xf32>
    %1029 = arith.addf %1002, %1028 : vector<31x92xf32>
    %c2_i32_560 = arith.constant 2 : i32
    %1030 = arith.addi %1017, %c2_i32_560 : i32
    %1031 = arith.index_cast %1030 : i32 to index
    %1032 = memref.load %arg2[%1031] : memref<480xf32, #tpu.memory_space<smem>>
    %1033 = vector.broadcast %1032 : f32 to vector<31x92xf32>
    %1034 = arith.mulf %1033, %1016 : vector<31x92xf32>
    %1035 = arith.addf %1008, %1034 : vector<31x92xf32>
    %c3_i32_561 = arith.constant 3 : i32
    %1036 = arith.addi %1017, %c3_i32_561 : i32
    %1037 = arith.index_cast %1036 : i32 to index
    %1038 = memref.load %arg2[%1037] : memref<480xf32, #tpu.memory_space<smem>>
    %1039 = vector.broadcast %1038 : f32 to vector<31x92xf32>
    %1040 = arith.mulf %1039, %1016 : vector<31x92xf32>
    %1041 = arith.addf %1014, %1040 : vector<31x92xf32>
    %c2_562 = arith.constant 2 : index
    %c0_563 = arith.constant 0 : index
    %c1_564 = arith.constant 1 : index
    %c0_565 = arith.constant 0 : index
    %1042 = vector.load %arg5[%c2_562, %c0_563, %c1_564, %c0_565] : memref<4x5x33x92xf32, #tpu.memory_space<vmem>>, vector<1x1x31x92xf32>
    %1043 = vector.shape_cast %1042 : vector<1x1x31x92xf32> to vector<31x92xf32>
    %c176_i32 = arith.constant 176 : i32
    %1044 = arith.addi %c176_i32, %0 : i32
    %c0_i32_566 = arith.constant 0 : i32
    %1045 = arith.addi %1044, %c0_i32_566 : i32
    %1046 = arith.index_cast %1045 : i32 to index
    %1047 = memref.load %arg2[%1046] : memref<480xf32, #tpu.memory_space<smem>>
    %1048 = vector.broadcast %1047 : f32 to vector<31x92xf32>
    %1049 = arith.mulf %1048, %1043 : vector<31x92xf32>
    %1050 = arith.addf %1023, %1049 : vector<31x92xf32>
    %c1_i32_567 = arith.constant 1 : i32
    %1051 = arith.addi %1044, %c1_i32_567 : i32
    %1052 = arith.index_cast %1051 : i32 to index
    %1053 = memref.load %arg2[%1052] : memref<480xf32, #tpu.memory_space<smem>>
    %1054 = vector.broadcast %1053 : f32 to vector<31x92xf32>
    %1055 = arith.mulf %1054, %1043 : vector<31x92xf32>
    %1056 = arith.addf %1029, %1055 : vector<31x92xf32>
    %c2_i32_568 = arith.constant 2 : i32
    %1057 = arith.addi %1044, %c2_i32_568 : i32
    %1058 = arith.index_cast %1057 : i32 to index
    %1059 = memref.load %arg2[%1058] : memref<480xf32, #tpu.memory_space<smem>>
    %1060 = vector.broadcast %1059 : f32 to vector<31x92xf32>
    %1061 = arith.mulf %1060, %1043 : vector<31x92xf32>
    %1062 = arith.addf %1035, %1061 : vector<31x92xf32>
    %c3_i32_569 = arith.constant 3 : i32
    %1063 = arith.addi %1044, %c3_i32_569 : i32
    %1064 = arith.index_cast %1063 : i32 to index
    %1065 = memref.load %arg2[%1064] : memref<480xf32, #tpu.memory_space<smem>>
    %1066 = vector.broadcast %1065 : f32 to vector<31x92xf32>
    %1067 = arith.mulf %1066, %1043 : vector<31x92xf32>
    %1068 = arith.addf %1041, %1067 : vector<31x92xf32>
    %c2_570 = arith.constant 2 : index
    %c0_571 = arith.constant 0 : index
    %c2_572 = arith.constant 2 : index
    %c0_573 = arith.constant 0 : index
    %1069 = vector.load %arg5[%c2_570, %c0_571, %c2_572, %c0_573] : memref<4x5x33x92xf32, #tpu.memory_space<vmem>>, vector<1x1x31x92xf32>
    %1070 = vector.shape_cast %1069 : vector<1x1x31x92xf32> to vector<31x92xf32>
    %c336_i32 = arith.constant 336 : i32
    %1071 = arith.addi %c336_i32, %0 : i32
    %c0_i32_574 = arith.constant 0 : i32
    %1072 = arith.addi %1071, %c0_i32_574 : i32
    %1073 = arith.index_cast %1072 : i32 to index
    %1074 = memref.load %arg2[%1073] : memref<480xf32, #tpu.memory_space<smem>>
    %1075 = vector.broadcast %1074 : f32 to vector<31x92xf32>
    %1076 = arith.mulf %1075, %1070 : vector<31x92xf32>
    %1077 = arith.addf %1050, %1076 : vector<31x92xf32>
    %c1_i32_575 = arith.constant 1 : i32
    %1078 = arith.addi %1071, %c1_i32_575 : i32
    %1079 = arith.index_cast %1078 : i32 to index
    %1080 = memref.load %arg2[%1079] : memref<480xf32, #tpu.memory_space<smem>>
    %1081 = vector.broadcast %1080 : f32 to vector<31x92xf32>
    %1082 = arith.mulf %1081, %1070 : vector<31x92xf32>
    %1083 = arith.addf %1056, %1082 : vector<31x92xf32>
    %c2_i32_576 = arith.constant 2 : i32
    %1084 = arith.addi %1071, %c2_i32_576 : i32
    %1085 = arith.index_cast %1084 : i32 to index
    %1086 = memref.load %arg2[%1085] : memref<480xf32, #tpu.memory_space<smem>>
    %1087 = vector.broadcast %1086 : f32 to vector<31x92xf32>
    %1088 = arith.mulf %1087, %1070 : vector<31x92xf32>
    %1089 = arith.addf %1062, %1088 : vector<31x92xf32>
    %c3_i32_577 = arith.constant 3 : i32
    %1090 = arith.addi %1071, %c3_i32_577 : i32
    %1091 = arith.index_cast %1090 : i32 to index
    %1092 = memref.load %arg2[%1091] : memref<480xf32, #tpu.memory_space<smem>>
    %1093 = vector.broadcast %1092 : f32 to vector<31x92xf32>
    %1094 = arith.mulf %1093, %1070 : vector<31x92xf32>
    %1095 = arith.addf %1068, %1094 : vector<31x92xf32>
    %c2_578 = arith.constant 2 : index
    %c1_579 = arith.constant 1 : index
    %c0_580 = arith.constant 0 : index
    %c0_581 = arith.constant 0 : index
    %1096 = vector.load %arg5[%c2_578, %c1_579, %c0_580, %c0_581] : memref<4x5x33x92xf32, #tpu.memory_space<vmem>>, vector<1x1x31x92xf32>
    %1097 = vector.shape_cast %1096 : vector<1x1x31x92xf32> to vector<31x92xf32>
    %c48_i32 = arith.constant 48 : i32
    %1098 = arith.addi %c48_i32, %0 : i32
    %c0_i32_582 = arith.constant 0 : i32
    %1099 = arith.addi %1098, %c0_i32_582 : i32
    %1100 = arith.index_cast %1099 : i32 to index
    %1101 = memref.load %arg2[%1100] : memref<480xf32, #tpu.memory_space<smem>>
    %1102 = vector.broadcast %1101 : f32 to vector<31x92xf32>
    %1103 = arith.mulf %1102, %1097 : vector<31x92xf32>
    %1104 = arith.addf %1077, %1103 : vector<31x92xf32>
    %c1_i32_583 = arith.constant 1 : i32
    %1105 = arith.addi %1098, %c1_i32_583 : i32
    %1106 = arith.index_cast %1105 : i32 to index
    %1107 = memref.load %arg2[%1106] : memref<480xf32, #tpu.memory_space<smem>>
    %1108 = vector.broadcast %1107 : f32 to vector<31x92xf32>
    %1109 = arith.mulf %1108, %1097 : vector<31x92xf32>
    %1110 = arith.addf %1083, %1109 : vector<31x92xf32>
    %c2_i32_584 = arith.constant 2 : i32
    %1111 = arith.addi %1098, %c2_i32_584 : i32
    %1112 = arith.index_cast %1111 : i32 to index
    %1113 = memref.load %arg2[%1112] : memref<480xf32, #tpu.memory_space<smem>>
    %1114 = vector.broadcast %1113 : f32 to vector<31x92xf32>
    %1115 = arith.mulf %1114, %1097 : vector<31x92xf32>
    %1116 = arith.addf %1089, %1115 : vector<31x92xf32>
    %c3_i32_585 = arith.constant 3 : i32
    %1117 = arith.addi %1098, %c3_i32_585 : i32
    %1118 = arith.index_cast %1117 : i32 to index
    %1119 = memref.load %arg2[%1118] : memref<480xf32, #tpu.memory_space<smem>>
    %1120 = vector.broadcast %1119 : f32 to vector<31x92xf32>
    %1121 = arith.mulf %1120, %1097 : vector<31x92xf32>
    %1122 = arith.addf %1095, %1121 : vector<31x92xf32>
    %c2_586 = arith.constant 2 : index
    %c1_587 = arith.constant 1 : index
    %c1_588 = arith.constant 1 : index
    %c0_589 = arith.constant 0 : index
    %1123 = vector.load %arg5[%c2_586, %c1_587, %c1_588, %c0_589] : memref<4x5x33x92xf32, #tpu.memory_space<vmem>>, vector<1x1x31x92xf32>
    %1124 = vector.shape_cast %1123 : vector<1x1x31x92xf32> to vector<31x92xf32>
    %c208_i32 = arith.constant 208 : i32
    %1125 = arith.addi %c208_i32, %0 : i32
    %c0_i32_590 = arith.constant 0 : i32
    %1126 = arith.addi %1125, %c0_i32_590 : i32
    %1127 = arith.index_cast %1126 : i32 to index
    %1128 = memref.load %arg2[%1127] : memref<480xf32, #tpu.memory_space<smem>>
    %1129 = vector.broadcast %1128 : f32 to vector<31x92xf32>
    %1130 = arith.mulf %1129, %1124 : vector<31x92xf32>
    %1131 = arith.addf %1104, %1130 : vector<31x92xf32>
    %c1_i32_591 = arith.constant 1 : i32
    %1132 = arith.addi %1125, %c1_i32_591 : i32
    %1133 = arith.index_cast %1132 : i32 to index
    %1134 = memref.load %arg2[%1133] : memref<480xf32, #tpu.memory_space<smem>>
    %1135 = vector.broadcast %1134 : f32 to vector<31x92xf32>
    %1136 = arith.mulf %1135, %1124 : vector<31x92xf32>
    %1137 = arith.addf %1110, %1136 : vector<31x92xf32>
    %c2_i32_592 = arith.constant 2 : i32
    %1138 = arith.addi %1125, %c2_i32_592 : i32
    %1139 = arith.index_cast %1138 : i32 to index
    %1140 = memref.load %arg2[%1139] : memref<480xf32, #tpu.memory_space<smem>>
    %1141 = vector.broadcast %1140 : f32 to vector<31x92xf32>
    %1142 = arith.mulf %1141, %1124 : vector<31x92xf32>
    %1143 = arith.addf %1116, %1142 : vector<31x92xf32>
    %c3_i32_593 = arith.constant 3 : i32
    %1144 = arith.addi %1125, %c3_i32_593 : i32
    %1145 = arith.index_cast %1144 : i32 to index
    %1146 = memref.load %arg2[%1145] : memref<480xf32, #tpu.memory_space<smem>>
    %1147 = vector.broadcast %1146 : f32 to vector<31x92xf32>
    %1148 = arith.mulf %1147, %1124 : vector<31x92xf32>
    %1149 = arith.addf %1122, %1148 : vector<31x92xf32>
    %c2_594 = arith.constant 2 : index
    %c1_595 = arith.constant 1 : index
    %c2_596 = arith.constant 2 : index
    %c0_597 = arith.constant 0 : index
    %1150 = vector.load %arg5[%c2_594, %c1_595, %c2_596, %c0_597] : memref<4x5x33x92xf32, #tpu.memory_space<vmem>>, vector<1x1x31x92xf32>
    %1151 = vector.shape_cast %1150 : vector<1x1x31x92xf32> to vector<31x92xf32>
    %c368_i32 = arith.constant 368 : i32
    %1152 = arith.addi %c368_i32, %0 : i32
    %c0_i32_598 = arith.constant 0 : i32
    %1153 = arith.addi %1152, %c0_i32_598 : i32
    %1154 = arith.index_cast %1153 : i32 to index
    %1155 = memref.load %arg2[%1154] : memref<480xf32, #tpu.memory_space<smem>>
    %1156 = vector.broadcast %1155 : f32 to vector<31x92xf32>
    %1157 = arith.mulf %1156, %1151 : vector<31x92xf32>
    %1158 = arith.addf %1131, %1157 : vector<31x92xf32>
    %c1_i32_599 = arith.constant 1 : i32
    %1159 = arith.addi %1152, %c1_i32_599 : i32
    %1160 = arith.index_cast %1159 : i32 to index
    %1161 = memref.load %arg2[%1160] : memref<480xf32, #tpu.memory_space<smem>>
    %1162 = vector.broadcast %1161 : f32 to vector<31x92xf32>
    %1163 = arith.mulf %1162, %1151 : vector<31x92xf32>
    %1164 = arith.addf %1137, %1163 : vector<31x92xf32>
    %c2_i32_600 = arith.constant 2 : i32
    %1165 = arith.addi %1152, %c2_i32_600 : i32
    %1166 = arith.index_cast %1165 : i32 to index
    %1167 = memref.load %arg2[%1166] : memref<480xf32, #tpu.memory_space<smem>>
    %1168 = vector.broadcast %1167 : f32 to vector<31x92xf32>
    %1169 = arith.mulf %1168, %1151 : vector<31x92xf32>
    %1170 = arith.addf %1143, %1169 : vector<31x92xf32>
    %c3_i32_601 = arith.constant 3 : i32
    %1171 = arith.addi %1152, %c3_i32_601 : i32
    %1172 = arith.index_cast %1171 : i32 to index
    %1173 = memref.load %arg2[%1172] : memref<480xf32, #tpu.memory_space<smem>>
    %1174 = vector.broadcast %1173 : f32 to vector<31x92xf32>
    %1175 = arith.mulf %1174, %1151 : vector<31x92xf32>
    %1176 = arith.addf %1149, %1175 : vector<31x92xf32>
    %c2_602 = arith.constant 2 : index
    %c2_603 = arith.constant 2 : index
    %c0_604 = arith.constant 0 : index
    %c0_605 = arith.constant 0 : index
    %1177 = vector.load %arg5[%c2_602, %c2_603, %c0_604, %c0_605] : memref<4x5x33x92xf32, #tpu.memory_space<vmem>>, vector<1x1x31x92xf32>
    %1178 = vector.shape_cast %1177 : vector<1x1x31x92xf32> to vector<31x92xf32>
    %c80_i32 = arith.constant 80 : i32
    %1179 = arith.addi %c80_i32, %0 : i32
    %c0_i32_606 = arith.constant 0 : i32
    %1180 = arith.addi %1179, %c0_i32_606 : i32
    %1181 = arith.index_cast %1180 : i32 to index
    %1182 = memref.load %arg2[%1181] : memref<480xf32, #tpu.memory_space<smem>>
    %1183 = vector.broadcast %1182 : f32 to vector<31x92xf32>
    %1184 = arith.mulf %1183, %1178 : vector<31x92xf32>
    %1185 = arith.addf %1158, %1184 : vector<31x92xf32>
    %c1_i32_607 = arith.constant 1 : i32
    %1186 = arith.addi %1179, %c1_i32_607 : i32
    %1187 = arith.index_cast %1186 : i32 to index
    %1188 = memref.load %arg2[%1187] : memref<480xf32, #tpu.memory_space<smem>>
    %1189 = vector.broadcast %1188 : f32 to vector<31x92xf32>
    %1190 = arith.mulf %1189, %1178 : vector<31x92xf32>
    %1191 = arith.addf %1164, %1190 : vector<31x92xf32>
    %c2_i32_608 = arith.constant 2 : i32
    %1192 = arith.addi %1179, %c2_i32_608 : i32
    %1193 = arith.index_cast %1192 : i32 to index
    %1194 = memref.load %arg2[%1193] : memref<480xf32, #tpu.memory_space<smem>>
    %1195 = vector.broadcast %1194 : f32 to vector<31x92xf32>
    %1196 = arith.mulf %1195, %1178 : vector<31x92xf32>
    %1197 = arith.addf %1170, %1196 : vector<31x92xf32>
    %c3_i32_609 = arith.constant 3 : i32
    %1198 = arith.addi %1179, %c3_i32_609 : i32
    %1199 = arith.index_cast %1198 : i32 to index
    %1200 = memref.load %arg2[%1199] : memref<480xf32, #tpu.memory_space<smem>>
    %1201 = vector.broadcast %1200 : f32 to vector<31x92xf32>
    %1202 = arith.mulf %1201, %1178 : vector<31x92xf32>
    %1203 = arith.addf %1176, %1202 : vector<31x92xf32>
    %c2_610 = arith.constant 2 : index
    %c2_611 = arith.constant 2 : index
    %c1_612 = arith.constant 1 : index
    %c0_613 = arith.constant 0 : index
    %1204 = vector.load %arg5[%c2_610, %c2_611, %c1_612, %c0_613] : memref<4x5x33x92xf32, #tpu.memory_space<vmem>>, vector<1x1x31x92xf32>
    %1205 = vector.shape_cast %1204 : vector<1x1x31x92xf32> to vector<31x92xf32>
    %c240_i32 = arith.constant 240 : i32
    %1206 = arith.addi %c240_i32, %0 : i32
    %c0_i32_614 = arith.constant 0 : i32
    %1207 = arith.addi %1206, %c0_i32_614 : i32
    %1208 = arith.index_cast %1207 : i32 to index
    %1209 = memref.load %arg2[%1208] : memref<480xf32, #tpu.memory_space<smem>>
    %1210 = vector.broadcast %1209 : f32 to vector<31x92xf32>
    %1211 = arith.mulf %1210, %1205 : vector<31x92xf32>
    %1212 = arith.addf %1185, %1211 : vector<31x92xf32>
    %c1_i32_615 = arith.constant 1 : i32
    %1213 = arith.addi %1206, %c1_i32_615 : i32
    %1214 = arith.index_cast %1213 : i32 to index
    %1215 = memref.load %arg2[%1214] : memref<480xf32, #tpu.memory_space<smem>>
    %1216 = vector.broadcast %1215 : f32 to vector<31x92xf32>
    %1217 = arith.mulf %1216, %1205 : vector<31x92xf32>
    %1218 = arith.addf %1191, %1217 : vector<31x92xf32>
    %c2_i32_616 = arith.constant 2 : i32
    %1219 = arith.addi %1206, %c2_i32_616 : i32
    %1220 = arith.index_cast %1219 : i32 to index
    %1221 = memref.load %arg2[%1220] : memref<480xf32, #tpu.memory_space<smem>>
    %1222 = vector.broadcast %1221 : f32 to vector<31x92xf32>
    %1223 = arith.mulf %1222, %1205 : vector<31x92xf32>
    %1224 = arith.addf %1197, %1223 : vector<31x92xf32>
    %c3_i32_617 = arith.constant 3 : i32
    %1225 = arith.addi %1206, %c3_i32_617 : i32
    %1226 = arith.index_cast %1225 : i32 to index
    %1227 = memref.load %arg2[%1226] : memref<480xf32, #tpu.memory_space<smem>>
    %1228 = vector.broadcast %1227 : f32 to vector<31x92xf32>
    %1229 = arith.mulf %1228, %1205 : vector<31x92xf32>
    %1230 = arith.addf %1203, %1229 : vector<31x92xf32>
    %c2_618 = arith.constant 2 : index
    %c2_619 = arith.constant 2 : index
    %c2_620 = arith.constant 2 : index
    %c0_621 = arith.constant 0 : index
    %1231 = vector.load %arg5[%c2_618, %c2_619, %c2_620, %c0_621] : memref<4x5x33x92xf32, #tpu.memory_space<vmem>>, vector<1x1x31x92xf32>
    %1232 = vector.shape_cast %1231 : vector<1x1x31x92xf32> to vector<31x92xf32>
    %c400_i32 = arith.constant 400 : i32
    %1233 = arith.addi %c400_i32, %0 : i32
    %c0_i32_622 = arith.constant 0 : i32
    %1234 = arith.addi %1233, %c0_i32_622 : i32
    %1235 = arith.index_cast %1234 : i32 to index
    %1236 = memref.load %arg2[%1235] : memref<480xf32, #tpu.memory_space<smem>>
    %1237 = vector.broadcast %1236 : f32 to vector<31x92xf32>
    %1238 = arith.mulf %1237, %1232 : vector<31x92xf32>
    %1239 = arith.addf %1212, %1238 : vector<31x92xf32>
    %c1_i32_623 = arith.constant 1 : i32
    %1240 = arith.addi %1233, %c1_i32_623 : i32
    %1241 = arith.index_cast %1240 : i32 to index
    %1242 = memref.load %arg2[%1241] : memref<480xf32, #tpu.memory_space<smem>>
    %1243 = vector.broadcast %1242 : f32 to vector<31x92xf32>
    %1244 = arith.mulf %1243, %1232 : vector<31x92xf32>
    %1245 = arith.addf %1218, %1244 : vector<31x92xf32>
    %c2_i32_624 = arith.constant 2 : i32
    %1246 = arith.addi %1233, %c2_i32_624 : i32
    %1247 = arith.index_cast %1246 : i32 to index
    %1248 = memref.load %arg2[%1247] : memref<480xf32, #tpu.memory_space<smem>>
    %1249 = vector.broadcast %1248 : f32 to vector<31x92xf32>
    %1250 = arith.mulf %1249, %1232 : vector<31x92xf32>
    %1251 = arith.addf %1224, %1250 : vector<31x92xf32>
    %c3_i32_625 = arith.constant 3 : i32
    %1252 = arith.addi %1233, %c3_i32_625 : i32
    %1253 = arith.index_cast %1252 : i32 to index
    %1254 = memref.load %arg2[%1253] : memref<480xf32, #tpu.memory_space<smem>>
    %1255 = vector.broadcast %1254 : f32 to vector<31x92xf32>
    %1256 = arith.mulf %1255, %1232 : vector<31x92xf32>
    %1257 = arith.addf %1230, %1256 : vector<31x92xf32>
    %c2_626 = arith.constant 2 : index
    %c3_627 = arith.constant 3 : index
    %c0_628 = arith.constant 0 : index
    %c0_629 = arith.constant 0 : index
    %1258 = vector.load %arg5[%c2_626, %c3_627, %c0_628, %c0_629] : memref<4x5x33x92xf32, #tpu.memory_space<vmem>>, vector<1x1x31x92xf32>
    %1259 = vector.shape_cast %1258 : vector<1x1x31x92xf32> to vector<31x92xf32>
    %c112_i32 = arith.constant 112 : i32
    %1260 = arith.addi %c112_i32, %0 : i32
    %c0_i32_630 = arith.constant 0 : i32
    %1261 = arith.addi %1260, %c0_i32_630 : i32
    %1262 = arith.index_cast %1261 : i32 to index
    %1263 = memref.load %arg2[%1262] : memref<480xf32, #tpu.memory_space<smem>>
    %1264 = vector.broadcast %1263 : f32 to vector<31x92xf32>
    %1265 = arith.mulf %1264, %1259 : vector<31x92xf32>
    %1266 = arith.addf %1239, %1265 : vector<31x92xf32>
    %c1_i32_631 = arith.constant 1 : i32
    %1267 = arith.addi %1260, %c1_i32_631 : i32
    %1268 = arith.index_cast %1267 : i32 to index
    %1269 = memref.load %arg2[%1268] : memref<480xf32, #tpu.memory_space<smem>>
    %1270 = vector.broadcast %1269 : f32 to vector<31x92xf32>
    %1271 = arith.mulf %1270, %1259 : vector<31x92xf32>
    %1272 = arith.addf %1245, %1271 : vector<31x92xf32>
    %c2_i32_632 = arith.constant 2 : i32
    %1273 = arith.addi %1260, %c2_i32_632 : i32
    %1274 = arith.index_cast %1273 : i32 to index
    %1275 = memref.load %arg2[%1274] : memref<480xf32, #tpu.memory_space<smem>>
    %1276 = vector.broadcast %1275 : f32 to vector<31x92xf32>
    %1277 = arith.mulf %1276, %1259 : vector<31x92xf32>
    %1278 = arith.addf %1251, %1277 : vector<31x92xf32>
    %c3_i32_633 = arith.constant 3 : i32
    %1279 = arith.addi %1260, %c3_i32_633 : i32
    %1280 = arith.index_cast %1279 : i32 to index
    %1281 = memref.load %arg2[%1280] : memref<480xf32, #tpu.memory_space<smem>>
    %1282 = vector.broadcast %1281 : f32 to vector<31x92xf32>
    %1283 = arith.mulf %1282, %1259 : vector<31x92xf32>
    %1284 = arith.addf %1257, %1283 : vector<31x92xf32>
    %c2_634 = arith.constant 2 : index
    %c3_635 = arith.constant 3 : index
    %c1_636 = arith.constant 1 : index
    %c0_637 = arith.constant 0 : index
    %1285 = vector.load %arg5[%c2_634, %c3_635, %c1_636, %c0_637] : memref<4x5x33x92xf32, #tpu.memory_space<vmem>>, vector<1x1x31x92xf32>
    %1286 = vector.shape_cast %1285 : vector<1x1x31x92xf32> to vector<31x92xf32>
    %c272_i32 = arith.constant 272 : i32
    %1287 = arith.addi %c272_i32, %0 : i32
    %c0_i32_638 = arith.constant 0 : i32
    %1288 = arith.addi %1287, %c0_i32_638 : i32
    %1289 = arith.index_cast %1288 : i32 to index
    %1290 = memref.load %arg2[%1289] : memref<480xf32, #tpu.memory_space<smem>>
    %1291 = vector.broadcast %1290 : f32 to vector<31x92xf32>
    %1292 = arith.mulf %1291, %1286 : vector<31x92xf32>
    %1293 = arith.addf %1266, %1292 : vector<31x92xf32>
    %c1_i32_639 = arith.constant 1 : i32
    %1294 = arith.addi %1287, %c1_i32_639 : i32
    %1295 = arith.index_cast %1294 : i32 to index
    %1296 = memref.load %arg2[%1295] : memref<480xf32, #tpu.memory_space<smem>>
    %1297 = vector.broadcast %1296 : f32 to vector<31x92xf32>
    %1298 = arith.mulf %1297, %1286 : vector<31x92xf32>
    %1299 = arith.addf %1272, %1298 : vector<31x92xf32>
    %c2_i32_640 = arith.constant 2 : i32
    %1300 = arith.addi %1287, %c2_i32_640 : i32
    %1301 = arith.index_cast %1300 : i32 to index
    %1302 = memref.load %arg2[%1301] : memref<480xf32, #tpu.memory_space<smem>>
    %1303 = vector.broadcast %1302 : f32 to vector<31x92xf32>
    %1304 = arith.mulf %1303, %1286 : vector<31x92xf32>
    %1305 = arith.addf %1278, %1304 : vector<31x92xf32>
    %c3_i32_641 = arith.constant 3 : i32
    %1306 = arith.addi %1287, %c3_i32_641 : i32
    %1307 = arith.index_cast %1306 : i32 to index
    %1308 = memref.load %arg2[%1307] : memref<480xf32, #tpu.memory_space<smem>>
    %1309 = vector.broadcast %1308 : f32 to vector<31x92xf32>
    %1310 = arith.mulf %1309, %1286 : vector<31x92xf32>
    %1311 = arith.addf %1284, %1310 : vector<31x92xf32>
    %c2_642 = arith.constant 2 : index
    %c3_643 = arith.constant 3 : index
    %c2_644 = arith.constant 2 : index
    %c0_645 = arith.constant 0 : index
    %1312 = vector.load %arg5[%c2_642, %c3_643, %c2_644, %c0_645] : memref<4x5x33x92xf32, #tpu.memory_space<vmem>>, vector<1x1x31x92xf32>
    %1313 = vector.shape_cast %1312 : vector<1x1x31x92xf32> to vector<31x92xf32>
    %c432_i32 = arith.constant 432 : i32
    %1314 = arith.addi %c432_i32, %0 : i32
    %c0_i32_646 = arith.constant 0 : i32
    %1315 = arith.addi %1314, %c0_i32_646 : i32
    %1316 = arith.index_cast %1315 : i32 to index
    %1317 = memref.load %arg2[%1316] : memref<480xf32, #tpu.memory_space<smem>>
    %1318 = vector.broadcast %1317 : f32 to vector<31x92xf32>
    %1319 = arith.mulf %1318, %1313 : vector<31x92xf32>
    %1320 = arith.addf %1293, %1319 : vector<31x92xf32>
    %c1_i32_647 = arith.constant 1 : i32
    %1321 = arith.addi %1314, %c1_i32_647 : i32
    %1322 = arith.index_cast %1321 : i32 to index
    %1323 = memref.load %arg2[%1322] : memref<480xf32, #tpu.memory_space<smem>>
    %1324 = vector.broadcast %1323 : f32 to vector<31x92xf32>
    %1325 = arith.mulf %1324, %1313 : vector<31x92xf32>
    %1326 = arith.addf %1299, %1325 : vector<31x92xf32>
    %c2_i32_648 = arith.constant 2 : i32
    %1327 = arith.addi %1314, %c2_i32_648 : i32
    %1328 = arith.index_cast %1327 : i32 to index
    %1329 = memref.load %arg2[%1328] : memref<480xf32, #tpu.memory_space<smem>>
    %1330 = vector.broadcast %1329 : f32 to vector<31x92xf32>
    %1331 = arith.mulf %1330, %1313 : vector<31x92xf32>
    %1332 = arith.addf %1305, %1331 : vector<31x92xf32>
    %c3_i32_649 = arith.constant 3 : i32
    %1333 = arith.addi %1314, %c3_i32_649 : i32
    %1334 = arith.index_cast %1333 : i32 to index
    %1335 = memref.load %arg2[%1334] : memref<480xf32, #tpu.memory_space<smem>>
    %1336 = vector.broadcast %1335 : f32 to vector<31x92xf32>
    %1337 = arith.mulf %1336, %1313 : vector<31x92xf32>
    %1338 = arith.addf %1311, %1337 : vector<31x92xf32>
    %c2_650 = arith.constant 2 : index
    %c4_651 = arith.constant 4 : index
    %c0_652 = arith.constant 0 : index
    %c0_653 = arith.constant 0 : index
    %1339 = vector.load %arg5[%c2_650, %c4_651, %c0_652, %c0_653] : memref<4x5x33x92xf32, #tpu.memory_space<vmem>>, vector<1x1x31x92xf32>
    %1340 = vector.shape_cast %1339 : vector<1x1x31x92xf32> to vector<31x92xf32>
    %c144_i32 = arith.constant 144 : i32
    %1341 = arith.addi %c144_i32, %0 : i32
    %c0_i32_654 = arith.constant 0 : i32
    %1342 = arith.addi %1341, %c0_i32_654 : i32
    %1343 = arith.index_cast %1342 : i32 to index
    %1344 = memref.load %arg2[%1343] : memref<480xf32, #tpu.memory_space<smem>>
    %1345 = vector.broadcast %1344 : f32 to vector<31x92xf32>
    %1346 = arith.mulf %1345, %1340 : vector<31x92xf32>
    %1347 = arith.addf %1320, %1346 : vector<31x92xf32>
    %c1_i32_655 = arith.constant 1 : i32
    %1348 = arith.addi %1341, %c1_i32_655 : i32
    %1349 = arith.index_cast %1348 : i32 to index
    %1350 = memref.load %arg2[%1349] : memref<480xf32, #tpu.memory_space<smem>>
    %1351 = vector.broadcast %1350 : f32 to vector<31x92xf32>
    %1352 = arith.mulf %1351, %1340 : vector<31x92xf32>
    %1353 = arith.addf %1326, %1352 : vector<31x92xf32>
    %c2_i32_656 = arith.constant 2 : i32
    %1354 = arith.addi %1341, %c2_i32_656 : i32
    %1355 = arith.index_cast %1354 : i32 to index
    %1356 = memref.load %arg2[%1355] : memref<480xf32, #tpu.memory_space<smem>>
    %1357 = vector.broadcast %1356 : f32 to vector<31x92xf32>
    %1358 = arith.mulf %1357, %1340 : vector<31x92xf32>
    %1359 = arith.addf %1332, %1358 : vector<31x92xf32>
    %c3_i32_657 = arith.constant 3 : i32
    %1360 = arith.addi %1341, %c3_i32_657 : i32
    %1361 = arith.index_cast %1360 : i32 to index
    %1362 = memref.load %arg2[%1361] : memref<480xf32, #tpu.memory_space<smem>>
    %1363 = vector.broadcast %1362 : f32 to vector<31x92xf32>
    %1364 = arith.mulf %1363, %1340 : vector<31x92xf32>
    %1365 = arith.addf %1338, %1364 : vector<31x92xf32>
    %c2_658 = arith.constant 2 : index
    %c4_659 = arith.constant 4 : index
    %c1_660 = arith.constant 1 : index
    %c0_661 = arith.constant 0 : index
    %1366 = vector.load %arg5[%c2_658, %c4_659, %c1_660, %c0_661] : memref<4x5x33x92xf32, #tpu.memory_space<vmem>>, vector<1x1x31x92xf32>
    %1367 = vector.shape_cast %1366 : vector<1x1x31x92xf32> to vector<31x92xf32>
    %c304_i32 = arith.constant 304 : i32
    %1368 = arith.addi %c304_i32, %0 : i32
    %c0_i32_662 = arith.constant 0 : i32
    %1369 = arith.addi %1368, %c0_i32_662 : i32
    %1370 = arith.index_cast %1369 : i32 to index
    %1371 = memref.load %arg2[%1370] : memref<480xf32, #tpu.memory_space<smem>>
    %1372 = vector.broadcast %1371 : f32 to vector<31x92xf32>
    %1373 = arith.mulf %1372, %1367 : vector<31x92xf32>
    %1374 = arith.addf %1347, %1373 : vector<31x92xf32>
    %c1_i32_663 = arith.constant 1 : i32
    %1375 = arith.addi %1368, %c1_i32_663 : i32
    %1376 = arith.index_cast %1375 : i32 to index
    %1377 = memref.load %arg2[%1376] : memref<480xf32, #tpu.memory_space<smem>>
    %1378 = vector.broadcast %1377 : f32 to vector<31x92xf32>
    %1379 = arith.mulf %1378, %1367 : vector<31x92xf32>
    %1380 = arith.addf %1353, %1379 : vector<31x92xf32>
    %c2_i32_664 = arith.constant 2 : i32
    %1381 = arith.addi %1368, %c2_i32_664 : i32
    %1382 = arith.index_cast %1381 : i32 to index
    %1383 = memref.load %arg2[%1382] : memref<480xf32, #tpu.memory_space<smem>>
    %1384 = vector.broadcast %1383 : f32 to vector<31x92xf32>
    %1385 = arith.mulf %1384, %1367 : vector<31x92xf32>
    %1386 = arith.addf %1359, %1385 : vector<31x92xf32>
    %c3_i32_665 = arith.constant 3 : i32
    %1387 = arith.addi %1368, %c3_i32_665 : i32
    %1388 = arith.index_cast %1387 : i32 to index
    %1389 = memref.load %arg2[%1388] : memref<480xf32, #tpu.memory_space<smem>>
    %1390 = vector.broadcast %1389 : f32 to vector<31x92xf32>
    %1391 = arith.mulf %1390, %1367 : vector<31x92xf32>
    %1392 = arith.addf %1365, %1391 : vector<31x92xf32>
    %c2_666 = arith.constant 2 : index
    %c4_667 = arith.constant 4 : index
    %c2_668 = arith.constant 2 : index
    %c0_669 = arith.constant 0 : index
    %1393 = vector.load %arg5[%c2_666, %c4_667, %c2_668, %c0_669] : memref<4x5x33x92xf32, #tpu.memory_space<vmem>>, vector<1x1x31x92xf32>
    %1394 = vector.shape_cast %1393 : vector<1x1x31x92xf32> to vector<31x92xf32>
    %c464_i32 = arith.constant 464 : i32
    %1395 = arith.addi %c464_i32, %0 : i32
    %c0_i32_670 = arith.constant 0 : i32
    %1396 = arith.addi %1395, %c0_i32_670 : i32
    %1397 = arith.index_cast %1396 : i32 to index
    %1398 = memref.load %arg2[%1397] : memref<480xf32, #tpu.memory_space<smem>>
    %1399 = vector.broadcast %1398 : f32 to vector<31x92xf32>
    %1400 = arith.mulf %1399, %1394 : vector<31x92xf32>
    %1401 = arith.addf %1374, %1400 : vector<31x92xf32>
    %c1_i32_671 = arith.constant 1 : i32
    %1402 = arith.addi %1395, %c1_i32_671 : i32
    %1403 = arith.index_cast %1402 : i32 to index
    %1404 = memref.load %arg2[%1403] : memref<480xf32, #tpu.memory_space<smem>>
    %1405 = vector.broadcast %1404 : f32 to vector<31x92xf32>
    %1406 = arith.mulf %1405, %1394 : vector<31x92xf32>
    %1407 = arith.addf %1380, %1406 : vector<31x92xf32>
    %c2_i32_672 = arith.constant 2 : i32
    %1408 = arith.addi %1395, %c2_i32_672 : i32
    %1409 = arith.index_cast %1408 : i32 to index
    %1410 = memref.load %arg2[%1409] : memref<480xf32, #tpu.memory_space<smem>>
    %1411 = vector.broadcast %1410 : f32 to vector<31x92xf32>
    %1412 = arith.mulf %1411, %1394 : vector<31x92xf32>
    %1413 = arith.addf %1386, %1412 : vector<31x92xf32>
    %c3_i32_673 = arith.constant 3 : i32
    %1414 = arith.addi %1395, %c3_i32_673 : i32
    %1415 = arith.index_cast %1414 : i32 to index
    %1416 = memref.load %arg2[%1415] : memref<480xf32, #tpu.memory_space<smem>>
    %1417 = vector.broadcast %1416 : f32 to vector<31x92xf32>
    %1418 = arith.mulf %1417, %1394 : vector<31x92xf32>
    %1419 = arith.addf %1392, %1418 : vector<31x92xf32>
    %c3_674 = arith.constant 3 : index
    %c0_675 = arith.constant 0 : index
    %c0_676 = arith.constant 0 : index
    %c0_677 = arith.constant 0 : index
    %1420 = vector.load %arg5[%c3_674, %c0_675, %c0_676, %c0_677] : memref<4x5x33x92xf32, #tpu.memory_space<vmem>>, vector<1x1x31x92xf32>
    %1421 = vector.shape_cast %1420 : vector<1x1x31x92xf32> to vector<31x92xf32>
    %c24_i32 = arith.constant 24 : i32
    %1422 = arith.addi %c24_i32, %0 : i32
    %c0_i32_678 = arith.constant 0 : i32
    %1423 = arith.addi %1422, %c0_i32_678 : i32
    %1424 = arith.index_cast %1423 : i32 to index
    %1425 = memref.load %arg2[%1424] : memref<480xf32, #tpu.memory_space<smem>>
    %1426 = vector.broadcast %1425 : f32 to vector<31x92xf32>
    %1427 = arith.mulf %1426, %1421 : vector<31x92xf32>
    %1428 = arith.addf %1401, %1427 : vector<31x92xf32>
    %c1_i32_679 = arith.constant 1 : i32
    %1429 = arith.addi %1422, %c1_i32_679 : i32
    %1430 = arith.index_cast %1429 : i32 to index
    %1431 = memref.load %arg2[%1430] : memref<480xf32, #tpu.memory_space<smem>>
    %1432 = vector.broadcast %1431 : f32 to vector<31x92xf32>
    %1433 = arith.mulf %1432, %1421 : vector<31x92xf32>
    %1434 = arith.addf %1407, %1433 : vector<31x92xf32>
    %c2_i32_680 = arith.constant 2 : i32
    %1435 = arith.addi %1422, %c2_i32_680 : i32
    %1436 = arith.index_cast %1435 : i32 to index
    %1437 = memref.load %arg2[%1436] : memref<480xf32, #tpu.memory_space<smem>>
    %1438 = vector.broadcast %1437 : f32 to vector<31x92xf32>
    %1439 = arith.mulf %1438, %1421 : vector<31x92xf32>
    %1440 = arith.addf %1413, %1439 : vector<31x92xf32>
    %c3_i32_681 = arith.constant 3 : i32
    %1441 = arith.addi %1422, %c3_i32_681 : i32
    %1442 = arith.index_cast %1441 : i32 to index
    %1443 = memref.load %arg2[%1442] : memref<480xf32, #tpu.memory_space<smem>>
    %1444 = vector.broadcast %1443 : f32 to vector<31x92xf32>
    %1445 = arith.mulf %1444, %1421 : vector<31x92xf32>
    %1446 = arith.addf %1419, %1445 : vector<31x92xf32>
    %c3_682 = arith.constant 3 : index
    %c0_683 = arith.constant 0 : index
    %c1_684 = arith.constant 1 : index
    %c0_685 = arith.constant 0 : index
    %1447 = vector.load %arg5[%c3_682, %c0_683, %c1_684, %c0_685] : memref<4x5x33x92xf32, #tpu.memory_space<vmem>>, vector<1x1x31x92xf32>
    %1448 = vector.shape_cast %1447 : vector<1x1x31x92xf32> to vector<31x92xf32>
    %c184_i32 = arith.constant 184 : i32
    %1449 = arith.addi %c184_i32, %0 : i32
    %c0_i32_686 = arith.constant 0 : i32
    %1450 = arith.addi %1449, %c0_i32_686 : i32
    %1451 = arith.index_cast %1450 : i32 to index
    %1452 = memref.load %arg2[%1451] : memref<480xf32, #tpu.memory_space<smem>>
    %1453 = vector.broadcast %1452 : f32 to vector<31x92xf32>
    %1454 = arith.mulf %1453, %1448 : vector<31x92xf32>
    %1455 = arith.addf %1428, %1454 : vector<31x92xf32>
    %c1_i32_687 = arith.constant 1 : i32
    %1456 = arith.addi %1449, %c1_i32_687 : i32
    %1457 = arith.index_cast %1456 : i32 to index
    %1458 = memref.load %arg2[%1457] : memref<480xf32, #tpu.memory_space<smem>>
    %1459 = vector.broadcast %1458 : f32 to vector<31x92xf32>
    %1460 = arith.mulf %1459, %1448 : vector<31x92xf32>
    %1461 = arith.addf %1434, %1460 : vector<31x92xf32>
    %c2_i32_688 = arith.constant 2 : i32
    %1462 = arith.addi %1449, %c2_i32_688 : i32
    %1463 = arith.index_cast %1462 : i32 to index
    %1464 = memref.load %arg2[%1463] : memref<480xf32, #tpu.memory_space<smem>>
    %1465 = vector.broadcast %1464 : f32 to vector<31x92xf32>
    %1466 = arith.mulf %1465, %1448 : vector<31x92xf32>
    %1467 = arith.addf %1440, %1466 : vector<31x92xf32>
    %c3_i32_689 = arith.constant 3 : i32
    %1468 = arith.addi %1449, %c3_i32_689 : i32
    %1469 = arith.index_cast %1468 : i32 to index
    %1470 = memref.load %arg2[%1469] : memref<480xf32, #tpu.memory_space<smem>>
    %1471 = vector.broadcast %1470 : f32 to vector<31x92xf32>
    %1472 = arith.mulf %1471, %1448 : vector<31x92xf32>
    %1473 = arith.addf %1446, %1472 : vector<31x92xf32>
    %c3_690 = arith.constant 3 : index
    %c0_691 = arith.constant 0 : index
    %c2_692 = arith.constant 2 : index
    %c0_693 = arith.constant 0 : index
    %1474 = vector.load %arg5[%c3_690, %c0_691, %c2_692, %c0_693] : memref<4x5x33x92xf32, #tpu.memory_space<vmem>>, vector<1x1x31x92xf32>
    %1475 = vector.shape_cast %1474 : vector<1x1x31x92xf32> to vector<31x92xf32>
    %c344_i32 = arith.constant 344 : i32
    %1476 = arith.addi %c344_i32, %0 : i32
    %c0_i32_694 = arith.constant 0 : i32
    %1477 = arith.addi %1476, %c0_i32_694 : i32
    %1478 = arith.index_cast %1477 : i32 to index
    %1479 = memref.load %arg2[%1478] : memref<480xf32, #tpu.memory_space<smem>>
    %1480 = vector.broadcast %1479 : f32 to vector<31x92xf32>
    %1481 = arith.mulf %1480, %1475 : vector<31x92xf32>
    %1482 = arith.addf %1455, %1481 : vector<31x92xf32>
    %c1_i32_695 = arith.constant 1 : i32
    %1483 = arith.addi %1476, %c1_i32_695 : i32
    %1484 = arith.index_cast %1483 : i32 to index
    %1485 = memref.load %arg2[%1484] : memref<480xf32, #tpu.memory_space<smem>>
    %1486 = vector.broadcast %1485 : f32 to vector<31x92xf32>
    %1487 = arith.mulf %1486, %1475 : vector<31x92xf32>
    %1488 = arith.addf %1461, %1487 : vector<31x92xf32>
    %c2_i32_696 = arith.constant 2 : i32
    %1489 = arith.addi %1476, %c2_i32_696 : i32
    %1490 = arith.index_cast %1489 : i32 to index
    %1491 = memref.load %arg2[%1490] : memref<480xf32, #tpu.memory_space<smem>>
    %1492 = vector.broadcast %1491 : f32 to vector<31x92xf32>
    %1493 = arith.mulf %1492, %1475 : vector<31x92xf32>
    %1494 = arith.addf %1467, %1493 : vector<31x92xf32>
    %c3_i32_697 = arith.constant 3 : i32
    %1495 = arith.addi %1476, %c3_i32_697 : i32
    %1496 = arith.index_cast %1495 : i32 to index
    %1497 = memref.load %arg2[%1496] : memref<480xf32, #tpu.memory_space<smem>>
    %1498 = vector.broadcast %1497 : f32 to vector<31x92xf32>
    %1499 = arith.mulf %1498, %1475 : vector<31x92xf32>
    %1500 = arith.addf %1473, %1499 : vector<31x92xf32>
    %c3_698 = arith.constant 3 : index
    %c1_699 = arith.constant 1 : index
    %c0_700 = arith.constant 0 : index
    %c0_701 = arith.constant 0 : index
    %1501 = vector.load %arg5[%c3_698, %c1_699, %c0_700, %c0_701] : memref<4x5x33x92xf32, #tpu.memory_space<vmem>>, vector<1x1x31x92xf32>
    %1502 = vector.shape_cast %1501 : vector<1x1x31x92xf32> to vector<31x92xf32>
    %c56_i32 = arith.constant 56 : i32
    %1503 = arith.addi %c56_i32, %0 : i32
    %c0_i32_702 = arith.constant 0 : i32
    %1504 = arith.addi %1503, %c0_i32_702 : i32
    %1505 = arith.index_cast %1504 : i32 to index
    %1506 = memref.load %arg2[%1505] : memref<480xf32, #tpu.memory_space<smem>>
    %1507 = vector.broadcast %1506 : f32 to vector<31x92xf32>
    %1508 = arith.mulf %1507, %1502 : vector<31x92xf32>
    %1509 = arith.addf %1482, %1508 : vector<31x92xf32>
    %c1_i32_703 = arith.constant 1 : i32
    %1510 = arith.addi %1503, %c1_i32_703 : i32
    %1511 = arith.index_cast %1510 : i32 to index
    %1512 = memref.load %arg2[%1511] : memref<480xf32, #tpu.memory_space<smem>>
    %1513 = vector.broadcast %1512 : f32 to vector<31x92xf32>
    %1514 = arith.mulf %1513, %1502 : vector<31x92xf32>
    %1515 = arith.addf %1488, %1514 : vector<31x92xf32>
    %c2_i32_704 = arith.constant 2 : i32
    %1516 = arith.addi %1503, %c2_i32_704 : i32
    %1517 = arith.index_cast %1516 : i32 to index
    %1518 = memref.load %arg2[%1517] : memref<480xf32, #tpu.memory_space<smem>>
    %1519 = vector.broadcast %1518 : f32 to vector<31x92xf32>
    %1520 = arith.mulf %1519, %1502 : vector<31x92xf32>
    %1521 = arith.addf %1494, %1520 : vector<31x92xf32>
    %c3_i32_705 = arith.constant 3 : i32
    %1522 = arith.addi %1503, %c3_i32_705 : i32
    %1523 = arith.index_cast %1522 : i32 to index
    %1524 = memref.load %arg2[%1523] : memref<480xf32, #tpu.memory_space<smem>>
    %1525 = vector.broadcast %1524 : f32 to vector<31x92xf32>
    %1526 = arith.mulf %1525, %1502 : vector<31x92xf32>
    %1527 = arith.addf %1500, %1526 : vector<31x92xf32>
    %c3_706 = arith.constant 3 : index
    %c1_707 = arith.constant 1 : index
    %c1_708 = arith.constant 1 : index
    %c0_709 = arith.constant 0 : index
    %1528 = vector.load %arg5[%c3_706, %c1_707, %c1_708, %c0_709] : memref<4x5x33x92xf32, #tpu.memory_space<vmem>>, vector<1x1x31x92xf32>
    %1529 = vector.shape_cast %1528 : vector<1x1x31x92xf32> to vector<31x92xf32>
    %c216_i32 = arith.constant 216 : i32
    %1530 = arith.addi %c216_i32, %0 : i32
    %c0_i32_710 = arith.constant 0 : i32
    %1531 = arith.addi %1530, %c0_i32_710 : i32
    %1532 = arith.index_cast %1531 : i32 to index
    %1533 = memref.load %arg2[%1532] : memref<480xf32, #tpu.memory_space<smem>>
    %1534 = vector.broadcast %1533 : f32 to vector<31x92xf32>
    %1535 = arith.mulf %1534, %1529 : vector<31x92xf32>
    %1536 = arith.addf %1509, %1535 : vector<31x92xf32>
    %c1_i32_711 = arith.constant 1 : i32
    %1537 = arith.addi %1530, %c1_i32_711 : i32
    %1538 = arith.index_cast %1537 : i32 to index
    %1539 = memref.load %arg2[%1538] : memref<480xf32, #tpu.memory_space<smem>>
    %1540 = vector.broadcast %1539 : f32 to vector<31x92xf32>
    %1541 = arith.mulf %1540, %1529 : vector<31x92xf32>
    %1542 = arith.addf %1515, %1541 : vector<31x92xf32>
    %c2_i32_712 = arith.constant 2 : i32
    %1543 = arith.addi %1530, %c2_i32_712 : i32
    %1544 = arith.index_cast %1543 : i32 to index
    %1545 = memref.load %arg2[%1544] : memref<480xf32, #tpu.memory_space<smem>>
    %1546 = vector.broadcast %1545 : f32 to vector<31x92xf32>
    %1547 = arith.mulf %1546, %1529 : vector<31x92xf32>
    %1548 = arith.addf %1521, %1547 : vector<31x92xf32>
    %c3_i32_713 = arith.constant 3 : i32
    %1549 = arith.addi %1530, %c3_i32_713 : i32
    %1550 = arith.index_cast %1549 : i32 to index
    %1551 = memref.load %arg2[%1550] : memref<480xf32, #tpu.memory_space<smem>>
    %1552 = vector.broadcast %1551 : f32 to vector<31x92xf32>
    %1553 = arith.mulf %1552, %1529 : vector<31x92xf32>
    %1554 = arith.addf %1527, %1553 : vector<31x92xf32>
    %c3_714 = arith.constant 3 : index
    %c1_715 = arith.constant 1 : index
    %c2_716 = arith.constant 2 : index
    %c0_717 = arith.constant 0 : index
    %1555 = vector.load %arg5[%c3_714, %c1_715, %c2_716, %c0_717] : memref<4x5x33x92xf32, #tpu.memory_space<vmem>>, vector<1x1x31x92xf32>
    %1556 = vector.shape_cast %1555 : vector<1x1x31x92xf32> to vector<31x92xf32>
    %c376_i32 = arith.constant 376 : i32
    %1557 = arith.addi %c376_i32, %0 : i32
    %c0_i32_718 = arith.constant 0 : i32
    %1558 = arith.addi %1557, %c0_i32_718 : i32
    %1559 = arith.index_cast %1558 : i32 to index
    %1560 = memref.load %arg2[%1559] : memref<480xf32, #tpu.memory_space<smem>>
    %1561 = vector.broadcast %1560 : f32 to vector<31x92xf32>
    %1562 = arith.mulf %1561, %1556 : vector<31x92xf32>
    %1563 = arith.addf %1536, %1562 : vector<31x92xf32>
    %c1_i32_719 = arith.constant 1 : i32
    %1564 = arith.addi %1557, %c1_i32_719 : i32
    %1565 = arith.index_cast %1564 : i32 to index
    %1566 = memref.load %arg2[%1565] : memref<480xf32, #tpu.memory_space<smem>>
    %1567 = vector.broadcast %1566 : f32 to vector<31x92xf32>
    %1568 = arith.mulf %1567, %1556 : vector<31x92xf32>
    %1569 = arith.addf %1542, %1568 : vector<31x92xf32>
    %c2_i32_720 = arith.constant 2 : i32
    %1570 = arith.addi %1557, %c2_i32_720 : i32
    %1571 = arith.index_cast %1570 : i32 to index
    %1572 = memref.load %arg2[%1571] : memref<480xf32, #tpu.memory_space<smem>>
    %1573 = vector.broadcast %1572 : f32 to vector<31x92xf32>
    %1574 = arith.mulf %1573, %1556 : vector<31x92xf32>
    %1575 = arith.addf %1548, %1574 : vector<31x92xf32>
    %c3_i32_721 = arith.constant 3 : i32
    %1576 = arith.addi %1557, %c3_i32_721 : i32
    %1577 = arith.index_cast %1576 : i32 to index
    %1578 = memref.load %arg2[%1577] : memref<480xf32, #tpu.memory_space<smem>>
    %1579 = vector.broadcast %1578 : f32 to vector<31x92xf32>
    %1580 = arith.mulf %1579, %1556 : vector<31x92xf32>
    %1581 = arith.addf %1554, %1580 : vector<31x92xf32>
    %c3_722 = arith.constant 3 : index
    %c2_723 = arith.constant 2 : index
    %c0_724 = arith.constant 0 : index
    %c0_725 = arith.constant 0 : index
    %1582 = vector.load %arg5[%c3_722, %c2_723, %c0_724, %c0_725] : memref<4x5x33x92xf32, #tpu.memory_space<vmem>>, vector<1x1x31x92xf32>
    %1583 = vector.shape_cast %1582 : vector<1x1x31x92xf32> to vector<31x92xf32>
    %c88_i32 = arith.constant 88 : i32
    %1584 = arith.addi %c88_i32, %0 : i32
    %c0_i32_726 = arith.constant 0 : i32
    %1585 = arith.addi %1584, %c0_i32_726 : i32
    %1586 = arith.index_cast %1585 : i32 to index
    %1587 = memref.load %arg2[%1586] : memref<480xf32, #tpu.memory_space<smem>>
    %1588 = vector.broadcast %1587 : f32 to vector<31x92xf32>
    %1589 = arith.mulf %1588, %1583 : vector<31x92xf32>
    %1590 = arith.addf %1563, %1589 : vector<31x92xf32>
    %c1_i32_727 = arith.constant 1 : i32
    %1591 = arith.addi %1584, %c1_i32_727 : i32
    %1592 = arith.index_cast %1591 : i32 to index
    %1593 = memref.load %arg2[%1592] : memref<480xf32, #tpu.memory_space<smem>>
    %1594 = vector.broadcast %1593 : f32 to vector<31x92xf32>
    %1595 = arith.mulf %1594, %1583 : vector<31x92xf32>
    %1596 = arith.addf %1569, %1595 : vector<31x92xf32>
    %c2_i32_728 = arith.constant 2 : i32
    %1597 = arith.addi %1584, %c2_i32_728 : i32
    %1598 = arith.index_cast %1597 : i32 to index
    %1599 = memref.load %arg2[%1598] : memref<480xf32, #tpu.memory_space<smem>>
    %1600 = vector.broadcast %1599 : f32 to vector<31x92xf32>
    %1601 = arith.mulf %1600, %1583 : vector<31x92xf32>
    %1602 = arith.addf %1575, %1601 : vector<31x92xf32>
    %c3_i32_729 = arith.constant 3 : i32
    %1603 = arith.addi %1584, %c3_i32_729 : i32
    %1604 = arith.index_cast %1603 : i32 to index
    %1605 = memref.load %arg2[%1604] : memref<480xf32, #tpu.memory_space<smem>>
    %1606 = vector.broadcast %1605 : f32 to vector<31x92xf32>
    %1607 = arith.mulf %1606, %1583 : vector<31x92xf32>
    %1608 = arith.addf %1581, %1607 : vector<31x92xf32>
    %c3_730 = arith.constant 3 : index
    %c2_731 = arith.constant 2 : index
    %c1_732 = arith.constant 1 : index
    %c0_733 = arith.constant 0 : index
    %1609 = vector.load %arg5[%c3_730, %c2_731, %c1_732, %c0_733] : memref<4x5x33x92xf32, #tpu.memory_space<vmem>>, vector<1x1x31x92xf32>
    %1610 = vector.shape_cast %1609 : vector<1x1x31x92xf32> to vector<31x92xf32>
    %c248_i32 = arith.constant 248 : i32
    %1611 = arith.addi %c248_i32, %0 : i32
    %c0_i32_734 = arith.constant 0 : i32
    %1612 = arith.addi %1611, %c0_i32_734 : i32
    %1613 = arith.index_cast %1612 : i32 to index
    %1614 = memref.load %arg2[%1613] : memref<480xf32, #tpu.memory_space<smem>>
    %1615 = vector.broadcast %1614 : f32 to vector<31x92xf32>
    %1616 = arith.mulf %1615, %1610 : vector<31x92xf32>
    %1617 = arith.addf %1590, %1616 : vector<31x92xf32>
    %c1_i32_735 = arith.constant 1 : i32
    %1618 = arith.addi %1611, %c1_i32_735 : i32
    %1619 = arith.index_cast %1618 : i32 to index
    %1620 = memref.load %arg2[%1619] : memref<480xf32, #tpu.memory_space<smem>>
    %1621 = vector.broadcast %1620 : f32 to vector<31x92xf32>
    %1622 = arith.mulf %1621, %1610 : vector<31x92xf32>
    %1623 = arith.addf %1596, %1622 : vector<31x92xf32>
    %c2_i32_736 = arith.constant 2 : i32
    %1624 = arith.addi %1611, %c2_i32_736 : i32
    %1625 = arith.index_cast %1624 : i32 to index
    %1626 = memref.load %arg2[%1625] : memref<480xf32, #tpu.memory_space<smem>>
    %1627 = vector.broadcast %1626 : f32 to vector<31x92xf32>
    %1628 = arith.mulf %1627, %1610 : vector<31x92xf32>
    %1629 = arith.addf %1602, %1628 : vector<31x92xf32>
    %c3_i32_737 = arith.constant 3 : i32
    %1630 = arith.addi %1611, %c3_i32_737 : i32
    %1631 = arith.index_cast %1630 : i32 to index
    %1632 = memref.load %arg2[%1631] : memref<480xf32, #tpu.memory_space<smem>>
    %1633 = vector.broadcast %1632 : f32 to vector<31x92xf32>
    %1634 = arith.mulf %1633, %1610 : vector<31x92xf32>
    %1635 = arith.addf %1608, %1634 : vector<31x92xf32>
    %c3_738 = arith.constant 3 : index
    %c2_739 = arith.constant 2 : index
    %c2_740 = arith.constant 2 : index
    %c0_741 = arith.constant 0 : index
    %1636 = vector.load %arg5[%c3_738, %c2_739, %c2_740, %c0_741] : memref<4x5x33x92xf32, #tpu.memory_space<vmem>>, vector<1x1x31x92xf32>
    %1637 = vector.shape_cast %1636 : vector<1x1x31x92xf32> to vector<31x92xf32>
    %c408_i32 = arith.constant 408 : i32
    %1638 = arith.addi %c408_i32, %0 : i32
    %c0_i32_742 = arith.constant 0 : i32
    %1639 = arith.addi %1638, %c0_i32_742 : i32
    %1640 = arith.index_cast %1639 : i32 to index
    %1641 = memref.load %arg2[%1640] : memref<480xf32, #tpu.memory_space<smem>>
    %1642 = vector.broadcast %1641 : f32 to vector<31x92xf32>
    %1643 = arith.mulf %1642, %1637 : vector<31x92xf32>
    %1644 = arith.addf %1617, %1643 : vector<31x92xf32>
    %c1_i32_743 = arith.constant 1 : i32
    %1645 = arith.addi %1638, %c1_i32_743 : i32
    %1646 = arith.index_cast %1645 : i32 to index
    %1647 = memref.load %arg2[%1646] : memref<480xf32, #tpu.memory_space<smem>>
    %1648 = vector.broadcast %1647 : f32 to vector<31x92xf32>
    %1649 = arith.mulf %1648, %1637 : vector<31x92xf32>
    %1650 = arith.addf %1623, %1649 : vector<31x92xf32>
    %c2_i32_744 = arith.constant 2 : i32
    %1651 = arith.addi %1638, %c2_i32_744 : i32
    %1652 = arith.index_cast %1651 : i32 to index
    %1653 = memref.load %arg2[%1652] : memref<480xf32, #tpu.memory_space<smem>>
    %1654 = vector.broadcast %1653 : f32 to vector<31x92xf32>
    %1655 = arith.mulf %1654, %1637 : vector<31x92xf32>
    %1656 = arith.addf %1629, %1655 : vector<31x92xf32>
    %c3_i32_745 = arith.constant 3 : i32
    %1657 = arith.addi %1638, %c3_i32_745 : i32
    %1658 = arith.index_cast %1657 : i32 to index
    %1659 = memref.load %arg2[%1658] : memref<480xf32, #tpu.memory_space<smem>>
    %1660 = vector.broadcast %1659 : f32 to vector<31x92xf32>
    %1661 = arith.mulf %1660, %1637 : vector<31x92xf32>
    %1662 = arith.addf %1635, %1661 : vector<31x92xf32>
    %c3_746 = arith.constant 3 : index
    %c3_747 = arith.constant 3 : index
    %c0_748 = arith.constant 0 : index
    %c0_749 = arith.constant 0 : index
    %1663 = vector.load %arg5[%c3_746, %c3_747, %c0_748, %c0_749] : memref<4x5x33x92xf32, #tpu.memory_space<vmem>>, vector<1x1x31x92xf32>
    %1664 = vector.shape_cast %1663 : vector<1x1x31x92xf32> to vector<31x92xf32>
    %c120_i32 = arith.constant 120 : i32
    %1665 = arith.addi %c120_i32, %0 : i32
    %c0_i32_750 = arith.constant 0 : i32
    %1666 = arith.addi %1665, %c0_i32_750 : i32
    %1667 = arith.index_cast %1666 : i32 to index
    %1668 = memref.load %arg2[%1667] : memref<480xf32, #tpu.memory_space<smem>>
    %1669 = vector.broadcast %1668 : f32 to vector<31x92xf32>
    %1670 = arith.mulf %1669, %1664 : vector<31x92xf32>
    %1671 = arith.addf %1644, %1670 : vector<31x92xf32>
    %c1_i32_751 = arith.constant 1 : i32
    %1672 = arith.addi %1665, %c1_i32_751 : i32
    %1673 = arith.index_cast %1672 : i32 to index
    %1674 = memref.load %arg2[%1673] : memref<480xf32, #tpu.memory_space<smem>>
    %1675 = vector.broadcast %1674 : f32 to vector<31x92xf32>
    %1676 = arith.mulf %1675, %1664 : vector<31x92xf32>
    %1677 = arith.addf %1650, %1676 : vector<31x92xf32>
    %c2_i32_752 = arith.constant 2 : i32
    %1678 = arith.addi %1665, %c2_i32_752 : i32
    %1679 = arith.index_cast %1678 : i32 to index
    %1680 = memref.load %arg2[%1679] : memref<480xf32, #tpu.memory_space<smem>>
    %1681 = vector.broadcast %1680 : f32 to vector<31x92xf32>
    %1682 = arith.mulf %1681, %1664 : vector<31x92xf32>
    %1683 = arith.addf %1656, %1682 : vector<31x92xf32>
    %c3_i32_753 = arith.constant 3 : i32
    %1684 = arith.addi %1665, %c3_i32_753 : i32
    %1685 = arith.index_cast %1684 : i32 to index
    %1686 = memref.load %arg2[%1685] : memref<480xf32, #tpu.memory_space<smem>>
    %1687 = vector.broadcast %1686 : f32 to vector<31x92xf32>
    %1688 = arith.mulf %1687, %1664 : vector<31x92xf32>
    %1689 = arith.addf %1662, %1688 : vector<31x92xf32>
    %c3_754 = arith.constant 3 : index
    %c3_755 = arith.constant 3 : index
    %c1_756 = arith.constant 1 : index
    %c0_757 = arith.constant 0 : index
    %1690 = vector.load %arg5[%c3_754, %c3_755, %c1_756, %c0_757] : memref<4x5x33x92xf32, #tpu.memory_space<vmem>>, vector<1x1x31x92xf32>
    %1691 = vector.shape_cast %1690 : vector<1x1x31x92xf32> to vector<31x92xf32>
    %c280_i32 = arith.constant 280 : i32
    %1692 = arith.addi %c280_i32, %0 : i32
    %c0_i32_758 = arith.constant 0 : i32
    %1693 = arith.addi %1692, %c0_i32_758 : i32
    %1694 = arith.index_cast %1693 : i32 to index
    %1695 = memref.load %arg2[%1694] : memref<480xf32, #tpu.memory_space<smem>>
    %1696 = vector.broadcast %1695 : f32 to vector<31x92xf32>
    %1697 = arith.mulf %1696, %1691 : vector<31x92xf32>
    %1698 = arith.addf %1671, %1697 : vector<31x92xf32>
    %c1_i32_759 = arith.constant 1 : i32
    %1699 = arith.addi %1692, %c1_i32_759 : i32
    %1700 = arith.index_cast %1699 : i32 to index
    %1701 = memref.load %arg2[%1700] : memref<480xf32, #tpu.memory_space<smem>>
    %1702 = vector.broadcast %1701 : f32 to vector<31x92xf32>
    %1703 = arith.mulf %1702, %1691 : vector<31x92xf32>
    %1704 = arith.addf %1677, %1703 : vector<31x92xf32>
    %c2_i32_760 = arith.constant 2 : i32
    %1705 = arith.addi %1692, %c2_i32_760 : i32
    %1706 = arith.index_cast %1705 : i32 to index
    %1707 = memref.load %arg2[%1706] : memref<480xf32, #tpu.memory_space<smem>>
    %1708 = vector.broadcast %1707 : f32 to vector<31x92xf32>
    %1709 = arith.mulf %1708, %1691 : vector<31x92xf32>
    %1710 = arith.addf %1683, %1709 : vector<31x92xf32>
    %c3_i32_761 = arith.constant 3 : i32
    %1711 = arith.addi %1692, %c3_i32_761 : i32
    %1712 = arith.index_cast %1711 : i32 to index
    %1713 = memref.load %arg2[%1712] : memref<480xf32, #tpu.memory_space<smem>>
    %1714 = vector.broadcast %1713 : f32 to vector<31x92xf32>
    %1715 = arith.mulf %1714, %1691 : vector<31x92xf32>
    %1716 = arith.addf %1689, %1715 : vector<31x92xf32>
    %c3_762 = arith.constant 3 : index
    %c3_763 = arith.constant 3 : index
    %c2_764 = arith.constant 2 : index
    %c0_765 = arith.constant 0 : index
    %1717 = vector.load %arg5[%c3_762, %c3_763, %c2_764, %c0_765] : memref<4x5x33x92xf32, #tpu.memory_space<vmem>>, vector<1x1x31x92xf32>
    %1718 = vector.shape_cast %1717 : vector<1x1x31x92xf32> to vector<31x92xf32>
    %c440_i32 = arith.constant 440 : i32
    %1719 = arith.addi %c440_i32, %0 : i32
    %c0_i32_766 = arith.constant 0 : i32
    %1720 = arith.addi %1719, %c0_i32_766 : i32
    %1721 = arith.index_cast %1720 : i32 to index
    %1722 = memref.load %arg2[%1721] : memref<480xf32, #tpu.memory_space<smem>>
    %1723 = vector.broadcast %1722 : f32 to vector<31x92xf32>
    %1724 = arith.mulf %1723, %1718 : vector<31x92xf32>
    %1725 = arith.addf %1698, %1724 : vector<31x92xf32>
    %c1_i32_767 = arith.constant 1 : i32
    %1726 = arith.addi %1719, %c1_i32_767 : i32
    %1727 = arith.index_cast %1726 : i32 to index
    %1728 = memref.load %arg2[%1727] : memref<480xf32, #tpu.memory_space<smem>>
    %1729 = vector.broadcast %1728 : f32 to vector<31x92xf32>
    %1730 = arith.mulf %1729, %1718 : vector<31x92xf32>
    %1731 = arith.addf %1704, %1730 : vector<31x92xf32>
    %c2_i32_768 = arith.constant 2 : i32
    %1732 = arith.addi %1719, %c2_i32_768 : i32
    %1733 = arith.index_cast %1732 : i32 to index
    %1734 = memref.load %arg2[%1733] : memref<480xf32, #tpu.memory_space<smem>>
    %1735 = vector.broadcast %1734 : f32 to vector<31x92xf32>
    %1736 = arith.mulf %1735, %1718 : vector<31x92xf32>
    %1737 = arith.addf %1710, %1736 : vector<31x92xf32>
    %c3_i32_769 = arith.constant 3 : i32
    %1738 = arith.addi %1719, %c3_i32_769 : i32
    %1739 = arith.index_cast %1738 : i32 to index
    %1740 = memref.load %arg2[%1739] : memref<480xf32, #tpu.memory_space<smem>>
    %1741 = vector.broadcast %1740 : f32 to vector<31x92xf32>
    %1742 = arith.mulf %1741, %1718 : vector<31x92xf32>
    %1743 = arith.addf %1716, %1742 : vector<31x92xf32>
    %c3_770 = arith.constant 3 : index
    %c4_771 = arith.constant 4 : index
    %c0_772 = arith.constant 0 : index
    %c0_773 = arith.constant 0 : index
    %1744 = vector.load %arg5[%c3_770, %c4_771, %c0_772, %c0_773] : memref<4x5x33x92xf32, #tpu.memory_space<vmem>>, vector<1x1x31x92xf32>
    %1745 = vector.shape_cast %1744 : vector<1x1x31x92xf32> to vector<31x92xf32>
    %c152_i32 = arith.constant 152 : i32
    %1746 = arith.addi %c152_i32, %0 : i32
    %c0_i32_774 = arith.constant 0 : i32
    %1747 = arith.addi %1746, %c0_i32_774 : i32
    %1748 = arith.index_cast %1747 : i32 to index
    %1749 = memref.load %arg2[%1748] : memref<480xf32, #tpu.memory_space<smem>>
    %1750 = vector.broadcast %1749 : f32 to vector<31x92xf32>
    %1751 = arith.mulf %1750, %1745 : vector<31x92xf32>
    %1752 = arith.addf %1725, %1751 : vector<31x92xf32>
    %c1_i32_775 = arith.constant 1 : i32
    %1753 = arith.addi %1746, %c1_i32_775 : i32
    %1754 = arith.index_cast %1753 : i32 to index
    %1755 = memref.load %arg2[%1754] : memref<480xf32, #tpu.memory_space<smem>>
    %1756 = vector.broadcast %1755 : f32 to vector<31x92xf32>
    %1757 = arith.mulf %1756, %1745 : vector<31x92xf32>
    %1758 = arith.addf %1731, %1757 : vector<31x92xf32>
    %c2_i32_776 = arith.constant 2 : i32
    %1759 = arith.addi %1746, %c2_i32_776 : i32
    %1760 = arith.index_cast %1759 : i32 to index
    %1761 = memref.load %arg2[%1760] : memref<480xf32, #tpu.memory_space<smem>>
    %1762 = vector.broadcast %1761 : f32 to vector<31x92xf32>
    %1763 = arith.mulf %1762, %1745 : vector<31x92xf32>
    %1764 = arith.addf %1737, %1763 : vector<31x92xf32>
    %c3_i32_777 = arith.constant 3 : i32
    %1765 = arith.addi %1746, %c3_i32_777 : i32
    %1766 = arith.index_cast %1765 : i32 to index
    %1767 = memref.load %arg2[%1766] : memref<480xf32, #tpu.memory_space<smem>>
    %1768 = vector.broadcast %1767 : f32 to vector<31x92xf32>
    %1769 = arith.mulf %1768, %1745 : vector<31x92xf32>
    %1770 = arith.addf %1743, %1769 : vector<31x92xf32>
    %c3_778 = arith.constant 3 : index
    %c4_779 = arith.constant 4 : index
    %c1_780 = arith.constant 1 : index
    %c0_781 = arith.constant 0 : index
    %1771 = vector.load %arg5[%c3_778, %c4_779, %c1_780, %c0_781] : memref<4x5x33x92xf32, #tpu.memory_space<vmem>>, vector<1x1x31x92xf32>
    %1772 = vector.shape_cast %1771 : vector<1x1x31x92xf32> to vector<31x92xf32>
    %c312_i32 = arith.constant 312 : i32
    %1773 = arith.addi %c312_i32, %0 : i32
    %c0_i32_782 = arith.constant 0 : i32
    %1774 = arith.addi %1773, %c0_i32_782 : i32
    %1775 = arith.index_cast %1774 : i32 to index
    %1776 = memref.load %arg2[%1775] : memref<480xf32, #tpu.memory_space<smem>>
    %1777 = vector.broadcast %1776 : f32 to vector<31x92xf32>
    %1778 = arith.mulf %1777, %1772 : vector<31x92xf32>
    %1779 = arith.addf %1752, %1778 : vector<31x92xf32>
    %c1_i32_783 = arith.constant 1 : i32
    %1780 = arith.addi %1773, %c1_i32_783 : i32
    %1781 = arith.index_cast %1780 : i32 to index
    %1782 = memref.load %arg2[%1781] : memref<480xf32, #tpu.memory_space<smem>>
    %1783 = vector.broadcast %1782 : f32 to vector<31x92xf32>
    %1784 = arith.mulf %1783, %1772 : vector<31x92xf32>
    %1785 = arith.addf %1758, %1784 : vector<31x92xf32>
    %c2_i32_784 = arith.constant 2 : i32
    %1786 = arith.addi %1773, %c2_i32_784 : i32
    %1787 = arith.index_cast %1786 : i32 to index
    %1788 = memref.load %arg2[%1787] : memref<480xf32, #tpu.memory_space<smem>>
    %1789 = vector.broadcast %1788 : f32 to vector<31x92xf32>
    %1790 = arith.mulf %1789, %1772 : vector<31x92xf32>
    %1791 = arith.addf %1764, %1790 : vector<31x92xf32>
    %c3_i32_785 = arith.constant 3 : i32
    %1792 = arith.addi %1773, %c3_i32_785 : i32
    %1793 = arith.index_cast %1792 : i32 to index
    %1794 = memref.load %arg2[%1793] : memref<480xf32, #tpu.memory_space<smem>>
    %1795 = vector.broadcast %1794 : f32 to vector<31x92xf32>
    %1796 = arith.mulf %1795, %1772 : vector<31x92xf32>
    %1797 = arith.addf %1770, %1796 : vector<31x92xf32>
    %c3_786 = arith.constant 3 : index
    %c4_787 = arith.constant 4 : index
    %c2_788 = arith.constant 2 : index
    %c0_789 = arith.constant 0 : index
    %1798 = vector.load %arg5[%c3_786, %c4_787, %c2_788, %c0_789] : memref<4x5x33x92xf32, #tpu.memory_space<vmem>>, vector<1x1x31x92xf32>
    %1799 = vector.shape_cast %1798 : vector<1x1x31x92xf32> to vector<31x92xf32>
    %c472_i32 = arith.constant 472 : i32
    %1800 = arith.addi %c472_i32, %0 : i32
    %c0_i32_790 = arith.constant 0 : i32
    %1801 = arith.addi %1800, %c0_i32_790 : i32
    %1802 = arith.index_cast %1801 : i32 to index
    %1803 = memref.load %arg2[%1802] : memref<480xf32, #tpu.memory_space<smem>>
    %1804 = vector.broadcast %1803 : f32 to vector<31x92xf32>
    %1805 = arith.mulf %1804, %1799 : vector<31x92xf32>
    %1806 = arith.addf %1779, %1805 : vector<31x92xf32>
    %c1_i32_791 = arith.constant 1 : i32
    %1807 = arith.addi %1800, %c1_i32_791 : i32
    %1808 = arith.index_cast %1807 : i32 to index
    %1809 = memref.load %arg2[%1808] : memref<480xf32, #tpu.memory_space<smem>>
    %1810 = vector.broadcast %1809 : f32 to vector<31x92xf32>
    %1811 = arith.mulf %1810, %1799 : vector<31x92xf32>
    %1812 = arith.addf %1785, %1811 : vector<31x92xf32>
    %c2_i32_792 = arith.constant 2 : i32
    %1813 = arith.addi %1800, %c2_i32_792 : i32
    %1814 = arith.index_cast %1813 : i32 to index
    %1815 = memref.load %arg2[%1814] : memref<480xf32, #tpu.memory_space<smem>>
    %1816 = vector.broadcast %1815 : f32 to vector<31x92xf32>
    %1817 = arith.mulf %1816, %1799 : vector<31x92xf32>
    %1818 = arith.addf %1791, %1817 : vector<31x92xf32>
    %c3_i32_793 = arith.constant 3 : i32
    %1819 = arith.addi %1800, %c3_i32_793 : i32
    %1820 = arith.index_cast %1819 : i32 to index
    %1821 = memref.load %arg2[%1820] : memref<480xf32, #tpu.memory_space<smem>>
    %1822 = vector.broadcast %1821 : f32 to vector<31x92xf32>
    %1823 = arith.mulf %1822, %1799 : vector<31x92xf32>
    %1824 = arith.addf %1797, %1823 : vector<31x92xf32>
    %1825 = vector.extract_strided_slice %1806 {offsets = [0, 0], sizes = [31, 46], strides = [1, 1]} : vector<31x92xf32> to vector<31x46xf32>
    %c0_794 = arith.constant 0 : index
    %c0_795 = arith.constant 0 : index
    %c0_796 = arith.constant 0 : index
    %c0_797 = arith.constant 0 : index
    %1826 = vector.load %arg4[%c0_794, %c0_795, %c0_796, %c0_797] : memref<2x4x31x46xf32, #tpu.memory_space<vmem>>, vector<1x1x31x46xf32>
    %1827 = vector.shape_cast %1826 : vector<1x1x31x46xf32> to vector<31x46xf32>
    %1828 = vector.shape_cast %1825 : vector<31x46xf32> to vector<1x1x31x46xf32>
    tpu.vector_store %arg4[%c0_794, %c0_795, %c0_796, %c0_797], %1828 {strides = array<i32>} : memref<2x4x31x46xf32, #tpu.memory_space<vmem>>, vector<1x1x31x46xf32>,
    %1829 = vector.extract_strided_slice %1806 {offsets = [0, 46], sizes = [31, 46], strides = [1, 1]} : vector<31x92xf32> to vector<31x46xf32>
    %c1_798 = arith.constant 1 : index
    %c0_799 = arith.constant 0 : index
    %c0_800 = arith.constant 0 : index
    %c0_801 = arith.constant 0 : index
    %1830 = vector.load %arg4[%c1_798, %c0_799, %c0_800, %c0_801] : memref<2x4x31x46xf32, #tpu.memory_space<vmem>>, vector<1x1x31x46xf32>
    %1831 = vector.shape_cast %1830 : vector<1x1x31x46xf32> to vector<31x46xf32>
    %1832 = vector.shape_cast %1829 : vector<31x46xf32> to vector<1x1x31x46xf32>
    tpu.vector_store %arg4[%c1_798, %c0_799, %c0_800, %c0_801], %1832 {strides = array<i32>} : memref<2x4x31x46xf32, #tpu.memory_space<vmem>>, vector<1x1x31x46xf32>,
    %1833 = vector.extract_strided_slice %1812 {offsets = [0, 0], sizes = [31, 46], strides = [1, 1]} : vector<31x92xf32> to vector<31x46xf32>
    %c0_802 = arith.constant 0 : index
    %c1_803 = arith.constant 1 : index
    %c0_804 = arith.constant 0 : index
    %c0_805 = arith.constant 0 : index
    %1834 = vector.load %arg4[%c0_802, %c1_803, %c0_804, %c0_805] : memref<2x4x31x46xf32, #tpu.memory_space<vmem>>, vector<1x1x31x46xf32>
    %1835 = vector.shape_cast %1834 : vector<1x1x31x46xf32> to vector<31x46xf32>
    %1836 = vector.shape_cast %1833 : vector<31x46xf32> to vector<1x1x31x46xf32>
    tpu.vector_store %arg4[%c0_802, %c1_803, %c0_804, %c0_805], %1836 {strides = array<i32>} : memref<2x4x31x46xf32, #tpu.memory_space<vmem>>, vector<1x1x31x46xf32>,
    %1837 = vector.extract_strided_slice %1812 {offsets = [0, 46], sizes = [31, 46], strides = [1, 1]} : vector<31x92xf32> to vector<31x46xf32>
    %c1_806 = arith.constant 1 : index
    %c1_807 = arith.constant 1 : index
    %c0_808 = arith.constant 0 : index
    %c0_809 = arith.constant 0 : index
    %1838 = vector.load %arg4[%c1_806, %c1_807, %c0_808, %c0_809] : memref<2x4x31x46xf32, #tpu.memory_space<vmem>>, vector<1x1x31x46xf32>
    %1839 = vector.shape_cast %1838 : vector<1x1x31x46xf32> to vector<31x46xf32>
    %1840 = vector.shape_cast %1837 : vector<31x46xf32> to vector<1x1x31x46xf32>
    tpu.vector_store %arg4[%c1_806, %c1_807, %c0_808, %c0_809], %1840 {strides = array<i32>} : memref<2x4x31x46xf32, #tpu.memory_space<vmem>>, vector<1x1x31x46xf32>,
    %1841 = vector.extract_strided_slice %1818 {offsets = [0, 0], sizes = [31, 46], strides = [1, 1]} : vector<31x92xf32> to vector<31x46xf32>
    %c0_810 = arith.constant 0 : index
    %c2_811 = arith.constant 2 : index
    %c0_812 = arith.constant 0 : index
    %c0_813 = arith.constant 0 : index
    %1842 = vector.load %arg4[%c0_810, %c2_811, %c0_812, %c0_813] : memref<2x4x31x46xf32, #tpu.memory_space<vmem>>, vector<1x1x31x46xf32>
    %1843 = vector.shape_cast %1842 : vector<1x1x31x46xf32> to vector<31x46xf32>
    %1844 = vector.shape_cast %1841 : vector<31x46xf32> to vector<1x1x31x46xf32>
    tpu.vector_store %arg4[%c0_810, %c2_811, %c0_812, %c0_813], %1844 {strides = array<i32>} : memref<2x4x31x46xf32, #tpu.memory_space<vmem>>, vector<1x1x31x46xf32>,
    %1845 = vector.extract_strided_slice %1818 {offsets = [0, 46], sizes = [31, 46], strides = [1, 1]} : vector<31x92xf32> to vector<31x46xf32>
    %c1_814 = arith.constant 1 : index
    %c2_815 = arith.constant 2 : index
    %c0_816 = arith.constant 0 : index
    %c0_817 = arith.constant 0 : index
    %1846 = vector.load %arg4[%c1_814, %c2_815, %c0_816, %c0_817] : memref<2x4x31x46xf32, #tpu.memory_space<vmem>>, vector<1x1x31x46xf32>
    %1847 = vector.shape_cast %1846 : vector<1x1x31x46xf32> to vector<31x46xf32>
    %1848 = vector.shape_cast %1845 : vector<31x46xf32> to vector<1x1x31x46xf32>
    tpu.vector_store %arg4[%c1_814, %c2_815, %c0_816, %c0_817], %1848 {strides = array<i32>} : memref<2x4x31x46xf32, #tpu.memory_space<vmem>>, vector<1x1x31x46xf32>,
    %1849 = vector.extract_strided_slice %1824 {offsets = [0, 0], sizes = [31, 46], strides = [1, 1]} : vector<31x92xf32> to vector<31x46xf32>
    %c0_818 = arith.constant 0 : index
    %c3_819 = arith.constant 3 : index
    %c0_820 = arith.constant 0 : index
    %c0_821 = arith.constant 0 : index
    %1850 = vector.load %arg4[%c0_818, %c3_819, %c0_820, %c0_821] : memref<2x4x31x46xf32, #tpu.memory_space<vmem>>, vector<1x1x31x46xf32>
    %1851 = vector.shape_cast %1850 : vector<1x1x31x46xf32> to vector<31x46xf32>
    %1852 = vector.shape_cast %1849 : vector<31x46xf32> to vector<1x1x31x46xf32>
    tpu.vector_store %arg4[%c0_818, %c3_819, %c0_820, %c0_821], %1852 {strides = array<i32>} : memref<2x4x31x46xf32, #tpu.memory_space<vmem>>, vector<1x1x31x46xf32>,
    %1853 = vector.extract_strided_slice %1824 {offsets = [0, 46], sizes = [31, 46], strides = [1, 1]} : vector<31x92xf32> to vector<31x46xf32>
    %c1_822 = arith.constant 1 : index
    %c3_823 = arith.constant 3 : index
    %c0_824 = arith.constant 0 : index
    %c0_825 = arith.constant 0 : index
    %1854 = vector.load %arg4[%c1_822, %c3_823, %c0_824, %c0_825] : memref<2x4x31x46xf32, #tpu.memory_space<vmem>>, vector<1x1x31x46xf32>
    %1855 = vector.shape_cast %1854 : vector<1x1x31x46xf32> to vector<31x46xf32>
    %1856 = vector.shape_cast %1853 : vector<31x46xf32> to vector<1x1x31x46xf32>
    tpu.vector_store %arg4[%c1_822, %c3_823, %c0_824, %c0_825], %1856 {strides = array<i32>} : memref<2x4x31x46xf32, #tpu.memory_space<vmem>>, vector<1x1x31x46xf32>,
    return
  }
  func.func @transform_0(%arg0: i32, %arg1: i32) -> i32 {
    %c0_i32 = arith.constant 0 : i32
    %c0_i32_0 = arith.constant 0 : i32
    return %c0_i32 : i32
  }
  func.func @transform_1(%arg0: i32, %arg1: i32) -> (i32, i32, i32, i32) {
    %c0_i32 = arith.constant 0 : i32
    %c0_i32_0 = arith.constant 0 : i32
    %c0_i32_1 = arith.constant 0 : i32
    %c0_i32_2 = arith.constant 0 : i32
    return %arg0, %c0_i32, %c0_i32_0, %c0_i32_1 : i32, i32, i32, i32
  }
  func.func @transform_2(%arg0: i32, %arg1: i32) -> (i32, i32, i32, i32) {
    %c0_i32 = arith.constant 0 : i32
    %c0_i32_0 = arith.constant 0 : i32
    %c0_i32_1 = arith.constant 0 : i32
    return %arg0, %arg1, %c0_i32, %c0_i32_0 : i32, i32, i32, i32
  }
}

</mosaic_0001>

<llo_original>
// kernel: conv_transpose2d_pallas.1
$region0: #{conv_transpose2d_pallas.1}
  #allocation0 [shape = 'u32[]', space=smem, size = 0x4, offset = 0x4, fixed_abs, tag = 'smem constant byte address 0x4 - core index']
  #allocation1 [shape = 'u32[144,128]{1,0:T(1,128)}', space=vmem, size = 0x12000, scoped, tag = 'internal scratch']
  #allocation2 [shape = 'f32[4,5,33,92]{3,2,1,0:T(8,128)}', space=vmem, size = 0x64000, scoped, tag = 'scratch operand']
  %s0 = inlined_call_operand.vmem [shape: f32[480], index: 0, kind: input, shape index: {}]
  %s1 = inlined_call_operand.vmem [shape: f32[2,4,33,50], index: 1, kind: input, shape index: {}]
  %s2 = inlined_call_operand.vmem [shape: f32[2,8,31,46], index: 2, kind: output, shape index: {}]
  %s3 = sld [smem:[#allocation0]]
  $region79: #{conv_transpose2d_pallas.1} parent=0
    _
  %s5 = ssub.s32 1, %s3
  %s6 = scalar_select 0, %s5, %s3
  $region1: #{conv_transpose2d_pallas.1} parent=0
    #allocation3 [shape = 'u8[2048]{0}', space=smem, size = 0x800, scoped, tag = 'input window, operand 0, single buffered']
    #allocation4 [shape = 's32[2]{0}', space=sflag, size = 0x8, scoped, tag = 'scoped memory for conv_transpose2d_pallas.1']
    #allocation5 [shape = 'u8[262144]{0}', space=vmem, size = 0x40000, scoped, tag = 'output window, operand 0']
    %7 = vsyncpa [#allocation4], 0
    loop: start=0, step=1, limit=4
    $region2: #{conv_transpose2d_pallas.1} parent=1 // loop_pre_header
      _
    $region3: #{conv_transpose2d_pallas.1} parent=1 // loop_header
      %s9 = sphi 0, %s13
      %p10 = scmp.ge.s32.totalorder %s9, 4
      %s16 = sphi 0, %s28
      %s17 = sphi 0, %s24
      %s18 = sphi 0, %s16
      %s19 = sphi 0, %s17
      %s20 = sphi 0, %s18
      %s21 = sphi 0, %s19
      %s29 = sphi 0, %s29
      %s31 = sphi 0, %s29
      %s32 = sphi 0, %s31
      %s46 = sphi 0, %s32
      %s52 = sphi 0, %s54
      %s55 = sphi 0, %s52
      %s56 = sphi 0, %s55
      %s72 = sphi 0, %s56
      %s80 = sphi 0, %s82
      %s83 = sphi 0, %s80
      %s84 = sphi 0, %s83
      %s100 = sphi 0, %s84
    $region4: #{conv_transpose2d_pallas.1} parent=1 // loop_header_branch
      %12 = sbr.rel (%p10) target = $region8
    $region5: #{conv_transpose2d_pallas.1} parent=1 // loop_body
      %s14 = ssub.s32 %s9, 1
      %s15 = ssub.s32 %s9, 2
      %s22 = sadd.s32 1, %s17
      %p23 = scmp.ge.s32.totalorder %s22, 2
      %s24 = scalar_select %p23, 0, %s22
      %s25 = sadd.s32 1, %s16
      %s26 = scalar_select %p23, %s25, %s16
      %p27 = scmp.ge.s32.totalorder %s26, 1
      %s28 = scalar_select %p27, 0, %s26
      %s30 = sadd.s32 %s29, 1
      %p33 = scmp.eq.s32.totalorder %s9, 1
      %p34 = scmp.ne.s32.totalorder %s29, %s31
      %p35 = scmp.eq.s32.totalorder %s9, 0
      %p36 = por %p34, %p35
      %p37 = scmp.ne.s32.totalorder %s29, %s31
      %p38 = scmp.eq.s32.totalorder %s14, 1
      %p39 = por %p37, %p38
      %p40 = scmp.ne.s32.totalorder %s31, %s32
      %p41 = scmp.eq.s32.totalorder %s14, 0
      %p42 = por %p40, %p41
      %p43 = scmp.ne.s32.totalorder %s31, %s32
      %p44 = scmp.eq.s32.totalorder %s15, 1
      %p45 = por %p43, %p44
      %p47 = scmp.ne.s32.totalorder %s32, %s46
      %p48 = scmp.eq.s32.totalorder %s15, 0
      %p49 = por %p47, %p48
      %s50 = ssub.s32 %s16, %s28
      %p51 = scmp.eq.s32.totalorder %s50, 0
      %s53 = sadd.s32 %s52, 1
      %s54 = scalar_select %p51, %s52, %s53
      %p57 = pneg %p51
      %p58 = scmp.eq.s32.totalorder %s9, 1
      %p59 = por %p57, %p58
      %p60 = scmp.ne.s32.totalorder %s52, %s55
      %p61 = scmp.eq.s32.totalorder %s9, 0
      %p62 = por %p60, %p61
      %p63 = scmp.ne.s32.totalorder %s52, %s55
      %p64 = scmp.eq.s32.totalorder %s14, 1
      %p65 = por %p63, %p64
      %p66 = scmp.ne.s32.totalorder %s55, %s56
      %p67 = scmp.eq.s32.totalorder %s14, 0
      %p68 = por %p66, %p67
      %p69 = scmp.ne.s32.totalorder %s55, %s56
      %p70 = scmp.eq.s32.totalorder %s15, 1
      %p71 = por %p69, %p70
      %p73 = scmp.ne.s32.totalorder %s56, %s72
      %p74 = scmp.eq.s32.totalorder %s15, 0
      %p75 = por %p73, %p74
      %s76 = ssub.s32 %s16, %s28
      %s77 = ssub.s32 %s17, %s24
      %s78 = sor.u32 %s76, %s77
      %p79 = scmp.eq.s32.totalorder %s78, 0
      %s81 = sadd.s32 %s80, 1
      %s82 = scalar_select %p79, %s80, %s81
      %p85 = pneg %p79
      %p86 = scmp.eq.s32.totalorder %s9, 1
      %p87 = por %p85, %p86
      %p88 = scmp.ne.s32.totalorder %s80, %s83
      %p89 = scmp.eq.s32.totalorder %s9, 0
      %p90 = por %p88, %p89
      %p91 = scmp.ne.s32.totalorder %s80, %s83
      %p92 = scmp.eq.s32.totalorder %s14, 1
      %p93 = por %p91, %p92
      %p94 = scmp.ne.s32.totalorder %s83, %s84
      %p95 = scmp.eq.s32.totalorder %s14, 0
      %p96 = por %p94, %p95
      %p97 = scmp.ne.s32.totalorder %s83, %s84
      %p98 = scmp.eq.s32.totalorder %s15, 1
      %p99 = por %p97, %p98
      %p101 = scmp.ne.s32.totalorder %s84, %s100
      %p102 = scmp.eq.s32.totalorder %s15, 0
      %p103 = por %p101, %p102
      %p104 = scmp.le.s32.totalorder 1, %s9
      %p105 = scmp.lt.s32.totalorder %s9, 3
      %p106 = pnand %p104, %p105
      %p107 = pneg %p106
      // Predicated region
      $region9: #{conv_transpose2d_pallas.1} parent=5 // pred_check
        _
      $region10: #{conv_transpose2d_pallas.1} parent=5 // pred_check_branch
        %109 = sbr.rel (%p106) target = $region12
      $region11: #{conv_transpose2d_pallas.1} parent=5 // pred_region
        %s110 = ssub.s32 %s9, 1
        // Predicated region
        $region13: #{conv_transpose2d_pallas.1} parent=11 // pred_check
          %p111 = pneg %p42
        $region14: #{conv_transpose2d_pallas.1} parent=11 // pred_check_branch
          %113 = sbr.rel (%p111) target = $region16
        $region15: #{conv_transpose2d_pallas.1} parent=11 // pred_region
          %s115 = ssub.s32 64, 64
          %116 = vsyncadd [#allocation4], %s115
          %s118 = sshll.u32 %s0, 4
          %s119 = int_to_ptr.vmem [resolvable:$true] %s118
          %121 = dma.vmem_to_smem %s119, 64, [#allocation3], [#allocation4]
        $region16: #{conv_transpose2d_pallas.1} parent=11 // pred_fallthru
          _
        // Predicated region
        $region17: #{conv_transpose2d_pallas.1} parent=11 // pred_check
          %p122 = pneg %p68
        $region18: #{conv_transpose2d_pallas.1} parent=11 // pred_check_branch
          %124 = sbr.rel (%p122) target = $region20
        $region19: #{conv_transpose2d_pallas.1} parent=11 // pred_region
          %s125 = smul.u32 2, %s18
          %p126 = scmp.lt.s32.totalorder %s125, 1
          %s127 = scalar_select %p126, %s125, 1
          %s128 = smul.addr %s127, 20
          %s129 = smul.addr %s128, 8
          %s130 = scalar_lea.vmem %s1, %s129
          %s131 = smul.u32 2, %s18
        $region20: #{conv_transpose2d_pallas.1} parent=11 // pred_fallthru
          _
      $region12: #{conv_transpose2d_pallas.1} parent=5 // pred_fallthru
        _
      %p132 = scmp.lt.s32.totalorder %s9, 2
      // Predicated region
      $region21: #{conv_transpose2d_pallas.1} parent=5 // pred_check
        %p133 = pneg %p132
      $region22: #{conv_transpose2d_pallas.1} parent=5 // pred_check_branch
        %135 = sbr.rel (%p133) target = $region24
      $region23: #{conv_transpose2d_pallas.1} parent=5 // pred_region
        _
      $region24: #{conv_transpose2d_pallas.1} parent=5 // pred_fallthru
        _
      %p136 = scmp.le.s32.totalorder 1, %s9
      %p137 = scmp.lt.s32.totalorder %s9, 3
      %p138 = pnand %p136, %p137
      %p139 = pneg %p138
      // Predicated region
      $region25: #{conv_transpose2d_pallas.1} parent=5 // pred_check
        _
      $region26: #{conv_transpose2d_pallas.1} parent=5 // pred_check_branch
        %141 = sbr.rel (%p138) target = $region28
      $region27: #{conv_transpose2d_pallas.1} parent=5 // pred_region
        %s142 = ssub.s32 %s9, 1
        // Predicated region
        $region29: #{conv_transpose2d_pallas.1} parent=27 // pred_check
          %p143 = pneg %p42
        $region30: #{conv_transpose2d_pallas.1} parent=27 // pred_check_branch
          %145 = sbr.rel (%p143) target = $region32
        $region31: #{conv_transpose2d_pallas.1} parent=27 // pred_region
          %146 = dma.done [#allocation4], 64
        $region32: #{conv_transpose2d_pallas.1} parent=27 // pred_fallthru
          _
        %147 = sfence
        %p148 = pneg %p42
        %p149 = pneg %p39
        %s150 = smul.u32 2, %s18
        %p151 = scmp.lt.s32.totalorder %s150, 1
        %s152 = scalar_select %p151, %s150, 1
        %s153 = smul.addr %s152, 20
        %s154 = smul.addr %s153, 8
        %s155 = scalar_lea.vmem %s1, %s154
        %p156 = pneg %p68
        %p157 = pneg %p65
        %p158 = pneg %p96
        %p159 = pneg %p93
        %s160 = sand.u32 %s83, 1
        %s161 = sand.u32 %s83, 1
        %s162 = smul.addr %s161, 256
        %s163 = scalar_lea.vmem [#allocation5], %s162
        %s164 = smul.u32 2, %s18
        %p165 = scmp.lt.s32.totalorder %s164, 1
        %s166 = scalar_select %p165, %s164, 1
        %s167 = smul.addr %s166, 20
        %s168 = smul.addr %s167, 8
        %s169 = scalar_lea.vmem %s1, %s168
        %s170 = smul.u32 2, %s18
        %s171 = smul.u32 2, %s18
        %s172 = smul.u32 4, %s19
        %s173 = smul.u32 %s19, 4
        %v174 = vld [vmem:[%s169] sm:$0xff]
        %v175 = vld [vmem:[%s169 + $0x8] sm:$0xff]
        %v176 = vld [vmem:[%s169 + $0x10] sm:$0xff]
        %v177 = vld [vmem:[%s169 + $0x18] sm:$0xff]
        %v178 = vld [vmem:[%s169 + $0x20] sm:$0x1]
        %vm179 = vcmask 375808
        %180 = vst.msk [vmem:[#allocation2] sm:$0xff] %vm179, %v174
        %181 = vst.msk [vmem:[#allocation2 + $0x8] sm:$0xff] %vm179, %v175
        %182 = vst.msk [vmem:[#allocation2 + $0x10] sm:$0xff] %vm179, %v176
        %183 = vst.msk [vmem:[#allocation2 + $0x18] sm:$0xff] %vm179, %v177
        %vm184 = vcmask 368640
        %185 = vst.msk [vmem:[#allocation2 + $0x20] sm:$0x1] %vm184, %v178
        %s186 = scalar_lea.vmem %s169, 160
        %v187 = vld [vmem:[%s186] sm:$0xff]
        %v188 = vld [vmem:[%s186 + $0x8] sm:$0xff]
        %v189 = vld [vmem:[%s186 + $0x10] sm:$0xff]
        %v190 = vld [vmem:[%s186 + $0x18] sm:$0xff]
        %v191 = vld [vmem:[%s186 + $0x20] sm:$0x1]
        %197 = vrot.lane.b32.xlu0 %v187, 46
        %v198 = vpop.permute.xlu0 %197
        %199 = vrot.lane.b32.xlu0 %v188, 46
        %v200 = vpop.permute.xlu0 %199
        %201 = vrot.lane.b32.xlu0 %v189, 46
        %v202 = vpop.permute.xlu0 %201
        %203 = vrot.lane.b32.xlu0 %v190, 46
        %v204 = vpop.permute.xlu0 %203
        %205 = vrot.lane.b32.xlu0 %v191, 46
        %v206 = vpop.permute.xlu0 %205
        %vm212 = vcmask 753008
        %213 = vst.msk [vmem:[#allocation2] sm:$0xff] %vm212, %v198
        %214 = vst.msk [vmem:[#allocation2 + $0x8] sm:$0xff] %vm212, %v200
        %215 = vst.msk [vmem:[#allocation2 + $0x10] sm:$0xff] %vm212, %v202
        %216 = vst.msk [vmem:[#allocation2 + $0x18] sm:$0xff] %vm212, %v204
        %vm217 = vcmask 745840
        %218 = vst.msk [vmem:[#allocation2 + $0x20] sm:$0x1] %vm217, %v206
        %v219 = vld [vmem:[%s169] sm:$0xff]
        %v220 = vld [vmem:[%s169 + $0x8] sm:$0xff]
        %v221 = vld [vmem:[%s169 + $0x10] sm:$0xff]
        %v222 = vld [vmem:[%s169 + $0x18] sm:$0xff]
        %v223 = vld [vmem:[%s169 + $0x20] sm:$0x1]
        %229 = vrot.lane.b32.xlu0 %v219, 127
        %v230 = vpop.permute.xlu0 %229
        %231 = vrot.lane.b32.xlu0 %v220, 127
        %v232 = vpop.permute.xlu0 %231
        %233 = vrot.lane.b32.xlu0 %v221, 127
        %v234 = vpop.permute.xlu0 %233
        %235 = vrot.lane.b32.xlu0 %v222, 127
        %v236 = vpop.permute.xlu0 %235
        %237 = vrot.lane.b32.xlu0 %v223, 127
        %v238 = vpop.permute.xlu0 %237
        %s244 = scalar_lea.vmem [#allocation2], 40
        %245 = vst.msk [vmem:[%s244] sm:$0xff] %vm179, %v230
        %246 = vst.msk [vmem:[%s244 + $0x8] sm:$0xff] %vm179, %v232
        %247 = vst.msk [vmem:[%s244 + $0x10] sm:$0xff] %vm179, %v234
        %248 = vst.msk [vmem:[%s244 + $0x18] sm:$0xff] %vm179, %v236
        %249 = vst.msk [vmem:[%s244 + $0x20] sm:$0x1] %vm184, %v238
        %v250 = vld [vmem:[%s186] sm:$0xff]
        %v251 = vld [vmem:[%s186 + $0x8] sm:$0xff]
        %v252 = vld [vmem:[%s186 + $0x10] sm:$0xff]
        %v253 = vld [vmem:[%s186 + $0x18] sm:$0xff]
        %v254 = vld [vmem:[%s186 + $0x20] sm:$0x1]
        %260 = vrot.lane.b32.xlu0 %v250, 45
        %v261 = vpop.permute.xlu0 %260
        %262 = vrot.lane.b32.xlu0 %v251, 45
        %v263 = vpop.permute.xlu0 %262
        %264 = vrot.lane.b32.xlu0 %v252, 45
        %v265 = vpop.permute.xlu0 %264
        %266 = vrot.lane.b32.xlu0 %v253, 45
        %v267 = vpop.permute.xlu0 %266
        %268 = vrot.lane.b32.xlu0 %v254, 45
        %v269 = vpop.permute.xlu0 %268
        %275 = vst.msk [vmem:[%s244] sm:$0xff] %vm212, %v261
        %276 = vst.msk [vmem:[%s244 + $0x8] sm:$0xff] %vm212, %v263
        %277 = vst.msk [vmem:[%s244 + $0x10] sm:$0xff] %vm212, %v265
        %278 = vst.msk [vmem:[%s244 + $0x18] sm:$0xff] %vm212, %v267
        %279 = vst.msk [vmem:[%s244 + $0x20] sm:$0x1] %vm217, %v269
        %v280 = vld [vmem:[%s169] sm:$0xff]
        %v281 = vld [vmem:[%s169 + $0x8] sm:$0xff]
        %v282 = vld [vmem:[%s169 + $0x10] sm:$0xff]
        %v283 = vld [vmem:[%s169 + $0x18] sm:$0xff]
        %v284 = vld [vmem:[%s169 + $0x20] sm:$0x1]
        %290 = vrot.lane.b32.xlu0 %v280, 126
        %v291 = vpop.permute.xlu0 %290
        %292 = vrot.lane.b32.xlu0 %v281, 126
        %v293 = vpop.permute.xlu0 %292
        %294 = vrot.lane.b32.xlu0 %v282, 126
        %v295 = vpop.permute.xlu0 %294
        %296 = vrot.lane.b32.xlu0 %v283, 126
        %v297 = vpop.permute.xlu0 %296
        %298 = vrot.lane.b32.xlu0 %v284, 126
        %v299 = vpop.permute.xlu0 %298
        %s305 = scalar_lea.vmem [#allocation2], 80
        %306 = vst.msk [vmem:[%s305] sm:$0xff] %vm179, %v291
        %307 = vst.msk [vmem:[%s305 + $0x8] sm:$0xff] %vm179, %v293
        %308 = vst.msk [vmem:[%s305 + $0x10] sm:$0xff] %vm179, %v295
        %309 = vst.msk [vmem:[%s305 + $0x18] sm:$0xff] %vm179, %v297
        %310 = vst.msk [vmem:[%s305 + $0x20] sm:$0x1] %vm184, %v299
        %v311 = vld [vmem:[%s186] sm:$0xff]
        %v312 = vld [vmem:[%s186 + $0x8] sm:$0xff]
        %v313 = vld [vmem:[%s186 + $0x10] sm:$0xff]
        %v314 = vld [vmem:[%s186 + $0x18] sm:$0xff]
        %v315 = vld [vmem:[%s186 + $0x20] sm:$0x1]
        %321 = vrot.lane.b32.xlu0 %v311, 44
        %v322 = vpop.permute.xlu0 %321
        %323 = vrot.lane.b32.xlu0 %v312, 44
        %v324 = vpop.permute.xlu0 %323
        %325 = vrot.lane.b32.xlu0 %v313, 44
        %v326 = vpop.permute.xlu0 %325
        %327 = vrot.lane.b32.xlu0 %v314, 44
        %v328 = vpop.permute.xlu0 %327
        %329 = vrot.lane.b32.xlu0 %v315, 44
        %v330 = vpop.permute.xlu0 %329
        %336 = vst.msk [vmem:[%s305] sm:$0xff] %vm212, %v322
        %337 = vst.msk [vmem:[%s305 + $0x8] sm:$0xff] %vm212, %v324
        %338 = vst.msk [vmem:[%s305 + $0x10] sm:$0xff] %vm212, %v326
        %339 = vst.msk [vmem:[%s305 + $0x18] sm:$0xff] %vm212, %v328
        %340 = vst.msk [vmem:[%s305 + $0x20] sm:$0x1] %vm217, %v330
        %v341 = vld [vmem:[%s169] sm:$0xff]
        %v342 = vld [vmem:[%s169 + $0x8] sm:$0xff]
        %v343 = vld [vmem:[%s169 + $0x10] sm:$0xff]
        %v344 = vld [vmem:[%s169 + $0x18] sm:$0xff]
        %v345 = vld [vmem:[%s169 + $0x20] sm:$0x1]
        %351 = vrot.lane.b32.xlu0 %v341, 125
        %v352 = vpop.permute.xlu0 %351
        %353 = vrot.lane.b32.xlu0 %v342, 125
        %v354 = vpop.permute.xlu0 %353
        %355 = vrot.lane.b32.xlu0 %v343, 125
        %v356 = vpop.permute.xlu0 %355
        %357 = vrot.lane.b32.xlu0 %v344, 125
        %v358 = vpop.permute.xlu0 %357
        %359 = vrot.lane.b32.xlu0 %v345, 125
        %v360 = vpop.permute.xlu0 %359
        %s366 = scalar_lea.vmem [#allocation2], 120
        %367 = vst.msk [vmem:[%s366] sm:$0xff] %vm179, %v352
        %368 = vst.msk [vmem:[%s366 + $0x8] sm:$0xff] %vm179, %v354
        %369 = vst.msk [vmem:[%s366 + $0x10] sm:$0xff] %vm179, %v356
        %370 = vst.msk [vmem:[%s366 + $0x18] sm:$0xff] %vm179, %v358
        %371 = vst.msk [vmem:[%s366 + $0x20] sm:$0x1] %vm184, %v360
        %v372 = vld [vmem:[%s186] sm:$0xff]
        %v373 = vld [vmem:[%s186 + $0x8] sm:$0xff]
        %v374 = vld [vmem:[%s186 + $0x10] sm:$0xff]
        %v375 = vld [vmem:[%s186 + $0x18] sm:$0xff]
        %v376 = vld [vmem:[%s186 + $0x20] sm:$0x1]
        %382 = vrot.lane.b32.xlu0 %v372, 43
        %v383 = vpop.permute.xlu0 %382
        %384 = vrot.lane.b32.xlu0 %v373, 43
        %v385 = vpop.permute.xlu0 %384
        %386 = vrot.lane.b32.xlu0 %v374, 43
        %v387 = vpop.permute.xlu0 %386
        %388 = vrot.lane.b32.xlu0 %v375, 43
        %v389 = vpop.permute.xlu0 %388
        %390 = vrot.lane.b32.xlu0 %v376, 43
        %v391 = vpop.permute.xlu0 %390
        %397 = vst.msk [vmem:[%s366] sm:$0xff] %vm212, %v383
        %398 = vst.msk [vmem:[%s366 + $0x8] sm:$0xff] %vm212, %v385
        %399 = vst.msk [vmem:[%s366 + $0x10] sm:$0xff] %vm212, %v387
        %400 = vst.msk [vmem:[%s366 + $0x18] sm:$0xff] %vm212, %v389
        %401 = vst.msk [vmem:[%s366 + $0x20] sm:$0x1] %vm217, %v391
        %v402 = vld [vmem:[%s169] sm:$0xff]
        %v403 = vld [vmem:[%s169 + $0x8] sm:$0xff]
        %v404 = vld [vmem:[%s169 + $0x10] sm:$0xff]
        %v405 = vld [vmem:[%s169 + $0x18] sm:$0xff]
        %v406 = vld [vmem:[%s169 + $0x20] sm:$0x1]
        %412 = vrot.lane.b32.xlu0 %v402, 124
        %v413 = vpop.permute.xlu0 %412
        %414 = vrot.lane.b32.xlu0 %v403, 124
        %v415 = vpop.permute.xlu0 %414
        %416 = vrot.lane.b32.xlu0 %v404, 124
        %v417 = vpop.permute.xlu0 %416
        %418 = vrot.lane.b32.xlu0 %v405, 124
        %v419 = vpop.permute.xlu0 %418
        %420 = vrot.lane.b32.xlu0 %v406, 124
        %v421 = vpop.permute.xlu0 %420
        %s427 = scalar_lea.vmem [#allocation2], 160
        %428 = vst.msk [vmem:[%s427] sm:$0xff] %vm179, %v413
        %429 = vst.msk [vmem:[%s427 + $0x8] sm:$0xff] %vm179, %v415
        %430 = vst.msk [vmem:[%s427 + $0x10] sm:$0xff] %vm179, %v417
        %431 = vst.msk [vmem:[%s427 + $0x18] sm:$0xff] %vm179, %v419
        %432 = vst.msk [vmem:[%s427 + $0x20] sm:$0x1] %vm184, %v421
        %v433 = vld [vmem:[%s186] sm:$0xff]
        %v434 = vld [vmem:[%s186 + $0x8] sm:$0xff]
        %v435 = vld [vmem:[%s186 + $0x10] sm:$0xff]
        %v436 = vld [vmem:[%s186 + $0x18] sm:$0xff]
        %v437 = vld [vmem:[%s186 + $0x20] sm:$0x1]
        %443 = vrot.lane.b32.xlu0 %v433, 42
        %v444 = vpop.permute.xlu0 %443
        %445 = vrot.lane.b32.xlu0 %v434, 42
        %v446 = vpop.permute.xlu0 %445
        %447 = vrot.lane.b32.xlu0 %v435, 42
        %v448 = vpop.permute.xlu0 %447
        %449 = vrot.lane.b32.xlu0 %v436, 42
        %v450 = vpop.permute.xlu0 %449
        %451 = vrot.lane.b32.xlu0 %v437, 42
        %v452 = vpop.permute.xlu0 %451
        %458 = vst.msk [vmem:[%s427] sm:$0xff] %vm212, %v444
        %459 = vst.msk [vmem:[%s427 + $0x8] sm:$0xff] %vm212, %v446
        %460 = vst.msk [vmem:[%s427 + $0x10] sm:$0xff] %vm212, %v448
        %461 = vst.msk [vmem:[%s427 + $0x18] sm:$0xff] %vm212, %v450
        %462 = vst.msk [vmem:[%s427 + $0x20] sm:$0x1] %vm217, %v452
        %s463 = scalar_lea.vmem %s169, 40
        %v464 = vld [vmem:[%s463] sm:$0xff]
        %v465 = vld [vmem:[%s463 + $0x8] sm:$0xff]
        %v466 = vld [vmem:[%s463 + $0x10] sm:$0xff]
        %v467 = vld [vmem:[%s463 + $0x18] sm:$0xff]
        %v468 = vld [vmem:[%s463 + $0x20] sm:$0x1]
        %s469 = scalar_lea.vmem [#allocation2], 200
        %470 = vst.msk [vmem:[%s469] sm:$0xff] %vm179, %v464
        %471 = vst.msk [vmem:[%s469 + $0x8] sm:$0xff] %vm179, %v465
        %472 = vst.msk [vmem:[%s469 + $0x10] sm:$0xff] %vm179, %v466
        %473 = vst.msk [vmem:[%s469 + $0x18] sm:$0xff] %vm179, %v467
        %474 = vst.msk [vmem:[%s469 + $0x20] sm:$0x1] %vm184, %v468
        %s475 = scalar_lea.vmem %s169, 200
        %v476 = vld [vmem:[%s475] sm:$0xff]
        %v477 = vld [vmem:[%s475 + $0x8] sm:$0xff]
        %v478 = vld [vmem:[%s475 + $0x10] sm:$0xff]
        %v479 = vld [vmem:[%s475 + $0x18] sm:$0xff]
        %v480 = vld [vmem:[%s475 + $0x20] sm:$0x1]
        %486 = vrot.lane.b32.xlu0 %v476, 46
        %v487 = vpop.permute.xlu0 %486
        %488 = vrot.lane.b32.xlu0 %v477, 46
        %v489 = vpop.permute.xlu0 %488
        %490 = vrot.lane.b32.xlu0 %v478, 46
        %v491 = vpop.permute.xlu0 %490
        %492 = vrot.lane.b32.xlu0 %v479, 46
        %v493 = vpop.permute.xlu0 %492
        %494 = vrot.lane.b32.xlu0 %v480, 46
        %v495 = vpop.permute.xlu0 %494
        %501 = vst.msk [vmem:[%s469] sm:$0xff] %vm212, %v487
        %502 = vst.msk [vmem:[%s469 + $0x8] sm:$0xff] %vm212, %v489
        %503 = vst.msk [vmem:[%s469 + $0x10] sm:$0xff] %vm212, %v491
        %504 = vst.msk [vmem:[%s469 + $0x18] sm:$0xff] %vm212, %v493
        %505 = vst.msk [vmem:[%s469 + $0x20] sm:$0x1] %vm217, %v495
        %v506 = vld [vmem:[%s463] sm:$0xff]
        %v507 = vld [vmem:[%s463 + $0x8] sm:$0xff]
        %v508 = vld [vmem:[%s463 + $0x10] sm:$0xff]
        %v509 = vld [vmem:[%s463 + $0x18] sm:$0xff]
        %v510 = vld [vmem:[%s463 + $0x20] sm:$0x1]
        %516 = vrot.lane.b32.xlu0 %v506, 127
        %v517 = vpop.permute.xlu0 %516
        %518 = vrot.lane.b32.xlu0 %v507, 127
        %v519 = vpop.permute.xlu0 %518
        %520 = vrot.lane.b32.xlu0 %v508, 127
        %v521 = vpop.permute.xlu0 %520
        %522 = vrot.lane.b32.xlu0 %v509, 127
        %v523 = vpop.permute.xlu0 %522
        %524 = vrot.lane.b32.xlu0 %v510, 127
        %v525 = vpop.permute.xlu0 %524
        %s531 = scalar_lea.vmem [#allocation2], 240
        %532 = vst.msk [vmem:[%s531] sm:$0xff] %vm179, %v517
        %533 = vst.msk [vmem:[%s531 + $0x8] sm:$0xff] %vm179, %v519
        %534 = vst.msk [vmem:[%s531 + $0x10] sm:$0xff] %vm179, %v521
        %535 = vst.msk [vmem:[%s531 + $0x18] sm:$0xff] %vm179, %v523
        %536 = vst.msk [vmem:[%s531 + $0x20] sm:$0x1] %vm184, %v525
        %v537 = vld [vmem:[%s475] sm:$0xff]
        %v538 = vld [vmem:[%s475 + $0x8] sm:$0xff]
        %v539 = vld [vmem:[%s475 + $0x10] sm:$0xff]
        %v540 = vld [vmem:[%s475 + $0x18] sm:$0xff]
        %v541 = vld [vmem:[%s475 + $0x20] sm:$0x1]
        %547 = vrot.lane.b32.xlu0 %v537, 45
        %v548 = vpop.permute.xlu0 %547
        %549 = vrot.lane.b32.xlu0 %v538, 45
        %v550 = vpop.permute.xlu0 %549
        %551 = vrot.lane.b32.xlu0 %v539, 45
        %v552 = vpop.permute.xlu0 %551
        %553 = vrot.lane.b32.xlu0 %v540, 45
        %v554 = vpop.permute.xlu0 %553
        %555 = vrot.lane.b32.xlu0 %v541, 45
        %v556 = vpop.permute.xlu0 %555
        %562 = vst.msk [vmem:[%s531] sm:$0xff] %vm212, %v548
        %563 = vst.msk [vmem:[%s531 + $0x8] sm:$0xff] %vm212, %v550
        %564 = vst.msk [vmem:[%s531 + $0x10] sm:$0xff] %vm212, %v552
        %565 = vst.msk [vmem:[%s531 + $0x18] sm:$0xff] %vm212, %v554
        %566 = vst.msk [vmem:[%s531 + $0x20] sm:$0x1] %vm217, %v556
        %v567 = vld [vmem:[%s463] sm:$0xff]
        %v568 = vld [vmem:[%s463 + $0x8] sm:$0xff]
        %v569 = vld [vmem:[%s463 + $0x10] sm:$0xff]
        %v570 = vld [vmem:[%s463 + $0x18] sm:$0xff]
        %v571 = vld [vmem:[%s463 + $0x20] sm:$0x1]
        %577 = vrot.lane.b32.xlu0 %v567, 126
        %v578 = vpop.permute.xlu0 %577
        %579 = vrot.lane.b32.xlu0 %v568, 126
        %v580 = vpop.permute.xlu0 %579
        %581 = vrot.lane.b32.xlu0 %v569, 126
        %v582 = vpop.permute.xlu0 %581
        %583 = vrot.lane.b32.xlu0 %v570, 126
        %v584 = vpop.permute.xlu0 %583
        %585 = vrot.lane.b32.xlu0 %v571, 126
        %v586 = vpop.permute.xlu0 %585
        %s592 = scalar_lea.vmem [#allocation2], 280
        %593 = vst.msk [vmem:[%s592] sm:$0xff] %vm179, %v578
        %594 = vst.msk [vmem:[%s592 + $0x8] sm:$0xff] %vm179, %v580
        %595 = vst.msk [vmem:[%s592 + $0x10] sm:$0xff] %vm179, %v582
        %596 = vst.msk [vmem:[%s592 + $0x18] sm:$0xff] %vm179, %v584
        %597 = vst.msk [vmem:[%s592 + $0x20] sm:$0x1] %vm184, %v586
        %v598 = vld [vmem:[%s475] sm:$0xff]
        %v599 = vld [vmem:[%s475 + $0x8] sm:$0xff]
        %v600 = vld [vmem:[%s475 + $0x10] sm:$0xff]
        %v601 = vld [vmem:[%s475 + $0x18] sm:$0xff]
        %v602 = vld [vmem:[%s475 + $0x20] sm:$0x1]
        %608 = vrot.lane.b32.xlu0 %v598, 44
        %v609 = vpop.permute.xlu0 %608
        %610 = vrot.lane.b32.xlu0 %v599, 44
        %v611 = vpop.permute.xlu0 %610
        %612 = vrot.lane.b32.xlu0 %v600, 44
        %v613 = vpop.permute.xlu0 %612
        %614 = vrot.lane.b32.xlu0 %v601, 44
        %v615 = vpop.permute.xlu0 %614
        %616 = vrot.lane.b32.xlu0 %v602, 44
        %v617 = vpop.permute.xlu0 %616
        %623 = vst.msk [vmem:[%s592] sm:$0xff] %vm212, %v609
        %624 = vst.msk [vmem:[%s592 + $0x8] sm:$0xff] %vm212, %v611
        %625 = vst.msk [vmem:[%s592 + $0x10] sm:$0xff] %vm212, %v613
        %626 = vst.msk [vmem:[%s592 + $0x18] sm:$0xff] %vm212, %v615
        %627 = vst.msk [vmem:[%s592 + $0x20] sm:$0x1] %vm217, %v617
        %v628 = vld [vmem:[%s463] sm:$0xff]
        %v629 = vld [vmem:[%s463 + $0x8] sm:$0xff]
        %v630 = vld [vmem:[%s463 + $0x10] sm:$0xff]
        %v631 = vld [vmem:[%s463 + $0x18] sm:$0xff]
        %v632 = vld [vmem:[%s463 + $0x20] sm:$0x1]
        %638 = vrot.lane.b32.xlu0 %v628, 125
        %v639 = vpop.permute.xlu0 %638
        %640 = vrot.lane.b32.xlu0 %v629, 125
        %v641 = vpop.permute.xlu0 %640
        %642 = vrot.lane.b32.xlu0 %v630, 125
        %v643 = vpop.permute.xlu0 %642
        %644 = vrot.lane.b32.xlu0 %v631, 125
        %v645 = vpop.permute.xlu0 %644
        %646 = vrot.lane.b32.xlu0 %v632, 125
        %v647 = vpop.permute.xlu0 %646
        %s653 = scalar_lea.vmem [#allocation2], 320
        %654 = vst.msk [vmem:[%s653] sm:$0xff] %vm179, %v639
        %655 = vst.msk [vmem:[%s653 + $0x8] sm:$0xff] %vm179, %v641
        %656 = vst.msk [vmem:[%s653 + $0x10] sm:$0xff] %vm179, %v643
        %657 = vst.msk [vmem:[%s653 + $0x18] sm:$0xff] %vm179, %v645
        %658 = vst.msk [vmem:[%s653 + $0x20] sm:$0x1] %vm184, %v647
        %v659 = vld [vmem:[%s475] sm:$0xff]
        %v660 = vld [vmem:[%s475 + $0x8] sm:$0xff]
        %v661 = vld [vmem:[%s475 + $0x10] sm:$0xff]
        %v662 = vld [vmem:[%s475 + $0x18] sm:$0xff]
        %v663 = vld [vmem:[%s475 + $0x20] sm:$0x1]
        %669 = vrot.lane.b32.xlu0 %v659, 43
        %v670 = vpop.permute.xlu0 %669
        %671 = vrot.lane.b32.xlu0 %v660, 43
        %v672 = vpop.permute.xlu0 %671
        %673 = vrot.lane.b32.xlu0 %v661, 43
        %v674 = vpop.permute.xlu0 %673
        %675 = vrot.lane.b32.xlu0 %v662, 43
        %v676 = vpop.permute.xlu0 %675
        %677 = vrot.lane.b32.xlu0 %v663, 43
        %v678 = vpop.permute.xlu0 %677
        %684 = vst.msk [vmem:[%s653] sm:$0xff] %vm212, %v670
        %685 = vst.msk [vmem:[%s653 + $0x8] sm:$0xff] %vm212, %v672
        %686 = vst.msk [vmem:[%s653 + $0x10] sm:$0xff] %vm212, %v674
        %687 = vst.msk [vmem:[%s653 + $0x18] sm:$0xff] %vm212, %v676
        %688 = vst.msk [vmem:[%s653 + $0x20] sm:$0x1] %vm217, %v678
        %v689 = vld [vmem:[%s463] sm:$0xff]
        %v690 = vld [vmem:[%s463 + $0x8] sm:$0xff]
        %v691 = vld [vmem:[%s463 + $0x10] sm:$0xff]
        %v692 = vld [vmem:[%s463 + $0x18] sm:$0xff]
        %v693 = vld [vmem:[%s463 + $0x20] sm:$0x1]
        %699 = vrot.lane.b32.xlu0 %v689, 124
        %v700 = vpop.permute.xlu0 %699
        %701 = vrot.lane.b32.xlu0 %v690, 124
        %v702 = vpop.permute.xlu0 %701
        %703 = vrot.lane.b32.xlu0 %v691, 124
        %v704 = vpop.permute.xlu0 %703
        %705 = vrot.lane.b32.xlu0 %v692, 124
        %v706 = vpop.permute.xlu0 %705
        %707 = vrot.lane.b32.xlu0 %v693, 124
        %v708 = vpop.permute.xlu0 %707
        %s714 = scalar_lea.vmem [#allocation2], 360
        %715 = vst.msk [vmem:[%s714] sm:$0xff] %vm179, %v700
        %716 = vst.msk [vmem:[%s714 + $0x8] sm:$0xff] %vm179, %v702
        %717 = vst.msk [vmem:[%s714 + $0x10] sm:$0xff] %vm179, %v704
        %718 = vst.msk [vmem:[%s714 + $0x18] sm:$0xff] %vm179, %v706
        %719 = vst.msk [vmem:[%s714 + $0x20] sm:$0x1] %vm184, %v708
        %v720 = vld [vmem:[%s475] sm:$0xff]
        %v721 = vld [vmem:[%s475 + $0x8] sm:$0xff]
        %v722 = vld [vmem:[%s475 + $0x10] sm:$0xff]
        %v723 = vld [vmem:[%s475 + $0x18] sm:$0xff]
        %v724 = vld [vmem:[%s475 + $0x20] sm:$0x1]
        %730 = vrot.lane.b32.xlu0 %v720, 42
        %v731 = vpop.permute.xlu0 %730
        %732 = vrot.lane.b32.xlu0 %v721, 42
        %v733 = vpop.permute.xlu0 %732
        %734 = vrot.lane.b32.xlu0 %v722, 42
        %v735 = vpop.permute.xlu0 %734
        %736 = vrot.lane.b32.xlu0 %v723, 42
        %v737 = vpop.permute.xlu0 %736
        %738 = vrot.lane.b32.xlu0 %v724, 42
        %v739 = vpop.permute.xlu0 %738
        %745 = vst.msk [vmem:[%s714] sm:$0xff] %vm212, %v731
        %746 = vst.msk [vmem:[%s714 + $0x8] sm:$0xff] %vm212, %v733
        %747 = vst.msk [vmem:[%s714 + $0x10] sm:$0xff] %vm212, %v735
        %748 = vst.msk [vmem:[%s714 + $0x18] sm:$0xff] %vm212, %v737
        %749 = vst.msk [vmem:[%s714 + $0x20] sm:$0x1] %vm217, %v739
        %s750 = scalar_lea.vmem %s169, 80
        %v751 = vld [vmem:[%s750] sm:$0xff]
        %v752 = vld [vmem:[%s750 + $0x8] sm:$0xff]
        %v753 = vld [vmem:[%s750 + $0x10] sm:$0xff]
        %v754 = vld [vmem:[%s750 + $0x18] sm:$0xff]
        %v755 = vld [vmem:[%s750 + $0x20] sm:$0x1]
        %s756 = scalar_lea.vmem [#allocation2], 400
        %757 = vst.msk [vmem:[%s756] sm:$0xff] %vm179, %v751
        %758 = vst.msk [vmem:[%s756 + $0x8] sm:$0xff] %vm179, %v752
        %759 = vst.msk [vmem:[%s756 + $0x10] sm:$0xff] %vm179, %v753
        %760 = vst.msk [vmem:[%s756 + $0x18] sm:$0xff] %vm179, %v754
        %761 = vst.msk [vmem:[%s756 + $0x20] sm:$0x1] %vm184, %v755
        %s762 = scalar_lea.vmem %s169, 240
        %v763 = vld [vmem:[%s762] sm:$0xff]
        %v764 = vld [vmem:[%s762 + $0x8] sm:$0xff]
        %v765 = vld [vmem:[%s762 + $0x10] sm:$0xff]
        %v766 = vld [vmem:[%s762 + $0x18] sm:$0xff]
        %v767 = vld [vmem:[%s762 + $0x20] sm:$0x1]
        %773 = vrot.lane.b32.xlu0 %v763, 46
        %v774 = vpop.permute.xlu0 %773
        %775 = vrot.lane.b32.xlu0 %v764, 46
        %v776 = vpop.permute.xlu0 %775
        %777 = vrot.lane.b32.xlu0 %v765, 46
        %v778 = vpop.permute.xlu0 %777
        %779 = vrot.lane.b32.xlu0 %v766, 46
        %v780 = vpop.permute.xlu0 %779
        %781 = vrot.lane.b32.xlu0 %v767, 46
        %v782 = vpop.permute.xlu0 %781
        %788 = vst.msk [vmem:[%s756] sm:$0xff] %vm212, %v774
        %789 = vst.msk [vmem:[%s756 + $0x8] sm:$0xff] %vm212, %v776
        %790 = vst.msk [vmem:[%s756 + $0x10] sm:$0xff] %vm212, %v778
        %791 = vst.msk [vmem:[%s756 + $0x18] sm:$0xff] %vm212, %v780
        %792 = vst.msk [vmem:[%s756 + $0x20] sm:$0x1] %vm217, %v782
        %v793 = vld [vmem:[%s750] sm:$0xff]
        %v794 = vld [vmem:[%s750 + $0x8] sm:$0xff]
        %v795 = vld [vmem:[%s750 + $0x10] sm:$0xff]
        %v796 = vld [vmem:[%s750 + $0x18] sm:$0xff]
        %v797 = vld [vmem:[%s750 + $0x20] sm:$0x1]
        %803 = vrot.lane.b32.xlu0 %v793, 127
        %v804 = vpop.permute.xlu0 %803
        %805 = vrot.lane.b32.xlu0 %v794, 127
        %v806 = vpop.permute.xlu0 %805
        %807 = vrot.lane.b32.xlu0 %v795, 127
        %v808 = vpop.permute.xlu0 %807
        %809 = vrot.lane.b32.xlu0 %v796, 127
        %v810 = vpop.permute.xlu0 %809
        %811 = vrot.lane.b32.xlu0 %v797, 127
        %v812 = vpop.permute.xlu0 %811
        %s818 = scalar_lea.vmem [#allocation2], 440
        %819 = vst.msk [vmem:[%s818] sm:$0xff] %vm179, %v804
        %820 = vst.msk [vmem:[%s818 + $0x8] sm:$0xff] %vm179, %v806
        %821 = vst.msk [vmem:[%s818 + $0x10] sm:$0xff] %vm179, %v808
        %822 = vst.msk [vmem:[%s818 + $0x18] sm:$0xff] %vm179, %v810
        %823 = vst.msk [vmem:[%s818 + $0x20] sm:$0x1] %vm184, %v812
        %v824 = vld [vmem:[%s762] sm:$0xff]
        %v825 = vld [vmem:[%s762 + $0x8] sm:$0xff]
        %v826 = vld [vmem:[%s762 + $0x10] sm:$0xff]
        %v827 = vld [vmem:[%s762 + $0x18] sm:$0xff]
        %v828 = vld [vmem:[%s762 + $0x20] sm:$0x1]
        %834 = vrot.lane.b32.xlu0 %v824, 45
        %v835 = vpop.permute.xlu0 %834
        %836 = vrot.lane.b32.xlu0 %v825, 45
        %v837 = vpop.permute.xlu0 %836
        %838 = vrot.lane.b32.xlu0 %v826, 45
        %v839 = vpop.permute.xlu0 %838
        %840 = vrot.lane.b32.xlu0 %v827, 45
        %v841 = vpop.permute.xlu0 %840
        %842 = vrot.lane.b32.xlu0 %v828, 45
        %v843 = vpop.permute.xlu0 %842
        %849 = vst.msk [vmem:[%s818] sm:$0xff] %vm212, %v835
        %850 = vst.msk [vmem:[%s818 + $0x8] sm:$0xff] %vm212, %v837
        %851 = vst.msk [vmem:[%s818 + $0x10] sm:$0xff] %vm212, %v839
        %852 = vst.msk [vmem:[%s818 + $0x18] sm:$0xff] %vm212, %v841
        %853 = vst.msk [vmem:[%s818 + $0x20] sm:$0x1] %vm217, %v843
        %v854 = vld [vmem:[%s750] sm:$0xff]
        %v855 = vld [vmem:[%s750 + $0x8] sm:$0xff]
        %v856 = vld [vmem:[%s750 + $0x10] sm:$0xff]
        %v857 = vld [vmem:[%s750 + $0x18] sm:$0xff]
        %v858 = vld [vmem:[%s750 + $0x20] sm:$0x1]
        %864 = vrot.lane.b32.xlu0 %v854, 126
        %v865 = vpop.permute.xlu0 %864
        %866 = vrot.lane.b32.xlu0 %v855, 126
        %v867 = vpop.permute.xlu0 %866
        %868 = vrot.lane.b32.xlu0 %v856, 126
        %v869 = vpop.permute.xlu0 %868
        %870 = vrot.lane.b32.xlu0 %v857, 126
        %v871 = vpop.permute.xlu0 %870
        %872 = vrot.lane.b32.xlu0 %v858, 126
        %v873 = vpop.permute.xlu0 %872
        %s879 = scalar_lea.vmem [#allocation2], 480
        %880 = vst.msk [vmem:[%s879] sm:$0xff] %vm179, %v865
        %881 = vst.msk [vmem:[%s879 + $0x8] sm:$0xff] %vm179, %v867
        %882 = vst.msk [vmem:[%s879 + $0x10] sm:$0xff] %vm179, %v869
        %883 = vst.msk [vmem:[%s879 + $0x18] sm:$0xff] %vm179, %v871
        %884 = vst.msk [vmem:[%s879 + $0x20] sm:$0x1] %vm184, %v873
        %v885 = vld [vmem:[%s762] sm:$0xff]
        %v886 = vld [vmem:[%s762 + $0x8] sm:$0xff]
        %v887 = vld [vmem:[%s762 + $0x10] sm:$0xff]
        %v888 = vld [vmem:[%s762 + $0x18] sm:$0xff]
        %v889 = vld [vmem:[%s762 + $0x20] sm:$0x1]
        %895 = vrot.lane.b32.xlu0 %v885, 44
        %v896 = vpop.permute.xlu0 %895
        %897 = vrot.lane.b32.xlu0 %v886, 44
        %v898 = vpop.permute.xlu0 %897
        %899 = vrot.lane.b32.xlu0 %v887, 44
        %v900 = vpop.permute.xlu0 %899
        %901 = vrot.lane.b32.xlu0 %v888, 44
        %v902 = vpop.permute.xlu0 %901
        %903 = vrot.lane.b32.xlu0 %v889, 44
        %v904 = vpop.permute.xlu0 %903
        %910 = vst.msk [vmem:[%s879] sm:$0xff] %vm212, %v896
        %911 = vst.msk [vmem:[%s879 + $0x8] sm:$0xff] %vm212, %v898
        %912 = vst.msk [vmem:[%s879 + $0x10] sm:$0xff] %vm212, %v900
        %913 = vst.msk [vmem:[%s879 + $0x18] sm:$0xff] %vm212, %v902
        %914 = vst.msk [vmem:[%s879 + $0x20] sm:$0x1] %vm217, %v904
        %v915 = vld [vmem:[%s750] sm:$0xff]
        %v916 = vld [vmem:[%s750 + $0x8] sm:$0xff]
        %v917 = vld [vmem:[%s750 + $0x10] sm:$0xff]
        %v918 = vld [vmem:[%s750 + $0x18] sm:$0xff]
        %v919 = vld [vmem:[%s750 + $0x20] sm:$0x1]
        %925 = vrot.lane.b32.xlu0 %v915, 125
        %v926 = vpop.permute.xlu0 %925
        %927 = vrot.lane.b32.xlu0 %v916, 125
        %v928 = vpop.permute.xlu0 %927
        %929 = vrot.lane.b32.xlu0 %v917, 125
        %v930 = vpop.permute.xlu0 %929
        %931 = vrot.lane.b32.xlu0 %v918, 125
        %v932 = vpop.permute.xlu0 %931
        %933 = vrot.lane.b32.xlu0 %v919, 125
        %v934 = vpop.permute.xlu0 %933
        %s940 = scalar_lea.vmem [#allocation2], 520
        %941 = vst.msk [vmem:[%s940] sm:$0xff] %vm179, %v926
        %942 = vst.msk [vmem:[%s940 + $0x8] sm:$0xff] %vm179, %v928
        %943 = vst.msk [vmem:[%s940 + $0x10] sm:$0xff] %vm179, %v930
        %944 = vst.msk [vmem:[%s940 + $0x18] sm:$0xff] %vm179, %v932
        %945 = vst.msk [vmem:[%s940 + $0x20] sm:$0x1] %vm184, %v934
        %v946 = vld [vmem:[%s762] sm:$0xff]
        %v947 = vld [vmem:[%s762 + $0x8] sm:$0xff]
        %v948 = vld [vmem:[%s762 + $0x10] sm:$0xff]
        %v949 = vld [vmem:[%s762 + $0x18] sm:$0xff]
        %v950 = vld [vmem:[%s762 + $0x20] sm:$0x1]
        %956 = vrot.lane.b32.xlu0 %v946, 43
        %v957 = vpop.permute.xlu0 %956
        %958 = vrot.lane.b32.xlu0 %v947, 43
        %v959 = vpop.permute.xlu0 %958
        %960 = vrot.lane.b32.xlu0 %v948, 43
        %v961 = vpop.permute.xlu0 %960
        %962 = vrot.lane.b32.xlu0 %v949, 43
        %v963 = vpop.permute.xlu0 %962
        %964 = vrot.lane.b32.xlu0 %v950, 43
        %v965 = vpop.permute.xlu0 %964
        %971 = vst.msk [vmem:[%s940] sm:$0xff] %vm212, %v957
        %972 = vst.msk [vmem:[%s940 + $0x8] sm:$0xff] %vm212, %v959
        %973 = vst.msk [vmem:[%s940 + $0x10] sm:$0xff] %vm212, %v961
        %974 = vst.msk [vmem:[%s940 + $0x18] sm:$0xff] %vm212, %v963
        %975 = vst.msk [vmem:[%s940 + $0x20] sm:$0x1] %vm217, %v965
        %v976 = vld [vmem:[%s750] sm:$0xff]
        %v977 = vld [vmem:[%s750 + $0x8] sm:$0xff]
        %v978 = vld [vmem:[%s750 + $0x10] sm:$0xff]
        %v979 = vld [vmem:[%s750 + $0x18] sm:$0xff]
        %v980 = vld [vmem:[%s750 + $0x20] sm:$0x1]
        %986 = vrot.lane.b32.xlu0 %v976, 124
        %v987 = vpop.permute.xlu0 %986
        %988 = vrot.lane.b32.xlu0 %v977, 124
        %v989 = vpop.permute.xlu0 %988
        %990 = vrot.lane.b32.xlu0 %v978, 124
        %v991 = vpop.permute.xlu0 %990
        %992 = vrot.lane.b32.xlu0 %v979, 124
        %v993 = vpop.permute.xlu0 %992
        %994 = vrot.lane.b32.xlu0 %v980, 124
        %v995 = vpop.permute.xlu0 %994
        %s1001 = scalar_lea.vmem [#allocation2], 560
        %1002 = vst.msk [vmem:[%s1001] sm:$0xff] %vm179, %v987
        %1003 = vst.msk [vmem:[%s1001 + $0x8] sm:$0xff] %vm179, %v989
        %1004 = vst.msk [vmem:[%s1001 + $0x10] sm:$0xff] %vm179, %v991
        %1005 = vst.msk [vmem:[%s1001 + $0x18] sm:$0xff] %vm179, %v993
        %1006 = vst.msk [vmem:[%s1001 + $0x20] sm:$0x1] %vm184, %v995
        %v1007 = vld [vmem:[%s762] sm:$0xff]
        %v1008 = vld [vmem:[%s762 + $0x8] sm:$0xff]
        %v1009 = vld [vmem:[%s762 + $0x10] sm:$0xff]
        %v1010 = vld [vmem:[%s762 + $0x18] sm:$0xff]
        %v1011 = vld [vmem:[%s762 + $0x20] sm:$0x1]
        %1017 = vrot.lane.b32.xlu0 %v1007, 42
        %v1018 = vpop.permute.xlu0 %1017
        %1019 = vrot.lane.b32.xlu0 %v1008, 42
        %v1020 = vpop.permute.xlu0 %1019
        %1021 = vrot.lane.b32.xlu0 %v1009, 42
        %v1022 = vpop.permute.xlu0 %1021
        %1023 = vrot.lane.b32.xlu0 %v1010, 42
        %v1024 = vpop.permute.xlu0 %1023
        %1025 = vrot.lane.b32.xlu0 %v1011, 42
        %v1026 = vpop.permute.xlu0 %1025
        %1032 = vst.msk [vmem:[%s1001] sm:$0xff] %vm212, %v1018
        %1033 = vst.msk [vmem:[%s1001 + $0x8] sm:$0xff] %vm212, %v1020
        %1034 = vst.msk [vmem:[%s1001 + $0x10] sm:$0xff] %vm212, %v1022
        %1035 = vst.msk [vmem:[%s1001 + $0x18] sm:$0xff] %vm212, %v1024
        %1036 = vst.msk [vmem:[%s1001 + $0x20] sm:$0x1] %vm217, %v1026
        %s1037 = scalar_lea.vmem %s169, 120
        %v1038 = vld [vmem:[%s1037] sm:$0xff]
        %v1039 = vld [vmem:[%s1037 + $0x8] sm:$0xff]
        %v1040 = vld [vmem:[%s1037 + $0x10] sm:$0xff]
        %v1041 = vld [vmem:[%s1037 + $0x18] sm:$0xff]
        %v1042 = vld [vmem:[%s1037 + $0x20] sm:$0x1]
        %s1043 = scalar_lea.vmem [#allocation2], 600
        %1044 = vst.msk [vmem:[%s1043] sm:$0xff] %vm179, %v1038
        %1045 = vst.msk [vmem:[%s1043 + $0x8] sm:$0xff] %vm179, %v1039
        %1046 = vst.msk [vmem:[%s1043 + $0x10] sm:$0xff] %vm179, %v1040
        %1047 = vst.msk [vmem:[%s1043 + $0x18] sm:$0xff] %vm179, %v1041
        %1048 = vst.msk [vmem:[%s1043 + $0x20] sm:$0x1] %vm184, %v1042
        %s1049 = scalar_lea.vmem %s169, 280
        %v1050 = vld [vmem:[%s1049] sm:$0xff]
        %v1051 = vld [vmem:[%s1049 + $0x8] sm:$0xff]
        %v1052 = vld [vmem:[%s1049 + $0x10] sm:$0xff]
        %v1053 = vld [vmem:[%s1049 + $0x18] sm:$0xff]
        %v1054 = vld [vmem:[%s1049 + $0x20] sm:$0x1]
        %1060 = vrot.lane.b32.xlu0 %v1050, 46
        %v1061 = vpop.permute.xlu0 %1060
        %1062 = vrot.lane.b32.xlu0 %v1051, 46
        %v1063 = vpop.permute.xlu0 %1062
        %1064 = vrot.lane.b32.xlu0 %v1052, 46
        %v1065 = vpop.permute.xlu0 %1064
        %1066 = vrot.lane.b32.xlu0 %v1053, 46
        %v1067 = vpop.permute.xlu0 %1066
        %1068 = vrot.lane.b32.xlu0 %v1054, 46
        %v1069 = vpop.permute.xlu0 %1068
        %1075 = vst.msk [vmem:[%s1043] sm:$0xff] %vm212, %v1061
        %1076 = vst.msk [vmem:[%s1043 + $0x8] sm:$0xff] %vm212, %v1063
        %1077 = vst.msk [vmem:[%s1043 + $0x10] sm:$0xff] %vm212, %v1065
        %1078 = vst.msk [vmem:[%s1043 + $0x18] sm:$0xff] %vm212, %v1067
        %1079 = vst.msk [vmem:[%s1043 + $0x20] sm:$0x1] %vm217, %v1069
        %v1080 = vld [vmem:[%s1037] sm:$0xff]
        %v1081 = vld [vmem:[%s1037 + $0x8] sm:$0xff]
        %v1082 = vld [vmem:[%s1037 + $0x10] sm:$0xff]
        %v1083 = vld [vmem:[%s1037 + $0x18] sm:$0xff]
        %v1084 = vld [vmem:[%s1037 + $0x20] sm:$0x1]
        %1090 = vrot.lane.b32.xlu0 %v1080, 127
        %v1091 = vpop.permute.xlu0 %1090
        %1092 = vrot.lane.b32.xlu0 %v1081, 127
        %v1093 = vpop.permute.xlu0 %1092
        %1094 = vrot.lane.b32.xlu0 %v1082, 127
        %v1095 = vpop.permute.xlu0 %1094
        %1096 = vrot.lane.b32.xlu0 %v1083, 127
        %v1097 = vpop.permute.xlu0 %1096
        %1098 = vrot.lane.b32.xlu0 %v1084, 127
        %v1099 = vpop.permute.xlu0 %1098
        %s1105 = scalar_lea.vmem [#allocation2], 640
        %1106 = vst.msk [vmem:[%s1105] sm:$0xff] %vm179, %v1091
        %1107 = vst.msk [vmem:[%s1105 + $0x8] sm:$0xff] %vm179, %v1093
        %1108 = vst.msk [vmem:[%s1105 + $0x10] sm:$0xff] %vm179, %v1095
        %1109 = vst.msk [vmem:[%s1105 + $0x18] sm:$0xff] %vm179, %v1097
        %1110 = vst.msk [vmem:[%s1105 + $0x20] sm:$0x1] %vm184, %v1099
        %v1111 = vld [vmem:[%s1049] sm:$0xff]
        %v1112 = vld [vmem:[%s1049 + $0x8] sm:$0xff]
        %v1113 = vld [vmem:[%s1049 + $0x10] sm:$0xff]
        %v1114 = vld [vmem:[%s1049 + $0x18] sm:$0xff]
        %v1115 = vld [vmem:[%s1049 + $0x20] sm:$0x1]
        %1121 = vrot.lane.b32.xlu0 %v1111, 45
        %v1122 = vpop.permute.xlu0 %1121
        %1123 = vrot.lane.b32.xlu0 %v1112, 45
        %v1124 = vpop.permute.xlu0 %1123
        %1125 = vrot.lane.b32.xlu0 %v1113, 45
        %v1126 = vpop.permute.xlu0 %1125
        %1127 = vrot.lane.b32.xlu0 %v1114, 45
        %v1128 = vpop.permute.xlu0 %1127
        %1129 = vrot.lane.b32.xlu0 %v1115, 45
        %v1130 = vpop.permute.xlu0 %1129
        %1136 = vst.msk [vmem:[%s1105] sm:$0xff] %vm212, %v1122
        %1137 = vst.msk [vmem:[%s1105 + $0x8] sm:$0xff] %vm212, %v1124
        %1138 = vst.msk [vmem:[%s1105 + $0x10] sm:$0xff] %vm212, %v1126
        %1139 = vst.msk [vmem:[%s1105 + $0x18] sm:$0xff] %vm212, %v1128
        %1140 = vst.msk [vmem:[%s1105 + $0x20] sm:$0x1] %vm217, %v1130
        %v1141 = vld [vmem:[%s1037] sm:$0xff]
        %v1142 = vld [vmem:[%s1037 + $0x8] sm:$0xff]
        %v1143 = vld [vmem:[%s1037 + $0x10] sm:$0xff]
        %v1144 = vld [vmem:[%s1037 + $0x18] sm:$0xff]
        %v1145 = vld [vmem:[%s1037 + $0x20] sm:$0x1]
        %1151 = vrot.lane.b32.xlu0 %v1141, 126
        %v1152 = vpop.permute.xlu0 %1151
        %1153 = vrot.lane.b32.xlu0 %v1142, 126
        %v1154 = vpop.permute.xlu0 %1153
        %1155 = vrot.lane.b32.xlu0 %v1143, 126
        %v1156 = vpop.permute.xlu0 %1155
        %1157 = vrot.lane.b32.xlu0 %v1144, 126
        %v1158 = vpop.permute.xlu0 %1157
        %1159 = vrot.lane.b32.xlu0 %v1145, 126
        %v1160 = vpop.permute.xlu0 %1159
        %s1166 = scalar_lea.vmem [#allocation2], 680
        %1167 = vst.msk [vmem:[%s1166] sm:$0xff] %vm179, %v1152
        %1168 = vst.msk [vmem:[%s1166 + $0x8] sm:$0xff] %vm179, %v1154
        %1169 = vst.msk [vmem:[%s1166 + $0x10] sm:$0xff] %vm179, %v1156
        %1170 = vst.msk [vmem:[%s1166 + $0x18] sm:$0xff] %vm179, %v1158
        %1171 = vst.msk [vmem:[%s1166 + $0x20] sm:$0x1] %vm184, %v1160
        %v1172 = vld [vmem:[%s1049] sm:$0xff]
        %v1173 = vld [vmem:[%s1049 + $0x8] sm:$0xff]
        %v1174 = vld [vmem:[%s1049 + $0x10] sm:$0xff]
        %v1175 = vld [vmem:[%s1049 + $0x18] sm:$0xff]
        %v1176 = vld [vmem:[%s1049 + $0x20] sm:$0x1]
        %1182 = vrot.lane.b32.xlu0 %v1172, 44
        %v1183 = vpop.permute.xlu0 %1182
        %1184 = vrot.lane.b32.xlu0 %v1173, 44
        %v1185 = vpop.permute.xlu0 %1184
        %1186 = vrot.lane.b32.xlu0 %v1174, 44
        %v1187 = vpop.permute.xlu0 %1186
        %1188 = vrot.lane.b32.xlu0 %v1175, 44
        %v1189 = vpop.permute.xlu0 %1188
        %1190 = vrot.lane.b32.xlu0 %v1176, 44
        %v1191 = vpop.permute.xlu0 %1190
        %1197 = vst.msk [vmem:[%s1166] sm:$0xff] %vm212, %v1183
        %1198 = vst.msk [vmem:[%s1166 + $0x8] sm:$0xff] %vm212, %v1185
        %1199 = vst.msk [vmem:[%s1166 + $0x10] sm:$0xff] %vm212, %v1187
        %1200 = vst.msk [vmem:[%s1166 + $0x18] sm:$0xff] %vm212, %v1189
        %1201 = vst.msk [vmem:[%s1166 + $0x20] sm:$0x1] %vm217, %v1191
        %v1202 = vld [vmem:[%s1037] sm:$0xff]
        %v1203 = vld [vmem:[%s1037 + $0x8] sm:$0xff]
        %v1204 = vld [vmem:[%s1037 + $0x10] sm:$0xff]
        %v1205 = vld [vmem:[%s1037 + $0x18] sm:$0xff]
        %v1206 = vld [vmem:[%s1037 + $0x20] sm:$0x1]
        %1212 = vrot.lane.b32.xlu0 %v1202, 125
        %v1213 = vpop.permute.xlu0 %1212
        %1214 = vrot.lane.b32.xlu0 %v1203, 125
        %v1215 = vpop.permute.xlu0 %1214
        %1216 = vrot.lane.b32.xlu0 %v1204, 125
        %v1217 = vpop.permute.xlu0 %1216
        %1218 = vrot.lane.b32.xlu0 %v1205, 125
        %v1219 = vpop.permute.xlu0 %1218
        %1220 = vrot.lane.b32.xlu0 %v1206, 125
        %v1221 = vpop.permute.xlu0 %1220
        %s1227 = scalar_lea.vmem [#allocation2], 720
        %1228 = vst.msk [vmem:[%s1227] sm:$0xff] %vm179, %v1213
        %1229 = vst.msk [vmem:[%s1227 + $0x8] sm:$0xff] %vm179, %v1215
        %1230 = vst.msk [vmem:[%s1227 + $0x10] sm:$0xff] %vm179, %v1217
        %1231 = vst.msk [vmem:[%s1227 + $0x18] sm:$0xff] %vm179, %v1219
        %1232 = vst.msk [vmem:[%s1227 + $0x20] sm:$0x1] %vm184, %v1221
        %v1233 = vld [vmem:[%s1049] sm:$0xff]
        %v1234 = vld [vmem:[%s1049 + $0x8] sm:$0xff]
        %v1235 = vld [vmem:[%s1049 + $0x10] sm:$0xff]
        %v1236 = vld [vmem:[%s1049 + $0x18] sm:$0xff]
        %v1237 = vld [vmem:[%s1049 + $0x20] sm:$0x1]
        %1243 = vrot.lane.b32.xlu0 %v1233, 43
        %v1244 = vpop.permute.xlu0 %1243
        %1245 = vrot.lane.b32.xlu0 %v1234, 43
        %v1246 = vpop.permute.xlu0 %1245
        %1247 = vrot.lane.b32.xlu0 %v1235, 43
        %v1248 = vpop.permute.xlu0 %1247
        %1249 = vrot.lane.b32.xlu0 %v1236, 43
        %v1250 = vpop.permute.xlu0 %1249
        %1251 = vrot.lane.b32.xlu0 %v1237, 43
        %v1252 = vpop.permute.xlu0 %1251
        %1258 = vst.msk [vmem:[%s1227] sm:$0xff] %vm212, %v1244
        %1259 = vst.msk [vmem:[%s1227 + $0x8] sm:$0xff] %vm212, %v1246
        %1260 = vst.msk [vmem:[%s1227 + $0x10] sm:$0xff] %vm212, %v1248
        %1261 = vst.msk [vmem:[%s1227 + $0x18] sm:$0xff] %vm212, %v1250
        %1262 = vst.msk [vmem:[%s1227 + $0x20] sm:$0x1] %vm217, %v1252
        %v1263 = vld [vmem:[%s1037] sm:$0xff]
        %v1264 = vld [vmem:[%s1037 + $0x8] sm:$0xff]
        %v1265 = vld [vmem:[%s1037 + $0x10] sm:$0xff]
        %v1266 = vld [vmem:[%s1037 + $0x18] sm:$0xff]
        %v1267 = vld [vmem:[%s1037 + $0x20] sm:$0x1]
        %1273 = vrot.lane.b32.xlu0 %v1263, 124
        %v1274 = vpop.permute.xlu0 %1273
        %1275 = vrot.lane.b32.xlu0 %v1264, 124
        %v1276 = vpop.permute.xlu0 %1275
        %1277 = vrot.lane.b32.xlu0 %v1265, 124
        %v1278 = vpop.permute.xlu0 %1277
        %1279 = vrot.lane.b32.xlu0 %v1266, 124
        %v1280 = vpop.permute.xlu0 %1279
        %1281 = vrot.lane.b32.xlu0 %v1267, 124
        %v1282 = vpop.permute.xlu0 %1281
        %s1288 = scalar_lea.vmem [#allocation2], 760
        %1289 = vst.msk [vmem:[%s1288] sm:$0xff] %vm179, %v1274
        %1290 = vst.msk [vmem:[%s1288 + $0x8] sm:$0xff] %vm179, %v1276
        %1291 = vst.msk [vmem:[%s1288 + $0x10] sm:$0xff] %vm179, %v1278
        %1292 = vst.msk [vmem:[%s1288 + $0x18] sm:$0xff] %vm179, %v1280
        %1293 = vst.msk [vmem:[%s1288 + $0x20] sm:$0x1] %vm184, %v1282
        %v1294 = vld [vmem:[%s1049] sm:$0xff]
        %v1295 = vld [vmem:[%s1049 + $0x8] sm:$0xff]
        %v1296 = vld [vmem:[%s1049 + $0x10] sm:$0xff]
        %v1297 = vld [vmem:[%s1049 + $0x18] sm:$0xff]
        %v1298 = vld [vmem:[%s1049 + $0x20] sm:$0x1]
        %1304 = vrot.lane.b32.xlu0 %v1294, 42
        %v1305 = vpop.permute.xlu0 %1304
        %1306 = vrot.lane.b32.xlu0 %v1295, 42
        %v1307 = vpop.permute.xlu0 %1306
        %1308 = vrot.lane.b32.xlu0 %v1296, 42
        %v1309 = vpop.permute.xlu0 %1308
        %1310 = vrot.lane.b32.xlu0 %v1297, 42
        %v1311 = vpop.permute.xlu0 %1310
        %1312 = vrot.lane.b32.xlu0 %v1298, 42
        %v1313 = vpop.permute.xlu0 %1312
        %1319 = vst.msk [vmem:[%s1288] sm:$0xff] %vm212, %v1305
        %1320 = vst.msk [vmem:[%s1288 + $0x8] sm:$0xff] %vm212, %v1307
        %1321 = vst.msk [vmem:[%s1288 + $0x10] sm:$0xff] %vm212, %v1309
        %1322 = vst.msk [vmem:[%s1288 + $0x18] sm:$0xff] %vm212, %v1311
        %1323 = vst.msk [vmem:[%s1288 + $0x20] sm:$0x1] %vm217, %v1313
        %v1324 = vld [vmem:[#allocation2] sm:$0xff]
        %v1325 = vld [vmem:[#allocation2 + $0x8] sm:$0xff]
        %v1326 = vld [vmem:[#allocation2 + $0x10] sm:$0xff]
        %v1327 = vld [vmem:[#allocation2 + $0x18] sm:$0x7f]
        %s1328 = sld [smem:[#allocation3 + %s173]]
        %v1329 = vstv %s1328
        %v1330 = vmul.f32 %v1329, %v1324
        %v1331 = vmul.f32 %v1329, %v1325
        %v1332 = vmul.f32 %v1329, %v1326
        %v1333 = vmul.f32 %v1329, %v1327
        %v1334 = vadd.f32 %v1330, 0.0
        %v1335 = vadd.f32 %v1331, 0.0
        %v1336 = vadd.f32 %v1332, 0.0
        %v1337 = vadd.f32 %v1333, 0.0
        %s1338 = sadd.s32 %s173, 1
        %s1339 = sld [smem:[#allocation3 + %s1338]]
        %v1340 = vstv %s1339
        %v1341 = vmul.f32 %v1340, %v1324
        %v1342 = vmul.f32 %v1340, %v1325
        %v1343 = vmul.f32 %v1340, %v1326
        %v1344 = vmul.f32 %v1340, %v1327
        %v1345 = vadd.f32 %v1341, 0.0
        %v1346 = vadd.f32 %v1342, 0.0
        %v1347 = vadd.f32 %v1343, 0.0
        %v1348 = vadd.f32 %v1344, 0.0
        %s1349 = sadd.s32 %s173, 2
        %s1350 = sld [smem:[#allocation3 + %s1349]]
        %v1351 = vstv %s1350
        %v1352 = vmul.f32 %v1351, %v1324
        %v1353 = vmul.f32 %v1351, %v1325
        %v1354 = vmul.f32 %v1351, %v1326
        %v1355 = vmul.f32 %v1351, %v1327
        %v1356 = vadd.f32 %v1352, 0.0
        %v1357 = vadd.f32 %v1353, 0.0
        %v1358 = vadd.f32 %v1354, 0.0
        %v1359 = vadd.f32 %v1355, 0.0
        %s1360 = sadd.s32 %s173, 3
        %s1361 = sld [smem:[#allocation3 + %s1360]]
        %v1362 = vstv %s1361
        %v1363 = vmul.f32 %v1362, %v1324
        %v1364 = vmul.f32 %v1362, %v1325
        %v1365 = vmul.f32 %v1362, %v1326
        %v1366 = vmul.f32 %v1362, %v1327
        %v1367 = vadd.f32 %v1363, 0.0
        %v1368 = vadd.f32 %v1364, 0.0
        %v1369 = vadd.f32 %v1365, 0.0
        %v1370 = vadd.f32 %v1366, 0.0
        %v1371 = vld [vmem:[#allocation2 + $0x1] sm:$0xff]
        %v1372 = vld [vmem:[#allocation2 + $0x9] sm:$0xff]
        %v1373 = vld [vmem:[#allocation2 + $0x11] sm:$0xff]
        %v1374 = vld [vmem:[#allocation2 + $0x19] sm:$0x7f]
        %s1375 = sadd.s32 %s173, 160
        %s1376 = sld [smem:[#allocation3 + %s1375]]
        %v1377 = vstv %s1376
        %v1378 = vmul.f32 %v1377, %v1371
        %v1379 = vmul.f32 %v1377, %v1372
        %v1380 = vmul.f32 %v1377, %v1373
        %v1381 = vmul.f32 %v1377, %v1374
        %v1382 = vadd.f32 %v1334, %v1378
        %v1383 = vadd.f32 %v1335, %v1379
        %v1384 = vadd.f32 %v1336, %v1380
        %v1385 = vadd.f32 %v1337, %v1381
        %s1386 = sadd.s32 %s173, 161
        %s1387 = sld [smem:[#allocation3 + %s1386]]
        %v1388 = vstv %s1387
        %v1389 = vmul.f32 %v1388, %v1371
        %v1390 = vmul.f32 %v1388, %v1372
        %v1391 = vmul.f32 %v1388, %v1373
        %v1392 = vmul.f32 %v1388, %v1374
        %v1393 = vadd.f32 %v1345, %v1389
        %v1394 = vadd.f32 %v1346, %v1390
        %v1395 = vadd.f32 %v1347, %v1391
        %v1396 = vadd.f32 %v1348, %v1392
        %s1397 = sadd.s32 %s173, 162
        %s1398 = sld [smem:[#allocation3 + %s1397]]
        %v1399 = vstv %s1398
        %v1400 = vmul.f32 %v1399, %v1371
        %v1401 = vmul.f32 %v1399, %v1372
        %v1402 = vmul.f32 %v1399, %v1373
        %v1403 = vmul.f32 %v1399, %v1374
        %v1404 = vadd.f32 %v1356, %v1400
        %v1405 = vadd.f32 %v1357, %v1401
        %v1406 = vadd.f32 %v1358, %v1402
        %v1407 = vadd.f32 %v1359, %v1403
        %s1408 = sadd.s32 %s173, 163
        %s1409 = sld [smem:[#allocation3 + %s1408]]
        %v1410 = vstv %s1409
        %v1411 = vmul.f32 %v1410, %v1371
        %v1412 = vmul.f32 %v1410, %v1372
        %v1413 = vmul.f32 %v1410, %v1373
        %v1414 = vmul.f32 %v1410, %v1374
        %v1415 = vadd.f32 %v1367, %v1411
        %v1416 = vadd.f32 %v1368, %v1412
        %v1417 = vadd.f32 %v1369, %v1413
        %v1418 = vadd.f32 %v1370, %v1414
        %v1419 = vld [vmem:[#allocation2 + $0x2] sm:$0xff]
        %v1420 = vld [vmem:[#allocation2 + $0xa] sm:$0xff]
        %v1421 = vld [vmem:[#allocation2 + $0x12] sm:$0xff]
        %v1422 = vld [vmem:[#allocation2 + $0x1a] sm:$0x7f]
        %s1423 = sadd.s32 %s173, 320
        %s1424 = sld [smem:[#allocation3 + %s1423]]
        %v1425 = vstv %s1424
        %v1426 = vmul.f32 %v1425, %v1419
        %v1427 = vmul.f32 %v1425, %v1420
        %v1428 = vmul.f32 %v1425, %v1421
        %v1429 = vmul.f32 %v1425, %v1422
        %v1430 = vadd.f32 %v1382, %v1426
        %v1431 = vadd.f32 %v1383, %v1427
        %v1432 = vadd.f32 %v1384, %v1428
        %v1433 = vadd.f32 %v1385, %v1429
        %s1434 = sadd.s32 %s173, 321
        %s1435 = sld [smem:[#allocation3 + %s1434]]
        %v1436 = vstv %s1435
        %v1437 = vmul.f32 %v1436, %v1419
        %v1438 = vmul.f32 %v1436, %v1420
        %v1439 = vmul.f32 %v1436, %v1421
        %v1440 = vmul.f32 %v1436, %v1422
        %v1441 = vadd.f32 %v1393, %v1437
        %v1442 = vadd.f32 %v1394, %v1438
        %v1443 = vadd.f32 %v1395, %v1439
        %v1444 = vadd.f32 %v1396, %v1440
        %s1445 = sadd.s32 %s173, 322
        %s1446 = sld [smem:[#allocation3 + %s1445]]
        %v1447 = vstv %s1446
        %v1448 = vmul.f32 %v1447, %v1419
        %v1449 = vmul.f32 %v1447, %v1420
        %v1450 = vmul.f32 %v1447, %v1421
        %v1451 = vmul.f32 %v1447, %v1422
        %v1452 = vadd.f32 %v1404, %v1448
        %v1453 = vadd.f32 %v1405, %v1449
        %v1454 = vadd.f32 %v1406, %v1450
        %v1455 = vadd.f32 %v1407, %v1451
        %s1456 = sadd.s32 %s173, 323
        %s1457 = sld [smem:[#allocation3 + %s1456]]
        %v1458 = vstv %s1457
        %v1459 = vmul.f32 %v1458, %v1419
        %v1460 = vmul.f32 %v1458, %v1420
        %v1461 = vmul.f32 %v1458, %v1421
        %v1462 = vmul.f32 %v1458, %v1422
        %v1463 = vadd.f32 %v1415, %v1459
        %v1464 = vadd.f32 %v1416, %v1460
        %v1465 = vadd.f32 %v1417, %v1461
        %v1466 = vadd.f32 %v1418, %v1462
        %v1467 = vld [vmem:[%s244] sm:$0xff]
        %v1468 = vld [vmem:[%s244 + $0x8] sm:$0xff]
        %v1469 = vld [vmem:[%s244 + $0x10] sm:$0xff]
        %v1470 = vld [vmem:[%s244 + $0x18] sm:$0x7f]
        %s1471 = sadd.s32 %s173, 32
        %s1472 = sld [smem:[#allocation3 + %s1471]]
        %v1473 = vstv %s1472
        %v1474 = vmul.f32 %v1473, %v1467
        %v1475 = vmul.f32 %v1473, %v1468
        %v1476 = vmul.f32 %v1473, %v1469
        %v1477 = vmul.f32 %v1473, %v1470
        %v1478 = vadd.f32 %v1430, %v1474
        %v1479 = vadd.f32 %v1431, %v1475
        %v1480 = vadd.f32 %v1432, %v1476
        %v1481 = vadd.f32 %v1433, %v1477
        %s1482 = sadd.s32 %s173, 33
        %s1483 = sld [smem:[#allocation3 + %s1482]]
        %v1484 = vstv %s1483
        %v1485 = vmul.f32 %v1484, %v1467
        %v1486 = vmul.f32 %v1484, %v1468
        %v1487 = vmul.f32 %v1484, %v1469
        %v1488 = vmul.f32 %v1484, %v1470
        %v1489 = vadd.f32 %v1441, %v1485
        %v1490 = vadd.f32 %v1442, %v1486
        %v1491 = vadd.f32 %v1443, %v1487
        %v1492 = vadd.f32 %v1444, %v1488
        %s1493 = sadd.s32 %s173, 34
        %s1494 = sld [smem:[#allocation3 + %s1493]]
        %v1495 = vstv %s1494
        %v1496 = vmul.f32 %v1495, %v1467
        %v1497 = vmul.f32 %v1495, %v1468
        %v1498 = vmul.f32 %v1495, %v1469
        %v1499 = vmul.f32 %v1495, %v1470
        %v1500 = vadd.f32 %v1452, %v1496
        %v1501 = vadd.f32 %v1453, %v1497
        %v1502 = vadd.f32 %v1454, %v1498
        %v1503 = vadd.f32 %v1455, %v1499
        %s1504 = sadd.s32 %s173, 35
        %s1505 = sld [smem:[#allocation3 + %s1504]]
        %v1506 = vstv %s1505
        %v1507 = vmul.f32 %v1506, %v1467
        %v1508 = vmul.f32 %v1506, %v1468
        %v1509 = vmul.f32 %v1506, %v1469
        %v1510 = vmul.f32 %v1506, %v1470
        %v1511 = vadd.f32 %v1463, %v1507
        %v1512 = vadd.f32 %v1464, %v1508
        %v1513 = vadd.f32 %v1465, %v1509
        %v1514 = vadd.f32 %v1466, %v1510
        %v1515 = vld [vmem:[%s244 + $0x1] sm:$0xff]
        %v1516 = vld [vmem:[%s244 + $0x9] sm:$0xff]
        %v1517 = vld [vmem:[%s244 + $0x11] sm:$0xff]
        %v1518 = vld [vmem:[%s244 + $0x19] sm:$0x7f]
        %s1519 = sadd.s32 %s173, 192
        %s1520 = sld [smem:[#allocation3 + %s1519]]
        %v1521 = vstv %s1520
        %v1522 = vmul.f32 %v1521, %v1515
        %v1523 = vmul.f32 %v1521, %v1516
        %v1524 = vmul.f32 %v1521, %v1517
        %v1525 = vmul.f32 %v1521, %v1518
        %v1526 = vadd.f32 %v1478, %v1522
        %v1527 = vadd.f32 %v1479, %v1523
        %v1528 = vadd.f32 %v1480, %v1524
        %v1529 = vadd.f32 %v1481, %v1525
        %s1530 = sadd.s32 %s173, 193
        %s1531 = sld [smem:[#allocation3 + %s1530]]
        %v1532 = vstv %s1531
        %v1533 = vmul.f32 %v1532, %v1515
        %v1534 = vmul.f32 %v1532, %v1516
        %v1535 = vmul.f32 %v1532, %v1517
        %v1536 = vmul.f32 %v1532, %v1518
        %v1537 = vadd.f32 %v1489, %v1533
        %v1538 = vadd.f32 %v1490, %v1534
        %v1539 = vadd.f32 %v1491, %v1535
        %v1540 = vadd.f32 %v1492, %v1536
        %s1541 = sadd.s32 %s173, 194
        %s1542 = sld [smem:[#allocation3 + %s1541]]
        %v1543 = vstv %s1542
        %v1544 = vmul.f32 %v1543, %v1515
        %v1545 = vmul.f32 %v1543, %v1516
        %v1546 = vmul.f32 %v1543, %v1517
        %v1547 = vmul.f32 %v1543, %v1518
        %v1548 = vadd.f32 %v1500, %v1544
        %v1549 = vadd.f32 %v1501, %v1545
        %v1550 = vadd.f32 %v1502, %v1546
        %v1551 = vadd.f32 %v1503, %v1547
        %s1552 = sadd.s32 %s173, 195
        %s1553 = sld [smem:[#allocation3 + %s1552]]
        %v1554 = vstv %s1553
        %v1555 = vmul.f32 %v1554, %v1515
        %v1556 = vmul.f32 %v1554, %v1516
        %v1557 = vmul.f32 %v1554, %v1517
        %v1558 = vmul.f32 %v1554, %v1518
        %v1559 = vadd.f32 %v1511, %v1555
        %v1560 = vadd.f32 %v1512, %v1556
        %v1561 = vadd.f32 %v1513, %v1557
        %v1562 = vadd.f32 %v1514, %v1558
        %v1563 = vld [vmem:[%s244 + $0x2] sm:$0xff]
        %v1564 = vld [vmem:[%s244 + $0xa] sm:$0xff]
        %v1565 = vld [vmem:[%s244 + $0x12] sm:$0xff]
        %v1566 = vld [vmem:[%s244 + $0x1a] sm:$0x7f]
        %s1567 = sadd.s32 %s173, 352
        %s1568 = sld [smem:[#allocation3 + %s1567]]
        %v1569 = vstv %s1568
        %v1570 = vmul.f32 %v1569, %v1563
        %v1571 = vmul.f32 %v1569, %v1564
        %v1572 = vmul.f32 %v1569, %v1565
        %v1573 = vmul.f32 %v1569, %v1566
        %v1574 = vadd.f32 %v1526, %v1570
        %v1575 = vadd.f32 %v1527, %v1571
        %v1576 = vadd.f32 %v1528, %v1572
        %v1577 = vadd.f32 %v1529, %v1573
        %s1578 = sadd.s32 %s173, 353
        %s1579 = sld [smem:[#allocation3 + %s1578]]
        %v1580 = vstv %s1579
        %v1581 = vmul.f32 %v1580, %v1563
        %v1582 = vmul.f32 %v1580, %v1564
        %v1583 = vmul.f32 %v1580, %v1565
        %v1584 = vmul.f32 %v1580, %v1566
        %v1585 = vadd.f32 %v1537, %v1581
        %v1586 = vadd.f32 %v1538, %v1582
        %v1587 = vadd.f32 %v1539, %v1583
        %v1588 = vadd.f32 %v1540, %v1584
        %s1589 = sadd.s32 %s173, 354
        %s1590 = sld [smem:[#allocation3 + %s1589]]
        %v1591 = vstv %s1590
        %v1592 = vmul.f32 %v1591, %v1563
        %v1593 = vmul.f32 %v1591, %v1564
        %v1594 = vmul.f32 %v1591, %v1565
        %v1595 = vmul.f32 %v1591, %v1566
        %v1596 = vadd.f32 %v1548, %v1592
        %v1597 = vadd.f32 %v1549, %v1593
        %v1598 = vadd.f32 %v1550, %v1594
        %v1599 = vadd.f32 %v1551, %v1595
        %s1600 = sadd.s32 %s173, 355
        %s1601 = sld [smem:[#allocation3 + %s1600]]
        %v1602 = vstv %s1601
        %v1603 = vmul.f32 %v1602, %v1563
        %v1604 = vmul.f32 %v1602, %v1564
        %v1605 = vmul.f32 %v1602, %v1565
        %v1606 = vmul.f32 %v1602, %v1566
        %v1607 = vadd.f32 %v1559, %v1603
        %v1608 = vadd.f32 %v1560, %v1604
        %v1609 = vadd.f32 %v1561, %v1605
        %v1610 = vadd.f32 %v1562, %v1606
        %v1611 = vld [vmem:[%s305] sm:$0xff]
        %v1612 = vld [vmem:[%s305 + $0x8] sm:$0xff]
        %v1613 = vld [vmem:[%s305 + $0x10] sm:$0xff]
        %v1614 = vld [vmem:[%s305 + $0x18] sm:$0x7f]
        %s1615 = sadd.s32 %s173, 64
        %s1616 = sld [smem:[#allocation3 + %s1615]]
        %v1617 = vstv %s1616
        %v1618 = vmul.f32 %v1617, %v1611
        %v1619 = vmul.f32 %v1617, %v1612
        %v1620 = vmul.f32 %v1617, %v1613
        %v1621 = vmul.f32 %v1617, %v1614
        %v1622 = vadd.f32 %v1574, %v1618
        %v1623 = vadd.f32 %v1575, %v1619
        %v1624 = vadd.f32 %v1576, %v1620
        %v1625 = vadd.f32 %v1577, %v1621
        %s1626 = sadd.s32 %s173, 65
        %s1627 = sld [smem:[#allocation3 + %s1626]]
        %v1628 = vstv %s1627
        %v1629 = vmul.f32 %v1628, %v1611
        %v1630 = vmul.f32 %v1628, %v1612
        %v1631 = vmul.f32 %v1628, %v1613
        %v1632 = vmul.f32 %v1628, %v1614
        %v1633 = vadd.f32 %v1585, %v1629
        %v1634 = vadd.f32 %v1586, %v1630
        %v1635 = vadd.f32 %v1587, %v1631
        %v1636 = vadd.f32 %v1588, %v1632
        %s1637 = sadd.s32 %s173, 66
        %s1638 = sld [smem:[#allocation3 + %s1637]]
        %v1639 = vstv %s1638
        %v1640 = vmul.f32 %v1639, %v1611
        %v1641 = vmul.f32 %v1639, %v1612
        %v1642 = vmul.f32 %v1639, %v1613
        %v1643 = vmul.f32 %v1639, %v1614
        %v1644 = vadd.f32 %v1596, %v1640
        %v1645 = vadd.f32 %v1597, %v1641
        %v1646 = vadd.f32 %v1598, %v1642
        %v1647 = vadd.f32 %v1599, %v1643
        %s1648 = sadd.s32 %s173, 67
        %s1649 = sld [smem:[#allocation3 + %s1648]]
        %v1650 = vstv %s1649
        %v1651 = vmul.f32 %v1650, %v1611
        %v1652 = vmul.f32 %v1650, %v1612
        %v1653 = vmul.f32 %v1650, %v1613
        %v1654 = vmul.f32 %v1650, %v1614
        %v1655 = vadd.f32 %v1607, %v1651
        %v1656 = vadd.f32 %v1608, %v1652
        %v1657 = vadd.f32 %v1609, %v1653
        %v1658 = vadd.f32 %v1610, %v1654
        %v1659 = vld [vmem:[%s305 + $0x1] sm:$0xff]
        %v1660 = vld [vmem:[%s305 + $0x9] sm:$0xff]
        %v1661 = vld [vmem:[%s305 + $0x11] sm:$0xff]
        %v1662 = vld [vmem:[%s305 + $0x19] sm:$0x7f]
        %s1663 = sadd.s32 %s173, 224
        %s1664 = sld [smem:[#allocation3 + %s1663]]
        %v1665 = vstv %s1664
        %v1666 = vmul.f32 %v1665, %v1659
        %v1667 = vmul.f32 %v1665, %v1660
        %v1668 = vmul.f32 %v1665, %v1661
        %v1669 = vmul.f32 %v1665, %v1662
        %v1670 = vadd.f32 %v1622, %v1666
        %v1671 = vadd.f32 %v1623, %v1667
        %v1672 = vadd.f32 %v1624, %v1668
        %v1673 = vadd.f32 %v1625, %v1669
        %s1674 = sadd.s32 %s173, 225
        %s1675 = sld [smem:[#allocation3 + %s1674]]
        %v1676 = vstv %s1675
        %v1677 = vmul.f32 %v1676, %v1659
        %v1678 = vmul.f32 %v1676, %v1660
        %v1679 = vmul.f32 %v1676, %v1661
        %v1680 = vmul.f32 %v1676, %v1662
        %v1681 = vadd.f32 %v1633, %v1677
        %v1682 = vadd.f32 %v1634, %v1678
        %v1683 = vadd.f32 %v1635, %v1679
        %v1684 = vadd.f32 %v1636, %v1680
        %s1685 = sadd.s32 %s173, 226
        %s1686 = sld [smem:[#allocation3 + %s1685]]
        %v1687 = vstv %s1686
        %v1688 = vmul.f32 %v1687, %v1659
        %v1689 = vmul.f32 %v1687, %v1660
        %v1690 = vmul.f32 %v1687, %v1661
        %v1691 = vmul.f32 %v1687, %v1662
        %v1692 = vadd.f32 %v1644, %v1688
        %v1693 = vadd.f32 %v1645, %v1689
        %v1694 = vadd.f32 %v1646, %v1690
        %v1695 = vadd.f32 %v1647, %v1691
        %s1696 = sadd.s32 %s173, 227
        %s1697 = sld [smem:[#allocation3 + %s1696]]
        %v1698 = vstv %s1697
        %v1699 = vmul.f32 %v1698, %v1659
        %v1700 = vmul.f32 %v1698, %v1660
        %v1701 = vmul.f32 %v1698, %v1661
        %v1702 = vmul.f32 %v1698, %v1662
        %v1703 = vadd.f32 %v1655, %v1699
        %v1704 = vadd.f32 %v1656, %v1700
        %v1705 = vadd.f32 %v1657, %v1701
        %v1706 = vadd.f32 %v1658, %v1702
        %v1707 = vld [vmem:[%s305 + $0x2] sm:$0xff]
        %v1708 = vld [vmem:[%s305 + $0xa] sm:$0xff]
        %v1709 = vld [vmem:[%s305 + $0x12] sm:$0xff]
        %v1710 = vld [vmem:[%s305 + $0x1a] sm:$0x7f]
        %s1711 = sadd.s32 %s173, 384
        %s1712 = sld [smem:[#allocation3 + %s1711]]
        %v1713 = vstv %s1712
        %v1714 = vmul.f32 %v1713, %v1707
        %v1715 = vmul.f32 %v1713, %v1708
        %v1716 = vmul.f32 %v1713, %v1709
        %v1717 = vmul.f32 %v1713, %v1710
        %v1718 = vadd.f32 %v1670, %v1714
        %v1719 = vadd.f32 %v1671, %v1715
        %v1720 = vadd.f32 %v1672, %v1716
        %v1721 = vadd.f32 %v1673, %v1717
        %s1722 = sadd.s32 %s173, 385
        %s1723 = sld [smem:[#allocation3 + %s1722]]
        %v1724 = vstv %s1723
        %v1725 = vmul.f32 %v1724, %v1707
        %v1726 = vmul.f32 %v1724, %v1708
        %v1727 = vmul.f32 %v1724, %v1709
        %v1728 = vmul.f32 %v1724, %v1710
        %v1729 = vadd.f32 %v1681, %v1725
        %v1730 = vadd.f32 %v1682, %v1726
        %v1731 = vadd.f32 %v1683, %v1727
        %v1732 = vadd.f32 %v1684, %v1728
        %s1733 = sadd.s32 %s173, 386
        %s1734 = sld [smem:[#allocation3 + %s1733]]
        %v1735 = vstv %s1734
        %v1736 = vmul.f32 %v1735, %v1707
        %v1737 = vmul.f32 %v1735, %v1708
        %v1738 = vmul.f32 %v1735, %v1709
        %v1739 = vmul.f32 %v1735, %v1710
        %v1740 = vadd.f32 %v1692, %v1736
        %v1741 = vadd.f32 %v1693, %v1737
        %v1742 = vadd.f32 %v1694, %v1738
        %v1743 = vadd.f32 %v1695, %v1739
        %s1744 = sadd.s32 %s173, 387
        %s1745 = sld [smem:[#allocation3 + %s1744]]
        %v1746 = vstv %s1745
        %v1747 = vmul.f32 %v1746, %v1707
        %v1748 = vmul.f32 %v1746, %v1708
        %v1749 = vmul.f32 %v1746, %v1709
        %v1750 = vmul.f32 %v1746, %v1710
        %v1751 = vadd.f32 %v1703, %v1747
        %v1752 = vadd.f32 %v1704, %v1748
        %v1753 = vadd.f32 %v1705, %v1749
        %v1754 = vadd.f32 %v1706, %v1750
        %v1755 = vld [vmem:[%s366] sm:$0xff]
        %v1756 = vld [vmem:[%s366 + $0x8] sm:$0xff]
        %v1757 = vld [vmem:[%s366 + $0x10] sm:$0xff]
        %v1758 = vld [vmem:[%s366 + $0x18] sm:$0x7f]
        %s1759 = sadd.s32 %s173, 96
        %s1760 = sld [smem:[#allocation3 + %s1759]]
        %v1761 = vstv %s1760
        %v1762 = vmul.f32 %v1761, %v1755
        %v1763 = vmul.f32 %v1761, %v1756
        %v1764 = vmul.f32 %v1761, %v1757
        %v1765 = vmul.f32 %v1761, %v1758
        %v1766 = vadd.f32 %v1718, %v1762
        %v1767 = vadd.f32 %v1719, %v1763
        %v1768 = vadd.f32 %v1720, %v1764
        %v1769 = vadd.f32 %v1721, %v1765
        %s1770 = sadd.s32 %s173, 97
        %s1771 = sld [smem:[#allocation3 + %s1770]]
        %v1772 = vstv %s1771
        %v1773 = vmul.f32 %v1772, %v1755
        %v1774 = vmul.f32 %v1772, %v1756
        %v1775 = vmul.f32 %v1772, %v1757
        %v1776 = vmul.f32 %v1772, %v1758
        %v1777 = vadd.f32 %v1729, %v1773
        %v1778 = vadd.f32 %v1730, %v1774
        %v1779 = vadd.f32 %v1731, %v1775
        %v1780 = vadd.f32 %v1732, %v1776
        %s1781 = sadd.s32 %s173, 98
        %s1782 = sld [smem:[#allocation3 + %s1781]]
        %v1783 = vstv %s1782
        %v1784 = vmul.f32 %v1783, %v1755
        %v1785 = vmul.f32 %v1783, %v1756
        %v1786 = vmul.f32 %v1783, %v1757
        %v1787 = vmul.f32 %v1783, %v1758
        %v1788 = vadd.f32 %v1740, %v1784
        %v1789 = vadd.f32 %v1741, %v1785
        %v1790 = vadd.f32 %v1742, %v1786
        %v1791 = vadd.f32 %v1743, %v1787
        %s1792 = sadd.s32 %s173, 99
        %s1793 = sld [smem:[#allocation3 + %s1792]]
        %v1794 = vstv %s1793
        %v1795 = vmul.f32 %v1794, %v1755
        %v1796 = vmul.f32 %v1794, %v1756
        %v1797 = vmul.f32 %v1794, %v1757
        %v1798 = vmul.f32 %v1794, %v1758
        %v1799 = vadd.f32 %v1751, %v1795
        %v1800 = vadd.f32 %v1752, %v1796
        %v1801 = vadd.f32 %v1753, %v1797
        %v1802 = vadd.f32 %v1754, %v1798
        %v1803 = vld [vmem:[%s366 + $0x1] sm:$0xff]
        %v1804 = vld [vmem:[%s366 + $0x9] sm:$0xff]
        %v1805 = vld [vmem:[%s366 + $0x11] sm:$0xff]
        %v1806 = vld [vmem:[%s366 + $0x19] sm:$0x7f]
        %s1807 = sadd.s32 %s173, 256
        %s1808 = sld [smem:[#allocation3 + %s1807]]
        %v1809 = vstv %s1808
        %v1810 = vmul.f32 %v1809, %v1803
        %v1811 = vmul.f32 %v1809, %v1804
        %v1812 = vmul.f32 %v1809, %v1805
        %v1813 = vmul.f32 %v1809, %v1806
        %v1814 = vadd.f32 %v1766, %v1810
        %v1815 = vadd.f32 %v1767, %v1811
        %v1816 = vadd.f32 %v1768, %v1812
        %v1817 = vadd.f32 %v1769, %v1813
        %s1818 = sadd.s32 %s173, 257
        %s1819 = sld [smem:[#allocation3 + %s1818]]
        %v1820 = vstv %s1819
        %v1821 = vmul.f32 %v1820, %v1803
        %v1822 = vmul.f32 %v1820, %v1804
        %v1823 = vmul.f32 %v1820, %v1805
        %v1824 = vmul.f32 %v1820, %v1806
        %v1825 = vadd.f32 %v1777, %v1821
        %v1826 = vadd.f32 %v1778, %v1822
        %v1827 = vadd.f32 %v1779, %v1823
        %v1828 = vadd.f32 %v1780, %v1824
        %s1829 = sadd.s32 %s173, 258
        %s1830 = sld [smem:[#allocation3 + %s1829]]
        %v1831 = vstv %s1830
        %v1832 = vmul.f32 %v1831, %v1803
        %v1833 = vmul.f32 %v1831, %v1804
        %v1834 = vmul.f32 %v1831, %v1805
        %v1835 = vmul.f32 %v1831, %v1806
        %v1836 = vadd.f32 %v1788, %v1832
        %v1837 = vadd.f32 %v1789, %v1833
        %v1838 = vadd.f32 %v1790, %v1834
        %v1839 = vadd.f32 %v1791, %v1835
        %s1840 = sadd.s32 %s173, 259
        %s1841 = sld [smem:[#allocation3 + %s1840]]
        %v1842 = vstv %s1841
        %v1843 = vmul.f32 %v1842, %v1803
        %v1844 = vmul.f32 %v1842, %v1804
        %v1845 = vmul.f32 %v1842, %v1805
        %v1846 = vmul.f32 %v1842, %v1806
        %v1847 = vadd.f32 %v1799, %v1843
        %v1848 = vadd.f32 %v1800, %v1844
        %v1849 = vadd.f32 %v1801, %v1845
        %v1850 = vadd.f32 %v1802, %v1846
        %v1851 = vld [vmem:[%s366 + $0x2] sm:$0xff]
        %v1852 = vld [vmem:[%s366 + $0xa] sm:$0xff]
        %v1853 = vld [vmem:[%s366 + $0x12] sm:$0xff]
        %v1854 = vld [vmem:[%s366 + $0x1a] sm:$0x7f]
        %s1855 = sadd.s32 %s173, 416
        %s1856 = sld [smem:[#allocation3 + %s1855]]
        %v1857 = vstv %s1856
        %v1858 = vmul.f32 %v1857, %v1851
        %v1859 = vmul.f32 %v1857, %v1852
        %v1860 = vmul.f32 %v1857, %v1853
        %v1861 = vmul.f32 %v1857, %v1854
        %v1862 = vadd.f32 %v1814, %v1858
        %v1863 = vadd.f32 %v1815, %v1859
        %v1864 = vadd.f32 %v1816, %v1860
        %v1865 = vadd.f32 %v1817, %v1861
        %s1866 = sadd.s32 %s173, 417
        %s1867 = sld [smem:[#allocation3 + %s1866]]
        %v1868 = vstv %s1867
        %v1869 = vmul.f32 %v1868, %v1851
        %v1870 = vmul.f32 %v1868, %v1852
        %v1871 = vmul.f32 %v1868, %v1853
        %v1872 = vmul.f32 %v1868, %v1854
        %v1873 = vadd.f32 %v1825, %v1869
        %v1874 = vadd.f32 %v1826, %v1870
        %v1875 = vadd.f32 %v1827, %v1871
        %v1876 = vadd.f32 %v1828, %v1872
        %s1877 = sadd.s32 %s173, 418
        %s1878 = sld [smem:[#allocation3 + %s1877]]
        %v1879 = vstv %s1878
        %v1880 = vmul.f32 %v1879, %v1851
        %v1881 = vmul.f32 %v1879, %v1852
        %v1882 = vmul.f32 %v1879, %v1853
        %v1883 = vmul.f32 %v1879, %v1854
        %v1884 = vadd.f32 %v1836, %v1880
        %v1885 = vadd.f32 %v1837, %v1881
        %v1886 = vadd.f32 %v1838, %v1882
        %v1887 = vadd.f32 %v1839, %v1883
        %s1888 = sadd.s32 %s173, 419
        %s1889 = sld [smem:[#allocation3 + %s1888]]
        %v1890 = vstv %s1889
        %v1891 = vmul.f32 %v1890, %v1851
        %v1892 = vmul.f32 %v1890, %v1852
        %v1893 = vmul.f32 %v1890, %v1853
        %v1894 = vmul.f32 %v1890, %v1854
        %v1895 = vadd.f32 %v1847, %v1891
        %v1896 = vadd.f32 %v1848, %v1892
        %v1897 = vadd.f32 %v1849, %v1893
        %v1898 = vadd.f32 %v1850, %v1894
        %v1899 = vld [vmem:[%s427] sm:$0xff]
        %v1900 = vld [vmem:[%s427 + $0x8] sm:$0xff]
        %v1901 = vld [vmem:[%s427 + $0x10] sm:$0xff]
        %v1902 = vld [vmem:[%s427 + $0x18] sm:$0x7f]
        %s1903 = sadd.s32 %s173, 128
        %s1904 = sld [smem:[#allocation3 + %s1903]]
        %v1905 = vstv %s1904
        %v1906 = vmul.f32 %v1905, %v1899
        %v1907 = vmul.f32 %v1905, %v1900
        %v1908 = vmul.f32 %v1905, %v1901
        %v1909 = vmul.f32 %v1905, %v1902
        %v1910 = vadd.f32 %v1862, %v1906
        %v1911 = vadd.f32 %v1863, %v1907
        %v1912 = vadd.f32 %v1864, %v1908
        %v1913 = vadd.f32 %v1865, %v1909
        %s1914 = sadd.s32 %s173, 129
        %s1915 = sld [smem:[#allocation3 + %s1914]]
        %v1916 = vstv %s1915
        %v1917 = vmul.f32 %v1916, %v1899
        %v1918 = vmul.f32 %v1916, %v1900
        %v1919 = vmul.f32 %v1916, %v1901
        %v1920 = vmul.f32 %v1916, %v1902
        %v1921 = vadd.f32 %v1873, %v1917
        %v1922 = vadd.f32 %v1874, %v1918
        %v1923 = vadd.f32 %v1875, %v1919
        %v1924 = vadd.f32 %v1876, %v1920
        %s1925 = sadd.s32 %s173, 130
        %s1926 = sld [smem:[#allocation3 + %s1925]]
        %v1927 = vstv %s1926
        %v1928 = vmul.f32 %v1927, %v1899
        %v1929 = vmul.f32 %v1927, %v1900
        %v1930 = vmul.f32 %v1927, %v1901
        %v1931 = vmul.f32 %v1927, %v1902
        %v1932 = vadd.f32 %v1884, %v1928
        %v1933 = vadd.f32 %v1885, %v1929
        %v1934 = vadd.f32 %v1886, %v1930
        %v1935 = vadd.f32 %v1887, %v1931
        %s1936 = sadd.s32 %s173, 131
        %s1937 = sld [smem:[#allocation3 + %s1936]]
        %v1938 = vstv %s1937
        %v1939 = vmul.f32 %v1938, %v1899
        %v1940 = vmul.f32 %v1938, %v1900
        %v1941 = vmul.f32 %v1938, %v1901
        %v1942 = vmul.f32 %v1938, %v1902
        %v1943 = vadd.f32 %v1895, %v1939
        %v1944 = vadd.f32 %v1896, %v1940
        %v1945 = vadd.f32 %v1897, %v1941
        %v1946 = vadd.f32 %v1898, %v1942
        %v1947 = vld [vmem:[%s427 + $0x1] sm:$0xff]
        %v1948 = vld [vmem:[%s427 + $0x9] sm:$0xff]
        %v1949 = vld [vmem:[%s427 + $0x11] sm:$0xff]
        %v1950 = vld [vmem:[%s427 + $0x19] sm:$0x7f]
        %s1951 = sadd.s32 %s173, 288
        %s1952 = sld [smem:[#allocation3 + %s1951]]
        %v1953 = vstv %s1952
        %v1954 = vmul.f32 %v1953, %v1947
        %v1955 = vmul.f32 %v1953, %v1948
        %v1956 = vmul.f32 %v1953, %v1949
        %v1957 = vmul.f32 %v1953, %v1950
        %v1958 = vadd.f32 %v1910, %v1954
        %v1959 = vadd.f32 %v1911, %v1955
        %v1960 = vadd.f32 %v1912, %v1956
        %v1961 = vadd.f32 %v1913, %v1957
        %s1962 = sadd.s32 %s173, 289
        %s1963 = sld [smem:[#allocation3 + %s1962]]
        %v1964 = vstv %s1963
        %v1965 = vmul.f32 %v1964, %v1947
        %v1966 = vmul.f32 %v1964, %v1948
        %v1967 = vmul.f32 %v1964, %v1949
        %v1968 = vmul.f32 %v1964, %v1950
        %v1969 = vadd.f32 %v1921, %v1965
        %v1970 = vadd.f32 %v1922, %v1966
        %v1971 = vadd.f32 %v1923, %v1967
        %v1972 = vadd.f32 %v1924, %v1968
        %s1973 = sadd.s32 %s173, 290
        %s1974 = sld [smem:[#allocation3 + %s1973]]
        %v1975 = vstv %s1974
        %v1976 = vmul.f32 %v1975, %v1947
        %v1977 = vmul.f32 %v1975, %v1948
        %v1978 = vmul.f32 %v1975, %v1949
        %v1979 = vmul.f32 %v1975, %v1950
        %v1980 = vadd.f32 %v1932, %v1976
        %v1981 = vadd.f32 %v1933, %v1977
        %v1982 = vadd.f32 %v1934, %v1978
        %v1983 = vadd.f32 %v1935, %v1979
        %s1984 = sadd.s32 %s173, 291
        %s1985 = sld [smem:[#allocation3 + %s1984]]
        %v1986 = vstv %s1985
        %v1987 = vmul.f32 %v1986, %v1947
        %v1988 = vmul.f32 %v1986, %v1948
        %v1989 = vmul.f32 %v1986, %v1949
        %v1990 = vmul.f32 %v1986, %v1950
        %v1991 = vadd.f32 %v1943, %v1987
        %v1992 = vadd.f32 %v1944, %v1988
        %v1993 = vadd.f32 %v1945, %v1989
        %v1994 = vadd.f32 %v1946, %v1990
        %v1995 = vld [vmem:[%s427 + $0x2] sm:$0xff]
        %v1996 = vld [vmem:[%s427 + $0xa] sm:$0xff]
        %v1997 = vld [vmem:[%s427 + $0x12] sm:$0xff]
        %v1998 = vld [vmem:[%s427 + $0x1a] sm:$0x7f]
        %s1999 = sadd.s32 %s173, 448
        %s2000 = sld [smem:[#allocation3 + %s1999]]
        %v2001 = vstv %s2000
        %v2002 = vmul.f32 %v2001, %v1995
        %v2003 = vmul.f32 %v2001, %v1996
        %v2004 = vmul.f32 %v2001, %v1997
        %v2005 = vmul.f32 %v2001, %v1998
        %v2006 = vadd.f32 %v1958, %v2002
        %v2007 = vadd.f32 %v1959, %v2003
        %v2008 = vadd.f32 %v1960, %v2004
        %v2009 = vadd.f32 %v1961, %v2005
        %s2010 = sadd.s32 %s173, 449
        %s2011 = sld [smem:[#allocation3 + %s2010]]
        %v2012 = vstv %s2011
        %v2013 = vmul.f32 %v2012, %v1995
        %v2014 = vmul.f32 %v2012, %v1996
        %v2015 = vmul.f32 %v2012, %v1997
        %v2016 = vmul.f32 %v2012, %v1998
        %v2017 = vadd.f32 %v1969, %v2013
        %v2018 = vadd.f32 %v1970, %v2014
        %v2019 = vadd.f32 %v1971, %v2015
        %v2020 = vadd.f32 %v1972, %v2016
        %s2021 = sadd.s32 %s173, 450
        %s2022 = sld [smem:[#allocation3 + %s2021]]
        %v2023 = vstv %s2022
        %v2024 = vmul.f32 %v2023, %v1995
        %v2025 = vmul.f32 %v2023, %v1996
        %v2026 = vmul.f32 %v2023, %v1997
        %v2027 = vmul.f32 %v2023, %v1998
        %v2028 = vadd.f32 %v1980, %v2024
        %v2029 = vadd.f32 %v1981, %v2025
        %v2030 = vadd.f32 %v1982, %v2026
        %v2031 = vadd.f32 %v1983, %v2027
        %s2032 = sadd.s32 %s173, 451
        %s2033 = sld [smem:[#allocation3 + %s2032]]
        %v2034 = vstv %s2033
        %v2035 = vmul.f32 %v2034, %v1995
        %v2036 = vmul.f32 %v2034, %v1996
        %v2037 = vmul.f32 %v2034, %v1997
        %v2038 = vmul.f32 %v2034, %v1998
        %v2039 = vadd.f32 %v1991, %v2035
        %v2040 = vadd.f32 %v1992, %v2036
        %v2041 = vadd.f32 %v1993, %v2037
        %v2042 = vadd.f32 %v1994, %v2038
        %v2043 = vld [vmem:[%s469] sm:$0xff]
        %v2044 = vld [vmem:[%s469 + $0x8] sm:$0xff]
        %v2045 = vld [vmem:[%s469 + $0x10] sm:$0xff]
        %v2046 = vld [vmem:[%s469 + $0x18] sm:$0x7f]
        %s2047 = sadd.s32 %s173, 8
        %s2048 = sld [smem:[#allocation3 + %s2047]]
        %v2049 = vstv %s2048
        %v2050 = vmul.f32 %v2049, %v2043
        %v2051 = vmul.f32 %v2049, %v2044
        %v2052 = vmul.f32 %v2049, %v2045
        %v2053 = vmul.f32 %v2049, %v2046
        %v2054 = vadd.f32 %v2006, %v2050
        %v2055 = vadd.f32 %v2007, %v2051
        %v2056 = vadd.f32 %v2008, %v2052
        %v2057 = vadd.f32 %v2009, %v2053
        %s2058 = sadd.s32 %s173, 9
        %s2059 = sld [smem:[#allocation3 + %s2058]]
        %v2060 = vstv %s2059
        %v2061 = vmul.f32 %v2060, %v2043
        %v2062 = vmul.f32 %v2060, %v2044
        %v2063 = vmul.f32 %v2060, %v2045
        %v2064 = vmul.f32 %v2060, %v2046
        %v2065 = vadd.f32 %v2017, %v2061
        %v2066 = vadd.f32 %v2018, %v2062
        %v2067 = vadd.f32 %v2019, %v2063
        %v2068 = vadd.f32 %v2020, %v2064
        %s2069 = sadd.s32 %s173, 10
        %s2070 = sld [smem:[#allocation3 + %s2069]]
        %v2071 = vstv %s2070
        %v2072 = vmul.f32 %v2071, %v2043
        %v2073 = vmul.f32 %v2071, %v2044
        %v2074 = vmul.f32 %v2071, %v2045
        %v2075 = vmul.f32 %v2071, %v2046
        %v2076 = vadd.f32 %v2028, %v2072
        %v2077 = vadd.f32 %v2029, %v2073
        %v2078 = vadd.f32 %v2030, %v2074
        %v2079 = vadd.f32 %v2031, %v2075
        %s2080 = sadd.s32 %s173, 11
        %s2081 = sld [smem:[#allocation3 + %s2080]]
        %v2082 = vstv %s2081
        %v2083 = vmul.f32 %v2082, %v2043
        %v2084 = vmul.f32 %v2082, %v2044
        %v2085 = vmul.f32 %v2082, %v2045
        %v2086 = vmul.f32 %v2082, %v2046
        %v2087 = vadd.f32 %v2039, %v2083
        %v2088 = vadd.f32 %v2040, %v2084
        %v2089 = vadd.f32 %v2041, %v2085
        %v2090 = vadd.f32 %v2042, %v2086
        %v2091 = vld [vmem:[%s469 + $0x1] sm:$0xff]
        %v2092 = vld [vmem:[%s469 + $0x9] sm:$0xff]
        %v2093 = vld [vmem:[%s469 + $0x11] sm:$0xff]
        %v2094 = vld [vmem:[%s469 + $0x19] sm:$0x7f]
        %s2095 = sadd.s32 %s173, 168
        %s2096 = sld [smem:[#allocation3 + %s2095]]
        %v2097 = vstv %s2096
        %v2098 = vmul.f32 %v2097, %v2091
        %v2099 = vmul.f32 %v2097, %v2092
        %v2100 = vmul.f32 %v2097, %v2093
        %v2101 = vmul.f32 %v2097, %v2094
        %v2102 = vadd.f32 %v2054, %v2098
        %v2103 = vadd.f32 %v2055, %v2099
        %v2104 = vadd.f32 %v2056, %v2100
        %v2105 = vadd.f32 %v2057, %v2101
        %s2106 = sadd.s32 %s173, 169
        %s2107 = sld [smem:[#allocation3 + %s2106]]
        %v2108 = vstv %s2107
        %v2109 = vmul.f32 %v2108, %v2091
        %v2110 = vmul.f32 %v2108, %v2092
        %v2111 = vmul.f32 %v2108, %v2093
        %v2112 = vmul.f32 %v2108, %v2094
        %v2113 = vadd.f32 %v2065, %v2109
        %v2114 = vadd.f32 %v2066, %v2110
        %v2115 = vadd.f32 %v2067, %v2111
        %v2116 = vadd.f32 %v2068, %v2112
        %s2117 = sadd.s32 %s173, 170
        %s2118 = sld [smem:[#allocation3 + %s2117]]
        %v2119 = vstv %s2118
        %v2120 = vmul.f32 %v2119, %v2091
        %v2121 = vmul.f32 %v2119, %v2092
        %v2122 = vmul.f32 %v2119, %v2093
        %v2123 = vmul.f32 %v2119, %v2094
        %v2124 = vadd.f32 %v2076, %v2120
        %v2125 = vadd.f32 %v2077, %v2121
        %v2126 = vadd.f32 %v2078, %v2122
        %v2127 = vadd.f32 %v2079, %v2123
        %s2128 = sadd.s32 %s173, 171
        %s2129 = sld [smem:[#allocation3 + %s2128]]
        %v2130 = vstv %s2129
        %v2131 = vmul.f32 %v2130, %v2091
        %v2132 = vmul.f32 %v2130, %v2092
        %v2133 = vmul.f32 %v2130, %v2093
        %v2134 = vmul.f32 %v2130, %v2094
        %v2135 = vadd.f32 %v2087, %v2131
        %v2136 = vadd.f32 %v2088, %v2132
        %v2137 = vadd.f32 %v2089, %v2133
        %v2138 = vadd.f32 %v2090, %v2134
        %v2139 = vld [vmem:[%s469 + $0x2] sm:$0xff]
        %v2140 = vld [vmem:[%s469 + $0xa] sm:$0xff]
        %v2141 = vld [vmem:[%s469 + $0x12] sm:$0xff]
        %v2142 = vld [vmem:[%s469 + $0x1a] sm:$0x7f]
        %s2143 = sadd.s32 %s173, 328
        %s2144 = sld [smem:[#allocation3 + %s2143]]
        %v2145 = vstv %s2144
        %v2146 = vmul.f32 %v2145, %v2139
        %v2147 = vmul.f32 %v2145, %v2140
        %v2148 = vmul.f32 %v2145, %v2141
        %v2149 = vmul.f32 %v2145, %v2142
        %v2150 = vadd.f32 %v2102, %v2146
        %v2151 = vadd.f32 %v2103, %v2147
        %v2152 = vadd.f32 %v2104, %v2148
        %v2153 = vadd.f32 %v2105, %v2149
        %s2154 = sadd.s32 %s173, 329
        %s2155 = sld [smem:[#allocation3 + %s2154]]
        %v2156 = vstv %s2155
        %v2157 = vmul.f32 %v2156, %v2139
        %v2158 = vmul.f32 %v2156, %v2140
        %v2159 = vmul.f32 %v2156, %v2141
        %v2160 = vmul.f32 %v2156, %v2142
        %v2161 = vadd.f32 %v2113, %v2157
        %v2162 = vadd.f32 %v2114, %v2158
        %v2163 = vadd.f32 %v2115, %v2159
        %v2164 = vadd.f32 %v2116, %v2160
        %s2165 = sadd.s32 %s173, 330
        %s2166 = sld [smem:[#allocation3 + %s2165]]
        %v2167 = vstv %s2166
        %v2168 = vmul.f32 %v2167, %v2139
        %v2169 = vmul.f32 %v2167, %v2140
        %v2170 = vmul.f32 %v2167, %v2141
        %v2171 = vmul.f32 %v2167, %v2142
        %v2172 = vadd.f32 %v2124, %v2168
        %v2173 = vadd.f32 %v2125, %v2169
        %v2174 = vadd.f32 %v2126, %v2170
        %v2175 = vadd.f32 %v2127, %v2171
        %s2176 = sadd.s32 %s173, 331
        %s2177 = sld [smem:[#allocation3 + %s2176]]
        %v2178 = vstv %s2177
        %v2179 = vmul.f32 %v2178, %v2139
        %v2180 = vmul.f32 %v2178, %v2140
        %v2181 = vmul.f32 %v2178, %v2141
        %v2182 = vmul.f32 %v2178, %v2142
        %v2183 = vadd.f32 %v2135, %v2179
        %v2184 = vadd.f32 %v2136, %v2180
        %v2185 = vadd.f32 %v2137, %v2181
        %v2186 = vadd.f32 %v2138, %v2182
        %v2187 = vld [vmem:[%s531] sm:$0xff]
        %v2188 = vld [vmem:[%s531 + $0x8] sm:$0xff]
        %v2189 = vld [vmem:[%s531 + $0x10] sm:$0xff]
        %v2190 = vld [vmem:[%s531 + $0x18] sm:$0x7f]
        %s2191 = sadd.s32 %s173, 40
        %s2192 = sld [smem:[#allocation3 + %s2191]]
        %v2193 = vstv %s2192
        %v2194 = vmul.f32 %v2193, %v2187
        %v2195 = vmul.f32 %v2193, %v2188
        %v2196 = vmul.f32 %v2193, %v2189
        %v2197 = vmul.f32 %v2193, %v2190
        %v2198 = vadd.f32 %v2150, %v2194
        %v2199 = vadd.f32 %v2151, %v2195
        %v2200 = vadd.f32 %v2152, %v2196
        %v2201 = vadd.f32 %v2153, %v2197
        %s2202 = sadd.s32 %s173, 41
        %s2203 = sld [smem:[#allocation3 + %s2202]]
        %v2204 = vstv %s2203
        %v2205 = vmul.f32 %v2204, %v2187
        %v2206 = vmul.f32 %v2204, %v2188
        %v2207 = vmul.f32 %v2204, %v2189
        %v2208 = vmul.f32 %v2204, %v2190
        %v2209 = vadd.f32 %v2161, %v2205
        %v2210 = vadd.f32 %v2162, %v2206
        %v2211 = vadd.f32 %v2163, %v2207
        %v2212 = vadd.f32 %v2164, %v2208
        %s2213 = sadd.s32 %s173, 42
        %s2214 = sld [smem:[#allocation3 + %s2213]]
        %v2215 = vstv %s2214
        %v2216 = vmul.f32 %v2215, %v2187
        %v2217 = vmul.f32 %v2215, %v2188
        %v2218 = vmul.f32 %v2215, %v2189
        %v2219 = vmul.f32 %v2215, %v2190
        %v2220 = vadd.f32 %v2172, %v2216
        %v2221 = vadd.f32 %v2173, %v2217
        %v2222 = vadd.f32 %v2174, %v2218
        %v2223 = vadd.f32 %v2175, %v2219
        %s2224 = sadd.s32 %s173, 43
        %s2225 = sld [smem:[#allocation3 + %s2224]]
        %v2226 = vstv %s2225
        %v2227 = vmul.f32 %v2226, %v2187
        %v2228 = vmul.f32 %v2226, %v2188
        %v2229 = vmul.f32 %v2226, %v2189
        %v2230 = vmul.f32 %v2226, %v2190
        %v2231 = vadd.f32 %v2183, %v2227
        %v2232 = vadd.f32 %v2184, %v2228
        %v2233 = vadd.f32 %v2185, %v2229
        %v2234 = vadd.f32 %v2186, %v2230
        %v2235 = vld [vmem:[%s531 + $0x1] sm:$0xff]
        %v2236 = vld [vmem:[%s531 + $0x9] sm:$0xff]
        %v2237 = vld [vmem:[%s531 + $0x11] sm:$0xff]
        %v2238 = vld [vmem:[%s531 + $0x19] sm:$0x7f]
        %s2239 = sadd.s32 %s173, 200
        %s2240 = sld [smem:[#allocation3 + %s2239]]
        %v2241 = vstv %s2240
        %v2242 = vmul.f32 %v2241, %v2235
        %v2243 = vmul.f32 %v2241, %v2236
        %v2244 = vmul.f32 %v2241, %v2237
        %v2245 = vmul.f32 %v2241, %v2238
        %v2246 = vadd.f32 %v2198, %v2242
        %v2247 = vadd.f32 %v2199, %v2243
        %v2248 = vadd.f32 %v2200, %v2244
        %v2249 = vadd.f32 %v2201, %v2245
        %s2250 = sadd.s32 %s173, 201
        %s2251 = sld [smem:[#allocation3 + %s2250]]
        %v2252 = vstv %s2251
        %v2253 = vmul.f32 %v2252, %v2235
        %v2254 = vmul.f32 %v2252, %v2236
        %v2255 = vmul.f32 %v2252, %v2237
        %v2256 = vmul.f32 %v2252, %v2238
        %v2257 = vadd.f32 %v2209, %v2253
        %v2258 = vadd.f32 %v2210, %v2254
        %v2259 = vadd.f32 %v2211, %v2255
        %v2260 = vadd.f32 %v2212, %v2256
        %s2261 = sadd.s32 %s173, 202
        %s2262 = sld [smem:[#allocation3 + %s2261]]
        %v2263 = vstv %s2262
        %v2264 = vmul.f32 %v2263, %v2235
        %v2265 = vmul.f32 %v2263, %v2236
        %v2266 = vmul.f32 %v2263, %v2237
        %v2267 = vmul.f32 %v2263, %v2238
        %v2268 = vadd.f32 %v2220, %v2264
        %v2269 = vadd.f32 %v2221, %v2265
        %v2270 = vadd.f32 %v2222, %v2266
        %v2271 = vadd.f32 %v2223, %v2267
        %s2272 = sadd.s32 %s173, 203
        %s2273 = sld [smem:[#allocation3 + %s2272]]
        %v2274 = vstv %s2273
        %v2275 = vmul.f32 %v2274, %v2235
        %v2276 = vmul.f32 %v2274, %v2236
        %v2277 = vmul.f32 %v2274, %v2237
        %v2278 = vmul.f32 %v2274, %v2238
        %v2279 = vadd.f32 %v2231, %v2275
        %v2280 = vadd.f32 %v2232, %v2276
        %v2281 = vadd.f32 %v2233, %v2277
        %v2282 = vadd.f32 %v2234, %v2278
        %v2283 = vld [vmem:[%s531 + $0x2] sm:$0xff]
        %v2284 = vld [vmem:[%s531 + $0xa] sm:$0xff]
        %v2285 = vld [vmem:[%s531 + $0x12] sm:$0xff]
        %v2286 = vld [vmem:[%s531 + $0x1a] sm:$0x7f]
        %s2287 = sadd.s32 %s173, 360
        %s2288 = sld [smem:[#allocation3 + %s2287]]
        %v2289 = vstv %s2288
        %v2290 = vmul.f32 %v2289, %v2283
        %v2291 = vmul.f32 %v2289, %v2284
        %v2292 = vmul.f32 %v2289, %v2285
        %v2293 = vmul.f32 %v2289, %v2286
        %v2294 = vadd.f32 %v2246, %v2290
        %v2295 = vadd.f32 %v2247, %v2291
        %v2296 = vadd.f32 %v2248, %v2292
        %v2297 = vadd.f32 %v2249, %v2293
        %s2298 = sadd.s32 %s173, 361
        %s2299 = sld [smem:[#allocation3 + %s2298]]
        %v2300 = vstv %s2299
        %v2301 = vmul.f32 %v2300, %v2283
        %v2302 = vmul.f32 %v2300, %v2284
        %v2303 = vmul.f32 %v2300, %v2285
        %v2304 = vmul.f32 %v2300, %v2286
        %v2305 = vadd.f32 %v2257, %v2301
        %v2306 = vadd.f32 %v2258, %v2302
        %v2307 = vadd.f32 %v2259, %v2303
        %v2308 = vadd.f32 %v2260, %v2304
        %s2309 = sadd.s32 %s173, 362
        %s2310 = sld [smem:[#allocation3 + %s2309]]
        %v2311 = vstv %s2310
        %v2312 = vmul.f32 %v2311, %v2283
        %v2313 = vmul.f32 %v2311, %v2284
        %v2314 = vmul.f32 %v2311, %v2285
        %v2315 = vmul.f32 %v2311, %v2286
        %v2316 = vadd.f32 %v2268, %v2312
        %v2317 = vadd.f32 %v2269, %v2313
        %v2318 = vadd.f32 %v2270, %v2314
        %v2319 = vadd.f32 %v2271, %v2315
        %s2320 = sadd.s32 %s173, 363
        %s2321 = sld [smem:[#allocation3 + %s2320]]
        %v2322 = vstv %s2321
        %v2323 = vmul.f32 %v2322, %v2283
        %v2324 = vmul.f32 %v2322, %v2284
        %v2325 = vmul.f32 %v2322, %v2285
        %v2326 = vmul.f32 %v2322, %v2286
        %v2327 = vadd.f32 %v2279, %v2323
        %v2328 = vadd.f32 %v2280, %v2324
        %v2329 = vadd.f32 %v2281, %v2325
        %v2330 = vadd.f32 %v2282, %v2326
        %v2331 = vld [vmem:[%s592] sm:$0xff]
        %v2332 = vld [vmem:[%s592 + $0x8] sm:$0xff]
        %v2333 = vld [vmem:[%s592 + $0x10] sm:$0xff]
        %v2334 = vld [vmem:[%s592 + $0x18] sm:$0x7f]
        %s2335 = sadd.s32 %s173, 72
        %s2336 = sld [smem:[#allocation3 + %s2335]]
        %v2337 = vstv %s2336
        %v2338 = vmul.f32 %v2337, %v2331
        %v2339 = vmul.f32 %v2337, %v2332
        %v2340 = vmul.f32 %v2337, %v2333
        %v2341 = vmul.f32 %v2337, %v2334
        %v2342 = vadd.f32 %v2294, %v2338
        %v2343 = vadd.f32 %v2295, %v2339
        %v2344 = vadd.f32 %v2296, %v2340
        %v2345 = vadd.f32 %v2297, %v2341
        %s2346 = sadd.s32 %s173, 73
        %s2347 = sld [smem:[#allocation3 + %s2346]]
        %v2348 = vstv %s2347
        %v2349 = vmul.f32 %v2348, %v2331
        %v2350 = vmul.f32 %v2348, %v2332
        %v2351 = vmul.f32 %v2348, %v2333
        %v2352 = vmul.f32 %v2348, %v2334
        %v2353 = vadd.f32 %v2305, %v2349
        %v2354 = vadd.f32 %v2306, %v2350
        %v2355 = vadd.f32 %v2307, %v2351
        %v2356 = vadd.f32 %v2308, %v2352
        %s2357 = sadd.s32 %s173, 74
        %s2358 = sld [smem:[#allocation3 + %s2357]]
        %v2359 = vstv %s2358
        %v2360 = vmul.f32 %v2359, %v2331
        %v2361 = vmul.f32 %v2359, %v2332
        %v2362 = vmul.f32 %v2359, %v2333
        %v2363 = vmul.f32 %v2359, %v2334
        %v2364 = vadd.f32 %v2316, %v2360
        %v2365 = vadd.f32 %v2317, %v2361
        %v2366 = vadd.f32 %v2318, %v2362
        %v2367 = vadd.f32 %v2319, %v2363
        %s2368 = sadd.s32 %s173, 75
        %s2369 = sld [smem:[#allocation3 + %s2368]]
        %v2370 = vstv %s2369
        %v2371 = vmul.f32 %v2370, %v2331
        %v2372 = vmul.f32 %v2370, %v2332
        %v2373 = vmul.f32 %v2370, %v2333
        %v2374 = vmul.f32 %v2370, %v2334
        %v2375 = vadd.f32 %v2327, %v2371
        %v2376 = vadd.f32 %v2328, %v2372
        %v2377 = vadd.f32 %v2329, %v2373
        %v2378 = vadd.f32 %v2330, %v2374
        %v2379 = vld [vmem:[%s592 + $0x1] sm:$0xff]
        %v2380 = vld [vmem:[%s592 + $0x9] sm:$0xff]
        %v2381 = vld [vmem:[%s592 + $0x11] sm:$0xff]
        %v2382 = vld [vmem:[%s592 + $0x19] sm:$0x7f]
        %s2383 = sadd.s32 %s173, 232
        %s2384 = sld [smem:[#allocation3 + %s2383]]
        %v2385 = vstv %s2384
        %v2386 = vmul.f32 %v2385, %v2379
        %v2387 = vmul.f32 %v2385, %v2380
        %v2388 = vmul.f32 %v2385, %v2381
        %v2389 = vmul.f32 %v2385, %v2382
        %v2390 = vadd.f32 %v2342, %v2386
        %v2391 = vadd.f32 %v2343, %v2387
        %v2392 = vadd.f32 %v2344, %v2388
        %v2393 = vadd.f32 %v2345, %v2389
        %s2394 = sadd.s32 %s173, 233
        %s2395 = sld [smem:[#allocation3 + %s2394]]
        %v2396 = vstv %s2395
        %v2397 = vmul.f32 %v2396, %v2379
        %v2398 = vmul.f32 %v2396, %v2380
        %v2399 = vmul.f32 %v2396, %v2381
        %v2400 = vmul.f32 %v2396, %v2382
        %v2401 = vadd.f32 %v2353, %v2397
        %v2402 = vadd.f32 %v2354, %v2398
        %v2403 = vadd.f32 %v2355, %v2399
        %v2404 = vadd.f32 %v2356, %v2400
        %s2405 = sadd.s32 %s173, 234
        %s2406 = sld [smem:[#allocation3 + %s2405]]
        %v2407 = vstv %s2406
        %v2408 = vmul.f32 %v2407, %v2379
        %v2409 = vmul.f32 %v2407, %v2380
        %v2410 = vmul.f32 %v2407, %v2381
        %v2411 = vmul.f32 %v2407, %v2382
        %v2412 = vadd.f32 %v2364, %v2408
        %v2413 = vadd.f32 %v2365, %v2409
        %v2414 = vadd.f32 %v2366, %v2410
        %v2415 = vadd.f32 %v2367, %v2411
        %s2416 = sadd.s32 %s173, 235
        %s2417 = sld [smem:[#allocation3 + %s2416]]
        %v2418 = vstv %s2417
        %v2419 = vmul.f32 %v2418, %v2379
        %v2420 = vmul.f32 %v2418, %v2380
        %v2421 = vmul.f32 %v2418, %v2381
        %v2422 = vmul.f32 %v2418, %v2382
        %v2423 = vadd.f32 %v2375, %v2419
        %v2424 = vadd.f32 %v2376, %v2420
        %v2425 = vadd.f32 %v2377, %v2421
        %v2426 = vadd.f32 %v2378, %v2422
        %v2427 = vld [vmem:[%s592 + $0x2] sm:$0xff]
        %v2428 = vld [vmem:[%s592 + $0xa] sm:$0xff]
        %v2429 = vld [vmem:[%s592 + $0x12] sm:$0xff]
        %v2430 = vld [vmem:[%s592 + $0x1a] sm:$0x7f]
        %s2431 = sadd.s32 %s173, 392
        %s2432 = sld [smem:[#allocation3 + %s2431]]
        %v2433 = vstv %s2432
        %v2434 = vmul.f32 %v2433, %v2427
        %v2435 = vmul.f32 %v2433, %v2428
        %v2436 = vmul.f32 %v2433, %v2429
        %v2437 = vmul.f32 %v2433, %v2430
        %v2438 = vadd.f32 %v2390, %v2434
        %v2439 = vadd.f32 %v2391, %v2435
        %v2440 = vadd.f32 %v2392, %v2436
        %v2441 = vadd.f32 %v2393, %v2437
        %s2442 = sadd.s32 %s173, 393
        %s2443 = sld [smem:[#allocation3 + %s2442]]
        %v2444 = vstv %s2443
        %v2445 = vmul.f32 %v2444, %v2427
        %v2446 = vmul.f32 %v2444, %v2428
        %v2447 = vmul.f32 %v2444, %v2429
        %v2448 = vmul.f32 %v2444, %v2430
        %v2449 = vadd.f32 %v2401, %v2445
        %v2450 = vadd.f32 %v2402, %v2446
        %v2451 = vadd.f32 %v2403, %v2447
        %v2452 = vadd.f32 %v2404, %v2448
        %s2453 = sadd.s32 %s173, 394
        %s2454 = sld [smem:[#allocation3 + %s2453]]
        %v2455 = vstv %s2454
        %v2456 = vmul.f32 %v2455, %v2427
        %v2457 = vmul.f32 %v2455, %v2428
        %v2458 = vmul.f32 %v2455, %v2429
        %v2459 = vmul.f32 %v2455, %v2430
        %v2460 = vadd.f32 %v2412, %v2456
        %v2461 = vadd.f32 %v2413, %v2457
        %v2462 = vadd.f32 %v2414, %v2458
        %v2463 = vadd.f32 %v2415, %v2459
        %s2464 = sadd.s32 %s173, 395
        %s2465 = sld [smem:[#allocation3 + %s2464]]
        %v2466 = vstv %s2465
        %v2467 = vmul.f32 %v2466, %v2427
        %v2468 = vmul.f32 %v2466, %v2428
        %v2469 = vmul.f32 %v2466, %v2429
        %v2470 = vmul.f32 %v2466, %v2430
        %v2471 = vadd.f32 %v2423, %v2467
        %v2472 = vadd.f32 %v2424, %v2468
        %v2473 = vadd.f32 %v2425, %v2469
        %v2474 = vadd.f32 %v2426, %v2470
        %v2475 = vld [vmem:[%s653] sm:$0xff]
        %v2476 = vld [vmem:[%s653 + $0x8] sm:$0xff]
        %v2477 = vld [vmem:[%s653 + $0x10] sm:$0xff]
        %v2478 = vld [vmem:[%s653 + $0x18] sm:$0x7f]
        %s2479 = sadd.s32 %s173, 104
        %s2480 = sld [smem:[#allocation3 + %s2479]]
        %v2481 = vstv %s2480
        %v2482 = vmul.f32 %v2481, %v2475
        %v2483 = vmul.f32 %v2481, %v2476
        %v2484 = vmul.f32 %v2481, %v2477
        %v2485 = vmul.f32 %v2481, %v2478
        %v2486 = vadd.f32 %v2438, %v2482
        %v2487 = vadd.f32 %v2439, %v2483
        %v2488 = vadd.f32 %v2440, %v2484
        %v2489 = vadd.f32 %v2441, %v2485
        %s2490 = sadd.s32 %s173, 105
        %s2491 = sld [smem:[#allocation3 + %s2490]]
        %v2492 = vstv %s2491
        %v2493 = vmul.f32 %v2492, %v2475
        %v2494 = vmul.f32 %v2492, %v2476
        %v2495 = vmul.f32 %v2492, %v2477
        %v2496 = vmul.f32 %v2492, %v2478
        %v2497 = vadd.f32 %v2449, %v2493
        %v2498 = vadd.f32 %v2450, %v2494
        %v2499 = vadd.f32 %v2451, %v2495
        %v2500 = vadd.f32 %v2452, %v2496
        %s2501 = sadd.s32 %s173, 106
        %s2502 = sld [smem:[#allocation3 + %s2501]]
        %v2503 = vstv %s2502
        %v2504 = vmul.f32 %v2503, %v2475
        %v2505 = vmul.f32 %v2503, %v2476
        %v2506 = vmul.f32 %v2503, %v2477
        %v2507 = vmul.f32 %v2503, %v2478
        %v2508 = vadd.f32 %v2460, %v2504
        %v2509 = vadd.f32 %v2461, %v2505
        %v2510 = vadd.f32 %v2462, %v2506
        %v2511 = vadd.f32 %v2463, %v2507
        %s2512 = sadd.s32 %s173, 107
        %s2513 = sld [smem:[#allocation3 + %s2512]]
        %v2514 = vstv %s2513
        %v2515 = vmul.f32 %v2514, %v2475
        %v2516 = vmul.f32 %v2514, %v2476
        %v2517 = vmul.f32 %v2514, %v2477
        %v2518 = vmul.f32 %v2514, %v2478
        %v2519 = vadd.f32 %v2471, %v2515
        %v2520 = vadd.f32 %v2472, %v2516
        %v2521 = vadd.f32 %v2473, %v2517
        %v2522 = vadd.f32 %v2474, %v2518
        %v2523 = vld [vmem:[%s653 + $0x1] sm:$0xff]
        %v2524 = vld [vmem:[%s653 + $0x9] sm:$0xff]
        %v2525 = vld [vmem:[%s653 + $0x11] sm:$0xff]
        %v2526 = vld [vmem:[%s653 + $0x19] sm:$0x7f]
        %s2527 = sadd.s32 %s173, 264
        %s2528 = sld [smem:[#allocation3 + %s2527]]
        %v2529 = vstv %s2528
        %v2530 = vmul.f32 %v2529, %v2523
        %v2531 = vmul.f32 %v2529, %v2524
        %v2532 = vmul.f32 %v2529, %v2525
        %v2533 = vmul.f32 %v2529, %v2526
        %v2534 = vadd.f32 %v2486, %v2530
        %v2535 = vadd.f32 %v2487, %v2531
        %v2536 = vadd.f32 %v2488, %v2532
        %v2537 = vadd.f32 %v2489, %v2533
        %s2538 = sadd.s32 %s173, 265
        %s2539 = sld [smem:[#allocation3 + %s2538]]
        %v2540 = vstv %s2539
        %v2541 = vmul.f32 %v2540, %v2523
        %v2542 = vmul.f32 %v2540, %v2524
        %v2543 = vmul.f32 %v2540, %v2525
        %v2544 = vmul.f32 %v2540, %v2526
        %v2545 = vadd.f32 %v2497, %v2541
        %v2546 = vadd.f32 %v2498, %v2542
        %v2547 = vadd.f32 %v2499, %v2543
        %v2548 = vadd.f32 %v2500, %v2544
        %s2549 = sadd.s32 %s173, 266
        %s2550 = sld [smem:[#allocation3 + %s2549]]
        %v2551 = vstv %s2550
        %v2552 = vmul.f32 %v2551, %v2523
        %v2553 = vmul.f32 %v2551, %v2524
        %v2554 = vmul.f32 %v2551, %v2525
        %v2555 = vmul.f32 %v2551, %v2526
        %v2556 = vadd.f32 %v2508, %v2552
        %v2557 = vadd.f32 %v2509, %v2553
        %v2558 = vadd.f32 %v2510, %v2554
        %v2559 = vadd.f32 %v2511, %v2555
        %s2560 = sadd.s32 %s173, 267
        %s2561 = sld [smem:[#allocation3 + %s2560]]
        %v2562 = vstv %s2561
        %v2563 = vmul.f32 %v2562, %v2523
        %v2564 = vmul.f32 %v2562, %v2524
        %v2565 = vmul.f32 %v2562, %v2525
        %v2566 = vmul.f32 %v2562, %v2526
        %v2567 = vadd.f32 %v2519, %v2563
        %v2568 = vadd.f32 %v2520, %v2564
        %v2569 = vadd.f32 %v2521, %v2565
        %v2570 = vadd.f32 %v2522, %v2566
        %v2571 = vld [vmem:[%s653 + $0x2] sm:$0xff]
        %v2572 = vld [vmem:[%s653 + $0xa] sm:$0xff]
        %v2573 = vld [vmem:[%s653 + $0x12] sm:$0xff]
        %v2574 = vld [vmem:[%s653 + $0x1a] sm:$0x7f]
        %s2575 = sadd.s32 %s173, 424
        %s2576 = sld [smem:[#allocation3 + %s2575]]
        %v2577 = vstv %s2576
        %v2578 = vmul.f32 %v2577, %v2571
        %v2579 = vmul.f32 %v2577, %v2572
        %v2580 = vmul.f32 %v2577, %v2573
        %v2581 = vmul.f32 %v2577, %v2574
        %v2582 = vadd.f32 %v2534, %v2578
        %v2583 = vadd.f32 %v2535, %v2579
        %v2584 = vadd.f32 %v2536, %v2580
        %v2585 = vadd.f32 %v2537, %v2581
        %s2586 = sadd.s32 %s173, 425
        %s2587 = sld [smem:[#allocation3 + %s2586]]
        %v2588 = vstv %s2587
        %v2589 = vmul.f32 %v2588, %v2571
        %v2590 = vmul.f32 %v2588, %v2572
        %v2591 = vmul.f32 %v2588, %v2573
        %v2592 = vmul.f32 %v2588, %v2574
        %v2593 = vadd.f32 %v2545, %v2589
        %v2594 = vadd.f32 %v2546, %v2590
        %v2595 = vadd.f32 %v2547, %v2591
        %v2596 = vadd.f32 %v2548, %v2592
        %s2597 = sadd.s32 %s173, 426
        %s2598 = sld [smem:[#allocation3 + %s2597]]
        %v2599 = vstv %s2598
        %v2600 = vmul.f32 %v2599, %v2571
        %v2601 = vmul.f32 %v2599, %v2572
        %v2602 = vmul.f32 %v2599, %v2573
        %v2603 = vmul.f32 %v2599, %v2574
        %v2604 = vadd.f32 %v2556, %v2600
        %v2605 = vadd.f32 %v2557, %v2601
        %v2606 = vadd.f32 %v2558, %v2602
        %v2607 = vadd.f32 %v2559, %v2603
        %s2608 = sadd.s32 %s173, 427
        %s2609 = sld [smem:[#allocation3 + %s2608]]
        %v2610 = vstv %s2609
        %v2611 = vmul.f32 %v2610, %v2571
        %v2612 = vmul.f32 %v2610, %v2572
        %v2613 = vmul.f32 %v2610, %v2573
        %v2614 = vmul.f32 %v2610, %v2574
        %v2615 = vadd.f32 %v2567, %v2611
        %v2616 = vadd.f32 %v2568, %v2612
        %v2617 = vadd.f32 %v2569, %v2613
        %v2618 = vadd.f32 %v2570, %v2614
        %v2619 = vld [vmem:[%s714] sm:$0xff]
        %v2620 = vld [vmem:[%s714 + $0x8] sm:$0xff]
        %v2621 = vld [vmem:[%s714 + $0x10] sm:$0xff]
        %v2622 = vld [vmem:[%s714 + $0x18] sm:$0x7f]
        %s2623 = sadd.s32 %s173, 136
        %s2624 = sld [smem:[#allocation3 + %s2623]]
        %v2625 = vstv %s2624
        %v2626 = vmul.f32 %v2625, %v2619
        %v2627 = vmul.f32 %v2625, %v2620
        %v2628 = vmul.f32 %v2625, %v2621
        %v2629 = vmul.f32 %v2625, %v2622
        %v2630 = vadd.f32 %v2582, %v2626
        %v2631 = vadd.f32 %v2583, %v2627
        %v2632 = vadd.f32 %v2584, %v2628
        %v2633 = vadd.f32 %v2585, %v2629
        %s2634 = sadd.s32 %s173, 137
        %s2635 = sld [smem:[#allocation3 + %s2634]]
        %v2636 = vstv %s2635
        %v2637 = vmul.f32 %v2636, %v2619
        %v2638 = vmul.f32 %v2636, %v2620
        %v2639 = vmul.f32 %v2636, %v2621
        %v2640 = vmul.f32 %v2636, %v2622
        %v2641 = vadd.f32 %v2593, %v2637
        %v2642 = vadd.f32 %v2594, %v2638
        %v2643 = vadd.f32 %v2595, %v2639
        %v2644 = vadd.f32 %v2596, %v2640
        %s2645 = sadd.s32 %s173, 138
        %s2646 = sld [smem:[#allocation3 + %s2645]]
        %v2647 = vstv %s2646
        %v2648 = vmul.f32 %v2647, %v2619
        %v2649 = vmul.f32 %v2647, %v2620
        %v2650 = vmul.f32 %v2647, %v2621
        %v2651 = vmul.f32 %v2647, %v2622
        %v2652 = vadd.f32 %v2604, %v2648
        %v2653 = vadd.f32 %v2605, %v2649
        %v2654 = vadd.f32 %v2606, %v2650
        %v2655 = vadd.f32 %v2607, %v2651
        %s2656 = sadd.s32 %s173, 139
        %s2657 = sld [smem:[#allocation3 + %s2656]]
        %v2658 = vstv %s2657
        %v2659 = vmul.f32 %v2658, %v2619
        %v2660 = vmul.f32 %v2658, %v2620
        %v2661 = vmul.f32 %v2658, %v2621
        %v2662 = vmul.f32 %v2658, %v2622
        %v2663 = vadd.f32 %v2615, %v2659
        %v2664 = vadd.f32 %v2616, %v2660
        %v2665 = vadd.f32 %v2617, %v2661
        %v2666 = vadd.f32 %v2618, %v2662
        %v2667 = vld [vmem:[%s714 + $0x1] sm:$0xff]
        %v2668 = vld [vmem:[%s714 + $0x9] sm:$0xff]
        %v2669 = vld [vmem:[%s714 + $0x11] sm:$0xff]
        %v2670 = vld [vmem:[%s714 + $0x19] sm:$0x7f]
        %s2671 = sadd.s32 %s173, 296
        %s2672 = sld [smem:[#allocation3 + %s2671]]
        %v2673 = vstv %s2672
        %v2674 = vmul.f32 %v2673, %v2667
        %v2675 = vmul.f32 %v2673, %v2668
        %v2676 = vmul.f32 %v2673, %v2669
        %v2677 = vmul.f32 %v2673, %v2670
        %v2678 = vadd.f32 %v2630, %v2674
        %v2679 = vadd.f32 %v2631, %v2675
        %v2680 = vadd.f32 %v2632, %v2676
        %v2681 = vadd.f32 %v2633, %v2677
        %s2682 = sadd.s32 %s173, 297
        %s2683 = sld [smem:[#allocation3 + %s2682]]
        %v2684 = vstv %s2683
        %v2685 = vmul.f32 %v2684, %v2667
        %v2686 = vmul.f32 %v2684, %v2668
        %v2687 = vmul.f32 %v2684, %v2669
        %v2688 = vmul.f32 %v2684, %v2670
        %v2689 = vadd.f32 %v2641, %v2685
        %v2690 = vadd.f32 %v2642, %v2686
        %v2691 = vadd.f32 %v2643, %v2687
        %v2692 = vadd.f32 %v2644, %v2688
        %s2693 = sadd.s32 %s173, 298
        %s2694 = sld [smem:[#allocation3 + %s2693]]
        %v2695 = vstv %s2694
        %v2696 = vmul.f32 %v2695, %v2667
        %v2697 = vmul.f32 %v2695, %v2668
        %v2698 = vmul.f32 %v2695, %v2669
        %v2699 = vmul.f32 %v2695, %v2670
        %v2700 = vadd.f32 %v2652, %v2696
        %v2701 = vadd.f32 %v2653, %v2697
        %v2702 = vadd.f32 %v2654, %v2698
        %v2703 = vadd.f32 %v2655, %v2699
        %s2704 = sadd.s32 %s173, 299
        %s2705 = sld [smem:[#allocation3 + %s2704]]
        %v2706 = vstv %s2705
        %v2707 = vmul.f32 %v2706, %v2667
        %v2708 = vmul.f32 %v2706, %v2668
        %v2709 = vmul.f32 %v2706, %v2669
        %v2710 = vmul.f32 %v2706, %v2670
        %v2711 = vadd.f32 %v2663, %v2707
        %v2712 = vadd.f32 %v2664, %v2708
        %v2713 = vadd.f32 %v2665, %v2709
        %v2714 = vadd.f32 %v2666, %v2710
        %v2715 = vld [vmem:[%s714 + $0x2] sm:$0xff]
        %v2716 = vld [vmem:[%s714 + $0xa] sm:$0xff]
        %v2717 = vld [vmem:[%s714 + $0x12] sm:$0xff]
        %v2718 = vld [vmem:[%s714 + $0x1a] sm:$0x7f]
        %s2719 = sadd.s32 %s173, 456
        %s2720 = sld [smem:[#allocation3 + %s2719]]
        %v2721 = vstv %s2720
        %v2722 = vmul.f32 %v2721, %v2715
        %v2723 = vmul.f32 %v2721, %v2716
        %v2724 = vmul.f32 %v2721, %v2717
        %v2725 = vmul.f32 %v2721, %v2718
        %v2726 = vadd.f32 %v2678, %v2722
        %v2727 = vadd.f32 %v2679, %v2723
        %v2728 = vadd.f32 %v2680, %v2724
        %v2729 = vadd.f32 %v2681, %v2725
        %s2730 = sadd.s32 %s173, 457
        %s2731 = sld [smem:[#allocation3 + %s2730]]
        %v2732 = vstv %s2731
        %v2733 = vmul.f32 %v2732, %v2715
        %v2734 = vmul.f32 %v2732, %v2716
        %v2735 = vmul.f32 %v2732, %v2717
        %v2736 = vmul.f32 %v2732, %v2718
        %v2737 = vadd.f32 %v2689, %v2733
        %v2738 = vadd.f32 %v2690, %v2734
        %v2739 = vadd.f32 %v2691, %v2735
        %v2740 = vadd.f32 %v2692, %v2736
        %s2741 = sadd.s32 %s173, 458
        %s2742 = sld [smem:[#allocation3 + %s2741]]
        %v2743 = vstv %s2742
        %v2744 = vmul.f32 %v2743, %v2715
        %v2745 = vmul.f32 %v2743, %v2716
        %v2746 = vmul.f32 %v2743, %v2717
        %v2747 = vmul.f32 %v2743, %v2718
        %v2748 = vadd.f32 %v2700, %v2744
        %v2749 = vadd.f32 %v2701, %v2745
        %v2750 = vadd.f32 %v2702, %v2746
        %v2751 = vadd.f32 %v2703, %v2747
        %s2752 = sadd.s32 %s173, 459
        %s2753 = sld [smem:[#allocation3 + %s2752]]
        %v2754 = vstv %s2753
        %v2755 = vmul.f32 %v2754, %v2715
        %v2756 = vmul.f32 %v2754, %v2716
        %v2757 = vmul.f32 %v2754, %v2717
        %v2758 = vmul.f32 %v2754, %v2718
        %v2759 = vadd.f32 %v2711, %v2755
        %v2760 = vadd.f32 %v2712, %v2756
        %v2761 = vadd.f32 %v2713, %v2757
        %v2762 = vadd.f32 %v2714, %v2758
        %v2763 = vld [vmem:[%s756] sm:$0xff]
        %v2764 = vld [vmem:[%s756 + $0x8] sm:$0xff]
        %v2765 = vld [vmem:[%s756 + $0x10] sm:$0xff]
        %v2766 = vld [vmem:[%s756 + $0x18] sm:$0x7f]
        %s2767 = sadd.s32 %s173, 16
        %s2768 = sld [smem:[#allocation3 + %s2767]]
        %v2769 = vstv %s2768
        %v2770 = vmul.f32 %v2769, %v2763
        %v2771 = vmul.f32 %v2769, %v2764
        %v2772 = vmul.f32 %v2769, %v2765
        %v2773 = vmul.f32 %v2769, %v2766
        %v2774 = vadd.f32 %v2726, %v2770
        %v2775 = vadd.f32 %v2727, %v2771
        %v2776 = vadd.f32 %v2728, %v2772
        %v2777 = vadd.f32 %v2729, %v2773
        %s2778 = sadd.s32 %s173, 17
        %s2779 = sld [smem:[#allocation3 + %s2778]]
        %v2780 = vstv %s2779
        %v2781 = vmul.f32 %v2780, %v2763
        %v2782 = vmul.f32 %v2780, %v2764
        %v2783 = vmul.f32 %v2780, %v2765
        %v2784 = vmul.f32 %v2780, %v2766
        %v2785 = vadd.f32 %v2737, %v2781
        %v2786 = vadd.f32 %v2738, %v2782
        %v2787 = vadd.f32 %v2739, %v2783
        %v2788 = vadd.f32 %v2740, %v2784
        %s2789 = sadd.s32 %s173, 18
        %s2790 = sld [smem:[#allocation3 + %s2789]]
        %v2791 = vstv %s2790
        %v2792 = vmul.f32 %v2791, %v2763
        %v2793 = vmul.f32 %v2791, %v2764
        %v2794 = vmul.f32 %v2791, %v2765
        %v2795 = vmul.f32 %v2791, %v2766
        %v2796 = vadd.f32 %v2748, %v2792
        %v2797 = vadd.f32 %v2749, %v2793
        %v2798 = vadd.f32 %v2750, %v2794
        %v2799 = vadd.f32 %v2751, %v2795
        %s2800 = sadd.s32 %s173, 19
        %s2801 = sld [smem:[#allocation3 + %s2800]]
        %v2802 = vstv %s2801
        %v2803 = vmul.f32 %v2802, %v2763
        %v2804 = vmul.f32 %v2802, %v2764
        %v2805 = vmul.f32 %v2802, %v2765
        %v2806 = vmul.f32 %v2802, %v2766
        %v2807 = vadd.f32 %v2759, %v2803
        %v2808 = vadd.f32 %v2760, %v2804
        %v2809 = vadd.f32 %v2761, %v2805
        %v2810 = vadd.f32 %v2762, %v2806
        %v2811 = vld [vmem:[%s756 + $0x1] sm:$0xff]
        %v2812 = vld [vmem:[%s756 + $0x9] sm:$0xff]
        %v2813 = vld [vmem:[%s756 + $0x11] sm:$0xff]
        %v2814 = vld [vmem:[%s756 + $0x19] sm:$0x7f]
        %s2815 = sadd.s32 %s173, 176
        %s2816 = sld [smem:[#allocation3 + %s2815]]
        %v2817 = vstv %s2816
        %v2818 = vmul.f32 %v2817, %v2811
        %v2819 = vmul.f32 %v2817, %v2812
        %v2820 = vmul.f32 %v2817, %v2813
        %v2821 = vmul.f32 %v2817, %v2814
        %v2822 = vadd.f32 %v2774, %v2818
        %v2823 = vadd.f32 %v2775, %v2819
        %v2824 = vadd.f32 %v2776, %v2820
        %v2825 = vadd.f32 %v2777, %v2821
        %s2826 = sadd.s32 %s173, 177
        %s2827 = sld [smem:[#allocation3 + %s2826]]
        %v2828 = vstv %s2827
        %v2829 = vmul.f32 %v2828, %v2811
        %v2830 = vmul.f32 %v2828, %v2812
        %v2831 = vmul.f32 %v2828, %v2813
        %v2832 = vmul.f32 %v2828, %v2814
        %v2833 = vadd.f32 %v2785, %v2829
        %v2834 = vadd.f32 %v2786, %v2830
        %v2835 = vadd.f32 %v2787, %v2831
        %v2836 = vadd.f32 %v2788, %v2832
        %s2837 = sadd.s32 %s173, 178
        %s2838 = sld [smem:[#allocation3 + %s2837]]
        %v2839 = vstv %s2838
        %v2840 = vmul.f32 %v2839, %v2811
        %v2841 = vmul.f32 %v2839, %v2812
        %v2842 = vmul.f32 %v2839, %v2813
        %v2843 = vmul.f32 %v2839, %v2814
        %v2844 = vadd.f32 %v2796, %v2840
        %v2845 = vadd.f32 %v2797, %v2841
        %v2846 = vadd.f32 %v2798, %v2842
        %v2847 = vadd.f32 %v2799, %v2843
        %s2848 = sadd.s32 %s173, 179
        %s2849 = sld [smem:[#allocation3 + %s2848]]
        %v2850 = vstv %s2849
        %v2851 = vmul.f32 %v2850, %v2811
        %v2852 = vmul.f32 %v2850, %v2812
        %v2853 = vmul.f32 %v2850, %v2813
        %v2854 = vmul.f32 %v2850, %v2814
        %v2855 = vadd.f32 %v2807, %v2851
        %v2856 = vadd.f32 %v2808, %v2852
        %v2857 = vadd.f32 %v2809, %v2853
        %v2858 = vadd.f32 %v2810, %v2854
        %v2859 = vld [vmem:[%s756 + $0x2] sm:$0xff]
        %v2860 = vld [vmem:[%s756 + $0xa] sm:$0xff]
        %v2861 = vld [vmem:[%s756 + $0x12] sm:$0xff]
        %v2862 = vld [vmem:[%s756 + $0x1a] sm:$0x7f]
        %s2863 = sadd.s32 %s173, 336
        %s2864 = sld [smem:[#allocation3 + %s2863]]
        %v2865 = vstv %s2864
        %v2866 = vmul.f32 %v2865, %v2859
        %v2867 = vmul.f32 %v2865, %v2860
        %v2868 = vmul.f32 %v2865, %v2861
        %v2869 = vmul.f32 %v2865, %v2862
        %v2870 = vadd.f32 %v2822, %v2866
        %v2871 = vadd.f32 %v2823, %v2867
        %v2872 = vadd.f32 %v2824, %v2868
        %v2873 = vadd.f32 %v2825, %v2869
        %s2874 = sadd.s32 %s173, 337
        %s2875 = sld [smem:[#allocation3 + %s2874]]
        %v2876 = vstv %s2875
        %v2877 = vmul.f32 %v2876, %v2859
        %v2878 = vmul.f32 %v2876, %v2860
        %v2879 = vmul.f32 %v2876, %v2861
        %v2880 = vmul.f32 %v2876, %v2862
        %v2881 = vadd.f32 %v2833, %v2877
        %v2882 = vadd.f32 %v2834, %v2878
        %v2883 = vadd.f32 %v2835, %v2879
        %v2884 = vadd.f32 %v2836, %v2880
        %s2885 = sadd.s32 %s173, 338
        %s2886 = sld [smem:[#allocation3 + %s2885]]
        %v2887 = vstv %s2886
        %v2888 = vmul.f32 %v2887, %v2859
        %v2889 = vmul.f32 %v2887, %v2860
        %v2890 = vmul.f32 %v2887, %v2861
        %v2891 = vmul.f32 %v2887, %v2862
        %v2892 = vadd.f32 %v2844, %v2888
        %v2893 = vadd.f32 %v2845, %v2889
        %v2894 = vadd.f32 %v2846, %v2890
        %v2895 = vadd.f32 %v2847, %v2891
        %s2896 = sadd.s32 %s173, 339
        %s2897 = sld [smem:[#allocation3 + %s2896]]
        %v2898 = vstv %s2897
        %v2899 = vmul.f32 %v2898, %v2859
        %v2900 = vmul.f32 %v2898, %v2860
        %v2901 = vmul.f32 %v2898, %v2861
        %v2902 = vmul.f32 %v2898, %v2862
        %v2903 = vadd.f32 %v2855, %v2899
        %v2904 = vadd.f32 %v2856, %v2900
        %v2905 = vadd.f32 %v2857, %v2901
        %v2906 = vadd.f32 %v2858, %v2902
        %v2907 = vld [vmem:[%s818] sm:$0xff]
        %v2908 = vld [vmem:[%s818 + $0x8] sm:$0xff]
        %v2909 = vld [vmem:[%s818 + $0x10] sm:$0xff]
        %v2910 = vld [vmem:[%s818 + $0x18] sm:$0x7f]
        %s2911 = sadd.s32 %s173, 48
        %s2912 = sld [smem:[#allocation3 + %s2911]]
        %v2913 = vstv %s2912
        %v2914 = vmul.f32 %v2913, %v2907
        %v2915 = vmul.f32 %v2913, %v2908
        %v2916 = vmul.f32 %v2913, %v2909
        %v2917 = vmul.f32 %v2913, %v2910
        %v2918 = vadd.f32 %v2870, %v2914
        %v2919 = vadd.f32 %v2871, %v2915
        %v2920 = vadd.f32 %v2872, %v2916
        %v2921 = vadd.f32 %v2873, %v2917
        %s2922 = sadd.s32 %s173, 49
        %s2923 = sld [smem:[#allocation3 + %s2922]]
        %v2924 = vstv %s2923
        %v2925 = vmul.f32 %v2924, %v2907
        %v2926 = vmul.f32 %v2924, %v2908
        %v2927 = vmul.f32 %v2924, %v2909
        %v2928 = vmul.f32 %v2924, %v2910
        %v2929 = vadd.f32 %v2881, %v2925
        %v2930 = vadd.f32 %v2882, %v2926
        %v2931 = vadd.f32 %v2883, %v2927
        %v2932 = vadd.f32 %v2884, %v2928
        %s2933 = sadd.s32 %s173, 50
        %s2934 = sld [smem:[#allocation3 + %s2933]]
        %v2935 = vstv %s2934
        %v2936 = vmul.f32 %v2935, %v2907
        %v2937 = vmul.f32 %v2935, %v2908
        %v2938 = vmul.f32 %v2935, %v2909
        %v2939 = vmul.f32 %v2935, %v2910
        %v2940 = vadd.f32 %v2892, %v2936
        %v2941 = vadd.f32 %v2893, %v2937
        %v2942 = vadd.f32 %v2894, %v2938
        %v2943 = vadd.f32 %v2895, %v2939
        %s2944 = sadd.s32 %s173, 51
        %s2945 = sld [smem:[#allocation3 + %s2944]]
        %v2946 = vstv %s2945
        %v2947 = vmul.f32 %v2946, %v2907
        %v2948 = vmul.f32 %v2946, %v2908
        %v2949 = vmul.f32 %v2946, %v2909
        %v2950 = vmul.f32 %v2946, %v2910
        %v2951 = vadd.f32 %v2903, %v2947
        %v2952 = vadd.f32 %v2904, %v2948
        %v2953 = vadd.f32 %v2905, %v2949
        %v2954 = vadd.f32 %v2906, %v2950
        %v2955 = vld [vmem:[%s818 + $0x1] sm:$0xff]
        %v2956 = vld [vmem:[%s818 + $0x9] sm:$0xff]
        %v2957 = vld [vmem:[%s818 + $0x11] sm:$0xff]
        %v2958 = vld [vmem:[%s818 + $0x19] sm:$0x7f]
        %s2959 = sadd.s32 %s173, 208
        %s2960 = sld [smem:[#allocation3 + %s2959]]
        %v2961 = vstv %s2960
        %v2962 = vmul.f32 %v2961, %v2955
        %v2963 = vmul.f32 %v2961, %v2956
        %v2964 = vmul.f32 %v2961, %v2957
        %v2965 = vmul.f32 %v2961, %v2958
        %v2966 = vadd.f32 %v2918, %v2962
        %v2967 = vadd.f32 %v2919, %v2963
        %v2968 = vadd.f32 %v2920, %v2964
        %v2969 = vadd.f32 %v2921, %v2965
        %s2970 = sadd.s32 %s173, 209
        %s2971 = sld [smem:[#allocation3 + %s2970]]
        %v2972 = vstv %s2971
        %v2973 = vmul.f32 %v2972, %v2955
        %v2974 = vmul.f32 %v2972, %v2956
        %v2975 = vmul.f32 %v2972, %v2957
        %v2976 = vmul.f32 %v2972, %v2958
        %v2977 = vadd.f32 %v2929, %v2973
        %v2978 = vadd.f32 %v2930, %v2974
        %v2979 = vadd.f32 %v2931, %v2975
        %v2980 = vadd.f32 %v2932, %v2976
        %s2981 = sadd.s32 %s173, 210
        %s2982 = sld [smem:[#allocation3 + %s2981]]
        %v2983 = vstv %s2982
        %v2984 = vmul.f32 %v2983, %v2955
        %v2985 = vmul.f32 %v2983, %v2956
        %v2986 = vmul.f32 %v2983, %v2957
        %v2987 = vmul.f32 %v2983, %v2958
        %v2988 = vadd.f32 %v2940, %v2984
        %v2989 = vadd.f32 %v2941, %v2985
        %v2990 = vadd.f32 %v2942, %v2986
        %v2991 = vadd.f32 %v2943, %v2987
        %s2992 = sadd.s32 %s173, 211
        %s2993 = sld [smem:[#allocation3 + %s2992]]
        %v2994 = vstv %s2993
        %v2995 = vmul.f32 %v2994, %v2955
        %v2996 = vmul.f32 %v2994, %v2956
        %v2997 = vmul.f32 %v2994, %v2957
        %v2998 = vmul.f32 %v2994, %v2958
        %v2999 = vadd.f32 %v2951, %v2995
        %v3000 = vadd.f32 %v2952, %v2996
        %v3001 = vadd.f32 %v2953, %v2997
        %v3002 = vadd.f32 %v2954, %v2998
        %v3003 = vld [vmem:[%s818 + $0x2] sm:$0xff]
        %v3004 = vld [vmem:[%s818 + $0xa] sm:$0xff]
        %v3005 = vld [vmem:[%s818 + $0x12] sm:$0xff]
        %v3006 = vld [vmem:[%s818 + $0x1a] sm:$0x7f]
        %s3007 = sadd.s32 %s173, 368
        %s3008 = sld [smem:[#allocation3 + %s3007]]
        %v3009 = vstv %s3008
        %v3010 = vmul.f32 %v3009, %v3003
        %v3011 = vmul.f32 %v3009, %v3004
        %v3012 = vmul.f32 %v3009, %v3005
        %v3013 = vmul.f32 %v3009, %v3006
        %v3014 = vadd.f32 %v2966, %v3010
        %v3015 = vadd.f32 %v2967, %v3011
        %v3016 = vadd.f32 %v2968, %v3012
        %v3017 = vadd.f32 %v2969, %v3013
        %s3018 = sadd.s32 %s173, 369
        %s3019 = sld [smem:[#allocation3 + %s3018]]
        %v3020 = vstv %s3019
        %v3021 = vmul.f32 %v3020, %v3003
        %v3022 = vmul.f32 %v3020, %v3004
        %v3023 = vmul.f32 %v3020, %v3005
        %v3024 = vmul.f32 %v3020, %v3006
        %v3025 = vadd.f32 %v2977, %v3021
        %v3026 = vadd.f32 %v2978, %v3022
        %v3027 = vadd.f32 %v2979, %v3023
        %v3028 = vadd.f32 %v2980, %v3024
        %s3029 = sadd.s32 %s173, 370
        %s3030 = sld [smem:[#allocation3 + %s3029]]
        %v3031 = vstv %s3030
        %v3032 = vmul.f32 %v3031, %v3003
        %v3033 = vmul.f32 %v3031, %v3004
        %v3034 = vmul.f32 %v3031, %v3005
        %v3035 = vmul.f32 %v3031, %v3006
        %v3036 = vadd.f32 %v2988, %v3032
        %v3037 = vadd.f32 %v2989, %v3033
        %v3038 = vadd.f32 %v2990, %v3034
        %v3039 = vadd.f32 %v2991, %v3035
        %s3040 = sadd.s32 %s173, 371
        %s3041 = sld [smem:[#allocation3 + %s3040]]
        %v3042 = vstv %s3041
        %v3043 = vmul.f32 %v3042, %v3003
        %v3044 = vmul.f32 %v3042, %v3004
        %v3045 = vmul.f32 %v3042, %v3005
        %v3046 = vmul.f32 %v3042, %v3006
        %v3047 = vadd.f32 %v2999, %v3043
        %v3048 = vadd.f32 %v3000, %v3044
        %v3049 = vadd.f32 %v3001, %v3045
        %v3050 = vadd.f32 %v3002, %v3046
        %v3051 = vld [vmem:[%s879] sm:$0xff]
        %v3052 = vld [vmem:[%s879 + $0x8] sm:$0xff]
        %v3053 = vld [vmem:[%s879 + $0x10] sm:$0xff]
        %v3054 = vld [vmem:[%s879 + $0x18] sm:$0x7f]
        %s3055 = sadd.s32 %s173, 80
        %s3056 = sld [smem:[#allocation3 + %s3055]]
        %v3057 = vstv %s3056
        %v3058 = vmul.f32 %v3057, %v3051
        %v3059 = vmul.f32 %v3057, %v3052
        %v3060 = vmul.f32 %v3057, %v3053
        %v3061 = vmul.f32 %v3057, %v3054
        %v3062 = vadd.f32 %v3014, %v3058
        %v3063 = vadd.f32 %v3015, %v3059
        %v3064 = vadd.f32 %v3016, %v3060
        %v3065 = vadd.f32 %v3017, %v3061
        %s3066 = sadd.s32 %s173, 81
        %s3067 = sld [smem:[#allocation3 + %s3066]]
        %v3068 = vstv %s3067
        %v3069 = vmul.f32 %v3068, %v3051
        %v3070 = vmul.f32 %v3068, %v3052
        %v3071 = vmul.f32 %v3068, %v3053
        %v3072 = vmul.f32 %v3068, %v3054
        %v3073 = vadd.f32 %v3025, %v3069
        %v3074 = vadd.f32 %v3026, %v3070
        %v3075 = vadd.f32 %v3027, %v3071
        %v3076 = vadd.f32 %v3028, %v3072
        %s3077 = sadd.s32 %s173, 82
        %s3078 = sld [smem:[#allocation3 + %s3077]]
        %v3079 = vstv %s3078
        %v3080 = vmul.f32 %v3079, %v3051
        %v3081 = vmul.f32 %v3079, %v3052
        %v3082 = vmul.f32 %v3079, %v3053
        %v3083 = vmul.f32 %v3079, %v3054
        %v3084 = vadd.f32 %v3036, %v3080
        %v3085 = vadd.f32 %v3037, %v3081
        %v3086 = vadd.f32 %v3038, %v3082
        %v3087 = vadd.f32 %v3039, %v3083
        %s3088 = sadd.s32 %s173, 83
        %s3089 = sld [smem:[#allocation3 + %s3088]]
        %v3090 = vstv %s3089
        %v3091 = vmul.f32 %v3090, %v3051
        %v3092 = vmul.f32 %v3090, %v3052
        %v3093 = vmul.f32 %v3090, %v3053
        %v3094 = vmul.f32 %v3090, %v3054
        %v3095 = vadd.f32 %v3047, %v3091
        %v3096 = vadd.f32 %v3048, %v3092
        %v3097 = vadd.f32 %v3049, %v3093
        %v3098 = vadd.f32 %v3050, %v3094
        %v3099 = vld [vmem:[%s879 + $0x1] sm:$0xff]
        %v3100 = vld [vmem:[%s879 + $0x9] sm:$0xff]
        %v3101 = vld [vmem:[%s879 + $0x11] sm:$0xff]
        %v3102 = vld [vmem:[%s879 + $0x19] sm:$0x7f]
        %s3103 = sadd.s32 %s173, 240
        %s3104 = sld [smem:[#allocation3 + %s3103]]
        %v3105 = vstv %s3104
        %v3106 = vmul.f32 %v3105, %v3099
        %v3107 = vmul.f32 %v3105, %v3100
        %v3108 = vmul.f32 %v3105, %v3101
        %v3109 = vmul.f32 %v3105, %v3102
        %v3110 = vadd.f32 %v3062, %v3106
        %v3111 = vadd.f32 %v3063, %v3107
        %v3112 = vadd.f32 %v3064, %v3108
        %v3113 = vadd.f32 %v3065, %v3109
        %s3114 = sadd.s32 %s173, 241
        %s3115 = sld [smem:[#allocation3 + %s3114]]
        %v3116 = vstv %s3115
        %v3117 = vmul.f32 %v3116, %v3099
        %v3118 = vmul.f32 %v3116, %v3100
        %v3119 = vmul.f32 %v3116, %v3101
        %v3120 = vmul.f32 %v3116, %v3102
        %v3121 = vadd.f32 %v3073, %v3117
        %v3122 = vadd.f32 %v3074, %v3118
        %v3123 = vadd.f32 %v3075, %v3119
        %v3124 = vadd.f32 %v3076, %v3120
        %s3125 = sadd.s32 %s173, 242
        %s3126 = sld [smem:[#allocation3 + %s3125]]
        %v3127 = vstv %s3126
        %v3128 = vmul.f32 %v3127, %v3099
        %v3129 = vmul.f32 %v3127, %v3100
        %v3130 = vmul.f32 %v3127, %v3101
        %v3131 = vmul.f32 %v3127, %v3102
        %v3132 = vadd.f32 %v3084, %v3128
        %v3133 = vadd.f32 %v3085, %v3129
        %v3134 = vadd.f32 %v3086, %v3130
        %v3135 = vadd.f32 %v3087, %v3131
        %s3136 = sadd.s32 %s173, 243
        %s3137 = sld [smem:[#allocation3 + %s3136]]
        %v3138 = vstv %s3137
        %v3139 = vmul.f32 %v3138, %v3099
        %v3140 = vmul.f32 %v3138, %v3100
        %v3141 = vmul.f32 %v3138, %v3101
        %v3142 = vmul.f32 %v3138, %v3102
        %v3143 = vadd.f32 %v3095, %v3139
        %v3144 = vadd.f32 %v3096, %v3140
        %v3145 = vadd.f32 %v3097, %v3141
        %v3146 = vadd.f32 %v3098, %v3142
        %v3147 = vld [vmem:[%s879 + $0x2] sm:$0xff]
        %v3148 = vld [vmem:[%s879 + $0xa] sm:$0xff]
        %v3149 = vld [vmem:[%s879 + $0x12] sm:$0xff]
        %v3150 = vld [vmem:[%s879 + $0x1a] sm:$0x7f]
        %s3151 = sadd.s32 %s173, 400
        %s3152 = sld [smem:[#allocation3 + %s3151]]
        %v3153 = vstv %s3152
        %v3154 = vmul.f32 %v3153, %v3147
        %v3155 = vmul.f32 %v3153, %v3148
        %v3156 = vmul.f32 %v3153, %v3149
        %v3157 = vmul.f32 %v3153, %v3150
        %v3158 = vadd.f32 %v3110, %v3154
        %v3159 = vadd.f32 %v3111, %v3155
        %v3160 = vadd.f32 %v3112, %v3156
        %v3161 = vadd.f32 %v3113, %v3157
        %s3162 = sadd.s32 %s173, 401
        %s3163 = sld [smem:[#allocation3 + %s3162]]
        %v3164 = vstv %s3163
        %v3165 = vmul.f32 %v3164, %v3147
        %v3166 = vmul.f32 %v3164, %v3148
        %v3167 = vmul.f32 %v3164, %v3149
        %v3168 = vmul.f32 %v3164, %v3150
        %v3169 = vadd.f32 %v3121, %v3165
        %v3170 = vadd.f32 %v3122, %v3166
        %v3171 = vadd.f32 %v3123, %v3167
        %v3172 = vadd.f32 %v3124, %v3168
        %s3173 = sadd.s32 %s173, 402
        %s3174 = sld [smem:[#allocation3 + %s3173]]
        %v3175 = vstv %s3174
        %v3176 = vmul.f32 %v3175, %v3147
        %v3177 = vmul.f32 %v3175, %v3148
        %v3178 = vmul.f32 %v3175, %v3149
        %v3179 = vmul.f32 %v3175, %v3150
        %v3180 = vadd.f32 %v3132, %v3176
        %v3181 = vadd.f32 %v3133, %v3177
        %v3182 = vadd.f32 %v3134, %v3178
        %v3183 = vadd.f32 %v3135, %v3179
        %s3184 = sadd.s32 %s173, 403
        %s3185 = sld [smem:[#allocation3 + %s3184]]
        %v3186 = vstv %s3185
        %v3187 = vmul.f32 %v3186, %v3147
        %v3188 = vmul.f32 %v3186, %v3148
        %v3189 = vmul.f32 %v3186, %v3149
        %v3190 = vmul.f32 %v3186, %v3150
        %v3191 = vadd.f32 %v3143, %v3187
        %v3192 = vadd.f32 %v3144, %v3188
        %v3193 = vadd.f32 %v3145, %v3189
        %v3194 = vadd.f32 %v3146, %v3190
        %v3195 = vld [vmem:[%s940] sm:$0xff]
        %v3196 = vld [vmem:[%s940 + $0x8] sm:$0xff]
        %v3197 = vld [vmem:[%s940 + $0x10] sm:$0xff]
        %v3198 = vld [vmem:[%s940 + $0x18] sm:$0x7f]
        %s3199 = sadd.s32 %s173, 112
        %s3200 = sld [smem:[#allocation3 + %s3199]]
        %v3201 = vstv %s3200
        %v3202 = vmul.f32 %v3201, %v3195
        %v3203 = vmul.f32 %v3201, %v3196
        %v3204 = vmul.f32 %v3201, %v3197
        %v3205 = vmul.f32 %v3201, %v3198
        %v3206 = vadd.f32 %v3158, %v3202
        %v3207 = vadd.f32 %v3159, %v3203
        %v3208 = vadd.f32 %v3160, %v3204
        %v3209 = vadd.f32 %v3161, %v3205
        %s3210 = sadd.s32 %s173, 113
        %s3211 = sld [smem:[#allocation3 + %s3210]]
        %v3212 = vstv %s3211
        %v3213 = vmul.f32 %v3212, %v3195
        %v3214 = vmul.f32 %v3212, %v3196
        %v3215 = vmul.f32 %v3212, %v3197
        %v3216 = vmul.f32 %v3212, %v3198
        %v3217 = vadd.f32 %v3169, %v3213
        %v3218 = vadd.f32 %v3170, %v3214
        %v3219 = vadd.f32 %v3171, %v3215
        %v3220 = vadd.f32 %v3172, %v3216
        %s3221 = sadd.s32 %s173, 114
        %s3222 = sld [smem:[#allocation3 + %s3221]]
        %v3223 = vstv %s3222
        %v3224 = vmul.f32 %v3223, %v3195
        %v3225 = vmul.f32 %v3223, %v3196
        %v3226 = vmul.f32 %v3223, %v3197
        %v3227 = vmul.f32 %v3223, %v3198
        %v3228 = vadd.f32 %v3180, %v3224
        %v3229 = vadd.f32 %v3181, %v3225
        %v3230 = vadd.f32 %v3182, %v3226
        %v3231 = vadd.f32 %v3183, %v3227
        %s3232 = sadd.s32 %s173, 115
        %s3233 = sld [smem:[#allocation3 + %s3232]]
        %v3234 = vstv %s3233
        %v3235 = vmul.f32 %v3234, %v3195
        %v3236 = vmul.f32 %v3234, %v3196
        %v3237 = vmul.f32 %v3234, %v3197
        %v3238 = vmul.f32 %v3234, %v3198
        %v3239 = vadd.f32 %v3191, %v3235
        %v3240 = vadd.f32 %v3192, %v3236
        %v3241 = vadd.f32 %v3193, %v3237
        %v3242 = vadd.f32 %v3194, %v3238
        %v3243 = vld [vmem:[%s940 + $0x1] sm:$0xff]
        %v3244 = vld [vmem:[%s940 + $0x9] sm:$0xff]
        %v3245 = vld [vmem:[%s940 + $0x11] sm:$0xff]
        %v3246 = vld [vmem:[%s940 + $0x19] sm:$0x7f]
        %s3247 = sadd.s32 %s173, 272
        %s3248 = sld [smem:[#allocation3 + %s3247]]
        %v3249 = vstv %s3248
        %v3250 = vmul.f32 %v3249, %v3243
        %v3251 = vmul.f32 %v3249, %v3244
        %v3252 = vmul.f32 %v3249, %v3245
        %v3253 = vmul.f32 %v3249, %v3246
        %v3254 = vadd.f32 %v3206, %v3250
        %v3255 = vadd.f32 %v3207, %v3251
        %v3256 = vadd.f32 %v3208, %v3252
        %v3257 = vadd.f32 %v3209, %v3253
        %s3258 = sadd.s32 %s173, 273
        %s3259 = sld [smem:[#allocation3 + %s3258]]
        %v3260 = vstv %s3259
        %v3261 = vmul.f32 %v3260, %v3243
        %v3262 = vmul.f32 %v3260, %v3244
        %v3263 = vmul.f32 %v3260, %v3245
        %v3264 = vmul.f32 %v3260, %v3246
        %v3265 = vadd.f32 %v3217, %v3261
        %v3266 = vadd.f32 %v3218, %v3262
        %v3267 = vadd.f32 %v3219, %v3263
        %v3268 = vadd.f32 %v3220, %v3264
        %s3269 = sadd.s32 %s173, 274
        %s3270 = sld [smem:[#allocation3 + %s3269]]
        %v3271 = vstv %s3270
        %v3272 = vmul.f32 %v3271, %v3243
        %v3273 = vmul.f32 %v3271, %v3244
        %v3274 = vmul.f32 %v3271, %v3245
        %v3275 = vmul.f32 %v3271, %v3246
        %v3276 = vadd.f32 %v3228, %v3272
        %v3277 = vadd.f32 %v3229, %v3273
        %v3278 = vadd.f32 %v3230, %v3274
        %v3279 = vadd.f32 %v3231, %v3275
        %s3280 = sadd.s32 %s173, 275
        %s3281 = sld [smem:[#allocation3 + %s3280]]
        %v3282 = vstv %s3281
        %v3283 = vmul.f32 %v3282, %v3243
        %v3284 = vmul.f32 %v3282, %v3244
        %v3285 = vmul.f32 %v3282, %v3245
        %v3286 = vmul.f32 %v3282, %v3246
        %v3287 = vadd.f32 %v3239, %v3283
        %v3288 = vadd.f32 %v3240, %v3284
        %v3289 = vadd.f32 %v3241, %v3285
        %v3290 = vadd.f32 %v3242, %v3286
        %v3291 = vld [vmem:[%s940 + $0x2] sm:$0xff]
        %v3292 = vld [vmem:[%s940 + $0xa] sm:$0xff]
        %v3293 = vld [vmem:[%s940 + $0x12] sm:$0xff]
        %v3294 = vld [vmem:[%s940 + $0x1a] sm:$0x7f]
        %s3295 = sadd.s32 %s173, 432
        %s3296 = sld [smem:[#allocation3 + %s3295]]
        %v3297 = vstv %s3296
        %v3298 = vmul.f32 %v3297, %v3291
        %v3299 = vmul.f32 %v3297, %v3292
        %v3300 = vmul.f32 %v3297, %v3293
        %v3301 = vmul.f32 %v3297, %v3294
        %v3302 = vadd.f32 %v3254, %v3298
        %v3303 = vadd.f32 %v3255, %v3299
        %v3304 = vadd.f32 %v3256, %v3300
        %v3305 = vadd.f32 %v3257, %v3301
        %s3306 = sadd.s32 %s173, 433
        %s3307 = sld [smem:[#allocation3 + %s3306]]
        %v3308 = vstv %s3307
        %v3309 = vmul.f32 %v3308, %v3291
        %v3310 = vmul.f32 %v3308, %v3292
        %v3311 = vmul.f32 %v3308, %v3293
        %v3312 = vmul.f32 %v3308, %v3294
        %v3313 = vadd.f32 %v3265, %v3309
        %v3314 = vadd.f32 %v3266, %v3310
        %v3315 = vadd.f32 %v3267, %v3311
        %v3316 = vadd.f32 %v3268, %v3312
        %s3317 = sadd.s32 %s173, 434
        %s3318 = sld [smem:[#allocation3 + %s3317]]
        %v3319 = vstv %s3318
        %v3320 = vmul.f32 %v3319, %v3291
        %v3321 = vmul.f32 %v3319, %v3292
        %v3322 = vmul.f32 %v3319, %v3293
        %v3323 = vmul.f32 %v3319, %v3294
        %v3324 = vadd.f32 %v3276, %v3320
        %v3325 = vadd.f32 %v3277, %v3321
        %v3326 = vadd.f32 %v3278, %v3322
        %v3327 = vadd.f32 %v3279, %v3323
        %s3328 = sadd.s32 %s173, 435
        %s3329 = sld [smem:[#allocation3 + %s3328]]
        %v3330 = vstv %s3329
        %v3331 = vmul.f32 %v3330, %v3291
        %v3332 = vmul.f32 %v3330, %v3292
        %v3333 = vmul.f32 %v3330, %v3293
        %v3334 = vmul.f32 %v3330, %v3294
        %v3335 = vadd.f32 %v3287, %v3331
        %v3336 = vadd.f32 %v3288, %v3332
        %v3337 = vadd.f32 %v3289, %v3333
        %v3338 = vadd.f32 %v3290, %v3334
        %v3339 = vld [vmem:[%s1001] sm:$0xff]
        %v3340 = vld [vmem:[%s1001 + $0x8] sm:$0xff]
        %v3341 = vld [vmem:[%s1001 + $0x10] sm:$0xff]
        %v3342 = vld [vmem:[%s1001 + $0x18] sm:$0x7f]
        %s3343 = sadd.s32 %s173, 144
        %s3344 = sld [smem:[#allocation3 + %s3343]]
        %v3345 = vstv %s3344
        %v3346 = vmul.f32 %v3345, %v3339
        %v3347 = vmul.f32 %v3345, %v3340
        %v3348 = vmul.f32 %v3345, %v3341
        %v3349 = vmul.f32 %v3345, %v3342
        %v3350 = vadd.f32 %v3302, %v3346
        %v3351 = vadd.f32 %v3303, %v3347
        %v3352 = vadd.f32 %v3304, %v3348
        %v3353 = vadd.f32 %v3305, %v3349
        %s3354 = sadd.s32 %s173, 145
        %s3355 = sld [smem:[#allocation3 + %s3354]]
        %v3356 = vstv %s3355
        %v3357 = vmul.f32 %v3356, %v3339
        %v3358 = vmul.f32 %v3356, %v3340
        %v3359 = vmul.f32 %v3356, %v3341
        %v3360 = vmul.f32 %v3356, %v3342
        %v3361 = vadd.f32 %v3313, %v3357
        %v3362 = vadd.f32 %v3314, %v3358
        %v3363 = vadd.f32 %v3315, %v3359
        %v3364 = vadd.f32 %v3316, %v3360
        %s3365 = sadd.s32 %s173, 146
        %s3366 = sld [smem:[#allocation3 + %s3365]]
        %v3367 = vstv %s3366
        %v3368 = vmul.f32 %v3367, %v3339
        %v3369 = vmul.f32 %v3367, %v3340
        %v3370 = vmul.f32 %v3367, %v3341
        %v3371 = vmul.f32 %v3367, %v3342
        %v3372 = vadd.f32 %v3324, %v3368
        %v3373 = vadd.f32 %v3325, %v3369
        %v3374 = vadd.f32 %v3326, %v3370
        %v3375 = vadd.f32 %v3327, %v3371
        %s3376 = sadd.s32 %s173, 147
        %s3377 = sld [smem:[#allocation3 + %s3376]]
        %v3378 = vstv %s3377
        %v3379 = vmul.f32 %v3378, %v3339
        %v3380 = vmul.f32 %v3378, %v3340
        %v3381 = vmul.f32 %v3378, %v3341
        %v3382 = vmul.f32 %v3378, %v3342
        %v3383 = vadd.f32 %v3335, %v3379
        %v3384 = vadd.f32 %v3336, %v3380
        %v3385 = vadd.f32 %v3337, %v3381
        %v3386 = vadd.f32 %v3338, %v3382
        %v3387 = vld [vmem:[%s1001 + $0x1] sm:$0xff]
        %v3388 = vld [vmem:[%s1001 + $0x9] sm:$0xff]
        %v3389 = vld [vmem:[%s1001 + $0x11] sm:$0xff]
        %v3390 = vld [vmem:[%s1001 + $0x19] sm:$0x7f]
        %s3391 = sadd.s32 %s173, 304
        %s3392 = sld [smem:[#allocation3 + %s3391]]
        %v3393 = vstv %s3392
        %v3394 = vmul.f32 %v3393, %v3387
        %v3395 = vmul.f32 %v3393, %v3388
        %v3396 = vmul.f32 %v3393, %v3389
        %v3397 = vmul.f32 %v3393, %v3390
        %v3398 = vadd.f32 %v3350, %v3394
        %v3399 = vadd.f32 %v3351, %v3395
        %v3400 = vadd.f32 %v3352, %v3396
        %v3401 = vadd.f32 %v3353, %v3397
        %s3402 = sadd.s32 %s173, 305
        %s3403 = sld [smem:[#allocation3 + %s3402]]
        %v3404 = vstv %s3403
        %v3405 = vmul.f32 %v3404, %v3387
        %v3406 = vmul.f32 %v3404, %v3388
        %v3407 = vmul.f32 %v3404, %v3389
        %v3408 = vmul.f32 %v3404, %v3390
        %v3409 = vadd.f32 %v3361, %v3405
        %v3410 = vadd.f32 %v3362, %v3406
        %v3411 = vadd.f32 %v3363, %v3407
        %v3412 = vadd.f32 %v3364, %v3408
        %s3413 = sadd.s32 %s173, 306
        %s3414 = sld [smem:[#allocation3 + %s3413]]
        %v3415 = vstv %s3414
        %v3416 = vmul.f32 %v3415, %v3387
        %v3417 = vmul.f32 %v3415, %v3388
        %v3418 = vmul.f32 %v3415, %v3389
        %v3419 = vmul.f32 %v3415, %v3390
        %v3420 = vadd.f32 %v3372, %v3416
        %v3421 = vadd.f32 %v3373, %v3417
        %v3422 = vadd.f32 %v3374, %v3418
        %v3423 = vadd.f32 %v3375, %v3419
        %s3424 = sadd.s32 %s173, 307
        %s3425 = sld [smem:[#allocation3 + %s3424]]
        %v3426 = vstv %s3425
        %v3427 = vmul.f32 %v3426, %v3387
        %v3428 = vmul.f32 %v3426, %v3388
        %v3429 = vmul.f32 %v3426, %v3389
        %v3430 = vmul.f32 %v3426, %v3390
        %v3431 = vadd.f32 %v3383, %v3427
        %v3432 = vadd.f32 %v3384, %v3428
        %v3433 = vadd.f32 %v3385, %v3429
        %v3434 = vadd.f32 %v3386, %v3430
        %v3435 = vld [vmem:[%s1001 + $0x2] sm:$0xff]
        %v3436 = vld [vmem:[%s1001 + $0xa] sm:$0xff]
        %v3437 = vld [vmem:[%s1001 + $0x12] sm:$0xff]
        %v3438 = vld [vmem:[%s1001 + $0x1a] sm:$0x7f]
        %s3439 = sadd.s32 %s173, 464
        %s3440 = sld [smem:[#allocation3 + %s3439]]
        %v3441 = vstv %s3440
        %v3442 = vmul.f32 %v3441, %v3435
        %v3443 = vmul.f32 %v3441, %v3436
        %v3444 = vmul.f32 %v3441, %v3437
        %v3445 = vmul.f32 %v3441, %v3438
        %v3446 = vadd.f32 %v3398, %v3442
        %v3447 = vadd.f32 %v3399, %v3443
        %v3448 = vadd.f32 %v3400, %v3444
        %v3449 = vadd.f32 %v3401, %v3445
        %s3450 = sadd.s32 %s173, 465
        %s3451 = sld [smem:[#allocation3 + %s3450]]
        %v3452 = vstv %s3451
        %v3453 = vmul.f32 %v3452, %v3435
        %v3454 = vmul.f32 %v3452, %v3436
        %v3455 = vmul.f32 %v3452, %v3437
        %v3456 = vmul.f32 %v3452, %v3438
        %v3457 = vadd.f32 %v3409, %v3453
        %v3458 = vadd.f32 %v3410, %v3454
        %v3459 = vadd.f32 %v3411, %v3455
        %v3460 = vadd.f32 %v3412, %v3456
        %s3461 = sadd.s32 %s173, 466
        %s3462 = sld [smem:[#allocation3 + %s3461]]
        %v3463 = vstv %s3462
        %v3464 = vmul.f32 %v3463, %v3435
        %v3465 = vmul.f32 %v3463, %v3436
        %v3466 = vmul.f32 %v3463, %v3437
        %v3467 = vmul.f32 %v3463, %v3438
        %v3468 = vadd.f32 %v3420, %v3464
        %v3469 = vadd.f32 %v3421, %v3465
        %v3470 = vadd.f32 %v3422, %v3466
        %v3471 = vadd.f32 %v3423, %v3467
        %s3472 = sadd.s32 %s173, 467
        %s3473 = sld [smem:[#allocation3 + %s3472]]
        %v3474 = vstv %s3473
        %v3475 = vmul.f32 %v3474, %v3435
        %v3476 = vmul.f32 %v3474, %v3436
        %v3477 = vmul.f32 %v3474, %v3437
        %v3478 = vmul.f32 %v3474, %v3438
        %v3479 = vadd.f32 %v3431, %v3475
        %v3480 = vadd.f32 %v3432, %v3476
        %v3481 = vadd.f32 %v3433, %v3477
        %v3482 = vadd.f32 %v3434, %v3478
        %v3483 = vld [vmem:[%s1043] sm:$0xff]
        %v3484 = vld [vmem:[%s1043 + $0x8] sm:$0xff]
        %v3485 = vld [vmem:[%s1043 + $0x10] sm:$0xff]
        %v3486 = vld [vmem:[%s1043 + $0x18] sm:$0x7f]
        %s3487 = sadd.s32 %s173, 24
        %s3488 = sld [smem:[#allocation3 + %s3487]]
        %v3489 = vstv %s3488
        %v3490 = vmul.f32 %v3489, %v3483
        %v3491 = vmul.f32 %v3489, %v3484
        %v3492 = vmul.f32 %v3489, %v3485
        %v3493 = vmul.f32 %v3489, %v3486
        %v3494 = vadd.f32 %v3446, %v3490
        %v3495 = vadd.f32 %v3447, %v3491
        %v3496 = vadd.f32 %v3448, %v3492
        %v3497 = vadd.f32 %v3449, %v3493
        %s3498 = sadd.s32 %s173, 25
        %s3499 = sld [smem:[#allocation3 + %s3498]]
        %v3500 = vstv %s3499
        %v3501 = vmul.f32 %v3500, %v3483
        %v3502 = vmul.f32 %v3500, %v3484
        %v3503 = vmul.f32 %v3500, %v3485
        %v3504 = vmul.f32 %v3500, %v3486
        %v3505 = vadd.f32 %v3457, %v3501
        %v3506 = vadd.f32 %v3458, %v3502
        %v3507 = vadd.f32 %v3459, %v3503
        %v3508 = vadd.f32 %v3460, %v3504
        %s3509 = sadd.s32 %s173, 26
        %s3510 = sld [smem:[#allocation3 + %s3509]]
        %v3511 = vstv %s3510
        %v3512 = vmul.f32 %v3511, %v3483
        %v3513 = vmul.f32 %v3511, %v3484
        %v3514 = vmul.f32 %v3511, %v3485
        %v3515 = vmul.f32 %v3511, %v3486
        %v3516 = vadd.f32 %v3468, %v3512
        %v3517 = vadd.f32 %v3469, %v3513
        %v3518 = vadd.f32 %v3470, %v3514
        %v3519 = vadd.f32 %v3471, %v3515
        %s3520 = sadd.s32 %s173, 27
        %s3521 = sld [smem:[#allocation3 + %s3520]]
        %v3522 = vstv %s3521
        %v3523 = vmul.f32 %v3522, %v3483
        %v3524 = vmul.f32 %v3522, %v3484
        %v3525 = vmul.f32 %v3522, %v3485
        %v3526 = vmul.f32 %v3522, %v3486
        %v3527 = vadd.f32 %v3479, %v3523
        %v3528 = vadd.f32 %v3480, %v3524
        %v3529 = vadd.f32 %v3481, %v3525
        %v3530 = vadd.f32 %v3482, %v3526
        %v3531 = vld [vmem:[%s1043 + $0x1] sm:$0xff]
        %v3532 = vld [vmem:[%s1043 + $0x9] sm:$0xff]
        %v3533 = vld [vmem:[%s1043 + $0x11] sm:$0xff]
        %v3534 = vld [vmem:[%s1043 + $0x19] sm:$0x7f]
        %s3535 = sadd.s32 %s173, 184
        %s3536 = sld [smem:[#allocation3 + %s3535]]
        %v3537 = vstv %s3536
        %v3538 = vmul.f32 %v3537, %v3531
        %v3539 = vmul.f32 %v3537, %v3532
        %v3540 = vmul.f32 %v3537, %v3533
        %v3541 = vmul.f32 %v3537, %v3534
        %v3542 = vadd.f32 %v3494, %v3538
        %v3543 = vadd.f32 %v3495, %v3539
        %v3544 = vadd.f32 %v3496, %v3540
        %v3545 = vadd.f32 %v3497, %v3541
        %s3546 = sadd.s32 %s173, 185
        %s3547 = sld [smem:[#allocation3 + %s3546]]
        %v3548 = vstv %s3547
        %v3549 = vmul.f32 %v3548, %v3531
        %v3550 = vmul.f32 %v3548, %v3532
        %v3551 = vmul.f32 %v3548, %v3533
        %v3552 = vmul.f32 %v3548, %v3534
        %v3553 = vadd.f32 %v3505, %v3549
        %v3554 = vadd.f32 %v3506, %v3550
        %v3555 = vadd.f32 %v3507, %v3551
        %v3556 = vadd.f32 %v3508, %v3552
        %s3557 = sadd.s32 %s173, 186
        %s3558 = sld [smem:[#allocation3 + %s3557]]
        %v3559 = vstv %s3558
        %v3560 = vmul.f32 %v3559, %v3531
        %v3561 = vmul.f32 %v3559, %v3532
        %v3562 = vmul.f32 %v3559, %v3533
        %v3563 = vmul.f32 %v3559, %v3534
        %v3564 = vadd.f32 %v3516, %v3560
        %v3565 = vadd.f32 %v3517, %v3561
        %v3566 = vadd.f32 %v3518, %v3562
        %v3567 = vadd.f32 %v3519, %v3563
        %s3568 = sadd.s32 %s173, 187
        %s3569 = sld [smem:[#allocation3 + %s3568]]
        %v3570 = vstv %s3569
        %v3571 = vmul.f32 %v3570, %v3531
        %v3572 = vmul.f32 %v3570, %v3532
        %v3573 = vmul.f32 %v3570, %v3533
        %v3574 = vmul.f32 %v3570, %v3534
        %v3575 = vadd.f32 %v3527, %v3571
        %v3576 = vadd.f32 %v3528, %v3572
        %v3577 = vadd.f32 %v3529, %v3573
        %v3578 = vadd.f32 %v3530, %v3574
        %v3579 = vld [vmem:[%s1043 + $0x2] sm:$0xff]
        %v3580 = vld [vmem:[%s1043 + $0xa] sm:$0xff]
        %v3581 = vld [vmem:[%s1043 + $0x12] sm:$0xff]
        %v3582 = vld [vmem:[%s1043 + $0x1a] sm:$0x7f]
        %s3583 = sadd.s32 %s173, 344
        %s3584 = sld [smem:[#allocation3 + %s3583]]
        %v3585 = vstv %s3584
        %v3586 = vmul.f32 %v3585, %v3579
        %v3587 = vmul.f32 %v3585, %v3580
        %v3588 = vmul.f32 %v3585, %v3581
        %v3589 = vmul.f32 %v3585, %v3582
        %v3590 = vadd.f32 %v3542, %v3586
        %v3591 = vadd.f32 %v3543, %v3587
        %v3592 = vadd.f32 %v3544, %v3588
        %v3593 = vadd.f32 %v3545, %v3589
        %s3594 = sadd.s32 %s173, 345
        %s3595 = sld [smem:[#allocation3 + %s3594]]
        %v3596 = vstv %s3595
        %v3597 = vmul.f32 %v3596, %v3579
        %v3598 = vmul.f32 %v3596, %v3580
        %v3599 = vmul.f32 %v3596, %v3581
        %v3600 = vmul.f32 %v3596, %v3582
        %v3601 = vadd.f32 %v3553, %v3597
        %v3602 = vadd.f32 %v3554, %v3598
        %v3603 = vadd.f32 %v3555, %v3599
        %v3604 = vadd.f32 %v3556, %v3600
        %s3605 = sadd.s32 %s173, 346
        %s3606 = sld [smem:[#allocation3 + %s3605]]
        %v3607 = vstv %s3606
        %v3608 = vmul.f32 %v3607, %v3579
        %v3609 = vmul.f32 %v3607, %v3580
        %v3610 = vmul.f32 %v3607, %v3581
        %v3611 = vmul.f32 %v3607, %v3582
        %v3612 = vadd.f32 %v3564, %v3608
        %v3613 = vadd.f32 %v3565, %v3609
        %v3614 = vadd.f32 %v3566, %v3610
        %v3615 = vadd.f32 %v3567, %v3611
        %s3616 = sadd.s32 %s173, 347
        %s3617 = sld [smem:[#allocation3 + %s3616]]
        %v3618 = vstv %s3617
        %v3619 = vmul.f32 %v3618, %v3579
        %v3620 = vmul.f32 %v3618, %v3580
        %v3621 = vmul.f32 %v3618, %v3581
        %v3622 = vmul.f32 %v3618, %v3582
        %v3623 = vadd.f32 %v3575, %v3619
        %v3624 = vadd.f32 %v3576, %v3620
        %v3625 = vadd.f32 %v3577, %v3621
        %v3626 = vadd.f32 %v3578, %v3622
        %v3627 = vld [vmem:[%s1105] sm:$0xff]
        %v3628 = vld [vmem:[%s1105 + $0x8] sm:$0xff]
        %v3629 = vld [vmem:[%s1105 + $0x10] sm:$0xff]
        %v3630 = vld [vmem:[%s1105 + $0x18] sm:$0x7f]
        %s3631 = sadd.s32 %s173, 56
        %s3632 = sld [smem:[#allocation3 + %s3631]]
        %v3633 = vstv %s3632
        %v3634 = vmul.f32 %v3633, %v3627
        %v3635 = vmul.f32 %v3633, %v3628
        %v3636 = vmul.f32 %v3633, %v3629
        %v3637 = vmul.f32 %v3633, %v3630
        %v3638 = vadd.f32 %v3590, %v3634
        %v3639 = vadd.f32 %v3591, %v3635
        %v3640 = vadd.f32 %v3592, %v3636
        %v3641 = vadd.f32 %v3593, %v3637
        %s3642 = sadd.s32 %s173, 57
        %s3643 = sld [smem:[#allocation3 + %s3642]]
        %v3644 = vstv %s3643
        %v3645 = vmul.f32 %v3644, %v3627
        %v3646 = vmul.f32 %v3644, %v3628
        %v3647 = vmul.f32 %v3644, %v3629
        %v3648 = vmul.f32 %v3644, %v3630
        %v3649 = vadd.f32 %v3601, %v3645
        %v3650 = vadd.f32 %v3602, %v3646
        %v3651 = vadd.f32 %v3603, %v3647
        %v3652 = vadd.f32 %v3604, %v3648
        %s3653 = sadd.s32 %s173, 58
        %s3654 = sld [smem:[#allocation3 + %s3653]]
        %v3655 = vstv %s3654
        %v3656 = vmul.f32 %v3655, %v3627
        %v3657 = vmul.f32 %v3655, %v3628
        %v3658 = vmul.f32 %v3655, %v3629
        %v3659 = vmul.f32 %v3655, %v3630
        %v3660 = vadd.f32 %v3612, %v3656
        %v3661 = vadd.f32 %v3613, %v3657
        %v3662 = vadd.f32 %v3614, %v3658
        %v3663 = vadd.f32 %v3615, %v3659
        %s3664 = sadd.s32 %s173, 59
        %s3665 = sld [smem:[#allocation3 + %s3664]]
        %v3666 = vstv %s3665
        %v3667 = vmul.f32 %v3666, %v3627
        %v3668 = vmul.f32 %v3666, %v3628
        %v3669 = vmul.f32 %v3666, %v3629
        %v3670 = vmul.f32 %v3666, %v3630
        %v3671 = vadd.f32 %v3623, %v3667
        %v3672 = vadd.f32 %v3624, %v3668
        %v3673 = vadd.f32 %v3625, %v3669
        %v3674 = vadd.f32 %v3626, %v3670
        %v3675 = vld [vmem:[%s1105 + $0x1] sm:$0xff]
        %v3676 = vld [vmem:[%s1105 + $0x9] sm:$0xff]
        %v3677 = vld [vmem:[%s1105 + $0x11] sm:$0xff]
        %v3678 = vld [vmem:[%s1105 + $0x19] sm:$0x7f]
        %s3679 = sadd.s32 %s173, 216
        %s3680 = sld [smem:[#allocation3 + %s3679]]
        %v3681 = vstv %s3680
        %v3682 = vmul.f32 %v3681, %v3675
        %v3683 = vmul.f32 %v3681, %v3676
        %v3684 = vmul.f32 %v3681, %v3677
        %v3685 = vmul.f32 %v3681, %v3678
        %v3686 = vadd.f32 %v3638, %v3682
        %v3687 = vadd.f32 %v3639, %v3683
        %v3688 = vadd.f32 %v3640, %v3684
        %v3689 = vadd.f32 %v3641, %v3685
        %s3690 = sadd.s32 %s173, 217
        %s3691 = sld [smem:[#allocation3 + %s3690]]
        %v3692 = vstv %s3691
        %v3693 = vmul.f32 %v3692, %v3675
        %v3694 = vmul.f32 %v3692, %v3676
        %v3695 = vmul.f32 %v3692, %v3677
        %v3696 = vmul.f32 %v3692, %v3678
        %v3697 = vadd.f32 %v3649, %v3693
        %v3698 = vadd.f32 %v3650, %v3694
        %v3699 = vadd.f32 %v3651, %v3695
        %v3700 = vadd.f32 %v3652, %v3696
        %s3701 = sadd.s32 %s173, 218
        %s3702 = sld [smem:[#allocation3 + %s3701]]
        %v3703 = vstv %s3702
        %v3704 = vmul.f32 %v3703, %v3675
        %v3705 = vmul.f32 %v3703, %v3676
        %v3706 = vmul.f32 %v3703, %v3677
        %v3707 = vmul.f32 %v3703, %v3678
        %v3708 = vadd.f32 %v3660, %v3704
        %v3709 = vadd.f32 %v3661, %v3705
        %v3710 = vadd.f32 %v3662, %v3706
        %v3711 = vadd.f32 %v3663, %v3707
        %s3712 = sadd.s32 %s173, 219
        %s3713 = sld [smem:[#allocation3 + %s3712]]
        %v3714 = vstv %s3713
        %v3715 = vmul.f32 %v3714, %v3675
        %v3716 = vmul.f32 %v3714, %v3676
        %v3717 = vmul.f32 %v3714, %v3677
        %v3718 = vmul.f32 %v3714, %v3678
        %v3719 = vadd.f32 %v3671, %v3715
        %v3720 = vadd.f32 %v3672, %v3716
        %v3721 = vadd.f32 %v3673, %v3717
        %v3722 = vadd.f32 %v3674, %v3718
        %v3723 = vld [vmem:[%s1105 + $0x2] sm:$0xff]
        %v3724 = vld [vmem:[%s1105 + $0xa] sm:$0xff]
        %v3725 = vld [vmem:[%s1105 + $0x12] sm:$0xff]
        %v3726 = vld [vmem:[%s1105 + $0x1a] sm:$0x7f]
        %s3727 = sadd.s32 %s173, 376
        %s3728 = sld [smem:[#allocation3 + %s3727]]
        %v3729 = vstv %s3728
        %v3730 = vmul.f32 %v3729, %v3723
        %v3731 = vmul.f32 %v3729, %v3724
        %v3732 = vmul.f32 %v3729, %v3725
        %v3733 = vmul.f32 %v3729, %v3726
        %v3734 = vadd.f32 %v3686, %v3730
        %v3735 = vadd.f32 %v3687, %v3731
        %v3736 = vadd.f32 %v3688, %v3732
        %v3737 = vadd.f32 %v3689, %v3733
        %s3738 = sadd.s32 %s173, 377
        %s3739 = sld [smem:[#allocation3 + %s3738]]
        %v3740 = vstv %s3739
        %v3741 = vmul.f32 %v3740, %v3723
        %v3742 = vmul.f32 %v3740, %v3724
        %v3743 = vmul.f32 %v3740, %v3725
        %v3744 = vmul.f32 %v3740, %v3726
        %v3745 = vadd.f32 %v3697, %v3741
        %v3746 = vadd.f32 %v3698, %v3742
        %v3747 = vadd.f32 %v3699, %v3743
        %v3748 = vadd.f32 %v3700, %v3744
        %s3749 = sadd.s32 %s173, 378
        %s3750 = sld [smem:[#allocation3 + %s3749]]
        %v3751 = vstv %s3750
        %v3752 = vmul.f32 %v3751, %v3723
        %v3753 = vmul.f32 %v3751, %v3724
        %v3754 = vmul.f32 %v3751, %v3725
        %v3755 = vmul.f32 %v3751, %v3726
        %v3756 = vadd.f32 %v3708, %v3752
        %v3757 = vadd.f32 %v3709, %v3753
        %v3758 = vadd.f32 %v3710, %v3754
        %v3759 = vadd.f32 %v3711, %v3755
        %s3760 = sadd.s32 %s173, 379
        %s3761 = sld [smem:[#allocation3 + %s3760]]
        %v3762 = vstv %s3761
        %v3763 = vmul.f32 %v3762, %v3723
        %v3764 = vmul.f32 %v3762, %v3724
        %v3765 = vmul.f32 %v3762, %v3725
        %v3766 = vmul.f32 %v3762, %v3726
        %v3767 = vadd.f32 %v3719, %v3763
        %v3768 = vadd.f32 %v3720, %v3764
        %v3769 = vadd.f32 %v3721, %v3765
        %v3770 = vadd.f32 %v3722, %v3766
        %v3771 = vld [vmem:[%s1166] sm:$0xff]
        %v3772 = vld [vmem:[%s1166 + $0x8] sm:$0xff]
        %v3773 = vld [vmem:[%s1166 + $0x10] sm:$0xff]
        %v3774 = vld [vmem:[%s1166 + $0x18] sm:$0x7f]
        %s3775 = sadd.s32 %s173, 88
        %s3776 = sld [smem:[#allocation3 + %s3775]]
        %v3777 = vstv %s3776
        %v3778 = vmul.f32 %v3777, %v3771
        %v3779 = vmul.f32 %v3777, %v3772
        %v3780 = vmul.f32 %v3777, %v3773
        %v3781 = vmul.f32 %v3777, %v3774
        %v3782 = vadd.f32 %v3734, %v3778
        %v3783 = vadd.f32 %v3735, %v3779
        %v3784 = vadd.f32 %v3736, %v3780
        %v3785 = vadd.f32 %v3737, %v3781
        %s3786 = sadd.s32 %s173, 89
        %s3787 = sld [smem:[#allocation3 + %s3786]]
        %v3788 = vstv %s3787
        %v3789 = vmul.f32 %v3788, %v3771
        %v3790 = vmul.f32 %v3788, %v3772
        %v3791 = vmul.f32 %v3788, %v3773
        %v3792 = vmul.f32 %v3788, %v3774
        %v3793 = vadd.f32 %v3745, %v3789
        %v3794 = vadd.f32 %v3746, %v3790
        %v3795 = vadd.f32 %v3747, %v3791
        %v3796 = vadd.f32 %v3748, %v3792
        %s3797 = sadd.s32 %s173, 90
        %s3798 = sld [smem:[#allocation3 + %s3797]]
        %v3799 = vstv %s3798
        %v3800 = vmul.f32 %v3799, %v3771
        %v3801 = vmul.f32 %v3799, %v3772
        %v3802 = vmul.f32 %v3799, %v3773
        %v3803 = vmul.f32 %v3799, %v3774
        %v3804 = vadd.f32 %v3756, %v3800
        %v3805 = vadd.f32 %v3757, %v3801
        %v3806 = vadd.f32 %v3758, %v3802
        %v3807 = vadd.f32 %v3759, %v3803
        %s3808 = sadd.s32 %s173, 91
        %s3809 = sld [smem:[#allocation3 + %s3808]]
        %v3810 = vstv %s3809
        %v3811 = vmul.f32 %v3810, %v3771
        %v3812 = vmul.f32 %v3810, %v3772
        %v3813 = vmul.f32 %v3810, %v3773
        %v3814 = vmul.f32 %v3810, %v3774
        %v3815 = vadd.f32 %v3767, %v3811
        %v3816 = vadd.f32 %v3768, %v3812
        %v3817 = vadd.f32 %v3769, %v3813
        %v3818 = vadd.f32 %v3770, %v3814
        %v3819 = vld [vmem:[%s1166 + $0x1] sm:$0xff]
        %v3820 = vld [vmem:[%s1166 + $0x9] sm:$0xff]
        %v3821 = vld [vmem:[%s1166 + $0x11] sm:$0xff]
        %v3822 = vld [vmem:[%s1166 + $0x19] sm:$0x7f]
        %s3823 = sadd.s32 %s173, 248
        %s3824 = sld [smem:[#allocation3 + %s3823]]
        %v3825 = vstv %s3824
        %v3826 = vmul.f32 %v3825, %v3819
        %v3827 = vmul.f32 %v3825, %v3820
        %v3828 = vmul.f32 %v3825, %v3821
        %v3829 = vmul.f32 %v3825, %v3822
        %v3830 = vadd.f32 %v3782, %v3826
        %v3831 = vadd.f32 %v3783, %v3827
        %v3832 = vadd.f32 %v3784, %v3828
        %v3833 = vadd.f32 %v3785, %v3829
        %s3834 = sadd.s32 %s173, 249
        %s3835 = sld [smem:[#allocation3 + %s3834]]
        %v3836 = vstv %s3835
        %v3837 = vmul.f32 %v3836, %v3819
        %v3838 = vmul.f32 %v3836, %v3820
        %v3839 = vmul.f32 %v3836, %v3821
        %v3840 = vmul.f32 %v3836, %v3822
        %v3841 = vadd.f32 %v3793, %v3837
        %v3842 = vadd.f32 %v3794, %v3838
        %v3843 = vadd.f32 %v3795, %v3839
        %v3844 = vadd.f32 %v3796, %v3840
        %s3845 = sadd.s32 %s173, 250
        %s3846 = sld [smem:[#allocation3 + %s3845]]
        %v3847 = vstv %s3846
        %v3848 = vmul.f32 %v3847, %v3819
        %v3849 = vmul.f32 %v3847, %v3820
        %v3850 = vmul.f32 %v3847, %v3821
        %v3851 = vmul.f32 %v3847, %v3822
        %v3852 = vadd.f32 %v3804, %v3848
        %v3853 = vadd.f32 %v3805, %v3849
        %v3854 = vadd.f32 %v3806, %v3850
        %v3855 = vadd.f32 %v3807, %v3851
        %s3856 = sadd.s32 %s173, 251
        %s3857 = sld [smem:[#allocation3 + %s3856]]
        %v3858 = vstv %s3857
        %v3859 = vmul.f32 %v3858, %v3819
        %v3860 = vmul.f32 %v3858, %v3820
        %v3861 = vmul.f32 %v3858, %v3821
        %v3862 = vmul.f32 %v3858, %v3822
        %v3863 = vadd.f32 %v3815, %v3859
        %v3864 = vadd.f32 %v3816, %v3860
        %v3865 = vadd.f32 %v3817, %v3861
        %v3866 = vadd.f32 %v3818, %v3862
        %v3867 = vld [vmem:[%s1166 + $0x2] sm:$0xff]
        %v3868 = vld [vmem:[%s1166 + $0xa] sm:$0xff]
        %v3869 = vld [vmem:[%s1166 + $0x12] sm:$0xff]
        %v3870 = vld [vmem:[%s1166 + $0x1a] sm:$0x7f]
        %s3871 = sadd.s32 %s173, 408
        %s3872 = sld [smem:[#allocation3 + %s3871]]
        %v3873 = vstv %s3872
        %v3874 = vmul.f32 %v3873, %v3867
        %v3875 = vmul.f32 %v3873, %v3868
        %v3876 = vmul.f32 %v3873, %v3869
        %v3877 = vmul.f32 %v3873, %v3870
        %v3878 = vadd.f32 %v3830, %v3874
        %v3879 = vadd.f32 %v3831, %v3875
        %v3880 = vadd.f32 %v3832, %v3876
        %v3881 = vadd.f32 %v3833, %v3877
        %s3882 = sadd.s32 %s173, 409
        %s3883 = sld [smem:[#allocation3 + %s3882]]
        %v3884 = vstv %s3883
        %v3885 = vmul.f32 %v3884, %v3867
        %v3886 = vmul.f32 %v3884, %v3868
        %v3887 = vmul.f32 %v3884, %v3869
        %v3888 = vmul.f32 %v3884, %v3870
        %v3889 = vadd.f32 %v3841, %v3885
        %v3890 = vadd.f32 %v3842, %v3886
        %v3891 = vadd.f32 %v3843, %v3887
        %v3892 = vadd.f32 %v3844, %v3888
        %s3893 = sadd.s32 %s173, 410
        %s3894 = sld [smem:[#allocation3 + %s3893]]
        %v3895 = vstv %s3894
        %v3896 = vmul.f32 %v3895, %v3867
        %v3897 = vmul.f32 %v3895, %v3868
        %v3898 = vmul.f32 %v3895, %v3869
        %v3899 = vmul.f32 %v3895, %v3870
        %v3900 = vadd.f32 %v3852, %v3896
        %v3901 = vadd.f32 %v3853, %v3897
        %v3902 = vadd.f32 %v3854, %v3898
        %v3903 = vadd.f32 %v3855, %v3899
        %s3904 = sadd.s32 %s173, 411
        %s3905 = sld [smem:[#allocation3 + %s3904]]
        %v3906 = vstv %s3905
        %v3907 = vmul.f32 %v3906, %v3867
        %v3908 = vmul.f32 %v3906, %v3868
        %v3909 = vmul.f32 %v3906, %v3869
        %v3910 = vmul.f32 %v3906, %v3870
        %v3911 = vadd.f32 %v3863, %v3907
        %v3912 = vadd.f32 %v3864, %v3908
        %v3913 = vadd.f32 %v3865, %v3909
        %v3914 = vadd.f32 %v3866, %v3910
        %v3915 = vld [vmem:[%s1227] sm:$0xff]
        %v3916 = vld [vmem:[%s1227 + $0x8] sm:$0xff]
        %v3917 = vld [vmem:[%s1227 + $0x10] sm:$0xff]
        %v3918 = vld [vmem:[%s1227 + $0x18] sm:$0x7f]
        %s3919 = sadd.s32 %s173, 120
        %s3920 = sld [smem:[#allocation3 + %s3919]]
        %v3921 = vstv %s3920
        %v3922 = vmul.f32 %v3921, %v3915
        %v3923 = vmul.f32 %v3921, %v3916
        %v3924 = vmul.f32 %v3921, %v3917
        %v3925 = vmul.f32 %v3921, %v3918
        %v3926 = vadd.f32 %v3878, %v3922
        %v3927 = vadd.f32 %v3879, %v3923
        %v3928 = vadd.f32 %v3880, %v3924
        %v3929 = vadd.f32 %v3881, %v3925
        %s3930 = sadd.s32 %s173, 121
        %s3931 = sld [smem:[#allocation3 + %s3930]]
        %v3932 = vstv %s3931
        %v3933 = vmul.f32 %v3932, %v3915
        %v3934 = vmul.f32 %v3932, %v3916
        %v3935 = vmul.f32 %v3932, %v3917
        %v3936 = vmul.f32 %v3932, %v3918
        %v3937 = vadd.f32 %v3889, %v3933
        %v3938 = vadd.f32 %v3890, %v3934
        %v3939 = vadd.f32 %v3891, %v3935
        %v3940 = vadd.f32 %v3892, %v3936
        %s3941 = sadd.s32 %s173, 122
        %s3942 = sld [smem:[#allocation3 + %s3941]]
        %v3943 = vstv %s3942
        %v3944 = vmul.f32 %v3943, %v3915
        %v3945 = vmul.f32 %v3943, %v3916
        %v3946 = vmul.f32 %v3943, %v3917
        %v3947 = vmul.f32 %v3943, %v3918
        %v3948 = vadd.f32 %v3900, %v3944
        %v3949 = vadd.f32 %v3901, %v3945
        %v3950 = vadd.f32 %v3902, %v3946
        %v3951 = vadd.f32 %v3903, %v3947
        %s3952 = sadd.s32 %s173, 123
        %s3953 = sld [smem:[#allocation3 + %s3952]]
        %v3954 = vstv %s3953
        %v3955 = vmul.f32 %v3954, %v3915
        %v3956 = vmul.f32 %v3954, %v3916
        %v3957 = vmul.f32 %v3954, %v3917
        %v3958 = vmul.f32 %v3954, %v3918
        %v3959 = vadd.f32 %v3911, %v3955
        %v3960 = vadd.f32 %v3912, %v3956
        %v3961 = vadd.f32 %v3913, %v3957
        %v3962 = vadd.f32 %v3914, %v3958
        %v3963 = vld [vmem:[%s1227 + $0x1] sm:$0xff]
        %v3964 = vld [vmem:[%s1227 + $0x9] sm:$0xff]
        %v3965 = vld [vmem:[%s1227 + $0x11] sm:$0xff]
        %v3966 = vld [vmem:[%s1227 + $0x19] sm:$0x7f]
        %s3967 = sadd.s32 %s173, 280
        %s3968 = sld [smem:[#allocation3 + %s3967]]
        %v3969 = vstv %s3968
        %v3970 = vmul.f32 %v3969, %v3963
        %v3971 = vmul.f32 %v3969, %v3964
        %v3972 = vmul.f32 %v3969, %v3965
        %v3973 = vmul.f32 %v3969, %v3966
        %v3974 = vadd.f32 %v3926, %v3970
        %v3975 = vadd.f32 %v3927, %v3971
        %v3976 = vadd.f32 %v3928, %v3972
        %v3977 = vadd.f32 %v3929, %v3973
        %s3978 = sadd.s32 %s173, 281
        %s3979 = sld [smem:[#allocation3 + %s3978]]
        %v3980 = vstv %s3979
        %v3981 = vmul.f32 %v3980, %v3963
        %v3982 = vmul.f32 %v3980, %v3964
        %v3983 = vmul.f32 %v3980, %v3965
        %v3984 = vmul.f32 %v3980, %v3966
        %v3985 = vadd.f32 %v3937, %v3981
        %v3986 = vadd.f32 %v3938, %v3982
        %v3987 = vadd.f32 %v3939, %v3983
        %v3988 = vadd.f32 %v3940, %v3984
        %s3989 = sadd.s32 %s173, 282
        %s3990 = sld [smem:[#allocation3 + %s3989]]
        %v3991 = vstv %s3990
        %v3992 = vmul.f32 %v3991, %v3963
        %v3993 = vmul.f32 %v3991, %v3964
        %v3994 = vmul.f32 %v3991, %v3965
        %v3995 = vmul.f32 %v3991, %v3966
        %v3996 = vadd.f32 %v3948, %v3992
        %v3997 = vadd.f32 %v3949, %v3993
        %v3998 = vadd.f32 %v3950, %v3994
        %v3999 = vadd.f32 %v3951, %v3995
        %s4000 = sadd.s32 %s173, 283
        %s4001 = sld [smem:[#allocation3 + %s4000]]
        %v4002 = vstv %s4001
        %v4003 = vmul.f32 %v4002, %v3963
        %v4004 = vmul.f32 %v4002, %v3964
        %v4005 = vmul.f32 %v4002, %v3965
        %v4006 = vmul.f32 %v4002, %v3966
        %v4007 = vadd.f32 %v3959, %v4003
        %v4008 = vadd.f32 %v3960, %v4004
        %v4009 = vadd.f32 %v3961, %v4005
        %v4010 = vadd.f32 %v3962, %v4006
        %v4011 = vld [vmem:[%s1227 + $0x2] sm:$0xff]
        %v4012 = vld [vmem:[%s1227 + $0xa] sm:$0xff]
        %v4013 = vld [vmem:[%s1227 + $0x12] sm:$0xff]
        %v4014 = vld [vmem:[%s1227 + $0x1a] sm:$0x7f]
        %s4015 = sadd.s32 %s173, 440
        %s4016 = sld [smem:[#allocation3 + %s4015]]
        %v4017 = vstv %s4016
        %v4018 = vmul.f32 %v4017, %v4011
        %v4019 = vmul.f32 %v4017, %v4012
        %v4020 = vmul.f32 %v4017, %v4013
        %v4021 = vmul.f32 %v4017, %v4014
        %v4022 = vadd.f32 %v3974, %v4018
        %v4023 = vadd.f32 %v3975, %v4019
        %v4024 = vadd.f32 %v3976, %v4020
        %v4025 = vadd.f32 %v3977, %v4021
        %s4026 = sadd.s32 %s173, 441
        %s4027 = sld [smem:[#allocation3 + %s4026]]
        %v4028 = vstv %s4027
        %v4029 = vmul.f32 %v4028, %v4011
        %v4030 = vmul.f32 %v4028, %v4012
        %v4031 = vmul.f32 %v4028, %v4013
        %v4032 = vmul.f32 %v4028, %v4014
        %v4033 = vadd.f32 %v3985, %v4029
        %v4034 = vadd.f32 %v3986, %v4030
        %v4035 = vadd.f32 %v3987, %v4031
        %v4036 = vadd.f32 %v3988, %v4032
        %s4037 = sadd.s32 %s173, 442
        %s4038 = sld [smem:[#allocation3 + %s4037]]
        %v4039 = vstv %s4038
        %v4040 = vmul.f32 %v4039, %v4011
        %v4041 = vmul.f32 %v4039, %v4012
        %v4042 = vmul.f32 %v4039, %v4013
        %v4043 = vmul.f32 %v4039, %v4014
        %v4044 = vadd.f32 %v3996, %v4040
        %v4045 = vadd.f32 %v3997, %v4041
        %v4046 = vadd.f32 %v3998, %v4042
        %v4047 = vadd.f32 %v3999, %v4043
        %s4048 = sadd.s32 %s173, 443
        %s4049 = sld [smem:[#allocation3 + %s4048]]
        %v4050 = vstv %s4049
        %v4051 = vmul.f32 %v4050, %v4011
        %v4052 = vmul.f32 %v4050, %v4012
        %v4053 = vmul.f32 %v4050, %v4013
        %v4054 = vmul.f32 %v4050, %v4014
        %v4055 = vadd.f32 %v4007, %v4051
        %v4056 = vadd.f32 %v4008, %v4052
        %v4057 = vadd.f32 %v4009, %v4053
        %v4058 = vadd.f32 %v4010, %v4054
        %v4059 = vld [vmem:[%s1288] sm:$0xff]
        %v4060 = vld [vmem:[%s1288 + $0x8] sm:$0xff]
        %v4061 = vld [vmem:[%s1288 + $0x10] sm:$0xff]
        %v4062 = vld [vmem:[%s1288 + $0x18] sm:$0x7f]
        %s4063 = sadd.s32 %s173, 152
        %s4064 = sld [smem:[#allocation3 + %s4063]]
        %v4065 = vstv %s4064
        %v4066 = vmul.f32 %v4065, %v4059
        %v4067 = vmul.f32 %v4065, %v4060
        %v4068 = vmul.f32 %v4065, %v4061
        %v4069 = vmul.f32 %v4065, %v4062
        %v4070 = vadd.f32 %v4022, %v4066
        %v4071 = vadd.f32 %v4023, %v4067
        %v4072 = vadd.f32 %v4024, %v4068
        %v4073 = vadd.f32 %v4025, %v4069
        %s4074 = sadd.s32 %s173, 153
        %s4075 = sld [smem:[#allocation3 + %s4074]]
        %v4076 = vstv %s4075
        %v4077 = vmul.f32 %v4076, %v4059
        %v4078 = vmul.f32 %v4076, %v4060
        %v4079 = vmul.f32 %v4076, %v4061
        %v4080 = vmul.f32 %v4076, %v4062
        %v4081 = vadd.f32 %v4033, %v4077
        %v4082 = vadd.f32 %v4034, %v4078
        %v4083 = vadd.f32 %v4035, %v4079
        %v4084 = vadd.f32 %v4036, %v4080
        %s4085 = sadd.s32 %s173, 154
        %s4086 = sld [smem:[#allocation3 + %s4085]]
        %v4087 = vstv %s4086
        %v4088 = vmul.f32 %v4087, %v4059
        %v4089 = vmul.f32 %v4087, %v4060
        %v4090 = vmul.f32 %v4087, %v4061
        %v4091 = vmul.f32 %v4087, %v4062
        %v4092 = vadd.f32 %v4044, %v4088
        %v4093 = vadd.f32 %v4045, %v4089
        %v4094 = vadd.f32 %v4046, %v4090
        %v4095 = vadd.f32 %v4047, %v4091
        %s4096 = sadd.s32 %s173, 155
        %s4097 = sld [smem:[#allocation3 + %s4096]]
        %v4098 = vstv %s4097
        %v4099 = vmul.f32 %v4098, %v4059
        %v4100 = vmul.f32 %v4098, %v4060
        %v4101 = vmul.f32 %v4098, %v4061
        %v4102 = vmul.f32 %v4098, %v4062
        %v4103 = vadd.f32 %v4055, %v4099
        %v4104 = vadd.f32 %v4056, %v4100
        %v4105 = vadd.f32 %v4057, %v4101
        %v4106 = vadd.f32 %v4058, %v4102
        %v4107 = vld [vmem:[%s1288 + $0x1] sm:$0xff]
        %v4108 = vld [vmem:[%s1288 + $0x9] sm:$0xff]
        %v4109 = vld [vmem:[%s1288 + $0x11] sm:$0xff]
        %v4110 = vld [vmem:[%s1288 + $0x19] sm:$0x7f]
        %s4111 = sadd.s32 %s173, 312
        %s4112 = sld [smem:[#allocation3 + %s4111]]
        %v4113 = vstv %s4112
        %v4114 = vmul.f32 %v4113, %v4107
        %v4115 = vmul.f32 %v4113, %v4108
        %v4116 = vmul.f32 %v4113, %v4109
        %v4117 = vmul.f32 %v4113, %v4110
        %v4118 = vadd.f32 %v4070, %v4114
        %v4119 = vadd.f32 %v4071, %v4115
        %v4120 = vadd.f32 %v4072, %v4116
        %v4121 = vadd.f32 %v4073, %v4117
        %s4122 = sadd.s32 %s173, 313
        %s4123 = sld [smem:[#allocation3 + %s4122]]
        %v4124 = vstv %s4123
        %v4125 = vmul.f32 %v4124, %v4107
        %v4126 = vmul.f32 %v4124, %v4108
        %v4127 = vmul.f32 %v4124, %v4109
        %v4128 = vmul.f32 %v4124, %v4110
        %v4129 = vadd.f32 %v4081, %v4125
        %v4130 = vadd.f32 %v4082, %v4126
        %v4131 = vadd.f32 %v4083, %v4127
        %v4132 = vadd.f32 %v4084, %v4128
        %s4133 = sadd.s32 %s173, 314
        %s4134 = sld [smem:[#allocation3 + %s4133]]
        %v4135 = vstv %s4134
        %v4136 = vmul.f32 %v4135, %v4107
        %v4137 = vmul.f32 %v4135, %v4108
        %v4138 = vmul.f32 %v4135, %v4109
        %v4139 = vmul.f32 %v4135, %v4110
        %v4140 = vadd.f32 %v4092, %v4136
        %v4141 = vadd.f32 %v4093, %v4137
        %v4142 = vadd.f32 %v4094, %v4138
        %v4143 = vadd.f32 %v4095, %v4139
        %s4144 = sadd.s32 %s173, 315
        %s4145 = sld [smem:[#allocation3 + %s4144]]
        %v4146 = vstv %s4145
        %v4147 = vmul.f32 %v4146, %v4107
        %v4148 = vmul.f32 %v4146, %v4108
        %v4149 = vmul.f32 %v4146, %v4109
        %v4150 = vmul.f32 %v4146, %v4110
        %v4151 = vadd.f32 %v4103, %v4147
        %v4152 = vadd.f32 %v4104, %v4148
        %v4153 = vadd.f32 %v4105, %v4149
        %v4154 = vadd.f32 %v4106, %v4150
        %v4155 = vld [vmem:[%s1288 + $0x2] sm:$0xff]
        %v4156 = vld [vmem:[%s1288 + $0xa] sm:$0xff]
        %v4157 = vld [vmem:[%s1288 + $0x12] sm:$0xff]
        %v4158 = vld [vmem:[%s1288 + $0x1a] sm:$0x7f]
        %s4159 = sadd.s32 %s173, 472
        %s4160 = sld [smem:[#allocation3 + %s4159]]
        %v4161 = vstv %s4160
        %v4162 = vmul.f32 %v4161, %v4155
        %v4163 = vmul.f32 %v4161, %v4156
        %v4164 = vmul.f32 %v4161, %v4157
        %v4165 = vmul.f32 %v4161, %v4158
        %v4166 = vadd.f32 %v4118, %v4162
        %v4167 = vadd.f32 %v4119, %v4163
        %v4168 = vadd.f32 %v4120, %v4164
        %v4169 = vadd.f32 %v4121, %v4165
        %s4170 = sadd.s32 %s173, 473
        %s4171 = sld [smem:[#allocation3 + %s4170]]
        %v4172 = vstv %s4171
        %v4173 = vmul.f32 %v4172, %v4155
        %v4174 = vmul.f32 %v4172, %v4156
        %v4175 = vmul.f32 %v4172, %v4157
        %v4176 = vmul.f32 %v4172, %v4158
        %v4177 = vadd.f32 %v4129, %v4173
        %v4178 = vadd.f32 %v4130, %v4174
        %v4179 = vadd.f32 %v4131, %v4175
        %v4180 = vadd.f32 %v4132, %v4176
        %s4181 = sadd.s32 %s173, 474
        %s4182 = sld [smem:[#allocation3 + %s4181]]
        %v4183 = vstv %s4182
        %v4184 = vmul.f32 %v4183, %v4155
        %v4185 = vmul.f32 %v4183, %v4156
        %v4186 = vmul.f32 %v4183, %v4157
        %v4187 = vmul.f32 %v4183, %v4158
        %v4188 = vadd.f32 %v4140, %v4184
        %v4189 = vadd.f32 %v4141, %v4185
        %v4190 = vadd.f32 %v4142, %v4186
        %v4191 = vadd.f32 %v4143, %v4187
        %s4192 = sadd.s32 %s173, 475
        %s4193 = sld [smem:[#allocation3 + %s4192]]
        %v4194 = vstv %s4193
        %v4195 = vmul.f32 %v4194, %v4155
        %v4196 = vmul.f32 %v4194, %v4156
        %v4197 = vmul.f32 %v4194, %v4157
        %v4198 = vmul.f32 %v4194, %v4158
        %v4199 = vadd.f32 %v4151, %v4195
        %v4200 = vadd.f32 %v4152, %v4196
        %v4201 = vadd.f32 %v4153, %v4197
        %v4202 = vadd.f32 %v4154, %v4198
        %4203 = vst.msk [vmem:[%s163] sm:$0xff] %vm179, %v4166
        %4204 = vst.msk [vmem:[%s163 + $0x8] sm:$0xff] %vm179, %v4167
        %4205 = vst.msk [vmem:[%s163 + $0x10] sm:$0xff] %vm179, %v4168
        %vm4206 = vcmask 374784
        %4207 = vst.msk [vmem:[%s163 + $0x18] sm:$0x7f] %vm4206, %v4169
        %4212 = vrot.lane.b32.xlu0 %v4166, 82
        %v4213 = vpop.permute.xlu0 %4212
        %4214 = vrot.lane.b32.xlu0 %v4167, 82
        %v4215 = vpop.permute.xlu0 %4214
        %4216 = vrot.lane.b32.xlu0 %v4168, 82
        %v4217 = vpop.permute.xlu0 %4216
        %4218 = vrot.lane.b32.xlu0 %v4169, 82
        %v4219 = vpop.permute.xlu0 %4218
        %s4224 = scalar_lea.vmem %s163, 128 [#allocation5]
        %4225 = vst.msk [vmem:[%s4224] sm:$0xff] %vm179, %v4213
        %4226 = vst.msk [vmem:[%s4224 + $0x8] sm:$0xff] %vm179, %v4215
        %4227 = vst.msk [vmem:[%s4224 + $0x10] sm:$0xff] %vm179, %v4217
        %4228 = vst.msk [vmem:[%s4224 + $0x18] sm:$0x7f] %vm4206, %v4219
        %s4229 = scalar_lea.vmem %s163, 32 [#allocation5]
        %4230 = vst.msk [vmem:[%s4229] sm:$0xff] %vm179, %v4177
        %4231 = vst.msk [vmem:[%s4229 + $0x8] sm:$0xff] %vm179, %v4178
        %4232 = vst.msk [vmem:[%s4229 + $0x10] sm:$0xff] %vm179, %v4179
        %4233 = vst.msk [vmem:[%s4229 + $0x18] sm:$0x7f] %vm4206, %v4180
        %4238 = vrot.lane.b32.xlu0 %v4177, 82
        %v4239 = vpop.permute.xlu0 %4238
        %4240 = vrot.lane.b32.xlu0 %v4178, 82
        %v4241 = vpop.permute.xlu0 %4240
        %4242 = vrot.lane.b32.xlu0 %v4179, 82
        %v4243 = vpop.permute.xlu0 %4242
        %4244 = vrot.lane.b32.xlu0 %v4180, 82
        %v4245 = vpop.permute.xlu0 %4244
        %s4250 = scalar_lea.vmem %s163, 160 [#allocation5]
        %4251 = vst.msk [vmem:[%s4250] sm:$0xff] %vm179, %v4239
        %4252 = vst.msk [vmem:[%s4250 + $0x8] sm:$0xff] %vm179, %v4241
        %4253 = vst.msk [vmem:[%s4250 + $0x10] sm:$0xff] %vm179, %v4243
        %4254 = vst.msk [vmem:[%s4250 + $0x18] sm:$0x7f] %vm4206, %v4245
        %s4255 = scalar_lea.vmem %s163, 64 [#allocation5]
        %4256 = vst.msk [vmem:[%s4255] sm:$0xff] %vm179, %v4188
        %4257 = vst.msk [vmem:[%s4255 + $0x8] sm:$0xff] %vm179, %v4189
        %4258 = vst.msk [vmem:[%s4255 + $0x10] sm:$0xff] %vm179, %v4190
        %4259 = vst.msk [vmem:[%s4255 + $0x18] sm:$0x7f] %vm4206, %v4191
        %4264 = vrot.lane.b32.xlu0 %v4188, 82
        %v4265 = vpop.permute.xlu0 %4264
        %4266 = vrot.lane.b32.xlu0 %v4189, 82
        %v4267 = vpop.permute.xlu0 %4266
        %4268 = vrot.lane.b32.xlu0 %v4190, 82
        %v4269 = vpop.permute.xlu0 %4268
        %4270 = vrot.lane.b32.xlu0 %v4191, 82
        %v4271 = vpop.permute.xlu0 %4270
        %s4276 = scalar_lea.vmem %s163, 192 [#allocation5]
        %4277 = vst.msk [vmem:[%s4276] sm:$0xff] %vm179, %v4265
        %4278 = vst.msk [vmem:[%s4276 + $0x8] sm:$0xff] %vm179, %v4267
        %4279 = vst.msk [vmem:[%s4276 + $0x10] sm:$0xff] %vm179, %v4269
        %4280 = vst.msk [vmem:[%s4276 + $0x18] sm:$0x7f] %vm4206, %v4271
        %s4281 = scalar_lea.vmem %s163, 96 [#allocation5]
        %4282 = vst.msk [vmem:[%s4281] sm:$0xff] %vm179, %v4199
        %4283 = vst.msk [vmem:[%s4281 + $0x8] sm:$0xff] %vm179, %v4200
        %4284 = vst.msk [vmem:[%s4281 + $0x10] sm:$0xff] %vm179, %v4201
        %4285 = vst.msk [vmem:[%s4281 + $0x18] sm:$0x7f] %vm4206, %v4202
        %4290 = vrot.lane.b32.xlu0 %v4199, 82
        %v4291 = vpop.permute.xlu0 %4290
        %4292 = vrot.lane.b32.xlu0 %v4200, 82
        %v4293 = vpop.permute.xlu0 %4292
        %4294 = vrot.lane.b32.xlu0 %v4201, 82
        %v4295 = vpop.permute.xlu0 %4294
        %4296 = vrot.lane.b32.xlu0 %v4202, 82
        %v4297 = vpop.permute.xlu0 %4296
        %s4302 = scalar_lea.vmem %s163, 224 [#allocation5]
        %4303 = vst.msk [vmem:[%s4302] sm:$0xff] %vm179, %v4291
        %4304 = vst.msk [vmem:[%s4302 + $0x8] sm:$0xff] %vm179, %v4293
        %4305 = vst.msk [vmem:[%s4302 + $0x10] sm:$0xff] %vm179, %v4295
        %4306 = vst.msk [vmem:[%s4302 + $0x18] sm:$0x7f] %vm4206, %v4297
        %s4307 = sand.u32 %s83, 1
        %s4308 = sand.u32 %s83, 1
        %s4309 = smul.addr %s4308, 256
        %s4310 = scalar_lea.vmem [#allocation5], %s4309
        // Predicated region
        $region33: #{conv_transpose2d_pallas.1} parent=27 // pred_check
          %p4311 = pneg %p93
        $region34: #{conv_transpose2d_pallas.1} parent=27 // pred_check_branch
          %4313 = sbr.rel (%p4311) target = $region36
        $region35: #{conv_transpose2d_pallas.1} parent=27 // pred_region
          %s4314 = smul.u32 2, %s18
          %s4315 = smul.u32 4, %s19
          %s4316 = smul.addr %s4315, 4
          %s4317 = smul.addr %s4314, 32
          %s4318 = sadd.s32 %s4316, %s4317
          %s4319 = smul.addr %s4318, 8
          %s4320 = scalar_lea.vmem %s2, %s4319
          // Predicated region
          $region37: #{conv_transpose2d_pallas.1} parent=35 // pred_check
            _
          $region38: #{conv_transpose2d_pallas.1} parent=35 // pred_check_branch
            %4322 = sbr.rel (0) target = $region40
          $region39: #{conv_transpose2d_pallas.1} parent=35 // pred_region
            // Predicated region
            $region41: #{conv_transpose2d_pallas.1} parent=39 // pred_check
              _
            $region42: #{conv_transpose2d_pallas.1} parent=39 // pred_check_branch
              %4324 = sbr.rel (0) target = $region44
            $region43: #{conv_transpose2d_pallas.1} parent=39 // pred_region
              // Predicated region
              $region56: #{conv_transpose2d_pallas.1} parent=43 // pred_check
                _
              $region57: #{conv_transpose2d_pallas.1} parent=43 // pred_check_branch
                %4402 = sbr.rel (0) target = $region59
              $region58: #{conv_transpose2d_pallas.1} parent=43 // pred_region
                loop: start=0, step=1, limit=1
                $region60: #{conv_transpose2d_pallas.1} parent=58 // loop_pre_header
                  _
                $region61: #{conv_transpose2d_pallas.1} parent=58 // loop_header
                  %s4404 = sphi 0, %s4408
                  %p4405 = scmp.ge.s32.totalorder %s4404, 1
                  %s4409 = sphi %s4310, %s4310
                  %s4410 = sphi %s4320, %s4320
                $region62: #{conv_transpose2d_pallas.1} parent=58 // loop_header_branch
                  %4407 = sbr.rel (%p4405) target = $region66
                $region63: #{conv_transpose2d_pallas.1} parent=58 // loop_body
                  %v4411 = vld [vmem:[%s4409] sm:$0xff]
                  %4412 = vst [vmem:[%s4410] sm:$0xff] %v4411
                  %v4413 = vld [vmem:[%s4409 + $0x8] sm:$0xff]
                  %4414 = vst [vmem:[%s4410 + $0x8] sm:$0xff] %v4413
                  %v4415 = vld [vmem:[%s4409 + $0x10] sm:$0xff]
                  %4416 = vst [vmem:[%s4410 + $0x10] sm:$0xff] %v4415
                  %v4417 = vld [vmem:[%s4409 + $0x18] sm:$0xff]
                  %4418 = vst [vmem:[%s4410 + $0x18] sm:$0xff] %v4417
                  %v4419 = vld [vmem:[%s4409 + $0x20] sm:$0xff]
                  %4420 = vst [vmem:[%s4410 + $0x20] sm:$0xff] %v4419
                  %v4421 = vld [vmem:[%s4409 + $0x28] sm:$0xff]
                  %4422 = vst [vmem:[%s4410 + $0x28] sm:$0xff] %v4421
                  %v4423 = vld [vmem:[%s4409 + $0x30] sm:$0xff]
                  %4424 = vst [vmem:[%s4410 + $0x30] sm:$0xff] %v4423
                  %v4425 = vld [vmem:[%s4409 + $0x38] sm:$0xff]
                  %4426 = vst [vmem:[%s4410 + $0x38] sm:$0xff] %v4425
                  %v4427 = vld [vmem:[%s4409 + $0x40] sm:$0xff]
                  %4428 = vst [vmem:[%s4410 + $0x40] sm:$0xff] %v4427
                  %v4429 = vld [vmem:[%s4409 + $0x48] sm:$0xff]
                  %4430 = vst [vmem:[%s4410 + $0x48] sm:$0xff] %v4429
                  %v4431 = vld [vmem:[%s4409 + $0x50] sm:$0xff]
                  %4432 = vst [vmem:[%s4410 + $0x50] sm:$0xff] %v4431
                  %v4433 = vld [vmem:[%s4409 + $0x58] sm:$0xff]
                  %4434 = vst [vmem:[%s4410 + $0x58] sm:$0xff] %v4433
                  %v4435 = vld [vmem:[%s4409 + $0x60] sm:$0xff]
                  %4436 = vst [vmem:[%s4410 + $0x60] sm:$0xff] %v4435
                  %v4437 = vld [vmem:[%s4409 + $0x68] sm:$0xff]
                  %4438 = vst [vmem:[%s4410 + $0x68] sm:$0xff] %v4437
                  %v4439 = vld [vmem:[%s4409 + $0x70] sm:$0xff]
                  %4440 = vst [vmem:[%s4410 + $0x70] sm:$0xff] %v4439
                  %v4441 = vld [vmem:[%s4409 + $0x78] sm:$0xff]
                  %4442 = vst [vmem:[%s4410 + $0x78] sm:$0xff] %v4441
                  %v4443 = vld [vmem:[%s4409 + $0x80] sm:$0xff]
                  %4444 = vst [vmem:[%s4410 + $0x100] sm:$0xff] %v4443
                  %v4445 = vld [vmem:[%s4409 + $0x88] sm:$0xff]
                  %4446 = vst [vmem:[%s4410 + $0x108] sm:$0xff] %v4445
                  %v4447 = vld [vmem:[%s4409 + $0x90] sm:$0xff]
                  %4448 = vst [vmem:[%s4410 + $0x110] sm:$0xff] %v4447
                  %v4449 = vld [vmem:[%s4409 + $0x98] sm:$0xff]
                  %4450 = vst [vmem:[%s4410 + $0x118] sm:$0xff] %v4449
                  %v4451 = vld [vmem:[%s4409 + $0xa0] sm:$0xff]
                  %4452 = vst [vmem:[%s4410 + $0x120] sm:$0xff] %v4451
                  %v4453 = vld [vmem:[%s4409 + $0xa8] sm:$0xff]
                  %4454 = vst [vmem:[%s4410 + $0x128] sm:$0xff] %v4453
                  %v4455 = vld [vmem:[%s4409 + $0xb0] sm:$0xff]
                  %4456 = vst [vmem:[%s4410 + $0x130] sm:$0xff] %v4455
                  %v4457 = vld [vmem:[%s4409 + $0xb8] sm:$0xff]
                  %4458 = vst [vmem:[%s4410 + $0x138] sm:$0xff] %v4457
                  %v4459 = vld [vmem:[%s4409 + $0xc0] sm:$0xff]
                  %4460 = vst [vmem:[%s4410 + $0x140] sm:$0xff] %v4459
                  %v4461 = vld [vmem:[%s4409 + $0xc8] sm:$0xff]
                  %4462 = vst [vmem:[%s4410 + $0x148] sm:$0xff] %v4461
                  %v4463 = vld [vmem:[%s4409 + $0xd0] sm:$0xff]
                  %4464 = vst [vmem:[%s4410 + $0x150] sm:$0xff] %v4463
                  %v4465 = vld [vmem:[%s4409 + $0xd8] sm:$0xff]
                  %4466 = vst [vmem:[%s4410 + $0x158] sm:$0xff] %v4465
                  %v4467 = vld [vmem:[%s4409 + $0xe0] sm:$0xff]
                  %4468 = vst [vmem:[%s4410 + $0x160] sm:$0xff] %v4467
                  %v4469 = vld [vmem:[%s4409 + $0xe8] sm:$0xff]
                  %4470 = vst [vmem:[%s4410 + $0x168] sm:$0xff] %v4469
                  %v4471 = vld [vmem:[%s4409 + $0xf0] sm:$0xff]
                  %4472 = vst [vmem:[%s4410 + $0x170] sm:$0xff] %v4471
                  %v4473 = vld [vmem:[%s4409 + $0xf8] sm:$0xff]
                  %4474 = vst [vmem:[%s4410 + $0x178] sm:$0xff] %v4473
                $region64: #{conv_transpose2d_pallas.1} parent=58 // loop_footer
                  %s4408 = sadd.s32 1, %s4404
                $region65: #{conv_transpose2d_pallas.1} parent=58 // loop_footer_branch
                  %4403 = sbr.rel target = $region61
                $region66: #{conv_transpose2d_pallas.1} parent=58 // loop_exit
                  _
              $region59: #{conv_transpose2d_pallas.1} parent=43 // pred_fallthru
                _
              // Predicated region
              $region67: #{conv_transpose2d_pallas.1} parent=43 // pred_check
                _
              $region68: #{conv_transpose2d_pallas.1} parent=43 // pred_check_branch
                %4476 = sbr.rel target = $region70
              $region69: #{conv_transpose2d_pallas.1} parent=43 // pred_region
                _
              $region70: #{conv_transpose2d_pallas.1} parent=43 // pred_fallthru
                _
            $region44: #{conv_transpose2d_pallas.1} parent=39 // pred_fallthru
              _
            // Predicated region
            $region45: #{conv_transpose2d_pallas.1} parent=39 // pred_check
              _
            $region46: #{conv_transpose2d_pallas.1} parent=39 // pred_check_branch
              %4326 = sbr.rel target = $region48
            $region47: #{conv_transpose2d_pallas.1} parent=39 // pred_region
              %s4328 = ssub.s32 256, 1
              loop: start=0, step=1, limit=1
              $region49: #{conv_transpose2d_pallas.1} parent=47 // loop_pre_header
                _
              $region50: #{conv_transpose2d_pallas.1} parent=47 // loop_header
                %s4330 = sphi 0, %s4334
                %p4331 = scmp.ge.s32.totalorder %s4330, 1
                %s4335 = sphi %s4310, %s4310
                %s4336 = sphi %s4320, %s4320
              $region51: #{conv_transpose2d_pallas.1} parent=47 // loop_header_branch
                %4333 = sbr.rel (%p4331) target = $region55
              $region52: #{conv_transpose2d_pallas.1} parent=47 // loop_body
                %v4337 = vld [vmem:[%s4335] sm:%s4328]
                %4338 = vst [vmem:[%s4336] sm:%s4328] %v4337
                %v4339 = vld [vmem:[%s4335 + $0x8] sm:%s4328]
                %4340 = vst [vmem:[%s4336 + $0x8] sm:%s4328] %v4339
                %v4341 = vld [vmem:[%s4335 + $0x10] sm:%s4328]
                %4342 = vst [vmem:[%s4336 + $0x10] sm:%s4328] %v4341
                %v4343 = vld [vmem:[%s4335 + $0x18] sm:%s4328]
                %4344 = vst [vmem:[%s4336 + $0x18] sm:%s4328] %v4343
                %v4345 = vld [vmem:[%s4335 + $0x20] sm:%s4328]
                %4346 = vst [vmem:[%s4336 + $0x20] sm:%s4328] %v4345
                %v4347 = vld [vmem:[%s4335 + $0x28] sm:%s4328]
                %4348 = vst [vmem:[%s4336 + $0x28] sm:%s4328] %v4347
                %v4349 = vld [vmem:[%s4335 + $0x30] sm:%s4328]
                %4350 = vst [vmem:[%s4336 + $0x30] sm:%s4328] %v4349
                %v4351 = vld [vmem:[%s4335 + $0x38] sm:%s4328]
                %4352 = vst [vmem:[%s4336 + $0x38] sm:%s4328] %v4351
                %v4353 = vld [vmem:[%s4335 + $0x40] sm:%s4328]
                %4354 = vst [vmem:[%s4336 + $0x40] sm:%s4328] %v4353
                %v4355 = vld [vmem:[%s4335 + $0x48] sm:%s4328]
                %4356 = vst [vmem:[%s4336 + $0x48] sm:%s4328] %v4355
                %v4357 = vld [vmem:[%s4335 + $0x50] sm:%s4328]
                %4358 = vst [vmem:[%s4336 + $0x50] sm:%s4328] %v4357
                %v4359 = vld [vmem:[%s4335 + $0x58] sm:%s4328]
                %4360 = vst [vmem:[%s4336 + $0x58] sm:%s4328] %v4359
                %v4361 = vld [vmem:[%s4335 + $0x60] sm:%s4328]
                %4362 = vst [vmem:[%s4336 + $0x60] sm:%s4328] %v4361
                %v4363 = vld [vmem:[%s4335 + $0x68] sm:%s4328]
                %4364 = vst [vmem:[%s4336 + $0x68] sm:%s4328] %v4363
                %v4365 = vld [vmem:[%s4335 + $0x70] sm:%s4328]
                %4366 = vst [vmem:[%s4336 + $0x70] sm:%s4328] %v4365
                %v4367 = vld [vmem:[%s4335 + $0x78] sm:%s4328]
                %4368 = vst [vmem:[%s4336 + $0x78] sm:%s4328] %v4367
                %v4369 = vld [vmem:[%s4335 + $0x80] sm:%s4328]
                %4370 = vst [vmem:[%s4336 + $0x100] sm:%s4328] %v4369
                %v4371 = vld [vmem:[%s4335 + $0x88] sm:%s4328]
                %4372 = vst [vmem:[%s4336 + $0x108] sm:%s4328] %v4371
                %v4373 = vld [vmem:[%s4335 + $0x90] sm:%s4328]
                %4374 = vst [vmem:[%s4336 + $0x110] sm:%s4328] %v4373
                %v4375 = vld [vmem:[%s4335 + $0x98] sm:%s4328]
                %4376 = vst [vmem:[%s4336 + $0x118] sm:%s4328] %v4375
                %v4377 = vld [vmem:[%s4335 + $0xa0] sm:%s4328]
                %4378 = vst [vmem:[%s4336 + $0x120] sm:%s4328] %v4377
                %v4379 = vld [vmem:[%s4335 + $0xa8] sm:%s4328]
                %4380 = vst [vmem:[%s4336 + $0x128] sm:%s4328] %v4379
                %v4381 = vld [vmem:[%s4335 + $0xb0] sm:%s4328]
                %4382 = vst [vmem:[%s4336 + $0x130] sm:%s4328] %v4381
                %v4383 = vld [vmem:[%s4335 + $0xb8] sm:%s4328]
                %4384 = vst [vmem:[%s4336 + $0x138] sm:%s4328] %v4383
                %v4385 = vld [vmem:[%s4335 + $0xc0] sm:%s4328]
                %4386 = vst [vmem:[%s4336 + $0x140] sm:%s4328] %v4385
                %v4387 = vld [vmem:[%s4335 + $0xc8] sm:%s4328]
                %4388 = vst [vmem:[%s4336 + $0x148] sm:%s4328] %v4387
                %v4389 = vld [vmem:[%s4335 + $0xd0] sm:%s4328]
                %4390 = vst [vmem:[%s4336 + $0x150] sm:%s4328] %v4389
                %v4391 = vld [vmem:[%s4335 + $0xd8] sm:%s4328]
                %4392 = vst [vmem:[%s4336 + $0x158] sm:%s4328] %v4391
                %v4393 = vld [vmem:[%s4335 + $0xe0] sm:%s4328]
                %4394 = vst [vmem:[%s4336 + $0x160] sm:%s4328] %v4393
                %v4395 = vld [vmem:[%s4335 + $0xe8] sm:%s4328]
                %4396 = vst [vmem:[%s4336 + $0x168] sm:%s4328] %v4395
                %v4397 = vld [vmem:[%s4335 + $0xf0] sm:%s4328]
                %4398 = vst [vmem:[%s4336 + $0x170] sm:%s4328] %v4397
                %v4399 = vld [vmem:[%s4335 + $0xf8] sm:%s4328]
                %4400 = vst [vmem:[%s4336 + $0x178] sm:%s4328] %v4399
              $region53: #{conv_transpose2d_pallas.1} parent=47 // loop_footer
                %s4334 = sadd.s32 1, %s4330
              $region54: #{conv_transpose2d_pallas.1} parent=47 // loop_footer_branch
                %4329 = sbr.rel target = $region50
              $region55: #{conv_transpose2d_pallas.1} parent=47 // loop_exit
                _
            $region48: #{conv_transpose2d_pallas.1} parent=39 // pred_fallthru
              _
          $region40: #{conv_transpose2d_pallas.1} parent=35 // pred_fallthru
            _
          %4477 = vnop
        $region36: #{conv_transpose2d_pallas.1} parent=27 // pred_fallthru
          _
      $region28: #{conv_transpose2d_pallas.1} parent=5 // pred_fallthru
        _
      %p4478 = scmp.le.s32.totalorder 2, %s9
      // Predicated region
      $region71: #{conv_transpose2d_pallas.1} parent=5 // pred_check
        %p4479 = pneg %p4478
      $region72: #{conv_transpose2d_pallas.1} parent=5 // pred_check_branch
        %4481 = sbr.rel (%p4479) target = $region74
      $region73: #{conv_transpose2d_pallas.1} parent=5 // pred_region
        %s4482 = ssub.s32 %s9, 2
        // Predicated region
        $region75: #{conv_transpose2d_pallas.1} parent=73 // pred_check
          %p4483 = pneg %p99
        $region76: #{conv_transpose2d_pallas.1} parent=73 // pred_check_branch
          %4485 = sbr.rel (%p4483) target = $region78
        $region77: #{conv_transpose2d_pallas.1} parent=73 // pred_region
          %s4486 = sand.u32 %s84, 1
          %s4487 = sand.u32 %s84, 1
          %s4488 = smul.addr %s4487, 256
          %s4489 = scalar_lea.vmem [#allocation5], %s4488
        $region78: #{conv_transpose2d_pallas.1} parent=73 // pred_fallthru
          _
      $region74: #{conv_transpose2d_pallas.1} parent=5 // pred_fallthru
        _
    $region6: #{conv_transpose2d_pallas.1} parent=1 // loop_footer
      %s13 = sadd.s32 1, %s9
    $region7: #{conv_transpose2d_pallas.1} parent=1 // loop_footer_branch
      %8 = sbr.rel target = $region3
    $region8: #{conv_transpose2d_pallas.1} parent=1 // loop_exit
      _
    %4490 = vsyncpa [#allocation4], 1
    %s4491 = scalar_lea.sflag [#allocation4], 1
    %4492 = vsyncpa %s4491, 1

</llo_original>
